<compile_context>
chip_gen: v5e
topology: v5e:2x2
jax: 0.10.0
libtpu: 0.0.40
codegen_flags: <defaults>
</compile_context>

<pallas_src>
import functools

import jax
import jax.numpy as jnp
from jax.experimental import pallas as pl
from jax.experimental.pallas import tpu as pltpu

# ------------------------- model hyper-parameters ---------------------------
BATCH = 2
LATENT_DIM = 32        # args.latent_dim
GF_DIM = 8             # args.gf_dim
BOTTOM_WIDTH = 4       # args.bottom_width  (4 -> 8 -> 16 -> 32 through 3 cells)

# NAS-edge counts implied by Network_gen_Auto.genotype():
K_UP = 2
SKIP_2 = 1
SKIP_3 = 2
K_NORMAL = 5           # normal (conv) mixed-op edges per cell
NUM_UP_OPS = 3         # |PRIMITIVES_UP|
NUM_NORM_OPS = 6       # |normal primitives|

BN_EPS = 1e-5

VMEM_SPEC = pl.BlockSpec(memory_space=pltpu.MemorySpace.VMEM)


# ------------------------------ Pallas kernels -------------------------------
def _linear_kernel(z_ref, w_ref, b_ref, o_ref):
    """o = z @ w + b.  z:(N,Din) w:(Din,Dout) b:(1,Dout) -> lane-dense (N,Dout)."""
    o_ref[...] = (jnp.dot(z_ref[...], w_ref[...],
                          preferred_element_type=jnp.float32) + b_ref[...])


def linear_pallas(z, w, b):
    return pl.pallas_call(
        _linear_kernel,
        out_shape=jax.ShapeDtypeStruct((z.shape[0], w.shape[1]), jnp.float32),
        in_specs=[VMEM_SPEC] * 3,
        out_specs=VMEM_SPEC,
    )(z, w, b)


def _cell_kernel(x_ref, w_ref, b_ref, g_ref, bt_ref, m_ref, o_ref, *, W, cnt):
    """Fused conv3x3(pad=1) + bias + BatchNorm(batch stats) + ReLU.

    Layout (channel-major, lane-dense):
      x_ref : (Cin, P + 2*EXT)   zero-padded feature map flattened over
              (n, i_pad in [0,H+2), j_pad in [0,W+2)), with EXT = W+3 extra zero
              lanes on both ends so every conv tap is a static lane-offset slice.
      w_ref : (9, Cout, Cin)     tap-major (kh-major, kw-minor) conv weights.
      b_ref, g_ref, bt_ref : (Cout, 1)  conv bias / BN gamma / BN beta.
      m_ref : (1, P)             interior mask (1 at real pixels, 0 at spatial pad).
      o_ref : (Cout, P)          lane-dense output, pad positions zeroed.
    """
    P = o_ref.shape[1]
    Wp = W + 2
    ext = W + 3

    # in-kernel im2col: 9 accumulating (Cout,Cin)@(Cin,P) MXU matmuls over shifted slices.
    acc = jnp.zeros(o_ref.shape, jnp.float32)
    for kh in range(3):
        for kw in range(3):
            off = ext + (kh - 1) * Wp + (kw - 1)
            acc = acc + jnp.dot(w_ref[kh * 3 + kw], x_ref[:, off:off + P],
                                preferred_element_type=jnp.float32)
    y = acc + b_ref[...]

    # BatchNorm over the N*H*W valid positions (mask excludes spatial padding), then ReLU.
    mask = m_ref[...]
    inv_cnt = 1.0 / cnt
    mean = jnp.sum(y * mask, axis=1, keepdims=True) * inv_cnt
    d = (y - mean) * mask
    var = jnp.sum(d * d, axis=1, keepdims=True) * inv_cnt
    yn = (y - mean) * jax.lax.rsqrt(var + BN_EPS) * g_ref[...] + bt_ref[...]
    o_ref[...] = jnp.maximum(yn, 0.0) * mask


def cell_pallas(x_ext, w9, b, gamma, beta, mask, n, h, w):
    p = n * (h + 2) * (w + 2)
    cout = w9.shape[1]
    kern = functools.partial(_cell_kernel, W=w, cnt=float(n * h * w))
    return pl.pallas_call(
        kern,
        out_shape=jax.ShapeDtypeStruct((cout, p), jnp.float32),
        in_specs=[VMEM_SPEC] * 6,
        out_specs=VMEM_SPEC,
    )(x_ext, w9, b, gamma, beta, mask)


def _to_rgb_kernel(x_ref, w_ref, b_ref, g_ref, bt_ref, m_ref, o_ref, xs_ref, *, W, cnt):
    """Fused BatchNorm(batch stats) + ReLU + conv3x3(Cin->3, pad=1) + tanh.

    x_ref : (Cin, P + 2*EXT)  zero-padded feature map (zeros outside interior).
    m_ref : (1, P + 2*EXT)    interior mask.
    o_ref : (3, P)            lane-dense RGB output (padded layout, interior extracted outside).
    xs_ref: VMEM scratch (Cin, P + 2*EXT) holding the BN+ReLU'd map for the conv taps.
    """
    P = o_ref.shape[1]
    Wp = W + 2
    ext = W + 3

    x = x_ref[...]
    mask = m_ref[...]
    inv_cnt = 1.0 / cnt
    mean = jnp.sum(x * mask, axis=1, keepdims=True) * inv_cnt
    d = (x - mean) * mask
    var = jnp.sum(d * d, axis=1, keepdims=True) * inv_cnt
    xn = (x - mean) * jax.lax.rsqrt(var + BN_EPS) * g_ref[...] + bt_ref[...]
    xs_ref[...] = jnp.maximum(xn, 0.0) * mask      # conv below relies on zero padding

    acc = jnp.zeros(o_ref.shape, jnp.float32)
    for kh in range(3):
        for kw in range(3):
            off = ext + (kh - 1) * Wp + (kw - 1)
            acc = acc + jnp.dot(w_ref[kh * 3 + kw], xs_ref[:, off:off + P],
                                preferred_element_type=jnp.float32)
    o_ref[...] = jnp.tanh(acc + b_ref[...])


def to_rgb_pallas(x_ext, w9, b, gamma, beta, mask_ext, n, h, w):
    p = n * (h + 2) * (w + 2)
    ext = w + 3
    cin = x_ext.shape[0]
    cout = w9.shape[1]
    kern = functools.partial(_to_rgb_kernel, W=w, cnt=float(n * h * w))
    return pl.pallas_call(
        kern,
        out_shape=jax.ShapeDtypeStruct((cout, p), jnp.float32),
        in_specs=[VMEM_SPEC] * 6,
        out_specs=VMEM_SPEC,
        scratch_shapes=[pltpu.VMEM((cin, p + 2 * ext), jnp.float32)],
    )(x_ext, w9, b, gamma, beta, mask_ext)


# ------------------------------- JAX glue ------------------------------------
def nearest_up_cnhw(x, factor):
    """Nearest-neighbour upsample on a (C, N, H, W) map."""
    if factor == 1:
        return x
    x = jnp.repeat(x, factor, axis=2)
    return jnp.repeat(x, factor, axis=3)


def to_ext_flat(x_cnhw):
    """(C,N,H,W) -> (C, N*(H+2)*(W+2) + 2*EXT) zero-padded, channel-major, lane-flattened."""
    c, n, h, w = x_cnhw.shape
    ext = w + 3
    xp = jnp.pad(x_cnhw, ((0, 0), (0, 0), (1, 1), (1, 1)))
    flat = xp.reshape(c, n * (h + 2) * (w + 2))
    return jnp.pad(flat, ((0, 0), (ext, ext)))


def interior_mask(n, h, w, ext=0):
    """(1, N*(H+2)*(W+2) [+2*ext]) mask: 1 at real pixels, 0 at spatial/extension padding."""
    m = jnp.pad(jnp.ones((n, h, w), jnp.float32), ((0, 0), (1, 1), (1, 1)))
    m = m.reshape(1, n * (h + 2) * (w + 2))
    if ext:
        m = jnp.pad(m, ((0, 0), (ext, ext)))
    return m


def from_flat(xf, n, h, w):
    """(C, N*(H+2)*(W+2)) padded layout -> (C, N, H, W) interior."""
    c = xf.shape[0]
    return xf.reshape(c, n, h + 2, w + 2)[:, :, 1:h + 1, 1:w + 1]


def cell_forward(x_cnhw, cp, skips):
    # TODO(synk): Cell_gen_Auto source is not provided; implemented as a representative
    # AutoGAN cell = nearest 2x upsample (+ upsampled skip features) -> conv3x3 -> BN -> ReLU,
    # with conv + bias + BN + ReLU fused into a single Pallas kernel.
    up = nearest_up_cnhw(x_cnhw, 2)
    _, n, h, w = up.shape
    for s in skips:
        up = up + nearest_up_cnhw(s, h // s.shape[2])
    x_ext = to_ext_flat(up)
    mask = interior_mask(n, h, w)
    y_flat = cell_pallas(x_ext, cp["w9"], cp["b"], cp["gamma"], cp["beta"], mask, n, h, w)
    ft = from_flat(y_flat, n, h, w)
    return ft, ft, y_flat                      # (s_i, ft_i, flat layout for reuse)


# ------------------------------ parameters -----------------------------------
def init_params(key):
    ks = jax.random.split(key, 16)
    c, bw = GF_DIM, BOTTOM_WIDTH
    p = {}

    # l1 : Linear(latent_dim, bw^2 * gf_dim), stored pre-transposed as (in, out).
    p["l1_w"] = 0.05 * jax.random.normal(ks[0], (LATENT_DIM, bw * bw * c), jnp.float32)
    p["l1_b"] = 0.01 * jax.random.normal(ks[1], (1, bw * bw * c), jnp.float32)

    def conv_to_taps(w_hwio):
        # (3,3,Cin,Cout) -> (9, Cout, Cin), tap-major (kh-major, kw-minor) — the layout the
        # kernels consume directly (hoisted here so the forward does no per-call reshapes).
        cin, cout = w_hwio.shape[2], w_hwio.shape[3]
        return jnp.transpose(w_hwio, (0, 1, 3, 2)).reshape(9, cout, cin)

    def cell_params(k):
        k1, k2 = jax.random.split(k)
        return {
            "w9": conv_to_taps(0.05 * jax.random.normal(k1, (3, 3, c, c), jnp.float32)),
            "b": 0.01 * jax.random.normal(k2, (c, 1), jnp.float32),
            "gamma": jnp.ones((c, 1), jnp.float32),
            "beta": jnp.zeros((c, 1), jnp.float32),
        }

    p["cell1"] = cell_params(ks[2])
    p["cell2"] = cell_params(ks[3])
    p["cell3"] = cell_params(ks[4])

    # to_rgb: BatchNorm2d(gf_dim) -> ReLU -> Conv2d(gf_dim, 3, 3, 1, 1) -> Tanh
    p["rgb_gamma"] = jnp.ones((c, 1), jnp.float32)
    p["rgb_beta"] = jnp.zeros((c, 1), jnp.float32)
    p["rgb_w9"] = conv_to_taps(0.05 * jax.random.normal(ks[5], (3, 3, c, 3), jnp.float32))
    p["rgb_b"] = 0.01 * jax.random.normal(ks[6], (3, 1), jnp.float32)

    # architecture alphas (0.001 * randn, as in _initialize_alphas)
    p["alphas_normal_1"] = 0.001 * jax.random.normal(ks[7], (K_NORMAL, NUM_NORM_OPS), jnp.float32)
    p["alphas_normal_2"] = 0.001 * jax.random.normal(ks[8], (K_NORMAL, NUM_NORM_OPS), jnp.float32)
    p["alphas_normal_3"] = 0.001 * jax.random.normal(ks[9], (K_NORMAL, NUM_NORM_OPS), jnp.float32)
    p["alphas_up_1"] = 0.001 * jax.random.normal(ks[10], (K_UP, NUM_UP_OPS), jnp.float32)
    p["alphas_up_2"] = 0.001 * jax.random.normal(ks[11], (K_UP, NUM_UP_OPS), jnp.float32)
    p["alphas_up_3"] = 0.001 * jax.random.normal(ks[12], (K_UP, NUM_UP_OPS), jnp.float32)
    p["alphas_skip_2"] = 0.001 * jax.random.normal(ks[13], (SKIP_2, NUM_UP_OPS), jnp.float32)
    p["alphas_skip_3"] = 0.001 * jax.random.normal(ks[14], (SKIP_3, NUM_UP_OPS), jnp.float32)
    return p


# ------------------------------- forward --------------------------------------
def network_gen_auto_forward(z, p):
    n = z.shape[0]
    c, bw = GF_DIM, BOTTOM_WIDTH

    # l1 + view(-1, C, bw, bw)  (then to channel-major CNHW for the fused kernels)
    y = linear_pallas(z, p["l1_w"], p["l1_b"])                 # (N, bw*bw*C)
    ft0 = y.reshape(n, c, bw, bw).transpose(1, 0, 2, 3)        # (C, N, bw, bw)

    # three AutoGAN cells (4x4 -> 8x8 -> 16x16 -> 32x32), each one fused pallas_call
    s1, ft1, _ = cell_forward(ft0, p["cell1"], [])
    s2, ft2, _ = cell_forward(ft1, p["cell2"], [s1])
    _, _, ft3_flat = cell_forward(ft2, p["cell3"], [s1, s2])

    # to_rgb: BN -> ReLU -> Conv3x3(C->3) -> Tanh (one fused pallas_call).
    # cell3's flat output already has zeroed spatial padding, so only lane-extension
    # zeros are needed before feeding the conv-tap slicer.
    h = w = bw * 8
    ext = w + 3
    x_ext = jnp.pad(ft3_flat, ((0, 0), (ext, ext)))
    mask_ext = interior_mask(n, h, w, ext=ext)
    rgb_flat = to_rgb_pallas(x_ext, p["rgb_w9"], p["rgb_b"], p["rgb_gamma"],
                             p["rgb_beta"], mask_ext, n, h, w)     # (3, P)
    ft_final = from_flat(rgb_flat, n, h, w).transpose(1, 0, 2, 3)  # (N, 3, H, W)

    # attention outputs: softmax over op axis.  These are <=(5,6) arrays — plain jnp,
    # XLA fuses them; a pallas_call each would be pure launch overhead.
    up_att1 = jax.nn.softmax(p["alphas_up_1"], axis=-1)
    up_att2 = jnp.concatenate([jax.nn.softmax(p["alphas_skip_2"], axis=-1),
                               jax.nn.softmax(p["alphas_up_2"], axis=-1)], axis=0)
    up_att3 = jnp.concatenate([jax.nn.softmax(p["alphas_skip_3"], axis=-1),
                               jax.nn.softmax(p["alphas_up_3"], axis=-1)], axis=0)
    op_att1 = jax.nn.softmax(p["alphas_normal_1"], axis=-1)
    op_att2 = jax.nn.softmax(p["alphas_normal_2"], axis=-1)
    op_att3 = jax.nn.softmax(p["alphas_normal_3"], axis=-1)

    return ft_final, up_att1, up_att2, up_att3, op_att1, op_att2, op_att3


# --------------------------------- main ---------------------------------------
if __name__ == "__main__":
    key = jax.random.PRNGKey(0)
    k_param, k_z = jax.random.split(key)
    params = init_params(k_param)
    z = jax.random.normal(k_z, (BATCH, LATENT_DIM), jnp.float32)

    fwd = jax.jit(network_gen_auto_forward)
    outs = fwd(z, params)
    outs = jax.block_until_ready(outs)

    ft_final, up1, up2, up3, op1, op2, op3 = outs
    assert ft_final.shape == (BATCH, 3, BOTTOM_WIDTH * 8, BOTTOM_WIDTH * 8)
    assert up1.shape == (K_UP, NUM_UP_OPS)
    assert up2.shape == (K_UP + SKIP_2, NUM_UP_OPS)
    assert up3.shape == (K_UP + SKIP_3, NUM_UP_OPS)
    assert op1.shape == op2.shape == op3.shape == (K_NORMAL, NUM_NORM_OPS)
    assert bool(jnp.all(jnp.isfinite(ft_final)))
    print("KERNEL_OK")
</pallas_src>

<mosaic_0001>
module attributes {stable_mosaic.version = 11 : i64} {
  func.func @_linear_kernel(%arg0: memref<2x32xf32, #tpu.memory_space<vmem>>, %arg1: memref<32x128xf32, #tpu.memory_space<vmem>>, %arg2: memref<1x128xf32, #tpu.memory_space<vmem>>, %arg3: memref<2x128xf32, #tpu.memory_space<vmem>>) attributes {dimension_semantics = [], scalar_prefetch = 0 : i64, scratch_operands = 0 : i64, tpu.core_type = #tpu.core_type<tc>} {
    %c0 = arith.constant 0 : index
    %c0_0 = arith.constant 0 : index
    %0 = vector.load %arg0[%c0, %c0_0] : memref<2x32xf32, #tpu.memory_space<vmem>>, vector<2x32xf32>
    %c0_1 = arith.constant 0 : index
    %c0_2 = arith.constant 0 : index
    %1 = vector.load %arg1[%c0_1, %c0_2] : memref<32x128xf32, #tpu.memory_space<vmem>>, vector<32x128xf32>
    %cst = arith.constant dense<0.000000e+00> : vector<2x128xf32>
    %2 = tpu.matmul %0, %1, %cst {dimension_numbers = #tpu.dot_dimension_numbers<[1], [0], [0], [1], [0, 0, 1, 1], [], []>} : vector<2x32xf32>, vector<32x128xf32>, vector<2x128xf32> -> vector<2x128xf32>
    %c0_3 = arith.constant 0 : index
    %c0_4 = arith.constant 0 : index
    %3 = vector.load %arg2[%c0_3, %c0_4] : memref<1x128xf32, #tpu.memory_space<vmem>>, vector<1x128xf32>
    %4 = vector.broadcast %3 : vector<1x128xf32> to vector<2x128xf32>
    %5 = arith.addf %2, %4 : vector<2x128xf32>
    %c0_5 = arith.constant 0 : index
    %c0_6 = arith.constant 0 : index
    %6 = vector.load %arg3[%c0_5, %c0_6] : memref<2x128xf32, #tpu.memory_space<vmem>>, vector<2x128xf32>
    tpu.vector_store %arg3[%c0_5, %c0_6], %5 {strides = array<i32>} : memref<2x128xf32, #tpu.memory_space<vmem>>, vector<2x128xf32>,
    return
  }
}

module attributes {stable_mosaic.version = 11 : i64} {
  func.func @_cell_kernel(%arg0: memref<8x222xf32, #tpu.memory_space<vmem>>, %arg1: memref<9x8x8xf32, #tpu.memory_space<vmem>>, %arg2: memref<8x1xf32, #tpu.memory_space<vmem>>, %arg3: memref<8x1xf32, #tpu.memory_space<vmem>>, %arg4: memref<8x1xf32, #tpu.memory_space<vmem>>, %arg5: memref<1x200xf32, #tpu.memory_space<vmem>>, %arg6: memref<8x200xf32, #tpu.memory_space<vmem>>) attributes {dimension_semantics = [], scalar_prefetch = 0 : i64, scratch_operands = 0 : i64, tpu.core_type = #tpu.core_type<tc>} {
    %cst = arith.constant 0.000000e+00 : f32
    %0 = vector.broadcast %cst : f32 to vector<8x200xf32>
    %c0 = arith.constant 0 : index
    %c0_0 = arith.constant 0 : index
    %c0_1 = arith.constant 0 : index
    %1 = vector.load %arg1[%c0, %c0_0, %c0_1] : memref<9x8x8xf32, #tpu.memory_space<vmem>>, vector<1x8x8xf32>
    %2 = vector.shape_cast %1 : vector<1x8x8xf32> to vector<8x8xf32>
    %c0_2 = arith.constant 0 : index
    %c0_3 = arith.constant 0 : index
    %3 = vector.load %arg0[%c0_2, %c0_3] : memref<8x222xf32, #tpu.memory_space<vmem>>, vector<8x200xf32>
    %cst_4 = arith.constant dense<0.000000e+00> : vector<8x200xf32>
    %4 = tpu.matmul %2, %3, %cst_4 {dimension_numbers = #tpu.dot_dimension_numbers<[1], [0], [0], [1], [0, 0, 1, 1], [], []>} : vector<8x8xf32>, vector<8x200xf32>, vector<8x200xf32> -> vector<8x200xf32>
    %5 = arith.addf %0, %4 : vector<8x200xf32>
    %c1 = arith.constant 1 : index
    %c0_5 = arith.constant 0 : index
    %c0_6 = arith.constant 0 : index
    %6 = vector.load %arg1[%c1, %c0_5, %c0_6] : memref<9x8x8xf32, #tpu.memory_space<vmem>>, vector<1x8x8xf32>
    %7 = vector.shape_cast %6 : vector<1x8x8xf32> to vector<8x8xf32>
    %c0_7 = arith.constant 0 : index
    %c1_8 = arith.constant 1 : index
    %8 = vector.load %arg0[%c0_7, %c1_8] : memref<8x222xf32, #tpu.memory_space<vmem>>, vector<8x200xf32>
    %cst_9 = arith.constant dense<0.000000e+00> : vector<8x200xf32>
    %9 = tpu.matmul %7, %8, %cst_9 {dimension_numbers = #tpu.dot_dimension_numbers<[1], [0], [0], [1], [0, 0, 1, 1], [], []>} : vector<8x8xf32>, vector<8x200xf32>, vector<8x200xf32> -> vector<8x200xf32>
    %10 = arith.addf %5, %9 : vector<8x200xf32>
    %c2 = arith.constant 2 : index
    %c0_10 = arith.constant 0 : index
    %c0_11 = arith.constant 0 : index
    %11 = vector.load %arg1[%c2, %c0_10, %c0_11] : memref<9x8x8xf32, #tpu.memory_space<vmem>>, vector<1x8x8xf32>
    %12 = vector.shape_cast %11 : vector<1x8x8xf32> to vector<8x8xf32>
    %c0_12 = arith.constant 0 : index
    %c2_13 = arith.constant 2 : index
    %13 = vector.load %arg0[%c0_12, %c2_13] : memref<8x222xf32, #tpu.memory_space<vmem>>, vector<8x200xf32>
    %cst_14 = arith.constant dense<0.000000e+00> : vector<8x200xf32>
    %14 = tpu.matmul %12, %13, %cst_14 {dimension_numbers = #tpu.dot_dimension_numbers<[1], [0], [0], [1], [0, 0, 1, 1], [], []>} : vector<8x8xf32>, vector<8x200xf32>, vector<8x200xf32> -> vector<8x200xf32>
    %15 = arith.addf %10, %14 : vector<8x200xf32>
    %c3 = arith.constant 3 : index
    %c0_15 = arith.constant 0 : index
    %c0_16 = arith.constant 0 : index
    %16 = vector.load %arg1[%c3, %c0_15, %c0_16] : memref<9x8x8xf32, #tpu.memory_space<vmem>>, vector<1x8x8xf32>
    %17 = vector.shape_cast %16 : vector<1x8x8xf32> to vector<8x8xf32>
    %c0_17 = arith.constant 0 : index
    %c10 = arith.constant 10 : index
    %18 = vector.load %arg0[%c0_17, %c10] : memref<8x222xf32, #tpu.memory_space<vmem>>, vector<8x200xf32>
    %cst_18 = arith.constant dense<0.000000e+00> : vector<8x200xf32>
    %19 = tpu.matmul %17, %18, %cst_18 {dimension_numbers = #tpu.dot_dimension_numbers<[1], [0], [0], [1], [0, 0, 1, 1], [], []>} : vector<8x8xf32>, vector<8x200xf32>, vector<8x200xf32> -> vector<8x200xf32>
    %20 = arith.addf %15, %19 : vector<8x200xf32>
    %c4 = arith.constant 4 : index
    %c0_19 = arith.constant 0 : index
    %c0_20 = arith.constant 0 : index
    %21 = vector.load %arg1[%c4, %c0_19, %c0_20] : memref<9x8x8xf32, #tpu.memory_space<vmem>>, vector<1x8x8xf32>
    %22 = vector.shape_cast %21 : vector<1x8x8xf32> to vector<8x8xf32>
    %c0_21 = arith.constant 0 : index
    %c11 = arith.constant 11 : index
    %23 = vector.load %arg0[%c0_21, %c11] : memref<8x222xf32, #tpu.memory_space<vmem>>, vector<8x200xf32>
    %cst_22 = arith.constant dense<0.000000e+00> : vector<8x200xf32>
    %24 = tpu.matmul %22, %23, %cst_22 {dimension_numbers = #tpu.dot_dimension_numbers<[1], [0], [0], [1], [0, 0, 1, 1], [], []>} : vector<8x8xf32>, vector<8x200xf32>, vector<8x200xf32> -> vector<8x200xf32>
    %25 = arith.addf %20, %24 : vector<8x200xf32>
    %c5 = arith.constant 5 : index
    %c0_23 = arith.constant 0 : index
    %c0_24 = arith.constant 0 : index
    %26 = vector.load %arg1[%c5, %c0_23, %c0_24] : memref<9x8x8xf32, #tpu.memory_space<vmem>>, vector<1x8x8xf32>
    %27 = vector.shape_cast %26 : vector<1x8x8xf32> to vector<8x8xf32>
    %c0_25 = arith.constant 0 : index
    %c12 = arith.constant 12 : index
    %28 = vector.load %arg0[%c0_25, %c12] : memref<8x222xf32, #tpu.memory_space<vmem>>, vector<8x200xf32>
    %cst_26 = arith.constant dense<0.000000e+00> : vector<8x200xf32>
    %29 = tpu.matmul %27, %28, %cst_26 {dimension_numbers = #tpu.dot_dimension_numbers<[1], [0], [0], [1], [0, 0, 1, 1], [], []>} : vector<8x8xf32>, vector<8x200xf32>, vector<8x200xf32> -> vector<8x200xf32>
    %30 = arith.addf %25, %29 : vector<8x200xf32>
    %c6 = arith.constant 6 : index
    %c0_27 = arith.constant 0 : index
    %c0_28 = arith.constant 0 : index
    %31 = vector.load %arg1[%c6, %c0_27, %c0_28] : memref<9x8x8xf32, #tpu.memory_space<vmem>>, vector<1x8x8xf32>
    %32 = vector.shape_cast %31 : vector<1x8x8xf32> to vector<8x8xf32>
    %c0_29 = arith.constant 0 : index
    %c20 = arith.constant 20 : index
    %33 = vector.load %arg0[%c0_29, %c20] : memref<8x222xf32, #tpu.memory_space<vmem>>, vector<8x200xf32>
    %cst_30 = arith.constant dense<0.000000e+00> : vector<8x200xf32>
    %34 = tpu.matmul %32, %33, %cst_30 {dimension_numbers = #tpu.dot_dimension_numbers<[1], [0], [0], [1], [0, 0, 1, 1], [], []>} : vector<8x8xf32>, vector<8x200xf32>, vector<8x200xf32> -> vector<8x200xf32>
    %35 = arith.addf %30, %34 : vector<8x200xf32>
    %c7 = arith.constant 7 : index
    %c0_31 = arith.constant 0 : index
    %c0_32 = arith.constant 0 : index
    %36 = vector.load %arg1[%c7, %c0_31, %c0_32] : memref<9x8x8xf32, #tpu.memory_space<vmem>>, vector<1x8x8xf32>
    %37 = vector.shape_cast %36 : vector<1x8x8xf32> to vector<8x8xf32>
    %c0_33 = arith.constant 0 : index
    %c21 = arith.constant 21 : index
    %38 = vector.load %arg0[%c0_33, %c21] : memref<8x222xf32, #tpu.memory_space<vmem>>, vector<8x200xf32>
    %cst_34 = arith.constant dense<0.000000e+00> : vector<8x200xf32>
    %39 = tpu.matmul %37, %38, %cst_34 {dimension_numbers = #tpu.dot_dimension_numbers<[1], [0], [0], [1], [0, 0, 1, 1], [], []>} : vector<8x8xf32>, vector<8x200xf32>, vector<8x200xf32> -> vector<8x200xf32>
    %40 = arith.addf %35, %39 : vector<8x200xf32>
    %c8 = arith.constant 8 : index
    %c0_35 = arith.constant 0 : index
    %c0_36 = arith.constant 0 : index
    %41 = vector.load %arg1[%c8, %c0_35, %c0_36] : memref<9x8x8xf32, #tpu.memory_space<vmem>>, vector<1x8x8xf32>
    %42 = vector.shape_cast %41 : vector<1x8x8xf32> to vector<8x8xf32>
    %c0_37 = arith.constant 0 : index
    %c22 = arith.constant 22 : index
    %43 = vector.load %arg0[%c0_37, %c22] : memref<8x222xf32, #tpu.memory_space<vmem>>, vector<8x200xf32>
    %cst_38 = arith.constant dense<0.000000e+00> : vector<8x200xf32>
    %44 = tpu.matmul %42, %43, %cst_38 {dimension_numbers = #tpu.dot_dimension_numbers<[1], [0], [0], [1], [0, 0, 1, 1], [], []>} : vector<8x8xf32>, vector<8x200xf32>, vector<8x200xf32> -> vector<8x200xf32>
    %45 = arith.addf %40, %44 : vector<8x200xf32>
    %c0_39 = arith.constant 0 : index
    %c0_40 = arith.constant 0 : index
    %46 = vector.load %arg2[%c0_39, %c0_40] : memref<8x1xf32, #tpu.memory_space<vmem>>, vector<8x1xf32>
    %47 = vector.broadcast %46 : vector<8x1xf32> to vector<8x200xf32>
    %48 = arith.addf %45, %47 : vector<8x200xf32>
    %c0_41 = arith.constant 0 : index
    %c0_42 = arith.constant 0 : index
    %49 = vector.load %arg5[%c0_41, %c0_42] : memref<1x200xf32, #tpu.memory_space<vmem>>, vector<1x200xf32>
    %50 = vector.broadcast %49 : vector<1x200xf32> to vector<8x200xf32>
    %51 = arith.mulf %48, %50 : vector<8x200xf32>
    %cst_43 = arith.constant dense<0.000000e+00> : vector<8xf32>
    %52 = vector.multi_reduction <add>, %51, %cst_43 [1] : vector<8x200xf32> to vector<8xf32>
    %53 = vector.shape_cast %52 : vector<8xf32> to vector<8x1xf32>
    %cst_44 = arith.constant 7.812500e-03 : f32
    %54 = vector.broadcast %cst_44 : f32 to vector<8x1xf32>
    %55 = arith.mulf %53, %54 : vector<8x1xf32>
    %56 = vector.broadcast %55 : vector<8x1xf32> to vector<8x200xf32>
    %57 = arith.subf %48, %56 : vector<8x200xf32>
    %58 = vector.broadcast %49 : vector<1x200xf32> to vector<8x200xf32>
    %59 = arith.mulf %57, %58 : vector<8x200xf32>
    %60 = arith.mulf %59, %59 : vector<8x200xf32>
    %cst_45 = arith.constant dense<0.000000e+00> : vector<8xf32>
    %61 = vector.multi_reduction <add>, %60, %cst_45 [1] : vector<8x200xf32> to vector<8xf32>
    %62 = vector.shape_cast %61 : vector<8xf32> to vector<8x1xf32>
    %cst_46 = arith.constant 7.812500e-03 : f32
    %63 = vector.broadcast %cst_46 : f32 to vector<8x1xf32>
    %64 = arith.mulf %62, %63 : vector<8x1xf32>
    %65 = vector.broadcast %55 : vector<8x1xf32> to vector<8x200xf32>
    %66 = arith.subf %48, %65 : vector<8x200xf32>
    %cst_47 = arith.constant 9.99999974E-6 : f32
    %67 = vector.broadcast %cst_47 : f32 to vector<8x1xf32>
    %68 = arith.addf %64, %67 : vector<8x1xf32>
    %69 = math.rsqrt %68 : vector<8x1xf32>
    %70 = vector.broadcast %69 : vector<8x1xf32> to vector<8x200xf32>
    %71 = arith.mulf %66, %70 : vector<8x200xf32>
    %c0_48 = arith.constant 0 : index
    %c0_49 = arith.constant 0 : index
    %72 = vector.load %arg3[%c0_48, %c0_49] : memref<8x1xf32, #tpu.memory_space<vmem>>, vector<8x1xf32>
    %73 = vector.broadcast %72 : vector<8x1xf32> to vector<8x200xf32>
    %74 = arith.mulf %71, %73 : vector<8x200xf32>
    %c0_50 = arith.constant 0 : index
    %c0_51 = arith.constant 0 : index
    %75 = vector.load %arg4[%c0_50, %c0_51] : memref<8x1xf32, #tpu.memory_space<vmem>>, vector<8x1xf32>
    %76 = vector.broadcast %75 : vector<8x1xf32> to vector<8x200xf32>
    %77 = arith.addf %74, %76 : vector<8x200xf32>
    %cst_52 = arith.constant 0.000000e+00 : f32
    %78 = vector.broadcast %cst_52 : f32 to vector<8x200xf32>
    %79 = arith.maximumf %77, %78 : vector<8x200xf32>
    %80 = vector.broadcast %49 : vector<1x200xf32> to vector<8x200xf32>
    %81 = arith.mulf %79, %80 : vector<8x200xf32>
    %c0_53 = arith.constant 0 : index
    %c0_54 = arith.constant 0 : index
    %82 = vector.load %arg6[%c0_53, %c0_54] : memref<8x200xf32, #tpu.memory_space<vmem>>, vector<8x200xf32>
    tpu.vector_store %arg6[%c0_53, %c0_54], %81 {strides = array<i32>} : memref<8x200xf32, #tpu.memory_space<vmem>>, vector<8x200xf32>,
    return
  }
}

module attributes {stable_mosaic.version = 11 : i64} {
  func.func @_cell_kernel(%arg0: memref<8x686xf32, #tpu.memory_space<vmem>>, %arg1: memref<9x8x8xf32, #tpu.memory_space<vmem>>, %arg2: memref<8x1xf32, #tpu.memory_space<vmem>>, %arg3: memref<8x1xf32, #tpu.memory_space<vmem>>, %arg4: memref<8x1xf32, #tpu.memory_space<vmem>>, %arg5: memref<1x648xf32, #tpu.memory_space<vmem>>, %arg6: memref<8x648xf32, #tpu.memory_space<vmem>>) attributes {dimension_semantics = [], scalar_prefetch = 0 : i64, scratch_operands = 0 : i64, tpu.core_type = #tpu.core_type<tc>} {
    %cst = arith.constant 0.000000e+00 : f32
    %0 = vector.broadcast %cst : f32 to vector<8x648xf32>
    %c0 = arith.constant 0 : index
    %c0_0 = arith.constant 0 : index
    %c0_1 = arith.constant 0 : index
    %1 = vector.load %arg1[%c0, %c0_0, %c0_1] : memref<9x8x8xf32, #tpu.memory_space<vmem>>, vector<1x8x8xf32>
    %2 = vector.shape_cast %1 : vector<1x8x8xf32> to vector<8x8xf32>
    %c0_2 = arith.constant 0 : index
    %c0_3 = arith.constant 0 : index
    %3 = vector.load %arg0[%c0_2, %c0_3] : memref<8x686xf32, #tpu.memory_space<vmem>>, vector<8x648xf32>
    %cst_4 = arith.constant dense<0.000000e+00> : vector<8x648xf32>
    %4 = tpu.matmul %2, %3, %cst_4 {dimension_numbers = #tpu.dot_dimension_numbers<[1], [0], [0], [1], [0, 0, 1, 1], [], []>} : vector<8x8xf32>, vector<8x648xf32>, vector<8x648xf32> -> vector<8x648xf32>
    %5 = arith.addf %0, %4 : vector<8x648xf32>
    %c1 = arith.constant 1 : index
    %c0_5 = arith.constant 0 : index
    %c0_6 = arith.constant 0 : index
    %6 = vector.load %arg1[%c1, %c0_5, %c0_6] : memref<9x8x8xf32, #tpu.memory_space<vmem>>, vector<1x8x8xf32>
    %7 = vector.shape_cast %6 : vector<1x8x8xf32> to vector<8x8xf32>
    %c0_7 = arith.constant 0 : index
    %c1_8 = arith.constant 1 : index
    %8 = vector.load %arg0[%c0_7, %c1_8] : memref<8x686xf32, #tpu.memory_space<vmem>>, vector<8x648xf32>
    %cst_9 = arith.constant dense<0.000000e+00> : vector<8x648xf32>
    %9 = tpu.matmul %7, %8, %cst_9 {dimension_numbers = #tpu.dot_dimension_numbers<[1], [0], [0], [1], [0, 0, 1, 1], [], []>} : vector<8x8xf32>, vector<8x648xf32>, vector<8x648xf32> -> vector<8x648xf32>
    %10 = arith.addf %5, %9 : vector<8x648xf32>
    %c2 = arith.constant 2 : index
    %c0_10 = arith.constant 0 : index
    %c0_11 = arith.constant 0 : index
    %11 = vector.load %arg1[%c2, %c0_10, %c0_11] : memref<9x8x8xf32, #tpu.memory_space<vmem>>, vector<1x8x8xf32>
    %12 = vector.shape_cast %11 : vector<1x8x8xf32> to vector<8x8xf32>
    %c0_12 = arith.constant 0 : index
    %c2_13 = arith.constant 2 : index
    %13 = vector.load %arg0[%c0_12, %c2_13] : memref<8x686xf32, #tpu.memory_space<vmem>>, vector<8x648xf32>
    %cst_14 = arith.constant dense<0.000000e+00> : vector<8x648xf32>
    %14 = tpu.matmul %12, %13, %cst_14 {dimension_numbers = #tpu.dot_dimension_numbers<[1], [0], [0], [1], [0, 0, 1, 1], [], []>} : vector<8x8xf32>, vector<8x648xf32>, vector<8x648xf32> -> vector<8x648xf32>
    %15 = arith.addf %10, %14 : vector<8x648xf32>
    %c3 = arith.constant 3 : index
    %c0_15 = arith.constant 0 : index
    %c0_16 = arith.constant 0 : index
    %16 = vector.load %arg1[%c3, %c0_15, %c0_16] : memref<9x8x8xf32, #tpu.memory_space<vmem>>, vector<1x8x8xf32>
    %17 = vector.shape_cast %16 : vector<1x8x8xf32> to vector<8x8xf32>
    %c0_17 = arith.constant 0 : index
    %c18 = arith.constant 18 : index
    %18 = vector.load %arg0[%c0_17, %c18] : memref<8x686xf32, #tpu.memory_space<vmem>>, vector<8x648xf32>
    %cst_18 = arith.constant dense<0.000000e+00> : vector<8x648xf32>
    %19 = tpu.matmul %17, %18, %cst_18 {dimension_numbers = #tpu.dot_dimension_numbers<[1], [0], [0], [1], [0, 0, 1, 1], [], []>} : vector<8x8xf32>, vector<8x648xf32>, vector<8x648xf32> -> vector<8x648xf32>
    %20 = arith.addf %15, %19 : vector<8x648xf32>
    %c4 = arith.constant 4 : index
    %c0_19 = arith.constant 0 : index
    %c0_20 = arith.constant 0 : index
    %21 = vector.load %arg1[%c4, %c0_19, %c0_20] : memref<9x8x8xf32, #tpu.memory_space<vmem>>, vector<1x8x8xf32>
    %22 = vector.shape_cast %21 : vector<1x8x8xf32> to vector<8x8xf32>
    %c0_21 = arith.constant 0 : index
    %c19 = arith.constant 19 : index
    %23 = vector.load %arg0[%c0_21, %c19] : memref<8x686xf32, #tpu.memory_space<vmem>>, vector<8x648xf32>
    %cst_22 = arith.constant dense<0.000000e+00> : vector<8x648xf32>
    %24 = tpu.matmul %22, %23, %cst_22 {dimension_numbers = #tpu.dot_dimension_numbers<[1], [0], [0], [1], [0, 0, 1, 1], [], []>} : vector<8x8xf32>, vector<8x648xf32>, vector<8x648xf32> -> vector<8x648xf32>
    %25 = arith.addf %20, %24 : vector<8x648xf32>
    %c5 = arith.constant 5 : index
    %c0_23 = arith.constant 0 : index
    %c0_24 = arith.constant 0 : index
    %26 = vector.load %arg1[%c5, %c0_23, %c0_24] : memref<9x8x8xf32, #tpu.memory_space<vmem>>, vector<1x8x8xf32>
    %27 = vector.shape_cast %26 : vector<1x8x8xf32> to vector<8x8xf32>
    %c0_25 = arith.constant 0 : index
    %c20 = arith.constant 20 : index
    %28 = vector.load %arg0[%c0_25, %c20] : memref<8x686xf32, #tpu.memory_space<vmem>>, vector<8x648xf32>
    %cst_26 = arith.constant dense<0.000000e+00> : vector<8x648xf32>
    %29 = tpu.matmul %27, %28, %cst_26 {dimension_numbers = #tpu.dot_dimension_numbers<[1], [0], [0], [1], [0, 0, 1, 1], [], []>} : vector<8x8xf32>, vector<8x648xf32>, vector<8x648xf32> -> vector<8x648xf32>
    %30 = arith.addf %25, %29 : vector<8x648xf32>
    %c6 = arith.constant 6 : index
    %c0_27 = arith.constant 0 : index
    %c0_28 = arith.constant 0 : index
    %31 = vector.load %arg1[%c6, %c0_27, %c0_28] : memref<9x8x8xf32, #tpu.memory_space<vmem>>, vector<1x8x8xf32>
    %32 = vector.shape_cast %31 : vector<1x8x8xf32> to vector<8x8xf32>
    %c0_29 = arith.constant 0 : index
    %c36 = arith.constant 36 : index
    %33 = vector.load %arg0[%c0_29, %c36] : memref<8x686xf32, #tpu.memory_space<vmem>>, vector<8x648xf32>
    %cst_30 = arith.constant dense<0.000000e+00> : vector<8x648xf32>
    %34 = tpu.matmul %32, %33, %cst_30 {dimension_numbers = #tpu.dot_dimension_numbers<[1], [0], [0], [1], [0, 0, 1, 1], [], []>} : vector<8x8xf32>, vector<8x648xf32>, vector<8x648xf32> -> vector<8x648xf32>
    %35 = arith.addf %30, %34 : vector<8x648xf32>
    %c7 = arith.constant 7 : index
    %c0_31 = arith.constant 0 : index
    %c0_32 = arith.constant 0 : index
    %36 = vector.load %arg1[%c7, %c0_31, %c0_32] : memref<9x8x8xf32, #tpu.memory_space<vmem>>, vector<1x8x8xf32>
    %37 = vector.shape_cast %36 : vector<1x8x8xf32> to vector<8x8xf32>
    %c0_33 = arith.constant 0 : index
    %c37 = arith.constant 37 : index
    %38 = vector.load %arg0[%c0_33, %c37] : memref<8x686xf32, #tpu.memory_space<vmem>>, vector<8x648xf32>
    %cst_34 = arith.constant dense<0.000000e+00> : vector<8x648xf32>
    %39 = tpu.matmul %37, %38, %cst_34 {dimension_numbers = #tpu.dot_dimension_numbers<[1], [0], [0], [1], [0, 0, 1, 1], [], []>} : vector<8x8xf32>, vector<8x648xf32>, vector<8x648xf32> -> vector<8x648xf32>
    %40 = arith.addf %35, %39 : vector<8x648xf32>
    %c8 = arith.constant 8 : index
    %c0_35 = arith.constant 0 : index
    %c0_36 = arith.constant 0 : index
    %41 = vector.load %arg1[%c8, %c0_35, %c0_36] : memref<9x8x8xf32, #tpu.memory_space<vmem>>, vector<1x8x8xf32>
    %42 = vector.shape_cast %41 : vector<1x8x8xf32> to vector<8x8xf32>
    %c0_37 = arith.constant 0 : index
    %c38 = arith.constant 38 : index
    %43 = vector.load %arg0[%c0_37, %c38] : memref<8x686xf32, #tpu.memory_space<vmem>>, vector<8x648xf32>
    %cst_38 = arith.constant dense<0.000000e+00> : vector<8x648xf32>
    %44 = tpu.matmul %42, %43, %cst_38 {dimension_numbers = #tpu.dot_dimension_numbers<[1], [0], [0], [1], [0, 0, 1, 1], [], []>} : vector<8x8xf32>, vector<8x648xf32>, vector<8x648xf32> -> vector<8x648xf32>
    %45 = arith.addf %40, %44 : vector<8x648xf32>
    %c0_39 = arith.constant 0 : index
    %c0_40 = arith.constant 0 : index
    %46 = vector.load %arg2[%c0_39, %c0_40] : memref<8x1xf32, #tpu.memory_space<vmem>>, vector<8x1xf32>
    %47 = vector.broadcast %46 : vector<8x1xf32> to vector<8x648xf32>
    %48 = arith.addf %45, %47 : vector<8x648xf32>
    %c0_41 = arith.constant 0 : index
    %c0_42 = arith.constant 0 : index
    %49 = vector.load %arg5[%c0_41, %c0_42] : memref<1x648xf32, #tpu.memory_space<vmem>>, vector<1x648xf32>
    %50 = vector.broadcast %49 : vector<1x648xf32> to vector<8x648xf32>
    %51 = arith.mulf %48, %50 : vector<8x648xf32>
    %cst_43 = arith.constant dense<0.000000e+00> : vector<8xf32>
    %52 = vector.multi_reduction <add>, %51, %cst_43 [1] : vector<8x648xf32> to vector<8xf32>
    %53 = vector.shape_cast %52 : vector<8xf32> to vector<8x1xf32>
    %cst_44 = arith.constant 0.001953125 : f32
    %54 = vector.broadcast %cst_44 : f32 to vector<8x1xf32>
    %55 = arith.mulf %53, %54 : vector<8x1xf32>
    %56 = vector.broadcast %55 : vector<8x1xf32> to vector<8x648xf32>
    %57 = arith.subf %48, %56 : vector<8x648xf32>
    %58 = vector.broadcast %49 : vector<1x648xf32> to vector<8x648xf32>
    %59 = arith.mulf %57, %58 : vector<8x648xf32>
    %60 = arith.mulf %59, %59 : vector<8x648xf32>
    %cst_45 = arith.constant dense<0.000000e+00> : vector<8xf32>
    %61 = vector.multi_reduction <add>, %60, %cst_45 [1] : vector<8x648xf32> to vector<8xf32>
    %62 = vector.shape_cast %61 : vector<8xf32> to vector<8x1xf32>
    %cst_46 = arith.constant 0.001953125 : f32
    %63 = vector.broadcast %cst_46 : f32 to vector<8x1xf32>
    %64 = arith.mulf %62, %63 : vector<8x1xf32>
    %65 = vector.broadcast %55 : vector<8x1xf32> to vector<8x648xf32>
    %66 = arith.subf %48, %65 : vector<8x648xf32>
    %cst_47 = arith.constant 9.99999974E-6 : f32
    %67 = vector.broadcast %cst_47 : f32 to vector<8x1xf32>
    %68 = arith.addf %64, %67 : vector<8x1xf32>
    %69 = math.rsqrt %68 : vector<8x1xf32>
    %70 = vector.broadcast %69 : vector<8x1xf32> to vector<8x648xf32>
    %71 = arith.mulf %66, %70 : vector<8x648xf32>
    %c0_48 = arith.constant 0 : index
    %c0_49 = arith.constant 0 : index
    %72 = vector.load %arg3[%c0_48, %c0_49] : memref<8x1xf32, #tpu.memory_space<vmem>>, vector<8x1xf32>
    %73 = vector.broadcast %72 : vector<8x1xf32> to vector<8x648xf32>
    %74 = arith.mulf %71, %73 : vector<8x648xf32>
    %c0_50 = arith.constant 0 : index
    %c0_51 = arith.constant 0 : index
    %75 = vector.load %arg4[%c0_50, %c0_51] : memref<8x1xf32, #tpu.memory_space<vmem>>, vector<8x1xf32>
    %76 = vector.broadcast %75 : vector<8x1xf32> to vector<8x648xf32>
    %77 = arith.addf %74, %76 : vector<8x648xf32>
    %cst_52 = arith.constant 0.000000e+00 : f32
    %78 = vector.broadcast %cst_52 : f32 to vector<8x648xf32>
    %79 = arith.maximumf %77, %78 : vector<8x648xf32>
    %80 = vector.broadcast %49 : vector<1x648xf32> to vector<8x648xf32>
    %81 = arith.mulf %79, %80 : vector<8x648xf32>
    %c0_53 = arith.constant 0 : index
    %c0_54 = arith.constant 0 : index
    %82 = vector.load %arg6[%c0_53, %c0_54] : memref<8x648xf32, #tpu.memory_space<vmem>>, vector<8x648xf32>
    tpu.vector_store %arg6[%c0_53, %c0_54], %81 {strides = array<i32>} : memref<8x648xf32, #tpu.memory_space<vmem>>, vector<8x648xf32>,
    return
  }
}

module attributes {stable_mosaic.version = 11 : i64} {
  func.func @_cell_kernel(%arg0: memref<8x2382xf32, #tpu.memory_space<vmem>>, %arg1: memref<9x8x8xf32, #tpu.memory_space<vmem>>, %arg2: memref<8x1xf32, #tpu.memory_space<vmem>>, %arg3: memref<8x1xf32, #tpu.memory_space<vmem>>, %arg4: memref<8x1xf32, #tpu.memory_space<vmem>>, %arg5: memref<1x2312xf32, #tpu.memory_space<vmem>>, %arg6: memref<8x2312xf32, #tpu.memory_space<vmem>>) attributes {dimension_semantics = [], scalar_prefetch = 0 : i64, scratch_operands = 0 : i64, tpu.core_type = #tpu.core_type<tc>} {
    %cst = arith.constant 0.000000e+00 : f32
    %0 = vector.broadcast %cst : f32 to vector<8x2312xf32>
    %c0 = arith.constant 0 : index
    %c0_0 = arith.constant 0 : index
    %c0_1 = arith.constant 0 : index
    %1 = vector.load %arg1[%c0, %c0_0, %c0_1] : memref<9x8x8xf32, #tpu.memory_space<vmem>>, vector<1x8x8xf32>
    %2 = vector.shape_cast %1 : vector<1x8x8xf32> to vector<8x8xf32>
    %c0_2 = arith.constant 0 : index
    %c0_3 = arith.constant 0 : index
    %3 = vector.load %arg0[%c0_2, %c0_3] : memref<8x2382xf32, #tpu.memory_space<vmem>>, vector<8x2312xf32>
    %cst_4 = arith.constant dense<0.000000e+00> : vector<8x2312xf32>
    %4 = tpu.matmul %2, %3, %cst_4 {dimension_numbers = #tpu.dot_dimension_numbers<[1], [0], [0], [1], [0, 0, 1, 1], [], []>} : vector<8x8xf32>, vector<8x2312xf32>, vector<8x2312xf32> -> vector<8x2312xf32>
    %5 = arith.addf %0, %4 : vector<8x2312xf32>
    %c1 = arith.constant 1 : index
    %c0_5 = arith.constant 0 : index
    %c0_6 = arith.constant 0 : index
    %6 = vector.load %arg1[%c1, %c0_5, %c0_6] : memref<9x8x8xf32, #tpu.memory_space<vmem>>, vector<1x8x8xf32>
    %7 = vector.shape_cast %6 : vector<1x8x8xf32> to vector<8x8xf32>
    %c0_7 = arith.constant 0 : index
    %c1_8 = arith.constant 1 : index
    %8 = vector.load %arg0[%c0_7, %c1_8] : memref<8x2382xf32, #tpu.memory_space<vmem>>, vector<8x2312xf32>
    %cst_9 = arith.constant dense<0.000000e+00> : vector<8x2312xf32>
    %9 = tpu.matmul %7, %8, %cst_9 {dimension_numbers = #tpu.dot_dimension_numbers<[1], [0], [0], [1], [0, 0, 1, 1], [], []>} : vector<8x8xf32>, vector<8x2312xf32>, vector<8x2312xf32> -> vector<8x2312xf32>
    %10 = arith.addf %5, %9 : vector<8x2312xf32>
    %c2 = arith.constant 2 : index
    %c0_10 = arith.constant 0 : index
    %c0_11 = arith.constant 0 : index
    %11 = vector.load %arg1[%c2, %c0_10, %c0_11] : memref<9x8x8xf32, #tpu.memory_space<vmem>>, vector<1x8x8xf32>
    %12 = vector.shape_cast %11 : vector<1x8x8xf32> to vector<8x8xf32>
    %c0_12 = arith.constant 0 : index
    %c2_13 = arith.constant 2 : index
    %13 = vector.load %arg0[%c0_12, %c2_13] : memref<8x2382xf32, #tpu.memory_space<vmem>>, vector<8x2312xf32>
    %cst_14 = arith.constant dense<0.000000e+00> : vector<8x2312xf32>
    %14 = tpu.matmul %12, %13, %cst_14 {dimension_numbers = #tpu.dot_dimension_numbers<[1], [0], [0], [1], [0, 0, 1, 1], [], []>} : vector<8x8xf32>, vector<8x2312xf32>, vector<8x2312xf32> -> vector<8x2312xf32>
    %15 = arith.addf %10, %14 : vector<8x2312xf32>
    %c3 = arith.constant 3 : index
    %c0_15 = arith.constant 0 : index
    %c0_16 = arith.constant 0 : index
    %16 = vector.load %arg1[%c3, %c0_15, %c0_16] : memref<9x8x8xf32, #tpu.memory_space<vmem>>, vector<1x8x8xf32>
    %17 = vector.shape_cast %16 : vector<1x8x8xf32> to vector<8x8xf32>
    %c0_17 = arith.constant 0 : index
    %c34 = arith.constant 34 : index
    %18 = vector.load %arg0[%c0_17, %c34] : memref<8x2382xf32, #tpu.memory_space<vmem>>, vector<8x2312xf32>
    %cst_18 = arith.constant dense<0.000000e+00> : vector<8x2312xf32>
    %19 = tpu.matmul %17, %18, %cst_18 {dimension_numbers = #tpu.dot_dimension_numbers<[1], [0], [0], [1], [0, 0, 1, 1], [], []>} : vector<8x8xf32>, vector<8x2312xf32>, vector<8x2312xf32> -> vector<8x2312xf32>
    %20 = arith.addf %15, %19 : vector<8x2312xf32>
    %c4 = arith.constant 4 : index
    %c0_19 = arith.constant 0 : index
    %c0_20 = arith.constant 0 : index
    %21 = vector.load %arg1[%c4, %c0_19, %c0_20] : memref<9x8x8xf32, #tpu.memory_space<vmem>>, vector<1x8x8xf32>
    %22 = vector.shape_cast %21 : vector<1x8x8xf32> to vector<8x8xf32>
    %c0_21 = arith.constant 0 : index
    %c35 = arith.constant 35 : index
    %23 = vector.load %arg0[%c0_21, %c35] : memref<8x2382xf32, #tpu.memory_space<vmem>>, vector<8x2312xf32>
    %cst_22 = arith.constant dense<0.000000e+00> : vector<8x2312xf32>
    %24 = tpu.matmul %22, %23, %cst_22 {dimension_numbers = #tpu.dot_dimension_numbers<[1], [0], [0], [1], [0, 0, 1, 1], [], []>} : vector<8x8xf32>, vector<8x2312xf32>, vector<8x2312xf32> -> vector<8x2312xf32>
    %25 = arith.addf %20, %24 : vector<8x2312xf32>
    %c5 = arith.constant 5 : index
    %c0_23 = arith.constant 0 : index
    %c0_24 = arith.constant 0 : index
    %26 = vector.load %arg1[%c5, %c0_23, %c0_24] : memref<9x8x8xf32, #tpu.memory_space<vmem>>, vector<1x8x8xf32>
    %27 = vector.shape_cast %26 : vector<1x8x8xf32> to vector<8x8xf32>
    %c0_25 = arith.constant 0 : index
    %c36 = arith.constant 36 : index
    %28 = vector.load %arg0[%c0_25, %c36] : memref<8x2382xf32, #tpu.memory_space<vmem>>, vector<8x2312xf32>
    %cst_26 = arith.constant dense<0.000000e+00> : vector<8x2312xf32>
    %29 = tpu.matmul %27, %28, %cst_26 {dimension_numbers = #tpu.dot_dimension_numbers<[1], [0], [0], [1], [0, 0, 1, 1], [], []>} : vector<8x8xf32>, vector<8x2312xf32>, vector<8x2312xf32> -> vector<8x2312xf32>
    %30 = arith.addf %25, %29 : vector<8x2312xf32>
    %c6 = arith.constant 6 : index
    %c0_27 = arith.constant 0 : index
    %c0_28 = arith.constant 0 : index
    %31 = vector.load %arg1[%c6, %c0_27, %c0_28] : memref<9x8x8xf32, #tpu.memory_space<vmem>>, vector<1x8x8xf32>
    %32 = vector.shape_cast %31 : vector<1x8x8xf32> to vector<8x8xf32>
    %c0_29 = arith.constant 0 : index
    %c68 = arith.constant 68 : index
    %33 = vector.load %arg0[%c0_29, %c68] : memref<8x2382xf32, #tpu.memory_space<vmem>>, vector<8x2312xf32>
    %cst_30 = arith.constant dense<0.000000e+00> : vector<8x2312xf32>
    %34 = tpu.matmul %32, %33, %cst_30 {dimension_numbers = #tpu.dot_dimension_numbers<[1], [0], [0], [1], [0, 0, 1, 1], [], []>} : vector<8x8xf32>, vector<8x2312xf32>, vector<8x2312xf32> -> vector<8x2312xf32>
    %35 = arith.addf %30, %34 : vector<8x2312xf32>
    %c7 = arith.constant 7 : index
    %c0_31 = arith.constant 0 : index
    %c0_32 = arith.constant 0 : index
    %36 = vector.load %arg1[%c7, %c0_31, %c0_32] : memref<9x8x8xf32, #tpu.memory_space<vmem>>, vector<1x8x8xf32>
    %37 = vector.shape_cast %36 : vector<1x8x8xf32> to vector<8x8xf32>
    %c0_33 = arith.constant 0 : index
    %c69 = arith.constant 69 : index
    %38 = vector.load %arg0[%c0_33, %c69] : memref<8x2382xf32, #tpu.memory_space<vmem>>, vector<8x2312xf32>
    %cst_34 = arith.constant dense<0.000000e+00> : vector<8x2312xf32>
    %39 = tpu.matmul %37, %38, %cst_34 {dimension_numbers = #tpu.dot_dimension_numbers<[1], [0], [0], [1], [0, 0, 1, 1], [], []>} : vector<8x8xf32>, vector<8x2312xf32>, vector<8x2312xf32> -> vector<8x2312xf32>
    %40 = arith.addf %35, %39 : vector<8x2312xf32>
    %c8 = arith.constant 8 : index
    %c0_35 = arith.constant 0 : index
    %c0_36 = arith.constant 0 : index
    %41 = vector.load %arg1[%c8, %c0_35, %c0_36] : memref<9x8x8xf32, #tpu.memory_space<vmem>>, vector<1x8x8xf32>
    %42 = vector.shape_cast %41 : vector<1x8x8xf32> to vector<8x8xf32>
    %c0_37 = arith.constant 0 : index
    %c70 = arith.constant 70 : index
    %43 = vector.load %arg0[%c0_37, %c70] : memref<8x2382xf32, #tpu.memory_space<vmem>>, vector<8x2312xf32>
    %cst_38 = arith.constant dense<0.000000e+00> : vector<8x2312xf32>
    %44 = tpu.matmul %42, %43, %cst_38 {dimension_numbers = #tpu.dot_dimension_numbers<[1], [0], [0], [1], [0, 0, 1, 1], [], []>} : vector<8x8xf32>, vector<8x2312xf32>, vector<8x2312xf32> -> vector<8x2312xf32>
    %45 = arith.addf %40, %44 : vector<8x2312xf32>
    %c0_39 = arith.constant 0 : index
    %c0_40 = arith.constant 0 : index
    %46 = vector.load %arg2[%c0_39, %c0_40] : memref<8x1xf32, #tpu.memory_space<vmem>>, vector<8x1xf32>
    %47 = vector.broadcast %46 : vector<8x1xf32> to vector<8x2312xf32>
    %48 = arith.addf %45, %47 : vector<8x2312xf32>
    %c0_41 = arith.constant 0 : index
    %c0_42 = arith.constant 0 : index
    %49 = vector.load %arg5[%c0_41, %c0_42] : memref<1x2312xf32, #tpu.memory_space<vmem>>, vector<1x2312xf32>
    %50 = vector.broadcast %49 : vector<1x2312xf32> to vector<8x2312xf32>
    %51 = arith.mulf %48, %50 : vector<8x2312xf32>
    %cst_43 = arith.constant dense<0.000000e+00> : vector<8xf32>
    %52 = vector.multi_reduction <add>, %51, %cst_43 [1] : vector<8x2312xf32> to vector<8xf32>
    %53 = vector.shape_cast %52 : vector<8xf32> to vector<8x1xf32>
    %cst_44 = arith.constant 4.8828125E-4 : f32
    %54 = vector.broadcast %cst_44 : f32 to vector<8x1xf32>
    %55 = arith.mulf %53, %54 : vector<8x1xf32>
    %56 = vector.broadcast %55 : vector<8x1xf32> to vector<8x2312xf32>
    %57 = arith.subf %48, %56 : vector<8x2312xf32>
    %58 = vector.broadcast %49 : vector<1x2312xf32> to vector<8x2312xf32>
    %59 = arith.mulf %57, %58 : vector<8x2312xf32>
    %60 = arith.mulf %59, %59 : vector<8x2312xf32>
    %cst_45 = arith.constant dense<0.000000e+00> : vector<8xf32>
    %61 = vector.multi_reduction <add>, %60, %cst_45 [1] : vector<8x2312xf32> to vector<8xf32>
    %62 = vector.shape_cast %61 : vector<8xf32> to vector<8x1xf32>
    %cst_46 = arith.constant 4.8828125E-4 : f32
    %63 = vector.broadcast %cst_46 : f32 to vector<8x1xf32>
    %64 = arith.mulf %62, %63 : vector<8x1xf32>
    %65 = vector.broadcast %55 : vector<8x1xf32> to vector<8x2312xf32>
    %66 = arith.subf %48, %65 : vector<8x2312xf32>
    %cst_47 = arith.constant 9.99999974E-6 : f32
    %67 = vector.broadcast %cst_47 : f32 to vector<8x1xf32>
    %68 = arith.addf %64, %67 : vector<8x1xf32>
    %69 = math.rsqrt %68 : vector<8x1xf32>
    %70 = vector.broadcast %69 : vector<8x1xf32> to vector<8x2312xf32>
    %71 = arith.mulf %66, %70 : vector<8x2312xf32>
    %c0_48 = arith.constant 0 : index
    %c0_49 = arith.constant 0 : index
    %72 = vector.load %arg3[%c0_48, %c0_49] : memref<8x1xf32, #tpu.memory_space<vmem>>, vector<8x1xf32>
    %73 = vector.broadcast %72 : vector<8x1xf32> to vector<8x2312xf32>
    %74 = arith.mulf %71, %73 : vector<8x2312xf32>
    %c0_50 = arith.constant 0 : index
    %c0_51 = arith.constant 0 : index
    %75 = vector.load %arg4[%c0_50, %c0_51] : memref<8x1xf32, #tpu.memory_space<vmem>>, vector<8x1xf32>
    %76 = vector.broadcast %75 : vector<8x1xf32> to vector<8x2312xf32>
    %77 = arith.addf %74, %76 : vector<8x2312xf32>
    %cst_52 = arith.constant 0.000000e+00 : f32
    %78 = vector.broadcast %cst_52 : f32 to vector<8x2312xf32>
    %79 = arith.maximumf %77, %78 : vector<8x2312xf32>
    %80 = vector.broadcast %49 : vector<1x2312xf32> to vector<8x2312xf32>
    %81 = arith.mulf %79, %80 : vector<8x2312xf32>
    %c0_53 = arith.constant 0 : index
    %c0_54 = arith.constant 0 : index
    %82 = vector.load %arg6[%c0_53, %c0_54] : memref<8x2312xf32, #tpu.memory_space<vmem>>, vector<8x2312xf32>
    tpu.vector_store %arg6[%c0_53, %c0_54], %81 {strides = array<i32>} : memref<8x2312xf32, #tpu.memory_space<vmem>>, vector<8x2312xf32>,
    return
  }
}

module attributes {stable_mosaic.version = 11 : i64} {
  func.func @_to_rgb_kernel(%arg0: memref<8x2382xf32, #tpu.memory_space<vmem>>, %arg1: memref<9x3x8xf32, #tpu.memory_space<vmem>>, %arg2: memref<3x1xf32, #tpu.memory_space<vmem>>, %arg3: memref<8x1xf32, #tpu.memory_space<vmem>>, %arg4: memref<8x1xf32, #tpu.memory_space<vmem>>, %arg5: memref<1x2382xf32, #tpu.memory_space<vmem>>, %arg6: memref<3x2312xf32, #tpu.memory_space<vmem>>, %arg7: memref<8x2382xf32, #tpu.memory_space<vmem>>) attributes {dimension_semantics = [], scalar_prefetch = 0 : i64, scratch_operands = 1 : i64, tpu.core_type = #tpu.core_type<tc>} {
    %c0 = arith.constant 0 : index
    %c0_0 = arith.constant 0 : index
    %0 = vector.load %arg0[%c0, %c0_0] : memref<8x2382xf32, #tpu.memory_space<vmem>>, vector<8x2382xf32>
    %c0_1 = arith.constant 0 : index
    %c0_2 = arith.constant 0 : index
    %1 = vector.load %arg5[%c0_1, %c0_2] : memref<1x2382xf32, #tpu.memory_space<vmem>>, vector<1x2382xf32>
    %2 = vector.broadcast %1 : vector<1x2382xf32> to vector<8x2382xf32>
    %3 = arith.mulf %0, %2 : vector<8x2382xf32>
    %cst = arith.constant dense<0.000000e+00> : vector<8xf32>
    %4 = vector.multi_reduction <add>, %3, %cst [1] : vector<8x2382xf32> to vector<8xf32>
    %5 = vector.shape_cast %4 : vector<8xf32> to vector<8x1xf32>
    %cst_3 = arith.constant 4.8828125E-4 : f32
    %6 = vector.broadcast %cst_3 : f32 to vector<8x1xf32>
    %7 = arith.mulf %5, %6 : vector<8x1xf32>
    %8 = vector.broadcast %7 : vector<8x1xf32> to vector<8x2382xf32>
    %9 = arith.subf %0, %8 : vector<8x2382xf32>
    %10 = vector.broadcast %1 : vector<1x2382xf32> to vector<8x2382xf32>
    %11 = arith.mulf %9, %10 : vector<8x2382xf32>
    %12 = arith.mulf %11, %11 : vector<8x2382xf32>
    %cst_4 = arith.constant dense<0.000000e+00> : vector<8xf32>
    %13 = vector.multi_reduction <add>, %12, %cst_4 [1] : vector<8x2382xf32> to vector<8xf32>
    %14 = vector.shape_cast %13 : vector<8xf32> to vector<8x1xf32>
    %cst_5 = arith.constant 4.8828125E-4 : f32
    %15 = vector.broadcast %cst_5 : f32 to vector<8x1xf32>
    %16 = arith.mulf %14, %15 : vector<8x1xf32>
    %17 = vector.broadcast %7 : vector<8x1xf32> to vector<8x2382xf32>
    %18 = arith.subf %0, %17 : vector<8x2382xf32>
    %cst_6 = arith.constant 9.99999974E-6 : f32
    %19 = vector.broadcast %cst_6 : f32 to vector<8x1xf32>
    %20 = arith.addf %16, %19 : vector<8x1xf32>
    %21 = math.rsqrt %20 : vector<8x1xf32>
    %22 = vector.broadcast %21 : vector<8x1xf32> to vector<8x2382xf32>
    %23 = arith.mulf %18, %22 : vector<8x2382xf32>
    %c0_7 = arith.constant 0 : index
    %c0_8 = arith.constant 0 : index
    %24 = vector.load %arg3[%c0_7, %c0_8] : memref<8x1xf32, #tpu.memory_space<vmem>>, vector<8x1xf32>
    %25 = vector.broadcast %24 : vector<8x1xf32> to vector<8x2382xf32>
    %26 = arith.mulf %23, %25 : vector<8x2382xf32>
    %c0_9 = arith.constant 0 : index
    %c0_10 = arith.constant 0 : index
    %27 = vector.load %arg4[%c0_9, %c0_10] : memref<8x1xf32, #tpu.memory_space<vmem>>, vector<8x1xf32>
    %28 = vector.broadcast %27 : vector<8x1xf32> to vector<8x2382xf32>
    %29 = arith.addf %26, %28 : vector<8x2382xf32>
    %cst_11 = arith.constant 0.000000e+00 : f32
    %30 = vector.broadcast %cst_11 : f32 to vector<8x2382xf32>
    %31 = arith.maximumf %29, %30 : vector<8x2382xf32>
    %32 = vector.broadcast %1 : vector<1x2382xf32> to vector<8x2382xf32>
    %33 = arith.mulf %31, %32 : vector<8x2382xf32>
    %c0_12 = arith.constant 0 : index
    %c0_13 = arith.constant 0 : index
    %34 = vector.load %arg7[%c0_12, %c0_13] : memref<8x2382xf32, #tpu.memory_space<vmem>>, vector<8x2382xf32>
    tpu.vector_store %arg7[%c0_12, %c0_13], %33 {strides = array<i32>} : memref<8x2382xf32, #tpu.memory_space<vmem>>, vector<8x2382xf32>,
    %cst_14 = arith.constant 0.000000e+00 : f32
    %35 = vector.broadcast %cst_14 : f32 to vector<3x2312xf32>
    %c0_15 = arith.constant 0 : index
    %c0_16 = arith.constant 0 : index
    %c0_17 = arith.constant 0 : index
    %36 = vector.load %arg1[%c0_15, %c0_16, %c0_17] : memref<9x3x8xf32, #tpu.memory_space<vmem>>, vector<1x3x8xf32>
    %37 = vector.shape_cast %36 : vector<1x3x8xf32> to vector<3x8xf32>
    %c0_18 = arith.constant 0 : index
    %c0_19 = arith.constant 0 : index
    %38 = vector.load %arg7[%c0_18, %c0_19] : memref<8x2382xf32, #tpu.memory_space<vmem>>, vector<8x2312xf32>
    %cst_20 = arith.constant dense<0.000000e+00> : vector<3x2312xf32>
    %39 = tpu.matmul %37, %38, %cst_20 {dimension_numbers = #tpu.dot_dimension_numbers<[1], [0], [0], [1], [0, 0, 1, 1], [], []>} : vector<3x8xf32>, vector<8x2312xf32>, vector<3x2312xf32> -> vector<3x2312xf32>
    %40 = arith.addf %35, %39 : vector<3x2312xf32>
    %c1 = arith.constant 1 : index
    %c0_21 = arith.constant 0 : index
    %c0_22 = arith.constant 0 : index
    %41 = vector.load %arg1[%c1, %c0_21, %c0_22] : memref<9x3x8xf32, #tpu.memory_space<vmem>>, vector<1x3x8xf32>
    %42 = vector.shape_cast %41 : vector<1x3x8xf32> to vector<3x8xf32>
    %c0_23 = arith.constant 0 : index
    %c1_24 = arith.constant 1 : index
    %43 = vector.load %arg7[%c0_23, %c1_24] : memref<8x2382xf32, #tpu.memory_space<vmem>>, vector<8x2312xf32>
    %cst_25 = arith.constant dense<0.000000e+00> : vector<3x2312xf32>
    %44 = tpu.matmul %42, %43, %cst_25 {dimension_numbers = #tpu.dot_dimension_numbers<[1], [0], [0], [1], [0, 0, 1, 1], [], []>} : vector<3x8xf32>, vector<8x2312xf32>, vector<3x2312xf32> -> vector<3x2312xf32>
    %45 = arith.addf %40, %44 : vector<3x2312xf32>
    %c2 = arith.constant 2 : index
    %c0_26 = arith.constant 0 : index
    %c0_27 = arith.constant 0 : index
    %46 = vector.load %arg1[%c2, %c0_26, %c0_27] : memref<9x3x8xf32, #tpu.memory_space<vmem>>, vector<1x3x8xf32>
    %47 = vector.shape_cast %46 : vector<1x3x8xf32> to vector<3x8xf32>
    %c0_28 = arith.constant 0 : index
    %c2_29 = arith.constant 2 : index
    %48 = vector.load %arg7[%c0_28, %c2_29] : memref<8x2382xf32, #tpu.memory_space<vmem>>, vector<8x2312xf32>
    %cst_30 = arith.constant dense<0.000000e+00> : vector<3x2312xf32>
    %49 = tpu.matmul %47, %48, %cst_30 {dimension_numbers = #tpu.dot_dimension_numbers<[1], [0], [0], [1], [0, 0, 1, 1], [], []>} : vector<3x8xf32>, vector<8x2312xf32>, vector<3x2312xf32> -> vector<3x2312xf32>
    %50 = arith.addf %45, %49 : vector<3x2312xf32>
    %c3 = arith.constant 3 : index
    %c0_31 = arith.constant 0 : index
    %c0_32 = arith.constant 0 : index
    %51 = vector.load %arg1[%c3, %c0_31, %c0_32] : memref<9x3x8xf32, #tpu.memory_space<vmem>>, vector<1x3x8xf32>
    %52 = vector.shape_cast %51 : vector<1x3x8xf32> to vector<3x8xf32>
    %c0_33 = arith.constant 0 : index
    %c34 = arith.constant 34 : index
    %53 = vector.load %arg7[%c0_33, %c34] : memref<8x2382xf32, #tpu.memory_space<vmem>>, vector<8x2312xf32>
    %cst_34 = arith.constant dense<0.000000e+00> : vector<3x2312xf32>
    %54 = tpu.matmul %52, %53, %cst_34 {dimension_numbers = #tpu.dot_dimension_numbers<[1], [0], [0], [1], [0, 0, 1, 1], [], []>} : vector<3x8xf32>, vector<8x2312xf32>, vector<3x2312xf32> -> vector<3x2312xf32>
    %55 = arith.addf %50, %54 : vector<3x2312xf32>
    %c4 = arith.constant 4 : index
    %c0_35 = arith.constant 0 : index
    %c0_36 = arith.constant 0 : index
    %56 = vector.load %arg1[%c4, %c0_35, %c0_36] : memref<9x3x8xf32, #tpu.memory_space<vmem>>, vector<1x3x8xf32>
    %57 = vector.shape_cast %56 : vector<1x3x8xf32> to vector<3x8xf32>
    %c0_37 = arith.constant 0 : index
    %c35 = arith.constant 35 : index
    %58 = vector.load %arg7[%c0_37, %c35] : memref<8x2382xf32, #tpu.memory_space<vmem>>, vector<8x2312xf32>
    %cst_38 = arith.constant dense<0.000000e+00> : vector<3x2312xf32>
    %59 = tpu.matmul %57, %58, %cst_38 {dimension_numbers = #tpu.dot_dimension_numbers<[1], [0], [0], [1], [0, 0, 1, 1], [], []>} : vector<3x8xf32>, vector<8x2312xf32>, vector<3x2312xf32> -> vector<3x2312xf32>
    %60 = arith.addf %55, %59 : vector<3x2312xf32>
    %c5 = arith.constant 5 : index
    %c0_39 = arith.constant 0 : index
    %c0_40 = arith.constant 0 : index
    %61 = vector.load %arg1[%c5, %c0_39, %c0_40] : memref<9x3x8xf32, #tpu.memory_space<vmem>>, vector<1x3x8xf32>
    %62 = vector.shape_cast %61 : vector<1x3x8xf32> to vector<3x8xf32>
    %c0_41 = arith.constant 0 : index
    %c36 = arith.constant 36 : index
    %63 = vector.load %arg7[%c0_41, %c36] : memref<8x2382xf32, #tpu.memory_space<vmem>>, vector<8x2312xf32>
    %cst_42 = arith.constant dense<0.000000e+00> : vector<3x2312xf32>
    %64 = tpu.matmul %62, %63, %cst_42 {dimension_numbers = #tpu.dot_dimension_numbers<[1], [0], [0], [1], [0, 0, 1, 1], [], []>} : vector<3x8xf32>, vector<8x2312xf32>, vector<3x2312xf32> -> vector<3x2312xf32>
    %65 = arith.addf %60, %64 : vector<3x2312xf32>
    %c6 = arith.constant 6 : index
    %c0_43 = arith.constant 0 : index
    %c0_44 = arith.constant 0 : index
    %66 = vector.load %arg1[%c6, %c0_43, %c0_44] : memref<9x3x8xf32, #tpu.memory_space<vmem>>, vector<1x3x8xf32>
    %67 = vector.shape_cast %66 : vector<1x3x8xf32> to vector<3x8xf32>
    %c0_45 = arith.constant 0 : index
    %c68 = arith.constant 68 : index
    %68 = vector.load %arg7[%c0_45, %c68] : memref<8x2382xf32, #tpu.memory_space<vmem>>, vector<8x2312xf32>
    %cst_46 = arith.constant dense<0.000000e+00> : vector<3x2312xf32>
    %69 = tpu.matmul %67, %68, %cst_46 {dimension_numbers = #tpu.dot_dimension_numbers<[1], [0], [0], [1], [0, 0, 1, 1], [], []>} : vector<3x8xf32>, vector<8x2312xf32>, vector<3x2312xf32> -> vector<3x2312xf32>
    %70 = arith.addf %65, %69 : vector<3x2312xf32>
    %c7 = arith.constant 7 : index
    %c0_47 = arith.constant 0 : index
    %c0_48 = arith.constant 0 : index
    %71 = vector.load %arg1[%c7, %c0_47, %c0_48] : memref<9x3x8xf32, #tpu.memory_space<vmem>>, vector<1x3x8xf32>
    %72 = vector.shape_cast %71 : vector<1x3x8xf32> to vector<3x8xf32>
    %c0_49 = arith.constant 0 : index
    %c69 = arith.constant 69 : index
    %73 = vector.load %arg7[%c0_49, %c69] : memref<8x2382xf32, #tpu.memory_space<vmem>>, vector<8x2312xf32>
    %cst_50 = arith.constant dense<0.000000e+00> : vector<3x2312xf32>
    %74 = tpu.matmul %72, %73, %cst_50 {dimension_numbers = #tpu.dot_dimension_numbers<[1], [0], [0], [1], [0, 0, 1, 1], [], []>} : vector<3x8xf32>, vector<8x2312xf32>, vector<3x2312xf32> -> vector<3x2312xf32>
    %75 = arith.addf %70, %74 : vector<3x2312xf32>
    %c8 = arith.constant 8 : index
    %c0_51 = arith.constant 0 : index
    %c0_52 = arith.constant 0 : index
    %76 = vector.load %arg1[%c8, %c0_51, %c0_52] : memref<9x3x8xf32, #tpu.memory_space<vmem>>, vector<1x3x8xf32>
    %77 = vector.shape_cast %76 : vector<1x3x8xf32> to vector<3x8xf32>
    %c0_53 = arith.constant 0 : index
    %c70 = arith.constant 70 : index
    %78 = vector.load %arg7[%c0_53, %c70] : memref<8x2382xf32, #tpu.memory_space<vmem>>, vector<8x2312xf32>
    %cst_54 = arith.constant dense<0.000000e+00> : vector<3x2312xf32>
    %79 = tpu.matmul %77, %78, %cst_54 {dimension_numbers = #tpu.dot_dimension_numbers<[1], [0], [0], [1], [0, 0, 1, 1], [], []>} : vector<3x8xf32>, vector<8x2312xf32>, vector<3x2312xf32> -> vector<3x2312xf32>
    %80 = arith.addf %75, %79 : vector<3x2312xf32>
    %c0_55 = arith.constant 0 : index
    %c0_56 = arith.constant 0 : index
    %81 = vector.load %arg2[%c0_55, %c0_56] : memref<3x1xf32, #tpu.memory_space<vmem>>, vector<3x1xf32>
    %82 = vector.broadcast %81 : vector<3x1xf32> to vector<3x2312xf32>
    %83 = arith.addf %80, %82 : vector<3x2312xf32>
    %84 = math.tanh %83 : vector<3x2312xf32>
    %c0_57 = arith.constant 0 : index
    %c0_58 = arith.constant 0 : index
    %85 = vector.load %arg6[%c0_57, %c0_58] : memref<3x2312xf32, #tpu.memory_space<vmem>>, vector<3x2312xf32>
    tpu.vector_store %arg6[%c0_57, %c0_58], %84 {strides = array<i32>} : memref<3x2312xf32, #tpu.memory_space<vmem>>, vector<3x2312xf32>,
    return
  }
}

</mosaic_0001>

<llo_original>
// kernel: network_gen_auto_forward.5
$region0: #{network_gen_auto_forward.5}
  #allocation0 [shape = 'u32[]', space=smem, size = 0x4, offset = 0x4, fixed_abs, tag = 'smem constant byte address 0x4 - core index']
  #allocation1 [shape = 'u32[72,128]{1,0:T(1,128)}', space=vmem, size = 0x9000, scoped, tag = 'internal scratch']
  %s0 = inlined_call_operand.vmem [shape: f32[2,32], index: 0, kind: input, shape index: {}]
  %s1 = inlined_call_operand.hbm [shape: f32[32,128], index: 1, kind: input, shape index: {}]
  %s2 = inlined_call_operand.vmem [shape: f32[1,128], index: 2, kind: input, shape index: {}]
  %s3 = inlined_call_operand.vmem [shape: f32[2,128], index: 3, kind: output, shape index: {}]
  %s4 = sld [smem:[#allocation0]]
  $region26: #{network_gen_auto_forward.5} parent=0
    _
  %s6 = ssub.s32 1, %s4
  %s7 = scalar_select 0, %s6, %s4
  $region1: #{network_gen_auto_forward.5} parent=0
    #allocation2 [shape = 'u8[16384]{0}', space=vmem, size = 0x4000, scoped, tag = 'input window, operand 1, single buffered']
    #allocation3 [shape = 's32[1]{0}', space=sflag, size = 0x4, scoped, tag = 'scoped memory for network_gen_auto_forward.5']
    %8 = vsyncpa [#allocation3], 0
    // Predicated region
    $region2: #{network_gen_auto_forward.5} parent=1 // pred_check
      _
    $region3: #{network_gen_auto_forward.5} parent=1 // pred_check_branch
      %10 = sbr.rel (0) target = $region5
    $region4: #{network_gen_auto_forward.5} parent=1 // pred_region
      _
    $region5: #{network_gen_auto_forward.5} parent=1 // pred_fallthru
      _
    // Predicated region
    $region6: #{network_gen_auto_forward.5} parent=1 // pred_check
      _
    $region7: #{network_gen_auto_forward.5} parent=1 // pred_check_branch
      %12 = sbr.rel (0) target = $region9
    $region8: #{network_gen_auto_forward.5} parent=1 // pred_region
      %14 = vsyncadd [#allocation3], 0
      %s15 = sshll.u32 %s1, 4
      %s16 = int_to_ptr.hbm [resolvable:$true] %s15
      %s17 = sshll.u32 [#allocation2], 4
      %s18 = int_to_ptr.vmem [resolvable:$true] %s17
      %23 = dma.hbm_to_vmem [thread:$0]  %s16, 512, %s18, [#allocation3], 128, 128, 8
    $region9: #{network_gen_auto_forward.5} parent=1 // pred_fallthru
      _
    // Predicated region
    $region10: #{network_gen_auto_forward.5} parent=1 // pred_check
      _
    $region11: #{network_gen_auto_forward.5} parent=1 // pred_check_branch
      %25 = sbr.rel (0) target = $region13
    $region12: #{network_gen_auto_forward.5} parent=1 // pred_region
      _
    $region13: #{network_gen_auto_forward.5} parent=1 // pred_fallthru
      _
    // Predicated region
    $region14: #{network_gen_auto_forward.5} parent=1 // pred_check
      _
    $region15: #{network_gen_auto_forward.5} parent=1 // pred_check_branch
      %27 = sbr.rel (0) target = $region17
    $region16: #{network_gen_auto_forward.5} parent=1 // pred_region
      %29 = dma.done [#allocation3], 512
    $region17: #{network_gen_auto_forward.5} parent=1 // pred_fallthru
      _
    %v30 = vld [vmem:[%s0] sm:$0x3]
    %v31 = vld [vmem:[#allocation2] sm:$0xff]
    %v32 = vld [vmem:[#allocation2 + $0x8] sm:$0xff]
    %v33 = vld [vmem:[#allocation2 + $0x10] sm:$0xff]
    %v34 = vld [vmem:[#allocation2 + $0x18] sm:$0xff]
    %v35 = vld [vmem:[%s2] sm:$0x1]
    %v37 = vperm.slane %v35, 0
    %vm39 = vcmask 261120
    %v41 = vsel %vm39, %v30, 0
    %43 = vmatpush.msra.mxu0 0.0
    %44 = vmatpush.msra.mxu0 0.0
    %45 = vmatpush.msra.mxu0 0.0
    %46 = vmatpush.msra.mxu0 0.0
    %47 = vmatpush.msra.mxu0 0.0
    %48 = vmatpush.msra.mxu0 0.0
    %49 = vmatpush.msra.mxu0 0.0
    %50 = vmatpush.msra.mxu0 0.0
    %51 = vmatpush.msra.mxu0 0.0
    %52 = vmatpush.msra.mxu0 0.0
    %53 = vmatpush.msra.mxu0 0.0
    %54 = vmatpush.msra.mxu0 0.0
    %55 = vmatpush.msra.mxu0 %v34
    %56 = vmatpush.msra.mxu0 %v33
    %57 = vmatpush.msra.mxu0 %v32
    %58 = vmatpush.msra.mxu0 %v31
    %59 = vmatmul.f32.gmra.mxu0 %v41
    %v60 = vpop.f32.mrf.mxu0
    %v61 = vadd.f32 %v37, %v60
    %62 = vdwg.mxu0
    %63 = vst [vmem:[%s3] sm:$0x3] %v61
    // Predicated region
    $region18: #{network_gen_auto_forward.5} parent=1 // pred_check
      _
    $region19: #{network_gen_auto_forward.5} parent=1 // pred_check_branch
      %65 = sbr.rel (0) target = $region21
    $region20: #{network_gen_auto_forward.5} parent=1 // pred_region
      _
    $region21: #{network_gen_auto_forward.5} parent=1 // pred_fallthru
      _
    // Predicated region
    $region22: #{network_gen_auto_forward.5} parent=1 // pred_check
      _
    $region23: #{network_gen_auto_forward.5} parent=1 // pred_check_branch
      %67 = sbr.rel (0) target = $region25
    $region24: #{network_gen_auto_forward.5} parent=1 // pred_region
      _
    $region25: #{network_gen_auto_forward.5} parent=1 // pred_fallthru
      _
    %68 = vsyncpa [#allocation3], 1

// kernel: network_gen_auto_forward.6
$region0: #{network_gen_auto_forward.6}
  #allocation0 [shape = 'u32[]', space=smem, size = 0x4, offset = 0x4, fixed_abs, tag = 'smem constant byte address 0x4 - core index']
  #allocation1 [shape = 'u32[72,128]{1,0:T(1,128)}', space=vmem, size = 0x9000, scoped, tag = 'internal scratch']
  %s0 = inlined_call_operand.vmem [shape: f32[8,222], index: 0, kind: input, shape index: {}]
  %s1 = inlined_call_operand.vmem [shape: f32[9,8,8], index: 1, kind: input, shape index: {}]
  %s2 = inlined_call_operand.vmem [shape: f32[8,1], index: 2, kind: input, shape index: {}]
  %s3 = inlined_call_operand.vmem [shape: f32[8,1], index: 3, kind: input, shape index: {}]
  %s4 = inlined_call_operand.vmem [shape: f32[8,1], index: 4, kind: input, shape index: {}]
  %s5 = inlined_call_operand.vmem [shape: f32[1,200], index: 5, kind: input, shape index: {}]
  %s6 = inlined_call_operand.vmem [shape: f32[8,200], index: 6, kind: output, shape index: {}]
  %s7 = sld [smem:[#allocation0]]
  $region34: #{network_gen_auto_forward.6} parent=0
    _
  %s9 = ssub.s32 1, %s7
  %s10 = scalar_select 0, %s9, %s7
  // Predicated region
  $region2: #{network_gen_auto_forward.6} parent=0 // pred_check
    _
  $region3: #{network_gen_auto_forward.6} parent=0 // pred_check_branch
    %12 = sbr.rel (0) target = $region5
  $region4: #{network_gen_auto_forward.6} parent=0 // pred_region
    _
  $region5: #{network_gen_auto_forward.6} parent=0 // pred_fallthru
    _
  // Predicated region
  $region6: #{network_gen_auto_forward.6} parent=0 // pred_check
    _
  $region7: #{network_gen_auto_forward.6} parent=0 // pred_check_branch
    %14 = sbr.rel (0) target = $region9
  $region8: #{network_gen_auto_forward.6} parent=0 // pred_region
    _
  $region9: #{network_gen_auto_forward.6} parent=0 // pred_fallthru
    _
  // Predicated region
  $region10: #{network_gen_auto_forward.6} parent=0 // pred_check
    _
  $region11: #{network_gen_auto_forward.6} parent=0 // pred_check_branch
    %16 = sbr.rel (0) target = $region13
  $region12: #{network_gen_auto_forward.6} parent=0 // pred_region
    _
  $region13: #{network_gen_auto_forward.6} parent=0 // pred_fallthru
    _
  // Predicated region
  $region14: #{network_gen_auto_forward.6} parent=0 // pred_check
    _
  $region15: #{network_gen_auto_forward.6} parent=0 // pred_check_branch
    %18 = sbr.rel (0) target = $region17
  $region16: #{network_gen_auto_forward.6} parent=0 // pred_region
    _
  $region17: #{network_gen_auto_forward.6} parent=0 // pred_fallthru
    _
  // Predicated region
  $region18: #{network_gen_auto_forward.6} parent=0 // pred_check
    _
  $region19: #{network_gen_auto_forward.6} parent=0 // pred_check_branch
    %20 = sbr.rel (0) target = $region21
  $region20: #{network_gen_auto_forward.6} parent=0 // pred_region
    _
  $region21: #{network_gen_auto_forward.6} parent=0 // pred_fallthru
    _
  // Predicated region
  $region22: #{network_gen_auto_forward.6} parent=0 // pred_check
    _
  $region23: #{network_gen_auto_forward.6} parent=0 // pred_check_branch
    %22 = sbr.rel (0) target = $region25
  $region24: #{network_gen_auto_forward.6} parent=0 // pred_region
    _
  $region25: #{network_gen_auto_forward.6} parent=0 // pred_fallthru
    _
  %v23 = vld [vmem:[%s1] sm:$0xff]
  %v24 = vld [vmem:[%s0] sm:$0xff]
  %v25 = vld [vmem:[%s0 + $0x8] sm:$0xff]
  %s26 = scalar_lea.vmem %s1, 8
  %v27 = vld [vmem:[%s26] sm:$0xff]
  %30 = vrot.lane.b32.xlu0 %v24, 127
  %v31 = vpop.permute.xlu0 %30
  %32 = vrot.lane.b32.xlu0 %v25, 127
  %v33 = vpop.permute.xlu0 %32
  %vm34 = vcmask 1039360
  %v35 = vsel %vm34, %v31, %v33
  %vm38 = vcmask 64512
  %v40 = vsel %vm38, %v27, 0
  %42 = vmatpush.msra.mxu0 0.0
  %43 = vmatpush.msra.mxu0 0.0
  %44 = vmatpush.msra.mxu0 0.0
  %45 = vmatpush.msra.mxu0 0.0
  %46 = vmatpush.msra.mxu0 0.0
  %47 = vmatpush.msra.mxu0 0.0
  %48 = vmatpush.msra.mxu0 0.0
  %49 = vmatpush.msra.mxu0 0.0
  %50 = vmatpush.msra.mxu0 0.0
  %51 = vmatpush.msra.mxu0 0.0
  %52 = vmatpush.msra.mxu0 0.0
  %53 = vmatpush.msra.mxu0 0.0
  %54 = vmatpush.msra.mxu0 0.0
  %55 = vmatpush.msra.mxu0 0.0
  %56 = vmatpush.msra.mxu0 0.0
  %57 = vmatpush.msra.mxu0 %v35
  %58 = vmatmul.f32.gmra.mxu0 %v40
  %v59 = vpop.f32.mrf.mxu0
  %v60 = vadd.f32 0.0, %v59
  %61 = vdwg.mxu0
  %62 = vmatpush.msra.mxu0 0.0
  %63 = vmatpush.msra.mxu0 0.0
  %64 = vmatpush.msra.mxu0 0.0
  %65 = vmatpush.msra.mxu0 0.0
  %66 = vmatpush.msra.mxu0 0.0
  %67 = vmatpush.msra.mxu0 0.0
  %68 = vmatpush.msra.mxu0 0.0
  %69 = vmatpush.msra.mxu0 0.0
  %70 = vmatpush.msra.mxu0 0.0
  %71 = vmatpush.msra.mxu0 0.0
  %72 = vmatpush.msra.mxu0 0.0
  %73 = vmatpush.msra.mxu0 0.0
  %74 = vmatpush.msra.mxu0 0.0
  %75 = vmatpush.msra.mxu0 0.0
  %76 = vmatpush.msra.mxu0 0.0
  %77 = vmatpush.msra.mxu0 %v33
  %78 = vmatmul.f32.gmra.mxu0 %v40
  %v79 = vpop.f32.mrf.mxu0
  %v80 = vadd.f32 0.0, %v79
  %81 = vdwg.mxu0
  %v83 = vsel %vm38, %v23, 0
  %85 = vmatpush.msra.mxu0 0.0
  %86 = vmatpush.msra.mxu0 0.0
  %87 = vmatpush.msra.mxu0 0.0
  %88 = vmatpush.msra.mxu0 0.0
  %89 = vmatpush.msra.mxu0 0.0
  %90 = vmatpush.msra.mxu0 0.0
  %91 = vmatpush.msra.mxu0 0.0
  %92 = vmatpush.msra.mxu0 0.0
  %93 = vmatpush.msra.mxu0 0.0
  %94 = vmatpush.msra.mxu0 0.0
  %95 = vmatpush.msra.mxu0 0.0
  %96 = vmatpush.msra.mxu0 0.0
  %97 = vmatpush.msra.mxu0 0.0
  %98 = vmatpush.msra.mxu0 0.0
  %99 = vmatpush.msra.mxu0 0.0
  %100 = vmatpush.msra.mxu0 %v24
  %101 = vmatmul.f32.gmra.mxu0 %v83
  %v102 = vpop.f32.mrf.mxu0
  %v103 = vadd.f32 %v60, %v102
  %104 = vdwg.mxu0
  %105 = vmatpush.msra.mxu0 0.0
  %106 = vmatpush.msra.mxu0 0.0
  %107 = vmatpush.msra.mxu0 0.0
  %108 = vmatpush.msra.mxu0 0.0
  %109 = vmatpush.msra.mxu0 0.0
  %110 = vmatpush.msra.mxu0 0.0
  %111 = vmatpush.msra.mxu0 0.0
  %112 = vmatpush.msra.mxu0 0.0
  %113 = vmatpush.msra.mxu0 0.0
  %114 = vmatpush.msra.mxu0 0.0
  %115 = vmatpush.msra.mxu0 0.0
  %116 = vmatpush.msra.mxu0 0.0
  %117 = vmatpush.msra.mxu0 0.0
  %118 = vmatpush.msra.mxu0 0.0
  %119 = vmatpush.msra.mxu0 0.0
  %120 = vmatpush.msra.mxu0 %v25
  %121 = vmatmul.f32.gmra.mxu0 %v83
  %v122 = vpop.f32.mrf.mxu0
  %v123 = vadd.f32 %v80, %v122
  %124 = vdwg.mxu0
  %s125 = scalar_lea.vmem %s1, 16
  %v126 = vld [vmem:[%s125] sm:$0xff]
  %127 = vrot.lane.b32.xlu0 %v24, 126
  %v128 = vpop.permute.xlu0 %127
  %129 = vrot.lane.b32.xlu0 %v25, 126
  %v130 = vpop.permute.xlu0 %129
  %vm131 = vcmask 1031168
  %v132 = vsel %vm131, %v128, %v130
  %v136 = vsel %vm38, %v126, 0
  %138 = vmatpush.msra.mxu0 0.0
  %139 = vmatpush.msra.mxu0 0.0
  %140 = vmatpush.msra.mxu0 0.0
  %141 = vmatpush.msra.mxu0 0.0
  %142 = vmatpush.msra.mxu0 0.0
  %143 = vmatpush.msra.mxu0 0.0
  %144 = vmatpush.msra.mxu0 0.0
  %145 = vmatpush.msra.mxu0 0.0
  %146 = vmatpush.msra.mxu0 0.0
  %147 = vmatpush.msra.mxu0 0.0
  %148 = vmatpush.msra.mxu0 0.0
  %149 = vmatpush.msra.mxu0 0.0
  %150 = vmatpush.msra.mxu0 0.0
  %151 = vmatpush.msra.mxu0 0.0
  %152 = vmatpush.msra.mxu0 0.0
  %153 = vmatpush.msra.mxu0 %v132
  %154 = vmatmul.f32.gmra.mxu0 %v136
  %v155 = vpop.f32.mrf.mxu0
  %v156 = vadd.f32 0.0, %v155
  %157 = vdwg.mxu0
  %158 = vmatpush.msra.mxu0 0.0
  %159 = vmatpush.msra.mxu0 0.0
  %160 = vmatpush.msra.mxu0 0.0
  %161 = vmatpush.msra.mxu0 0.0
  %162 = vmatpush.msra.mxu0 0.0
  %163 = vmatpush.msra.mxu0 0.0
  %164 = vmatpush.msra.mxu0 0.0
  %165 = vmatpush.msra.mxu0 0.0
  %166 = vmatpush.msra.mxu0 0.0
  %167 = vmatpush.msra.mxu0 0.0
  %168 = vmatpush.msra.mxu0 0.0
  %169 = vmatpush.msra.mxu0 0.0
  %170 = vmatpush.msra.mxu0 0.0
  %171 = vmatpush.msra.mxu0 0.0
  %172 = vmatpush.msra.mxu0 0.0
  %173 = vmatpush.msra.mxu0 %v130
  %174 = vmatmul.f32.gmra.mxu0 %v136
  %v175 = vpop.f32.mrf.mxu0
  %v176 = vadd.f32 0.0, %v175
  %177 = vdwg.mxu0
  %v178 = vadd.f32 %v103, %v156
  %v179 = vadd.f32 %v123, %v176
  %s180 = scalar_lea.vmem %s1, 24
  %v181 = vld [vmem:[%s180] sm:$0xff]
  %182 = vrot.lane.b32.xlu0 %v24, 118
  %v183 = vpop.permute.xlu0 %182
  %184 = vrot.lane.b32.xlu0 %v25, 118
  %v185 = vpop.permute.xlu0 %184
  %vm186 = vcmask 965632
  %v187 = vsel %vm186, %v183, %v185
  %v191 = vsel %vm38, %v181, 0
  %193 = vmatpush.msra.mxu0 0.0
  %194 = vmatpush.msra.mxu0 0.0
  %195 = vmatpush.msra.mxu0 0.0
  %196 = vmatpush.msra.mxu0 0.0
  %197 = vmatpush.msra.mxu0 0.0
  %198 = vmatpush.msra.mxu0 0.0
  %199 = vmatpush.msra.mxu0 0.0
  %200 = vmatpush.msra.mxu0 0.0
  %201 = vmatpush.msra.mxu0 0.0
  %202 = vmatpush.msra.mxu0 0.0
  %203 = vmatpush.msra.mxu0 0.0
  %204 = vmatpush.msra.mxu0 0.0
  %205 = vmatpush.msra.mxu0 0.0
  %206 = vmatpush.msra.mxu0 0.0
  %207 = vmatpush.msra.mxu0 0.0
  %208 = vmatpush.msra.mxu0 %v187
  %209 = vmatmul.f32.gmra.mxu0 %v191
  %v210 = vpop.f32.mrf.mxu0
  %v211 = vadd.f32 0.0, %v210
  %212 = vdwg.mxu0
  %213 = vmatpush.msra.mxu0 0.0
  %214 = vmatpush.msra.mxu0 0.0
  %215 = vmatpush.msra.mxu0 0.0
  %216 = vmatpush.msra.mxu0 0.0
  %217 = vmatpush.msra.mxu0 0.0
  %218 = vmatpush.msra.mxu0 0.0
  %219 = vmatpush.msra.mxu0 0.0
  %220 = vmatpush.msra.mxu0 0.0
  %221 = vmatpush.msra.mxu0 0.0
  %222 = vmatpush.msra.mxu0 0.0
  %223 = vmatpush.msra.mxu0 0.0
  %224 = vmatpush.msra.mxu0 0.0
  %225 = vmatpush.msra.mxu0 0.0
  %226 = vmatpush.msra.mxu0 0.0
  %227 = vmatpush.msra.mxu0 0.0
  %228 = vmatpush.msra.mxu0 %v185
  %229 = vmatmul.f32.gmra.mxu0 %v191
  %v230 = vpop.f32.mrf.mxu0
  %v231 = vadd.f32 0.0, %v230
  %232 = vdwg.mxu0
  %v233 = vadd.f32 %v178, %v211
  %v234 = vadd.f32 %v179, %v231
  %s235 = scalar_lea.vmem %s1, 32
  %v236 = vld [vmem:[%s235] sm:$0xff]
  %237 = vrot.lane.b32.xlu0 %v24, 117
  %v238 = vpop.permute.xlu0 %237
  %239 = vrot.lane.b32.xlu0 %v25, 117
  %v240 = vpop.permute.xlu0 %239
  %vm241 = vcmask 957440
  %v242 = vsel %vm241, %v238, %v240
  %v246 = vsel %vm38, %v236, 0
  %248 = vmatpush.msra.mxu0 0.0
  %249 = vmatpush.msra.mxu0 0.0
  %250 = vmatpush.msra.mxu0 0.0
  %251 = vmatpush.msra.mxu0 0.0
  %252 = vmatpush.msra.mxu0 0.0
  %253 = vmatpush.msra.mxu0 0.0
  %254 = vmatpush.msra.mxu0 0.0
  %255 = vmatpush.msra.mxu0 0.0
  %256 = vmatpush.msra.mxu0 0.0
  %257 = vmatpush.msra.mxu0 0.0
  %258 = vmatpush.msra.mxu0 0.0
  %259 = vmatpush.msra.mxu0 0.0
  %260 = vmatpush.msra.mxu0 0.0
  %261 = vmatpush.msra.mxu0 0.0
  %262 = vmatpush.msra.mxu0 0.0
  %263 = vmatpush.msra.mxu0 %v242
  %264 = vmatmul.f32.gmra.mxu0 %v246
  %v265 = vpop.f32.mrf.mxu0
  %v266 = vadd.f32 0.0, %v265
  %267 = vdwg.mxu0
  %268 = vmatpush.msra.mxu0 0.0
  %269 = vmatpush.msra.mxu0 0.0
  %270 = vmatpush.msra.mxu0 0.0
  %271 = vmatpush.msra.mxu0 0.0
  %272 = vmatpush.msra.mxu0 0.0
  %273 = vmatpush.msra.mxu0 0.0
  %274 = vmatpush.msra.mxu0 0.0
  %275 = vmatpush.msra.mxu0 0.0
  %276 = vmatpush.msra.mxu0 0.0
  %277 = vmatpush.msra.mxu0 0.0
  %278 = vmatpush.msra.mxu0 0.0
  %279 = vmatpush.msra.mxu0 0.0
  %280 = vmatpush.msra.mxu0 0.0
  %281 = vmatpush.msra.mxu0 0.0
  %282 = vmatpush.msra.mxu0 0.0
  %283 = vmatpush.msra.mxu0 %v240
  %284 = vmatmul.f32.gmra.mxu0 %v246
  %v285 = vpop.f32.mrf.mxu0
  %v286 = vadd.f32 0.0, %v285
  %287 = vdwg.mxu0
  %v288 = vadd.f32 %v233, %v266
  %v289 = vadd.f32 %v234, %v286
  %s290 = scalar_lea.vmem %s1, 40
  %v291 = vld [vmem:[%s290] sm:$0xff]
  %292 = vrot.lane.b32.xlu0 %v24, 116
  %v293 = vpop.permute.xlu0 %292
  %294 = vrot.lane.b32.xlu0 %v25, 116
  %v295 = vpop.permute.xlu0 %294
  %vm296 = vcmask 949248
  %v297 = vsel %vm296, %v293, %v295
  %v301 = vsel %vm38, %v291, 0
  %303 = vmatpush.msra.mxu0 0.0
  %304 = vmatpush.msra.mxu0 0.0
  %305 = vmatpush.msra.mxu0 0.0
  %306 = vmatpush.msra.mxu0 0.0
  %307 = vmatpush.msra.mxu0 0.0
  %308 = vmatpush.msra.mxu0 0.0
  %309 = vmatpush.msra.mxu0 0.0
  %310 = vmatpush.msra.mxu0 0.0
  %311 = vmatpush.msra.mxu0 0.0
  %312 = vmatpush.msra.mxu0 0.0
  %313 = vmatpush.msra.mxu0 0.0
  %314 = vmatpush.msra.mxu0 0.0
  %315 = vmatpush.msra.mxu0 0.0
  %316 = vmatpush.msra.mxu0 0.0
  %317 = vmatpush.msra.mxu0 0.0
  %318 = vmatpush.msra.mxu0 %v297
  %319 = vmatmul.f32.gmra.mxu0 %v301
  %v320 = vpop.f32.mrf.mxu0
  %v321 = vadd.f32 0.0, %v320
  %322 = vdwg.mxu0
  %323 = vmatpush.msra.mxu0 0.0
  %324 = vmatpush.msra.mxu0 0.0
  %325 = vmatpush.msra.mxu0 0.0
  %326 = vmatpush.msra.mxu0 0.0
  %327 = vmatpush.msra.mxu0 0.0
  %328 = vmatpush.msra.mxu0 0.0
  %329 = vmatpush.msra.mxu0 0.0
  %330 = vmatpush.msra.mxu0 0.0
  %331 = vmatpush.msra.mxu0 0.0
  %332 = vmatpush.msra.mxu0 0.0
  %333 = vmatpush.msra.mxu0 0.0
  %334 = vmatpush.msra.mxu0 0.0
  %335 = vmatpush.msra.mxu0 0.0
  %336 = vmatpush.msra.mxu0 0.0
  %337 = vmatpush.msra.mxu0 0.0
  %338 = vmatpush.msra.mxu0 %v295
  %339 = vmatmul.f32.gmra.mxu0 %v301
  %v340 = vpop.f32.mrf.mxu0
  %v341 = vadd.f32 0.0, %v340
  %342 = vdwg.mxu0
  %v343 = vadd.f32 %v288, %v321
  %v344 = vadd.f32 %v289, %v341
  %s345 = scalar_lea.vmem %s1, 48
  %v346 = vld [vmem:[%s345] sm:$0xff]
  %347 = vrot.lane.b32.xlu0 %v24, 108
  %v348 = vpop.permute.xlu0 %347
  %349 = vrot.lane.b32.xlu0 %v25, 108
  %v350 = vpop.permute.xlu0 %349
  %vm351 = vcmask 883712
  %v352 = vsel %vm351, %v348, %v350
  %v356 = vsel %vm38, %v346, 0
  %358 = vmatpush.msra.mxu0 0.0
  %359 = vmatpush.msra.mxu0 0.0
  %360 = vmatpush.msra.mxu0 0.0
  %361 = vmatpush.msra.mxu0 0.0
  %362 = vmatpush.msra.mxu0 0.0
  %363 = vmatpush.msra.mxu0 0.0
  %364 = vmatpush.msra.mxu0 0.0
  %365 = vmatpush.msra.mxu0 0.0
  %366 = vmatpush.msra.mxu0 0.0
  %367 = vmatpush.msra.mxu0 0.0
  %368 = vmatpush.msra.mxu0 0.0
  %369 = vmatpush.msra.mxu0 0.0
  %370 = vmatpush.msra.mxu0 0.0
  %371 = vmatpush.msra.mxu0 0.0
  %372 = vmatpush.msra.mxu0 0.0
  %373 = vmatpush.msra.mxu0 %v352
  %374 = vmatmul.f32.gmra.mxu0 %v356
  %v375 = vpop.f32.mrf.mxu0
  %v376 = vadd.f32 0.0, %v375
  %377 = vdwg.mxu0
  %378 = vmatpush.msra.mxu0 0.0
  %379 = vmatpush.msra.mxu0 0.0
  %380 = vmatpush.msra.mxu0 0.0
  %381 = vmatpush.msra.mxu0 0.0
  %382 = vmatpush.msra.mxu0 0.0
  %383 = vmatpush.msra.mxu0 0.0
  %384 = vmatpush.msra.mxu0 0.0
  %385 = vmatpush.msra.mxu0 0.0
  %386 = vmatpush.msra.mxu0 0.0
  %387 = vmatpush.msra.mxu0 0.0
  %388 = vmatpush.msra.mxu0 0.0
  %389 = vmatpush.msra.mxu0 0.0
  %390 = vmatpush.msra.mxu0 0.0
  %391 = vmatpush.msra.mxu0 0.0
  %392 = vmatpush.msra.mxu0 0.0
  %393 = vmatpush.msra.mxu0 %v350
  %394 = vmatmul.f32.gmra.mxu0 %v356
  %v395 = vpop.f32.mrf.mxu0
  %v396 = vadd.f32 0.0, %v395
  %397 = vdwg.mxu0
  %v398 = vadd.f32 %v343, %v376
  %v399 = vadd.f32 %v344, %v396
  %s400 = scalar_lea.vmem %s1, 56
  %v401 = vld [vmem:[%s400] sm:$0xff]
  %402 = vrot.lane.b32.xlu0 %v24, 107
  %v403 = vpop.permute.xlu0 %402
  %404 = vrot.lane.b32.xlu0 %v25, 107
  %v405 = vpop.permute.xlu0 %404
  %vm406 = vcmask 875520
  %v407 = vsel %vm406, %v403, %v405
  %v411 = vsel %vm38, %v401, 0
  %413 = vmatpush.msra.mxu0 0.0
  %414 = vmatpush.msra.mxu0 0.0
  %415 = vmatpush.msra.mxu0 0.0
  %416 = vmatpush.msra.mxu0 0.0
  %417 = vmatpush.msra.mxu0 0.0
  %418 = vmatpush.msra.mxu0 0.0
  %419 = vmatpush.msra.mxu0 0.0
  %420 = vmatpush.msra.mxu0 0.0
  %421 = vmatpush.msra.mxu0 0.0
  %422 = vmatpush.msra.mxu0 0.0
  %423 = vmatpush.msra.mxu0 0.0
  %424 = vmatpush.msra.mxu0 0.0
  %425 = vmatpush.msra.mxu0 0.0
  %426 = vmatpush.msra.mxu0 0.0
  %427 = vmatpush.msra.mxu0 0.0
  %428 = vmatpush.msra.mxu0 %v407
  %429 = vmatmul.f32.gmra.mxu0 %v411
  %v430 = vpop.f32.mrf.mxu0
  %v431 = vadd.f32 0.0, %v430
  %432 = vdwg.mxu0
  %433 = vmatpush.msra.mxu0 0.0
  %434 = vmatpush.msra.mxu0 0.0
  %435 = vmatpush.msra.mxu0 0.0
  %436 = vmatpush.msra.mxu0 0.0
  %437 = vmatpush.msra.mxu0 0.0
  %438 = vmatpush.msra.mxu0 0.0
  %439 = vmatpush.msra.mxu0 0.0
  %440 = vmatpush.msra.mxu0 0.0
  %441 = vmatpush.msra.mxu0 0.0
  %442 = vmatpush.msra.mxu0 0.0
  %443 = vmatpush.msra.mxu0 0.0
  %444 = vmatpush.msra.mxu0 0.0
  %445 = vmatpush.msra.mxu0 0.0
  %446 = vmatpush.msra.mxu0 0.0
  %447 = vmatpush.msra.mxu0 0.0
  %448 = vmatpush.msra.mxu0 %v405
  %449 = vmatmul.f32.gmra.mxu0 %v411
  %v450 = vpop.f32.mrf.mxu0
  %v451 = vadd.f32 0.0, %v450
  %452 = vdwg.mxu0
  %v453 = vadd.f32 %v398, %v431
  %v454 = vadd.f32 %v399, %v451
  %s455 = scalar_lea.vmem %s1, 64
  %v456 = vld [vmem:[%s455] sm:$0xff]
  %457 = vrot.lane.b32.xlu0 %v24, 106
  %v458 = vpop.permute.xlu0 %457
  %459 = vrot.lane.b32.xlu0 %v25, 106
  %v460 = vpop.permute.xlu0 %459
  %vm461 = vcmask 867328
  %v462 = vsel %vm461, %v458, %v460
  %v466 = vsel %vm38, %v456, 0
  %468 = vmatpush.msra.mxu0 0.0
  %469 = vmatpush.msra.mxu0 0.0
  %470 = vmatpush.msra.mxu0 0.0
  %471 = vmatpush.msra.mxu0 0.0
  %472 = vmatpush.msra.mxu0 0.0
  %473 = vmatpush.msra.mxu0 0.0
  %474 = vmatpush.msra.mxu0 0.0
  %475 = vmatpush.msra.mxu0 0.0
  %476 = vmatpush.msra.mxu0 0.0
  %477 = vmatpush.msra.mxu0 0.0
  %478 = vmatpush.msra.mxu0 0.0
  %479 = vmatpush.msra.mxu0 0.0
  %480 = vmatpush.msra.mxu0 0.0
  %481 = vmatpush.msra.mxu0 0.0
  %482 = vmatpush.msra.mxu0 0.0
  %483 = vmatpush.msra.mxu0 %v462
  %484 = vmatmul.f32.gmra.mxu0 %v466
  %v485 = vpop.f32.mrf.mxu0
  %v486 = vadd.f32 0.0, %v485
  %487 = vdwg.mxu0
  %488 = vmatpush.msra.mxu0 0.0
  %489 = vmatpush.msra.mxu0 0.0
  %490 = vmatpush.msra.mxu0 0.0
  %491 = vmatpush.msra.mxu0 0.0
  %492 = vmatpush.msra.mxu0 0.0
  %493 = vmatpush.msra.mxu0 0.0
  %494 = vmatpush.msra.mxu0 0.0
  %495 = vmatpush.msra.mxu0 0.0
  %496 = vmatpush.msra.mxu0 0.0
  %497 = vmatpush.msra.mxu0 0.0
  %498 = vmatpush.msra.mxu0 0.0
  %499 = vmatpush.msra.mxu0 0.0
  %500 = vmatpush.msra.mxu0 0.0
  %501 = vmatpush.msra.mxu0 0.0
  %502 = vmatpush.msra.mxu0 0.0
  %503 = vmatpush.msra.mxu0 %v460
  %504 = vmatmul.f32.gmra.mxu0 %v466
  %v505 = vpop.f32.mrf.mxu0
  %v506 = vadd.f32 0.0, %v505
  %507 = vdwg.mxu0
  %v508 = vadd.f32 %v453, %v486
  %v509 = vadd.f32 %v454, %v506
  %v510 = vld [vmem:[%s2] sm:$0xff]
  %512 = vset.pattern.permute.xlu0 0
  %513 = vperm.xlu0 %512, %v510
  %v514 = vpop.permute.xlu0 %513
  %v516 = vadd.f32 %v508, %v514
  %v517 = vadd.f32 %v509, %v514
  %v518 = vld [vmem:[%s5] sm:$0x3]
  %v520 = vperm.slane %v518, 0
  %v521 = vperm.slane %v518, 1
  %v524 = vmul.f32 %v516, %v520
  %v525 = vmul.f32 %v517, %v521
  %vm526 = vcmask 588800
  %v527 = vsel %vm526, %v525, 0.0
  %v528 = vadd.f32 %v524, %v527
  %529 = vadd.xlane.f32.xlu0 %v528
  %v530 = vpop.xlane.xlu0 %529
  %v531 = vmul.f32 %v530, 0.0078125
  %v532 = vsub.f32 %v516, %v531
  %v533 = vsub.f32 %v517, %v531
  %v534 = vmul.f32 %v532, %v520
  %v535 = vmul.f32 %v533, %v521
  %v536 = vmul.f32 %v534, %v534
  %v537 = vmul.f32 %v535, %v535
  %v538 = vsel %vm526, %v537, 0.0
  %v539 = vadd.f32 %v536, %v538
  %540 = vadd.xlane.f32.xlu0 %v539
  %v541 = vpop.xlane.xlu0 %540
  %v542 = vmul.f32 %v541, 0.0078125
  %v543 = vadd.f32 %v542, 1e-05
  %v544 = vrsqrt.pop %v543
  %v545 = vmul.f32 %v544, %v543
  %v546 = vmul.f32 %v545, %v544
  %v547 = vmul.f32 0.5, %v546
  %v548 = vsub.f32 1.5, %v547
  %v549 = vmul.f32 %v544, %v548
  %vm550 = vweird.f32 %v543
  %vm551 = vweird.f32 %v544
  %vm552 = vmor %vm550, %vm551
  %v553 = vsel %vm552, %v544, %v549
  %v554 = vmul.f32 %v532, %v553
  %v555 = vmul.f32 %v533, %v553
  %v556 = vld [vmem:[%s3] sm:$0xff]
  %558 = vset.pattern.permute.xlu0 0
  %559 = vperm.xlu0 %558, %v556
  %v560 = vpop.permute.xlu0 %559
  %v562 = vmul.f32 %v554, %v560
  %v563 = vmul.f32 %v555, %v560
  %v564 = vld [vmem:[%s4] sm:$0xff]
  %566 = vset.pattern.permute.xlu0 0
  %567 = vperm.xlu0 %566, %v564
  %v568 = vpop.permute.xlu0 %567
  %v570 = vadd.f32 %v562, %v568
  %v571 = vadd.f32 %v563, %v568
  %v572 = vmax.f32 %v570, 0.0
  %v573 = vmax.f32 %v571, 0.0
  %v574 = vmul.f32 %v572, %v520
  %v575 = vmul.f32 %v573, %v521
  %576 = vst [vmem:[%s6] sm:$0xff] %v574
  %577 = vst.msk [vmem:[%s6 + $0x8] sm:$0xff] %vm526, %v575
  // Predicated region
  $region26: #{network_gen_auto_forward.6} parent=0 // pred_check
    _
  $region27: #{network_gen_auto_forward.6} parent=0 // pred_check_branch
    %579 = sbr.rel (0) target = $region29
  $region28: #{network_gen_auto_forward.6} parent=0 // pred_region
    _
  $region29: #{network_gen_auto_forward.6} parent=0 // pred_fallthru
    _
  // Predicated region
  $region30: #{network_gen_auto_forward.6} parent=0 // pred_check
    _
  $region31: #{network_gen_auto_forward.6} parent=0 // pred_check_branch
    %581 = sbr.rel (0) target = $region33
  $region32: #{network_gen_auto_forward.6} parent=0 // pred_region
    _
  $region33: #{network_gen_auto_forward.6} parent=0 // pred_fallthru
    _

// kernel: network_gen_auto_forward.7
$region0: #{network_gen_auto_forward.7}
  #allocation0 [shape = 'u32[]', space=smem, size = 0x4, offset = 0x4, fixed_abs, tag = 'smem constant byte address 0x4 - core index']
  #allocation1 [shape = 'u32[72,128]{1,0:T(1,128)}', space=vmem, size = 0x9000, scoped, tag = 'internal scratch']
  %s0 = inlined_call_operand.vmem [shape: f32[8,686], index: 0, kind: input, shape index: {}]
  %s1 = inlined_call_operand.vmem [shape: f32[9,8,8], index: 1, kind: input, shape index: {}]
  %s2 = inlined_call_operand.vmem [shape: f32[8,1], index: 2, kind: input, shape index: {}]
  %s3 = inlined_call_operand.vmem [shape: f32[8,1], index: 3, kind: input, shape index: {}]
  %s4 = inlined_call_operand.vmem [shape: f32[8,1], index: 4, kind: input, shape index: {}]
  %s5 = inlined_call_operand.vmem [shape: f32[1,648], index: 5, kind: input, shape index: {}]
  %s6 = inlined_call_operand.vmem [shape: f32[8,648], index: 6, kind: output, shape index: {}]
  %s7 = sld [smem:[#allocation0]]
  $region34: #{network_gen_auto_forward.7} parent=0
    _
  %s9 = ssub.s32 1, %s7
  %s10 = scalar_select 0, %s9, %s7
  // Predicated region
  $region2: #{network_gen_auto_forward.7} parent=0 // pred_check
    _
  $region3: #{network_gen_auto_forward.7} parent=0 // pred_check_branch
    %12 = sbr.rel (0) target = $region5
  $region4: #{network_gen_auto_forward.7} parent=0 // pred_region
    _
  $region5: #{network_gen_auto_forward.7} parent=0 // pred_fallthru
    _
  // Predicated region
  $region6: #{network_gen_auto_forward.7} parent=0 // pred_check
    _
  $region7: #{network_gen_auto_forward.7} parent=0 // pred_check_branch
    %14 = sbr.rel (0) target = $region9
  $region8: #{network_gen_auto_forward.7} parent=0 // pred_region
    _
  $region9: #{network_gen_auto_forward.7} parent=0 // pred_fallthru
    _
  // Predicated region
  $region10: #{network_gen_auto_forward.7} parent=0 // pred_check
    _
  $region11: #{network_gen_auto_forward.7} parent=0 // pred_check_branch
    %16 = sbr.rel (0) target = $region13
  $region12: #{network_gen_auto_forward.7} parent=0 // pred_region
    _
  $region13: #{network_gen_auto_forward.7} parent=0 // pred_fallthru
    _
  // Predicated region
  $region14: #{network_gen_auto_forward.7} parent=0 // pred_check
    _
  $region15: #{network_gen_auto_forward.7} parent=0 // pred_check_branch
    %18 = sbr.rel (0) target = $region17
  $region16: #{network_gen_auto_forward.7} parent=0 // pred_region
    _
  $region17: #{network_gen_auto_forward.7} parent=0 // pred_fallthru
    _
  // Predicated region
  $region18: #{network_gen_auto_forward.7} parent=0 // pred_check
    _
  $region19: #{network_gen_auto_forward.7} parent=0 // pred_check_branch
    %20 = sbr.rel (0) target = $region21
  $region20: #{network_gen_auto_forward.7} parent=0 // pred_region
    _
  $region21: #{network_gen_auto_forward.7} parent=0 // pred_fallthru
    _
  // Predicated region
  $region22: #{network_gen_auto_forward.7} parent=0 // pred_check
    _
  $region23: #{network_gen_auto_forward.7} parent=0 // pred_check_branch
    %22 = sbr.rel (0) target = $region25
  $region24: #{network_gen_auto_forward.7} parent=0 // pred_region
    _
  $region25: #{network_gen_auto_forward.7} parent=0 // pred_fallthru
    _
  %v23 = vld [vmem:[%s1] sm:$0xff]
  %v24 = vld [vmem:[%s0] sm:$0xff]
  %v25 = vld [vmem:[%s0 + $0x8] sm:$0xff]
  %v26 = vld [vmem:[%s0 + $0x10] sm:$0xff]
  %v27 = vld [vmem:[%s0 + $0x18] sm:$0xff]
  %v28 = vld [vmem:[%s0 + $0x20] sm:$0xff]
  %v29 = vld [vmem:[%s0 + $0x28] sm:$0xff]
  %s30 = scalar_lea.vmem %s1, 8
  %v31 = vld [vmem:[%s30] sm:$0xff]
  %38 = vrot.lane.b32.xlu0 %v24, 127
  %v39 = vpop.permute.xlu0 %38
  %40 = vrot.lane.b32.xlu0 %v25, 127
  %v41 = vpop.permute.xlu0 %40
  %42 = vrot.lane.b32.xlu0 %v26, 127
  %v43 = vpop.permute.xlu0 %42
  %44 = vrot.lane.b32.xlu0 %v27, 127
  %v45 = vpop.permute.xlu0 %44
  %46 = vrot.lane.b32.xlu0 %v28, 127
  %v47 = vpop.permute.xlu0 %46
  %48 = vrot.lane.b32.xlu0 %v29, 127
  %v49 = vpop.permute.xlu0 %48
  %vm50 = vcmask 1039360
  %v51 = vsel %vm50, %v39, %v41
  %v52 = vsel %vm50, %v41, %v43
  %v53 = vsel %vm50, %v43, %v45
  %v54 = vsel %vm50, %v45, %v47
  %v55 = vsel %vm50, %v47, %v49
  %vm62 = vcmask 64512
  %v64 = vsel %vm62, %v31, 0
  %66 = vmatpush.msra.mxu0 0.0
  %67 = vmatpush.msra.mxu0 0.0
  %68 = vmatpush.msra.mxu0 0.0
  %69 = vmatpush.msra.mxu0 0.0
  %70 = vmatpush.msra.mxu0 0.0
  %71 = vmatpush.msra.mxu0 0.0
  %72 = vmatpush.msra.mxu0 0.0
  %73 = vmatpush.msra.mxu0 0.0
  %74 = vmatpush.msra.mxu0 0.0
  %75 = vmatpush.msra.mxu0 0.0
  %76 = vmatpush.msra.mxu0 0.0
  %77 = vmatpush.msra.mxu0 0.0
  %78 = vmatpush.msra.mxu0 0.0
  %79 = vmatpush.msra.mxu0 0.0
  %80 = vmatpush.msra.mxu0 0.0
  %81 = vmatpush.msra.mxu0 %v51
  %82 = vmatmul.f32.gmra.mxu0 %v64
  %v83 = vpop.f32.mrf.mxu0
  %v84 = vadd.f32 0.0, %v83
  %85 = vdwg.mxu0
  %86 = vmatpush.msra.mxu0 0.0
  %87 = vmatpush.msra.mxu0 0.0
  %88 = vmatpush.msra.mxu0 0.0
  %89 = vmatpush.msra.mxu0 0.0
  %90 = vmatpush.msra.mxu0 0.0
  %91 = vmatpush.msra.mxu0 0.0
  %92 = vmatpush.msra.mxu0 0.0
  %93 = vmatpush.msra.mxu0 0.0
  %94 = vmatpush.msra.mxu0 0.0
  %95 = vmatpush.msra.mxu0 0.0
  %96 = vmatpush.msra.mxu0 0.0
  %97 = vmatpush.msra.mxu0 0.0
  %98 = vmatpush.msra.mxu0 0.0
  %99 = vmatpush.msra.mxu0 0.0
  %100 = vmatpush.msra.mxu0 0.0
  %101 = vmatpush.msra.mxu0 %v52
  %102 = vmatmul.f32.gmra.mxu0 %v64
  %v103 = vpop.f32.mrf.mxu0
  %v104 = vadd.f32 0.0, %v103
  %105 = vdwg.mxu0
  %106 = vmatpush.msra.mxu0 0.0
  %107 = vmatpush.msra.mxu0 0.0
  %108 = vmatpush.msra.mxu0 0.0
  %109 = vmatpush.msra.mxu0 0.0
  %110 = vmatpush.msra.mxu0 0.0
  %111 = vmatpush.msra.mxu0 0.0
  %112 = vmatpush.msra.mxu0 0.0
  %113 = vmatpush.msra.mxu0 0.0
  %114 = vmatpush.msra.mxu0 0.0
  %115 = vmatpush.msra.mxu0 0.0
  %116 = vmatpush.msra.mxu0 0.0
  %117 = vmatpush.msra.mxu0 0.0
  %118 = vmatpush.msra.mxu0 0.0
  %119 = vmatpush.msra.mxu0 0.0
  %120 = vmatpush.msra.mxu0 0.0
  %121 = vmatpush.msra.mxu0 %v53
  %122 = vmatmul.f32.gmra.mxu0 %v64
  %v123 = vpop.f32.mrf.mxu0
  %v124 = vadd.f32 0.0, %v123
  %125 = vdwg.mxu0
  %126 = vmatpush.msra.mxu0 0.0
  %127 = vmatpush.msra.mxu0 0.0
  %128 = vmatpush.msra.mxu0 0.0
  %129 = vmatpush.msra.mxu0 0.0
  %130 = vmatpush.msra.mxu0 0.0
  %131 = vmatpush.msra.mxu0 0.0
  %132 = vmatpush.msra.mxu0 0.0
  %133 = vmatpush.msra.mxu0 0.0
  %134 = vmatpush.msra.mxu0 0.0
  %135 = vmatpush.msra.mxu0 0.0
  %136 = vmatpush.msra.mxu0 0.0
  %137 = vmatpush.msra.mxu0 0.0
  %138 = vmatpush.msra.mxu0 0.0
  %139 = vmatpush.msra.mxu0 0.0
  %140 = vmatpush.msra.mxu0 0.0
  %141 = vmatpush.msra.mxu0 %v54
  %142 = vmatmul.f32.gmra.mxu0 %v64
  %v143 = vpop.f32.mrf.mxu0
  %v144 = vadd.f32 0.0, %v143
  %145 = vdwg.mxu0
  %146 = vmatpush.msra.mxu0 0.0
  %147 = vmatpush.msra.mxu0 0.0
  %148 = vmatpush.msra.mxu0 0.0
  %149 = vmatpush.msra.mxu0 0.0
  %150 = vmatpush.msra.mxu0 0.0
  %151 = vmatpush.msra.mxu0 0.0
  %152 = vmatpush.msra.mxu0 0.0
  %153 = vmatpush.msra.mxu0 0.0
  %154 = vmatpush.msra.mxu0 0.0
  %155 = vmatpush.msra.mxu0 0.0
  %156 = vmatpush.msra.mxu0 0.0
  %157 = vmatpush.msra.mxu0 0.0
  %158 = vmatpush.msra.mxu0 0.0
  %159 = vmatpush.msra.mxu0 0.0
  %160 = vmatpush.msra.mxu0 0.0
  %161 = vmatpush.msra.mxu0 %v55
  %162 = vmatmul.f32.gmra.mxu0 %v64
  %v163 = vpop.f32.mrf.mxu0
  %v164 = vadd.f32 0.0, %v163
  %165 = vdwg.mxu0
  %166 = vmatpush.msra.mxu0 0.0
  %167 = vmatpush.msra.mxu0 0.0
  %168 = vmatpush.msra.mxu0 0.0
  %169 = vmatpush.msra.mxu0 0.0
  %170 = vmatpush.msra.mxu0 0.0
  %171 = vmatpush.msra.mxu0 0.0
  %172 = vmatpush.msra.mxu0 0.0
  %173 = vmatpush.msra.mxu0 0.0
  %174 = vmatpush.msra.mxu0 0.0
  %175 = vmatpush.msra.mxu0 0.0
  %176 = vmatpush.msra.mxu0 0.0
  %177 = vmatpush.msra.mxu0 0.0
  %178 = vmatpush.msra.mxu0 0.0
  %179 = vmatpush.msra.mxu0 0.0
  %180 = vmatpush.msra.mxu0 0.0
  %181 = vmatpush.msra.mxu0 %v49
  %182 = vmatmul.f32.gmra.mxu0 %v64
  %v183 = vpop.f32.mrf.mxu0
  %v184 = vadd.f32 0.0, %v183
  %185 = vdwg.mxu0
  %v187 = vsel %vm62, %v23, 0
  %189 = vmatpush.msra.mxu0 0.0
  %190 = vmatpush.msra.mxu0 0.0
  %191 = vmatpush.msra.mxu0 0.0
  %192 = vmatpush.msra.mxu0 0.0
  %193 = vmatpush.msra.mxu0 0.0
  %194 = vmatpush.msra.mxu0 0.0
  %195 = vmatpush.msra.mxu0 0.0
  %196 = vmatpush.msra.mxu0 0.0
  %197 = vmatpush.msra.mxu0 0.0
  %198 = vmatpush.msra.mxu0 0.0
  %199 = vmatpush.msra.mxu0 0.0
  %200 = vmatpush.msra.mxu0 0.0
  %201 = vmatpush.msra.mxu0 0.0
  %202 = vmatpush.msra.mxu0 0.0
  %203 = vmatpush.msra.mxu0 0.0
  %204 = vmatpush.msra.mxu0 %v24
  %205 = vmatmul.f32.gmra.mxu0 %v187
  %v206 = vpop.f32.mrf.mxu0
  %v207 = vadd.f32 %v84, %v206
  %208 = vdwg.mxu0
  %209 = vmatpush.msra.mxu0 0.0
  %210 = vmatpush.msra.mxu0 0.0
  %211 = vmatpush.msra.mxu0 0.0
  %212 = vmatpush.msra.mxu0 0.0
  %213 = vmatpush.msra.mxu0 0.0
  %214 = vmatpush.msra.mxu0 0.0
  %215 = vmatpush.msra.mxu0 0.0
  %216 = vmatpush.msra.mxu0 0.0
  %217 = vmatpush.msra.mxu0 0.0
  %218 = vmatpush.msra.mxu0 0.0
  %219 = vmatpush.msra.mxu0 0.0
  %220 = vmatpush.msra.mxu0 0.0
  %221 = vmatpush.msra.mxu0 0.0
  %222 = vmatpush.msra.mxu0 0.0
  %223 = vmatpush.msra.mxu0 0.0
  %224 = vmatpush.msra.mxu0 %v25
  %225 = vmatmul.f32.gmra.mxu0 %v187
  %v226 = vpop.f32.mrf.mxu0
  %v227 = vadd.f32 %v104, %v226
  %228 = vdwg.mxu0
  %229 = vmatpush.msra.mxu0 0.0
  %230 = vmatpush.msra.mxu0 0.0
  %231 = vmatpush.msra.mxu0 0.0
  %232 = vmatpush.msra.mxu0 0.0
  %233 = vmatpush.msra.mxu0 0.0
  %234 = vmatpush.msra.mxu0 0.0
  %235 = vmatpush.msra.mxu0 0.0
  %236 = vmatpush.msra.mxu0 0.0
  %237 = vmatpush.msra.mxu0 0.0
  %238 = vmatpush.msra.mxu0 0.0
  %239 = vmatpush.msra.mxu0 0.0
  %240 = vmatpush.msra.mxu0 0.0
  %241 = vmatpush.msra.mxu0 0.0
  %242 = vmatpush.msra.mxu0 0.0
  %243 = vmatpush.msra.mxu0 0.0
  %244 = vmatpush.msra.mxu0 %v26
  %245 = vmatmul.f32.gmra.mxu0 %v187
  %v246 = vpop.f32.mrf.mxu0
  %v247 = vadd.f32 %v124, %v246
  %248 = vdwg.mxu0
  %249 = vmatpush.msra.mxu0 0.0
  %250 = vmatpush.msra.mxu0 0.0
  %251 = vmatpush.msra.mxu0 0.0
  %252 = vmatpush.msra.mxu0 0.0
  %253 = vmatpush.msra.mxu0 0.0
  %254 = vmatpush.msra.mxu0 0.0
  %255 = vmatpush.msra.mxu0 0.0
  %256 = vmatpush.msra.mxu0 0.0
  %257 = vmatpush.msra.mxu0 0.0
  %258 = vmatpush.msra.mxu0 0.0
  %259 = vmatpush.msra.mxu0 0.0
  %260 = vmatpush.msra.mxu0 0.0
  %261 = vmatpush.msra.mxu0 0.0
  %262 = vmatpush.msra.mxu0 0.0
  %263 = vmatpush.msra.mxu0 0.0
  %264 = vmatpush.msra.mxu0 %v27
  %265 = vmatmul.f32.gmra.mxu0 %v187
  %v266 = vpop.f32.mrf.mxu0
  %v267 = vadd.f32 %v144, %v266
  %268 = vdwg.mxu0
  %269 = vmatpush.msra.mxu0 0.0
  %270 = vmatpush.msra.mxu0 0.0
  %271 = vmatpush.msra.mxu0 0.0
  %272 = vmatpush.msra.mxu0 0.0
  %273 = vmatpush.msra.mxu0 0.0
  %274 = vmatpush.msra.mxu0 0.0
  %275 = vmatpush.msra.mxu0 0.0
  %276 = vmatpush.msra.mxu0 0.0
  %277 = vmatpush.msra.mxu0 0.0
  %278 = vmatpush.msra.mxu0 0.0
  %279 = vmatpush.msra.mxu0 0.0
  %280 = vmatpush.msra.mxu0 0.0
  %281 = vmatpush.msra.mxu0 0.0
  %282 = vmatpush.msra.mxu0 0.0
  %283 = vmatpush.msra.mxu0 0.0
  %284 = vmatpush.msra.mxu0 %v28
  %285 = vmatmul.f32.gmra.mxu0 %v187
  %v286 = vpop.f32.mrf.mxu0
  %v287 = vadd.f32 %v164, %v286
  %288 = vdwg.mxu0
  %289 = vmatpush.msra.mxu0 0.0
  %290 = vmatpush.msra.mxu0 0.0
  %291 = vmatpush.msra.mxu0 0.0
  %292 = vmatpush.msra.mxu0 0.0
  %293 = vmatpush.msra.mxu0 0.0
  %294 = vmatpush.msra.mxu0 0.0
  %295 = vmatpush.msra.mxu0 0.0
  %296 = vmatpush.msra.mxu0 0.0
  %297 = vmatpush.msra.mxu0 0.0
  %298 = vmatpush.msra.mxu0 0.0
  %299 = vmatpush.msra.mxu0 0.0
  %300 = vmatpush.msra.mxu0 0.0
  %301 = vmatpush.msra.mxu0 0.0
  %302 = vmatpush.msra.mxu0 0.0
  %303 = vmatpush.msra.mxu0 0.0
  %304 = vmatpush.msra.mxu0 %v29
  %305 = vmatmul.f32.gmra.mxu0 %v187
  %v306 = vpop.f32.mrf.mxu0
  %v307 = vadd.f32 %v184, %v306
  %308 = vdwg.mxu0
  %s309 = scalar_lea.vmem %s1, 16
  %v310 = vld [vmem:[%s309] sm:$0xff]
  %311 = vrot.lane.b32.xlu0 %v24, 126
  %v312 = vpop.permute.xlu0 %311
  %313 = vrot.lane.b32.xlu0 %v25, 126
  %v314 = vpop.permute.xlu0 %313
  %315 = vrot.lane.b32.xlu0 %v26, 126
  %v316 = vpop.permute.xlu0 %315
  %317 = vrot.lane.b32.xlu0 %v27, 126
  %v318 = vpop.permute.xlu0 %317
  %319 = vrot.lane.b32.xlu0 %v28, 126
  %v320 = vpop.permute.xlu0 %319
  %321 = vrot.lane.b32.xlu0 %v29, 126
  %v322 = vpop.permute.xlu0 %321
  %vm323 = vcmask 1031168
  %v324 = vsel %vm323, %v312, %v314
  %v325 = vsel %vm323, %v314, %v316
  %v326 = vsel %vm323, %v316, %v318
  %v327 = vsel %vm323, %v318, %v320
  %v328 = vsel %vm323, %v320, %v322
  %v336 = vsel %vm62, %v310, 0
  %338 = vmatpush.msra.mxu0 0.0
  %339 = vmatpush.msra.mxu0 0.0
  %340 = vmatpush.msra.mxu0 0.0
  %341 = vmatpush.msra.mxu0 0.0
  %342 = vmatpush.msra.mxu0 0.0
  %343 = vmatpush.msra.mxu0 0.0
  %344 = vmatpush.msra.mxu0 0.0
  %345 = vmatpush.msra.mxu0 0.0
  %346 = vmatpush.msra.mxu0 0.0
  %347 = vmatpush.msra.mxu0 0.0
  %348 = vmatpush.msra.mxu0 0.0
  %349 = vmatpush.msra.mxu0 0.0
  %350 = vmatpush.msra.mxu0 0.0
  %351 = vmatpush.msra.mxu0 0.0
  %352 = vmatpush.msra.mxu0 0.0
  %353 = vmatpush.msra.mxu0 %v324
  %354 = vmatmul.f32.gmra.mxu0 %v336
  %v355 = vpop.f32.mrf.mxu0
  %v356 = vadd.f32 0.0, %v355
  %357 = vdwg.mxu0
  %358 = vmatpush.msra.mxu0 0.0
  %359 = vmatpush.msra.mxu0 0.0
  %360 = vmatpush.msra.mxu0 0.0
  %361 = vmatpush.msra.mxu0 0.0
  %362 = vmatpush.msra.mxu0 0.0
  %363 = vmatpush.msra.mxu0 0.0
  %364 = vmatpush.msra.mxu0 0.0
  %365 = vmatpush.msra.mxu0 0.0
  %366 = vmatpush.msra.mxu0 0.0
  %367 = vmatpush.msra.mxu0 0.0
  %368 = vmatpush.msra.mxu0 0.0
  %369 = vmatpush.msra.mxu0 0.0
  %370 = vmatpush.msra.mxu0 0.0
  %371 = vmatpush.msra.mxu0 0.0
  %372 = vmatpush.msra.mxu0 0.0
  %373 = vmatpush.msra.mxu0 %v325
  %374 = vmatmul.f32.gmra.mxu0 %v336
  %v375 = vpop.f32.mrf.mxu0
  %v376 = vadd.f32 0.0, %v375
  %377 = vdwg.mxu0
  %378 = vmatpush.msra.mxu0 0.0
  %379 = vmatpush.msra.mxu0 0.0
  %380 = vmatpush.msra.mxu0 0.0
  %381 = vmatpush.msra.mxu0 0.0
  %382 = vmatpush.msra.mxu0 0.0
  %383 = vmatpush.msra.mxu0 0.0
  %384 = vmatpush.msra.mxu0 0.0
  %385 = vmatpush.msra.mxu0 0.0
  %386 = vmatpush.msra.mxu0 0.0
  %387 = vmatpush.msra.mxu0 0.0
  %388 = vmatpush.msra.mxu0 0.0
  %389 = vmatpush.msra.mxu0 0.0
  %390 = vmatpush.msra.mxu0 0.0
  %391 = vmatpush.msra.mxu0 0.0
  %392 = vmatpush.msra.mxu0 0.0
  %393 = vmatpush.msra.mxu0 %v326
  %394 = vmatmul.f32.gmra.mxu0 %v336
  %v395 = vpop.f32.mrf.mxu0
  %v396 = vadd.f32 0.0, %v395
  %397 = vdwg.mxu0
  %398 = vmatpush.msra.mxu0 0.0
  %399 = vmatpush.msra.mxu0 0.0
  %400 = vmatpush.msra.mxu0 0.0
  %401 = vmatpush.msra.mxu0 0.0
  %402 = vmatpush.msra.mxu0 0.0
  %403 = vmatpush.msra.mxu0 0.0
  %404 = vmatpush.msra.mxu0 0.0
  %405 = vmatpush.msra.mxu0 0.0
  %406 = vmatpush.msra.mxu0 0.0
  %407 = vmatpush.msra.mxu0 0.0
  %408 = vmatpush.msra.mxu0 0.0
  %409 = vmatpush.msra.mxu0 0.0
  %410 = vmatpush.msra.mxu0 0.0
  %411 = vmatpush.msra.mxu0 0.0
  %412 = vmatpush.msra.mxu0 0.0
  %413 = vmatpush.msra.mxu0 %v327
  %414 = vmatmul.f32.gmra.mxu0 %v336
  %v415 = vpop.f32.mrf.mxu0
  %v416 = vadd.f32 0.0, %v415
  %417 = vdwg.mxu0
  %418 = vmatpush.msra.mxu0 0.0
  %419 = vmatpush.msra.mxu0 0.0
  %420 = vmatpush.msra.mxu0 0.0
  %421 = vmatpush.msra.mxu0 0.0
  %422 = vmatpush.msra.mxu0 0.0
  %423 = vmatpush.msra.mxu0 0.0
  %424 = vmatpush.msra.mxu0 0.0
  %425 = vmatpush.msra.mxu0 0.0
  %426 = vmatpush.msra.mxu0 0.0
  %427 = vmatpush.msra.mxu0 0.0
  %428 = vmatpush.msra.mxu0 0.0
  %429 = vmatpush.msra.mxu0 0.0
  %430 = vmatpush.msra.mxu0 0.0
  %431 = vmatpush.msra.mxu0 0.0
  %432 = vmatpush.msra.mxu0 0.0
  %433 = vmatpush.msra.mxu0 %v328
  %434 = vmatmul.f32.gmra.mxu0 %v336
  %v435 = vpop.f32.mrf.mxu0
  %v436 = vadd.f32 0.0, %v435
  %437 = vdwg.mxu0
  %438 = vmatpush.msra.mxu0 0.0
  %439 = vmatpush.msra.mxu0 0.0
  %440 = vmatpush.msra.mxu0 0.0
  %441 = vmatpush.msra.mxu0 0.0
  %442 = vmatpush.msra.mxu0 0.0
  %443 = vmatpush.msra.mxu0 0.0
  %444 = vmatpush.msra.mxu0 0.0
  %445 = vmatpush.msra.mxu0 0.0
  %446 = vmatpush.msra.mxu0 0.0
  %447 = vmatpush.msra.mxu0 0.0
  %448 = vmatpush.msra.mxu0 0.0
  %449 = vmatpush.msra.mxu0 0.0
  %450 = vmatpush.msra.mxu0 0.0
  %451 = vmatpush.msra.mxu0 0.0
  %452 = vmatpush.msra.mxu0 0.0
  %453 = vmatpush.msra.mxu0 %v322
  %454 = vmatmul.f32.gmra.mxu0 %v336
  %v455 = vpop.f32.mrf.mxu0
  %v456 = vadd.f32 0.0, %v455
  %457 = vdwg.mxu0
  %v458 = vadd.f32 %v207, %v356
  %v459 = vadd.f32 %v227, %v376
  %v460 = vadd.f32 %v247, %v396
  %v461 = vadd.f32 %v267, %v416
  %v462 = vadd.f32 %v287, %v436
  %v463 = vadd.f32 %v307, %v456
  %s464 = scalar_lea.vmem %s1, 24
  %v465 = vld [vmem:[%s464] sm:$0xff]
  %466 = vrot.lane.b32.xlu0 %v24, 110
  %v467 = vpop.permute.xlu0 %466
  %468 = vrot.lane.b32.xlu0 %v25, 110
  %v469 = vpop.permute.xlu0 %468
  %470 = vrot.lane.b32.xlu0 %v26, 110
  %v471 = vpop.permute.xlu0 %470
  %472 = vrot.lane.b32.xlu0 %v27, 110
  %v473 = vpop.permute.xlu0 %472
  %474 = vrot.lane.b32.xlu0 %v28, 110
  %v475 = vpop.permute.xlu0 %474
  %476 = vrot.lane.b32.xlu0 %v29, 110
  %v477 = vpop.permute.xlu0 %476
  %vm478 = vcmask 900096
  %v479 = vsel %vm478, %v467, %v469
  %v480 = vsel %vm478, %v469, %v471
  %v481 = vsel %vm478, %v471, %v473
  %v482 = vsel %vm478, %v473, %v475
  %v483 = vsel %vm478, %v475, %v477
  %v491 = vsel %vm62, %v465, 0
  %493 = vmatpush.msra.mxu0 0.0
  %494 = vmatpush.msra.mxu0 0.0
  %495 = vmatpush.msra.mxu0 0.0
  %496 = vmatpush.msra.mxu0 0.0
  %497 = vmatpush.msra.mxu0 0.0
  %498 = vmatpush.msra.mxu0 0.0
  %499 = vmatpush.msra.mxu0 0.0
  %500 = vmatpush.msra.mxu0 0.0
  %501 = vmatpush.msra.mxu0 0.0
  %502 = vmatpush.msra.mxu0 0.0
  %503 = vmatpush.msra.mxu0 0.0
  %504 = vmatpush.msra.mxu0 0.0
  %505 = vmatpush.msra.mxu0 0.0
  %506 = vmatpush.msra.mxu0 0.0
  %507 = vmatpush.msra.mxu0 0.0
  %508 = vmatpush.msra.mxu0 %v479
  %509 = vmatmul.f32.gmra.mxu0 %v491
  %v510 = vpop.f32.mrf.mxu0
  %v511 = vadd.f32 0.0, %v510
  %512 = vdwg.mxu0
  %513 = vmatpush.msra.mxu0 0.0
  %514 = vmatpush.msra.mxu0 0.0
  %515 = vmatpush.msra.mxu0 0.0
  %516 = vmatpush.msra.mxu0 0.0
  %517 = vmatpush.msra.mxu0 0.0
  %518 = vmatpush.msra.mxu0 0.0
  %519 = vmatpush.msra.mxu0 0.0
  %520 = vmatpush.msra.mxu0 0.0
  %521 = vmatpush.msra.mxu0 0.0
  %522 = vmatpush.msra.mxu0 0.0
  %523 = vmatpush.msra.mxu0 0.0
  %524 = vmatpush.msra.mxu0 0.0
  %525 = vmatpush.msra.mxu0 0.0
  %526 = vmatpush.msra.mxu0 0.0
  %527 = vmatpush.msra.mxu0 0.0
  %528 = vmatpush.msra.mxu0 %v480
  %529 = vmatmul.f32.gmra.mxu0 %v491
  %v530 = vpop.f32.mrf.mxu0
  %v531 = vadd.f32 0.0, %v530
  %532 = vdwg.mxu0
  %533 = vmatpush.msra.mxu0 0.0
  %534 = vmatpush.msra.mxu0 0.0
  %535 = vmatpush.msra.mxu0 0.0
  %536 = vmatpush.msra.mxu0 0.0
  %537 = vmatpush.msra.mxu0 0.0
  %538 = vmatpush.msra.mxu0 0.0
  %539 = vmatpush.msra.mxu0 0.0
  %540 = vmatpush.msra.mxu0 0.0
  %541 = vmatpush.msra.mxu0 0.0
  %542 = vmatpush.msra.mxu0 0.0
  %543 = vmatpush.msra.mxu0 0.0
  %544 = vmatpush.msra.mxu0 0.0
  %545 = vmatpush.msra.mxu0 0.0
  %546 = vmatpush.msra.mxu0 0.0
  %547 = vmatpush.msra.mxu0 0.0
  %548 = vmatpush.msra.mxu0 %v481
  %549 = vmatmul.f32.gmra.mxu0 %v491
  %v550 = vpop.f32.mrf.mxu0
  %v551 = vadd.f32 0.0, %v550
  %552 = vdwg.mxu0
  %553 = vmatpush.msra.mxu0 0.0
  %554 = vmatpush.msra.mxu0 0.0
  %555 = vmatpush.msra.mxu0 0.0
  %556 = vmatpush.msra.mxu0 0.0
  %557 = vmatpush.msra.mxu0 0.0
  %558 = vmatpush.msra.mxu0 0.0
  %559 = vmatpush.msra.mxu0 0.0
  %560 = vmatpush.msra.mxu0 0.0
  %561 = vmatpush.msra.mxu0 0.0
  %562 = vmatpush.msra.mxu0 0.0
  %563 = vmatpush.msra.mxu0 0.0
  %564 = vmatpush.msra.mxu0 0.0
  %565 = vmatpush.msra.mxu0 0.0
  %566 = vmatpush.msra.mxu0 0.0
  %567 = vmatpush.msra.mxu0 0.0
  %568 = vmatpush.msra.mxu0 %v482
  %569 = vmatmul.f32.gmra.mxu0 %v491
  %v570 = vpop.f32.mrf.mxu0
  %v571 = vadd.f32 0.0, %v570
  %572 = vdwg.mxu0
  %573 = vmatpush.msra.mxu0 0.0
  %574 = vmatpush.msra.mxu0 0.0
  %575 = vmatpush.msra.mxu0 0.0
  %576 = vmatpush.msra.mxu0 0.0
  %577 = vmatpush.msra.mxu0 0.0
  %578 = vmatpush.msra.mxu0 0.0
  %579 = vmatpush.msra.mxu0 0.0
  %580 = vmatpush.msra.mxu0 0.0
  %581 = vmatpush.msra.mxu0 0.0
  %582 = vmatpush.msra.mxu0 0.0
  %583 = vmatpush.msra.mxu0 0.0
  %584 = vmatpush.msra.mxu0 0.0
  %585 = vmatpush.msra.mxu0 0.0
  %586 = vmatpush.msra.mxu0 0.0
  %587 = vmatpush.msra.mxu0 0.0
  %588 = vmatpush.msra.mxu0 %v483
  %589 = vmatmul.f32.gmra.mxu0 %v491
  %v590 = vpop.f32.mrf.mxu0
  %v591 = vadd.f32 0.0, %v590
  %592 = vdwg.mxu0
  %593 = vmatpush.msra.mxu0 0.0
  %594 = vmatpush.msra.mxu0 0.0
  %595 = vmatpush.msra.mxu0 0.0
  %596 = vmatpush.msra.mxu0 0.0
  %597 = vmatpush.msra.mxu0 0.0
  %598 = vmatpush.msra.mxu0 0.0
  %599 = vmatpush.msra.mxu0 0.0
  %600 = vmatpush.msra.mxu0 0.0
  %601 = vmatpush.msra.mxu0 0.0
  %602 = vmatpush.msra.mxu0 0.0
  %603 = vmatpush.msra.mxu0 0.0
  %604 = vmatpush.msra.mxu0 0.0
  %605 = vmatpush.msra.mxu0 0.0
  %606 = vmatpush.msra.mxu0 0.0
  %607 = vmatpush.msra.mxu0 0.0
  %608 = vmatpush.msra.mxu0 %v477
  %609 = vmatmul.f32.gmra.mxu0 %v491
  %v610 = vpop.f32.mrf.mxu0
  %v611 = vadd.f32 0.0, %v610
  %612 = vdwg.mxu0
  %v613 = vadd.f32 %v458, %v511
  %v614 = vadd.f32 %v459, %v531
  %v615 = vadd.f32 %v460, %v551
  %v616 = vadd.f32 %v461, %v571
  %v617 = vadd.f32 %v462, %v591
  %v618 = vadd.f32 %v463, %v611
  %s619 = scalar_lea.vmem %s1, 32
  %v620 = vld [vmem:[%s619] sm:$0xff]
  %621 = vrot.lane.b32.xlu0 %v24, 109
  %v622 = vpop.permute.xlu0 %621
  %623 = vrot.lane.b32.xlu0 %v25, 109
  %v624 = vpop.permute.xlu0 %623
  %625 = vrot.lane.b32.xlu0 %v26, 109
  %v626 = vpop.permute.xlu0 %625
  %627 = vrot.lane.b32.xlu0 %v27, 109
  %v628 = vpop.permute.xlu0 %627
  %629 = vrot.lane.b32.xlu0 %v28, 109
  %v630 = vpop.permute.xlu0 %629
  %631 = vrot.lane.b32.xlu0 %v29, 109
  %v632 = vpop.permute.xlu0 %631
  %vm633 = vcmask 891904
  %v634 = vsel %vm633, %v622, %v624
  %v635 = vsel %vm633, %v624, %v626
  %v636 = vsel %vm633, %v626, %v628
  %v637 = vsel %vm633, %v628, %v630
  %v638 = vsel %vm633, %v630, %v632
  %v646 = vsel %vm62, %v620, 0
  %648 = vmatpush.msra.mxu0 0.0
  %649 = vmatpush.msra.mxu0 0.0
  %650 = vmatpush.msra.mxu0 0.0
  %651 = vmatpush.msra.mxu0 0.0
  %652 = vmatpush.msra.mxu0 0.0
  %653 = vmatpush.msra.mxu0 0.0
  %654 = vmatpush.msra.mxu0 0.0
  %655 = vmatpush.msra.mxu0 0.0
  %656 = vmatpush.msra.mxu0 0.0
  %657 = vmatpush.msra.mxu0 0.0
  %658 = vmatpush.msra.mxu0 0.0
  %659 = vmatpush.msra.mxu0 0.0
  %660 = vmatpush.msra.mxu0 0.0
  %661 = vmatpush.msra.mxu0 0.0
  %662 = vmatpush.msra.mxu0 0.0
  %663 = vmatpush.msra.mxu0 %v634
  %664 = vmatmul.f32.gmra.mxu0 %v646
  %v665 = vpop.f32.mrf.mxu0
  %v666 = vadd.f32 0.0, %v665
  %667 = vdwg.mxu0
  %668 = vmatpush.msra.mxu0 0.0
  %669 = vmatpush.msra.mxu0 0.0
  %670 = vmatpush.msra.mxu0 0.0
  %671 = vmatpush.msra.mxu0 0.0
  %672 = vmatpush.msra.mxu0 0.0
  %673 = vmatpush.msra.mxu0 0.0
  %674 = vmatpush.msra.mxu0 0.0
  %675 = vmatpush.msra.mxu0 0.0
  %676 = vmatpush.msra.mxu0 0.0
  %677 = vmatpush.msra.mxu0 0.0
  %678 = vmatpush.msra.mxu0 0.0
  %679 = vmatpush.msra.mxu0 0.0
  %680 = vmatpush.msra.mxu0 0.0
  %681 = vmatpush.msra.mxu0 0.0
  %682 = vmatpush.msra.mxu0 0.0
  %683 = vmatpush.msra.mxu0 %v635
  %684 = vmatmul.f32.gmra.mxu0 %v646
  %v685 = vpop.f32.mrf.mxu0
  %v686 = vadd.f32 0.0, %v685
  %687 = vdwg.mxu0
  %688 = vmatpush.msra.mxu0 0.0
  %689 = vmatpush.msra.mxu0 0.0
  %690 = vmatpush.msra.mxu0 0.0
  %691 = vmatpush.msra.mxu0 0.0
  %692 = vmatpush.msra.mxu0 0.0
  %693 = vmatpush.msra.mxu0 0.0
  %694 = vmatpush.msra.mxu0 0.0
  %695 = vmatpush.msra.mxu0 0.0
  %696 = vmatpush.msra.mxu0 0.0
  %697 = vmatpush.msra.mxu0 0.0
  %698 = vmatpush.msra.mxu0 0.0
  %699 = vmatpush.msra.mxu0 0.0
  %700 = vmatpush.msra.mxu0 0.0
  %701 = vmatpush.msra.mxu0 0.0
  %702 = vmatpush.msra.mxu0 0.0
  %703 = vmatpush.msra.mxu0 %v636
  %704 = vmatmul.f32.gmra.mxu0 %v646
  %v705 = vpop.f32.mrf.mxu0
  %v706 = vadd.f32 0.0, %v705
  %707 = vdwg.mxu0
  %708 = vmatpush.msra.mxu0 0.0
  %709 = vmatpush.msra.mxu0 0.0
  %710 = vmatpush.msra.mxu0 0.0
  %711 = vmatpush.msra.mxu0 0.0
  %712 = vmatpush.msra.mxu0 0.0
  %713 = vmatpush.msra.mxu0 0.0
  %714 = vmatpush.msra.mxu0 0.0
  %715 = vmatpush.msra.mxu0 0.0
  %716 = vmatpush.msra.mxu0 0.0
  %717 = vmatpush.msra.mxu0 0.0
  %718 = vmatpush.msra.mxu0 0.0
  %719 = vmatpush.msra.mxu0 0.0
  %720 = vmatpush.msra.mxu0 0.0
  %721 = vmatpush.msra.mxu0 0.0
  %722 = vmatpush.msra.mxu0 0.0
  %723 = vmatpush.msra.mxu0 %v637
  %724 = vmatmul.f32.gmra.mxu0 %v646
  %v725 = vpop.f32.mrf.mxu0
  %v726 = vadd.f32 0.0, %v725
  %727 = vdwg.mxu0
  %728 = vmatpush.msra.mxu0 0.0
  %729 = vmatpush.msra.mxu0 0.0
  %730 = vmatpush.msra.mxu0 0.0
  %731 = vmatpush.msra.mxu0 0.0
  %732 = vmatpush.msra.mxu0 0.0
  %733 = vmatpush.msra.mxu0 0.0
  %734 = vmatpush.msra.mxu0 0.0
  %735 = vmatpush.msra.mxu0 0.0
  %736 = vmatpush.msra.mxu0 0.0
  %737 = vmatpush.msra.mxu0 0.0
  %738 = vmatpush.msra.mxu0 0.0
  %739 = vmatpush.msra.mxu0 0.0
  %740 = vmatpush.msra.mxu0 0.0
  %741 = vmatpush.msra.mxu0 0.0
  %742 = vmatpush.msra.mxu0 0.0
  %743 = vmatpush.msra.mxu0 %v638
  %744 = vmatmul.f32.gmra.mxu0 %v646
  %v745 = vpop.f32.mrf.mxu0
  %v746 = vadd.f32 0.0, %v745
  %747 = vdwg.mxu0
  %748 = vmatpush.msra.mxu0 0.0
  %749 = vmatpush.msra.mxu0 0.0
  %750 = vmatpush.msra.mxu0 0.0
  %751 = vmatpush.msra.mxu0 0.0
  %752 = vmatpush.msra.mxu0 0.0
  %753 = vmatpush.msra.mxu0 0.0
  %754 = vmatpush.msra.mxu0 0.0
  %755 = vmatpush.msra.mxu0 0.0
  %756 = vmatpush.msra.mxu0 0.0
  %757 = vmatpush.msra.mxu0 0.0
  %758 = vmatpush.msra.mxu0 0.0
  %759 = vmatpush.msra.mxu0 0.0
  %760 = vmatpush.msra.mxu0 0.0
  %761 = vmatpush.msra.mxu0 0.0
  %762 = vmatpush.msra.mxu0 0.0
  %763 = vmatpush.msra.mxu0 %v632
  %764 = vmatmul.f32.gmra.mxu0 %v646
  %v765 = vpop.f32.mrf.mxu0
  %v766 = vadd.f32 0.0, %v765
  %767 = vdwg.mxu0
  %v768 = vadd.f32 %v613, %v666
  %v769 = vadd.f32 %v614, %v686
  %v770 = vadd.f32 %v615, %v706
  %v771 = vadd.f32 %v616, %v726
  %v772 = vadd.f32 %v617, %v746
  %v773 = vadd.f32 %v618, %v766
  %s774 = scalar_lea.vmem %s1, 40
  %v775 = vld [vmem:[%s774] sm:$0xff]
  %776 = vrot.lane.b32.xlu0 %v24, 108
  %v777 = vpop.permute.xlu0 %776
  %778 = vrot.lane.b32.xlu0 %v25, 108
  %v779 = vpop.permute.xlu0 %778
  %780 = vrot.lane.b32.xlu0 %v26, 108
  %v781 = vpop.permute.xlu0 %780
  %782 = vrot.lane.b32.xlu0 %v27, 108
  %v783 = vpop.permute.xlu0 %782
  %784 = vrot.lane.b32.xlu0 %v28, 108
  %v785 = vpop.permute.xlu0 %784
  %786 = vrot.lane.b32.xlu0 %v29, 108
  %v787 = vpop.permute.xlu0 %786
  %vm788 = vcmask 883712
  %v789 = vsel %vm788, %v777, %v779
  %v790 = vsel %vm788, %v779, %v781
  %v791 = vsel %vm788, %v781, %v783
  %v792 = vsel %vm788, %v783, %v785
  %v793 = vsel %vm788, %v785, %v787
  %v801 = vsel %vm62, %v775, 0
  %803 = vmatpush.msra.mxu0 0.0
  %804 = vmatpush.msra.mxu0 0.0
  %805 = vmatpush.msra.mxu0 0.0
  %806 = vmatpush.msra.mxu0 0.0
  %807 = vmatpush.msra.mxu0 0.0
  %808 = vmatpush.msra.mxu0 0.0
  %809 = vmatpush.msra.mxu0 0.0
  %810 = vmatpush.msra.mxu0 0.0
  %811 = vmatpush.msra.mxu0 0.0
  %812 = vmatpush.msra.mxu0 0.0
  %813 = vmatpush.msra.mxu0 0.0
  %814 = vmatpush.msra.mxu0 0.0
  %815 = vmatpush.msra.mxu0 0.0
  %816 = vmatpush.msra.mxu0 0.0
  %817 = vmatpush.msra.mxu0 0.0
  %818 = vmatpush.msra.mxu0 %v789
  %819 = vmatmul.f32.gmra.mxu0 %v801
  %v820 = vpop.f32.mrf.mxu0
  %v821 = vadd.f32 0.0, %v820
  %822 = vdwg.mxu0
  %823 = vmatpush.msra.mxu0 0.0
  %824 = vmatpush.msra.mxu0 0.0
  %825 = vmatpush.msra.mxu0 0.0
  %826 = vmatpush.msra.mxu0 0.0
  %827 = vmatpush.msra.mxu0 0.0
  %828 = vmatpush.msra.mxu0 0.0
  %829 = vmatpush.msra.mxu0 0.0
  %830 = vmatpush.msra.mxu0 0.0
  %831 = vmatpush.msra.mxu0 0.0
  %832 = vmatpush.msra.mxu0 0.0
  %833 = vmatpush.msra.mxu0 0.0
  %834 = vmatpush.msra.mxu0 0.0
  %835 = vmatpush.msra.mxu0 0.0
  %836 = vmatpush.msra.mxu0 0.0
  %837 = vmatpush.msra.mxu0 0.0
  %838 = vmatpush.msra.mxu0 %v790
  %839 = vmatmul.f32.gmra.mxu0 %v801
  %v840 = vpop.f32.mrf.mxu0
  %v841 = vadd.f32 0.0, %v840
  %842 = vdwg.mxu0
  %843 = vmatpush.msra.mxu0 0.0
  %844 = vmatpush.msra.mxu0 0.0
  %845 = vmatpush.msra.mxu0 0.0
  %846 = vmatpush.msra.mxu0 0.0
  %847 = vmatpush.msra.mxu0 0.0
  %848 = vmatpush.msra.mxu0 0.0
  %849 = vmatpush.msra.mxu0 0.0
  %850 = vmatpush.msra.mxu0 0.0
  %851 = vmatpush.msra.mxu0 0.0
  %852 = vmatpush.msra.mxu0 0.0
  %853 = vmatpush.msra.mxu0 0.0
  %854 = vmatpush.msra.mxu0 0.0
  %855 = vmatpush.msra.mxu0 0.0
  %856 = vmatpush.msra.mxu0 0.0
  %857 = vmatpush.msra.mxu0 0.0
  %858 = vmatpush.msra.mxu0 %v791
  %859 = vmatmul.f32.gmra.mxu0 %v801
  %v860 = vpop.f32.mrf.mxu0
  %v861 = vadd.f32 0.0, %v860
  %862 = vdwg.mxu0
  %863 = vmatpush.msra.mxu0 0.0
  %864 = vmatpush.msra.mxu0 0.0
  %865 = vmatpush.msra.mxu0 0.0
  %866 = vmatpush.msra.mxu0 0.0
  %867 = vmatpush.msra.mxu0 0.0
  %868 = vmatpush.msra.mxu0 0.0
  %869 = vmatpush.msra.mxu0 0.0
  %870 = vmatpush.msra.mxu0 0.0
  %871 = vmatpush.msra.mxu0 0.0
  %872 = vmatpush.msra.mxu0 0.0
  %873 = vmatpush.msra.mxu0 0.0
  %874 = vmatpush.msra.mxu0 0.0
  %875 = vmatpush.msra.mxu0 0.0
  %876 = vmatpush.msra.mxu0 0.0
  %877 = vmatpush.msra.mxu0 0.0
  %878 = vmatpush.msra.mxu0 %v792
  %879 = vmatmul.f32.gmra.mxu0 %v801
  %v880 = vpop.f32.mrf.mxu0
  %v881 = vadd.f32 0.0, %v880
  %882 = vdwg.mxu0
  %883 = vmatpush.msra.mxu0 0.0
  %884 = vmatpush.msra.mxu0 0.0
  %885 = vmatpush.msra.mxu0 0.0
  %886 = vmatpush.msra.mxu0 0.0
  %887 = vmatpush.msra.mxu0 0.0
  %888 = vmatpush.msra.mxu0 0.0
  %889 = vmatpush.msra.mxu0 0.0
  %890 = vmatpush.msra.mxu0 0.0
  %891 = vmatpush.msra.mxu0 0.0
  %892 = vmatpush.msra.mxu0 0.0
  %893 = vmatpush.msra.mxu0 0.0
  %894 = vmatpush.msra.mxu0 0.0
  %895 = vmatpush.msra.mxu0 0.0
  %896 = vmatpush.msra.mxu0 0.0
  %897 = vmatpush.msra.mxu0 0.0
  %898 = vmatpush.msra.mxu0 %v793
  %899 = vmatmul.f32.gmra.mxu0 %v801
  %v900 = vpop.f32.mrf.mxu0
  %v901 = vadd.f32 0.0, %v900
  %902 = vdwg.mxu0
  %903 = vmatpush.msra.mxu0 0.0
  %904 = vmatpush.msra.mxu0 0.0
  %905 = vmatpush.msra.mxu0 0.0
  %906 = vmatpush.msra.mxu0 0.0
  %907 = vmatpush.msra.mxu0 0.0
  %908 = vmatpush.msra.mxu0 0.0
  %909 = vmatpush.msra.mxu0 0.0
  %910 = vmatpush.msra.mxu0 0.0
  %911 = vmatpush.msra.mxu0 0.0
  %912 = vmatpush.msra.mxu0 0.0
  %913 = vmatpush.msra.mxu0 0.0
  %914 = vmatpush.msra.mxu0 0.0
  %915 = vmatpush.msra.mxu0 0.0
  %916 = vmatpush.msra.mxu0 0.0
  %917 = vmatpush.msra.mxu0 0.0
  %918 = vmatpush.msra.mxu0 %v787
  %919 = vmatmul.f32.gmra.mxu0 %v801
  %v920 = vpop.f32.mrf.mxu0
  %v921 = vadd.f32 0.0, %v920
  %922 = vdwg.mxu0
  %v923 = vadd.f32 %v768, %v821
  %v924 = vadd.f32 %v769, %v841
  %v925 = vadd.f32 %v770, %v861
  %v926 = vadd.f32 %v771, %v881
  %v927 = vadd.f32 %v772, %v901
  %v928 = vadd.f32 %v773, %v921
  %s929 = scalar_lea.vmem %s1, 48
  %v930 = vld [vmem:[%s929] sm:$0xff]
  %931 = vrot.lane.b32.xlu0 %v24, 92
  %v932 = vpop.permute.xlu0 %931
  %933 = vrot.lane.b32.xlu0 %v25, 92
  %v934 = vpop.permute.xlu0 %933
  %935 = vrot.lane.b32.xlu0 %v26, 92
  %v936 = vpop.permute.xlu0 %935
  %937 = vrot.lane.b32.xlu0 %v27, 92
  %v938 = vpop.permute.xlu0 %937
  %939 = vrot.lane.b32.xlu0 %v28, 92
  %v940 = vpop.permute.xlu0 %939
  %941 = vrot.lane.b32.xlu0 %v29, 92
  %v942 = vpop.permute.xlu0 %941
  %vm943 = vcmask 752640
  %v944 = vsel %vm943, %v932, %v934
  %v945 = vsel %vm943, %v934, %v936
  %v946 = vsel %vm943, %v936, %v938
  %v947 = vsel %vm943, %v938, %v940
  %v948 = vsel %vm943, %v940, %v942
  %v956 = vsel %vm62, %v930, 0
  %958 = vmatpush.msra.mxu0 0.0
  %959 = vmatpush.msra.mxu0 0.0
  %960 = vmatpush.msra.mxu0 0.0
  %961 = vmatpush.msra.mxu0 0.0
  %962 = vmatpush.msra.mxu0 0.0
  %963 = vmatpush.msra.mxu0 0.0
  %964 = vmatpush.msra.mxu0 0.0
  %965 = vmatpush.msra.mxu0 0.0
  %966 = vmatpush.msra.mxu0 0.0
  %967 = vmatpush.msra.mxu0 0.0
  %968 = vmatpush.msra.mxu0 0.0
  %969 = vmatpush.msra.mxu0 0.0
  %970 = vmatpush.msra.mxu0 0.0
  %971 = vmatpush.msra.mxu0 0.0
  %972 = vmatpush.msra.mxu0 0.0
  %973 = vmatpush.msra.mxu0 %v944
  %974 = vmatmul.f32.gmra.mxu0 %v956
  %v975 = vpop.f32.mrf.mxu0
  %v976 = vadd.f32 0.0, %v975
  %977 = vdwg.mxu0
  %978 = vmatpush.msra.mxu0 0.0
  %979 = vmatpush.msra.mxu0 0.0
  %980 = vmatpush.msra.mxu0 0.0
  %981 = vmatpush.msra.mxu0 0.0
  %982 = vmatpush.msra.mxu0 0.0
  %983 = vmatpush.msra.mxu0 0.0
  %984 = vmatpush.msra.mxu0 0.0
  %985 = vmatpush.msra.mxu0 0.0
  %986 = vmatpush.msra.mxu0 0.0
  %987 = vmatpush.msra.mxu0 0.0
  %988 = vmatpush.msra.mxu0 0.0
  %989 = vmatpush.msra.mxu0 0.0
  %990 = vmatpush.msra.mxu0 0.0
  %991 = vmatpush.msra.mxu0 0.0
  %992 = vmatpush.msra.mxu0 0.0
  %993 = vmatpush.msra.mxu0 %v945
  %994 = vmatmul.f32.gmra.mxu0 %v956
  %v995 = vpop.f32.mrf.mxu0
  %v996 = vadd.f32 0.0, %v995
  %997 = vdwg.mxu0
  %998 = vmatpush.msra.mxu0 0.0
  %999 = vmatpush.msra.mxu0 0.0
  %1000 = vmatpush.msra.mxu0 0.0
  %1001 = vmatpush.msra.mxu0 0.0
  %1002 = vmatpush.msra.mxu0 0.0
  %1003 = vmatpush.msra.mxu0 0.0
  %1004 = vmatpush.msra.mxu0 0.0
  %1005 = vmatpush.msra.mxu0 0.0
  %1006 = vmatpush.msra.mxu0 0.0
  %1007 = vmatpush.msra.mxu0 0.0
  %1008 = vmatpush.msra.mxu0 0.0
  %1009 = vmatpush.msra.mxu0 0.0
  %1010 = vmatpush.msra.mxu0 0.0
  %1011 = vmatpush.msra.mxu0 0.0
  %1012 = vmatpush.msra.mxu0 0.0
  %1013 = vmatpush.msra.mxu0 %v946
  %1014 = vmatmul.f32.gmra.mxu0 %v956
  %v1015 = vpop.f32.mrf.mxu0
  %v1016 = vadd.f32 0.0, %v1015
  %1017 = vdwg.mxu0
  %1018 = vmatpush.msra.mxu0 0.0
  %1019 = vmatpush.msra.mxu0 0.0
  %1020 = vmatpush.msra.mxu0 0.0
  %1021 = vmatpush.msra.mxu0 0.0
  %1022 = vmatpush.msra.mxu0 0.0
  %1023 = vmatpush.msra.mxu0 0.0
  %1024 = vmatpush.msra.mxu0 0.0
  %1025 = vmatpush.msra.mxu0 0.0
  %1026 = vmatpush.msra.mxu0 0.0
  %1027 = vmatpush.msra.mxu0 0.0
  %1028 = vmatpush.msra.mxu0 0.0
  %1029 = vmatpush.msra.mxu0 0.0
  %1030 = vmatpush.msra.mxu0 0.0
  %1031 = vmatpush.msra.mxu0 0.0
  %1032 = vmatpush.msra.mxu0 0.0
  %1033 = vmatpush.msra.mxu0 %v947
  %1034 = vmatmul.f32.gmra.mxu0 %v956
  %v1035 = vpop.f32.mrf.mxu0
  %v1036 = vadd.f32 0.0, %v1035
  %1037 = vdwg.mxu0
  %1038 = vmatpush.msra.mxu0 0.0
  %1039 = vmatpush.msra.mxu0 0.0
  %1040 = vmatpush.msra.mxu0 0.0
  %1041 = vmatpush.msra.mxu0 0.0
  %1042 = vmatpush.msra.mxu0 0.0
  %1043 = vmatpush.msra.mxu0 0.0
  %1044 = vmatpush.msra.mxu0 0.0
  %1045 = vmatpush.msra.mxu0 0.0
  %1046 = vmatpush.msra.mxu0 0.0
  %1047 = vmatpush.msra.mxu0 0.0
  %1048 = vmatpush.msra.mxu0 0.0
  %1049 = vmatpush.msra.mxu0 0.0
  %1050 = vmatpush.msra.mxu0 0.0
  %1051 = vmatpush.msra.mxu0 0.0
  %1052 = vmatpush.msra.mxu0 0.0
  %1053 = vmatpush.msra.mxu0 %v948
  %1054 = vmatmul.f32.gmra.mxu0 %v956
  %v1055 = vpop.f32.mrf.mxu0
  %v1056 = vadd.f32 0.0, %v1055
  %1057 = vdwg.mxu0
  %1058 = vmatpush.msra.mxu0 0.0
  %1059 = vmatpush.msra.mxu0 0.0
  %1060 = vmatpush.msra.mxu0 0.0
  %1061 = vmatpush.msra.mxu0 0.0
  %1062 = vmatpush.msra.mxu0 0.0
  %1063 = vmatpush.msra.mxu0 0.0
  %1064 = vmatpush.msra.mxu0 0.0
  %1065 = vmatpush.msra.mxu0 0.0
  %1066 = vmatpush.msra.mxu0 0.0
  %1067 = vmatpush.msra.mxu0 0.0
  %1068 = vmatpush.msra.mxu0 0.0
  %1069 = vmatpush.msra.mxu0 0.0
  %1070 = vmatpush.msra.mxu0 0.0
  %1071 = vmatpush.msra.mxu0 0.0
  %1072 = vmatpush.msra.mxu0 0.0
  %1073 = vmatpush.msra.mxu0 %v942
  %1074 = vmatmul.f32.gmra.mxu0 %v956
  %v1075 = vpop.f32.mrf.mxu0
  %v1076 = vadd.f32 0.0, %v1075
  %1077 = vdwg.mxu0
  %v1078 = vadd.f32 %v923, %v976
  %v1079 = vadd.f32 %v924, %v996
  %v1080 = vadd.f32 %v925, %v1016
  %v1081 = vadd.f32 %v926, %v1036
  %v1082 = vadd.f32 %v927, %v1056
  %v1083 = vadd.f32 %v928, %v1076
  %s1084 = scalar_lea.vmem %s1, 56
  %v1085 = vld [vmem:[%s1084] sm:$0xff]
  %1086 = vrot.lane.b32.xlu0 %v24, 91
  %v1087 = vpop.permute.xlu0 %1086
  %1088 = vrot.lane.b32.xlu0 %v25, 91
  %v1089 = vpop.permute.xlu0 %1088
  %1090 = vrot.lane.b32.xlu0 %v26, 91
  %v1091 = vpop.permute.xlu0 %1090
  %1092 = vrot.lane.b32.xlu0 %v27, 91
  %v1093 = vpop.permute.xlu0 %1092
  %1094 = vrot.lane.b32.xlu0 %v28, 91
  %v1095 = vpop.permute.xlu0 %1094
  %1096 = vrot.lane.b32.xlu0 %v29, 91
  %v1097 = vpop.permute.xlu0 %1096
  %vm1098 = vcmask 744448
  %v1099 = vsel %vm1098, %v1087, %v1089
  %v1100 = vsel %vm1098, %v1089, %v1091
  %v1101 = vsel %vm1098, %v1091, %v1093
  %v1102 = vsel %vm1098, %v1093, %v1095
  %v1103 = vsel %vm1098, %v1095, %v1097
  %v1111 = vsel %vm62, %v1085, 0
  %1113 = vmatpush.msra.mxu0 0.0
  %1114 = vmatpush.msra.mxu0 0.0
  %1115 = vmatpush.msra.mxu0 0.0
  %1116 = vmatpush.msra.mxu0 0.0
  %1117 = vmatpush.msra.mxu0 0.0
  %1118 = vmatpush.msra.mxu0 0.0
  %1119 = vmatpush.msra.mxu0 0.0
  %1120 = vmatpush.msra.mxu0 0.0
  %1121 = vmatpush.msra.mxu0 0.0
  %1122 = vmatpush.msra.mxu0 0.0
  %1123 = vmatpush.msra.mxu0 0.0
  %1124 = vmatpush.msra.mxu0 0.0
  %1125 = vmatpush.msra.mxu0 0.0
  %1126 = vmatpush.msra.mxu0 0.0
  %1127 = vmatpush.msra.mxu0 0.0
  %1128 = vmatpush.msra.mxu0 %v1099
  %1129 = vmatmul.f32.gmra.mxu0 %v1111
  %v1130 = vpop.f32.mrf.mxu0
  %v1131 = vadd.f32 0.0, %v1130
  %1132 = vdwg.mxu0
  %1133 = vmatpush.msra.mxu0 0.0
  %1134 = vmatpush.msra.mxu0 0.0
  %1135 = vmatpush.msra.mxu0 0.0
  %1136 = vmatpush.msra.mxu0 0.0
  %1137 = vmatpush.msra.mxu0 0.0
  %1138 = vmatpush.msra.mxu0 0.0
  %1139 = vmatpush.msra.mxu0 0.0
  %1140 = vmatpush.msra.mxu0 0.0
  %1141 = vmatpush.msra.mxu0 0.0
  %1142 = vmatpush.msra.mxu0 0.0
  %1143 = vmatpush.msra.mxu0 0.0
  %1144 = vmatpush.msra.mxu0 0.0
  %1145 = vmatpush.msra.mxu0 0.0
  %1146 = vmatpush.msra.mxu0 0.0
  %1147 = vmatpush.msra.mxu0 0.0
  %1148 = vmatpush.msra.mxu0 %v1100
  %1149 = vmatmul.f32.gmra.mxu0 %v1111
  %v1150 = vpop.f32.mrf.mxu0
  %v1151 = vadd.f32 0.0, %v1150
  %1152 = vdwg.mxu0
  %1153 = vmatpush.msra.mxu0 0.0
  %1154 = vmatpush.msra.mxu0 0.0
  %1155 = vmatpush.msra.mxu0 0.0
  %1156 = vmatpush.msra.mxu0 0.0
  %1157 = vmatpush.msra.mxu0 0.0
  %1158 = vmatpush.msra.mxu0 0.0
  %1159 = vmatpush.msra.mxu0 0.0
  %1160 = vmatpush.msra.mxu0 0.0
  %1161 = vmatpush.msra.mxu0 0.0
  %1162 = vmatpush.msra.mxu0 0.0
  %1163 = vmatpush.msra.mxu0 0.0
  %1164 = vmatpush.msra.mxu0 0.0
  %1165 = vmatpush.msra.mxu0 0.0
  %1166 = vmatpush.msra.mxu0 0.0
  %1167 = vmatpush.msra.mxu0 0.0
  %1168 = vmatpush.msra.mxu0 %v1101
  %1169 = vmatmul.f32.gmra.mxu0 %v1111
  %v1170 = vpop.f32.mrf.mxu0
  %v1171 = vadd.f32 0.0, %v1170
  %1172 = vdwg.mxu0
  %1173 = vmatpush.msra.mxu0 0.0
  %1174 = vmatpush.msra.mxu0 0.0
  %1175 = vmatpush.msra.mxu0 0.0
  %1176 = vmatpush.msra.mxu0 0.0
  %1177 = vmatpush.msra.mxu0 0.0
  %1178 = vmatpush.msra.mxu0 0.0
  %1179 = vmatpush.msra.mxu0 0.0
  %1180 = vmatpush.msra.mxu0 0.0
  %1181 = vmatpush.msra.mxu0 0.0
  %1182 = vmatpush.msra.mxu0 0.0
  %1183 = vmatpush.msra.mxu0 0.0
  %1184 = vmatpush.msra.mxu0 0.0
  %1185 = vmatpush.msra.mxu0 0.0
  %1186 = vmatpush.msra.mxu0 0.0
  %1187 = vmatpush.msra.mxu0 0.0
  %1188 = vmatpush.msra.mxu0 %v1102
  %1189 = vmatmul.f32.gmra.mxu0 %v1111
  %v1190 = vpop.f32.mrf.mxu0
  %v1191 = vadd.f32 0.0, %v1190
  %1192 = vdwg.mxu0
  %1193 = vmatpush.msra.mxu0 0.0
  %1194 = vmatpush.msra.mxu0 0.0
  %1195 = vmatpush.msra.mxu0 0.0
  %1196 = vmatpush.msra.mxu0 0.0
  %1197 = vmatpush.msra.mxu0 0.0
  %1198 = vmatpush.msra.mxu0 0.0
  %1199 = vmatpush.msra.mxu0 0.0
  %1200 = vmatpush.msra.mxu0 0.0
  %1201 = vmatpush.msra.mxu0 0.0
  %1202 = vmatpush.msra.mxu0 0.0
  %1203 = vmatpush.msra.mxu0 0.0
  %1204 = vmatpush.msra.mxu0 0.0
  %1205 = vmatpush.msra.mxu0 0.0
  %1206 = vmatpush.msra.mxu0 0.0
  %1207 = vmatpush.msra.mxu0 0.0
  %1208 = vmatpush.msra.mxu0 %v1103
  %1209 = vmatmul.f32.gmra.mxu0 %v1111
  %v1210 = vpop.f32.mrf.mxu0
  %v1211 = vadd.f32 0.0, %v1210
  %1212 = vdwg.mxu0
  %1213 = vmatpush.msra.mxu0 0.0
  %1214 = vmatpush.msra.mxu0 0.0
  %1215 = vmatpush.msra.mxu0 0.0
  %1216 = vmatpush.msra.mxu0 0.0
  %1217 = vmatpush.msra.mxu0 0.0
  %1218 = vmatpush.msra.mxu0 0.0
  %1219 = vmatpush.msra.mxu0 0.0
  %1220 = vmatpush.msra.mxu0 0.0
  %1221 = vmatpush.msra.mxu0 0.0
  %1222 = vmatpush.msra.mxu0 0.0
  %1223 = vmatpush.msra.mxu0 0.0
  %1224 = vmatpush.msra.mxu0 0.0
  %1225 = vmatpush.msra.mxu0 0.0
  %1226 = vmatpush.msra.mxu0 0.0
  %1227 = vmatpush.msra.mxu0 0.0
  %1228 = vmatpush.msra.mxu0 %v1097
  %1229 = vmatmul.f32.gmra.mxu0 %v1111
  %v1230 = vpop.f32.mrf.mxu0
  %v1231 = vadd.f32 0.0, %v1230
  %1232 = vdwg.mxu0
  %v1233 = vadd.f32 %v1078, %v1131
  %v1234 = vadd.f32 %v1079, %v1151
  %v1235 = vadd.f32 %v1080, %v1171
  %v1236 = vadd.f32 %v1081, %v1191
  %v1237 = vadd.f32 %v1082, %v1211
  %v1238 = vadd.f32 %v1083, %v1231
  %s1239 = scalar_lea.vmem %s1, 64
  %v1240 = vld [vmem:[%s1239] sm:$0xff]
  %1241 = vrot.lane.b32.xlu0 %v24, 90
  %v1242 = vpop.permute.xlu0 %1241
  %1243 = vrot.lane.b32.xlu0 %v25, 90
  %v1244 = vpop.permute.xlu0 %1243
  %1245 = vrot.lane.b32.xlu0 %v26, 90
  %v1246 = vpop.permute.xlu0 %1245
  %1247 = vrot.lane.b32.xlu0 %v27, 90
  %v1248 = vpop.permute.xlu0 %1247
  %1249 = vrot.lane.b32.xlu0 %v28, 90
  %v1250 = vpop.permute.xlu0 %1249
  %1251 = vrot.lane.b32.xlu0 %v29, 90
  %v1252 = vpop.permute.xlu0 %1251
  %vm1253 = vcmask 736256
  %v1254 = vsel %vm1253, %v1242, %v1244
  %v1255 = vsel %vm1253, %v1244, %v1246
  %v1256 = vsel %vm1253, %v1246, %v1248
  %v1257 = vsel %vm1253, %v1248, %v1250
  %v1258 = vsel %vm1253, %v1250, %v1252
  %v1266 = vsel %vm62, %v1240, 0
  %1268 = vmatpush.msra.mxu0 0.0
  %1269 = vmatpush.msra.mxu0 0.0
  %1270 = vmatpush.msra.mxu0 0.0
  %1271 = vmatpush.msra.mxu0 0.0
  %1272 = vmatpush.msra.mxu0 0.0
  %1273 = vmatpush.msra.mxu0 0.0
  %1274 = vmatpush.msra.mxu0 0.0
  %1275 = vmatpush.msra.mxu0 0.0
  %1276 = vmatpush.msra.mxu0 0.0
  %1277 = vmatpush.msra.mxu0 0.0
  %1278 = vmatpush.msra.mxu0 0.0
  %1279 = vmatpush.msra.mxu0 0.0
  %1280 = vmatpush.msra.mxu0 0.0
  %1281 = vmatpush.msra.mxu0 0.0
  %1282 = vmatpush.msra.mxu0 0.0
  %1283 = vmatpush.msra.mxu0 %v1254
  %1284 = vmatmul.f32.gmra.mxu0 %v1266
  %v1285 = vpop.f32.mrf.mxu0
  %v1286 = vadd.f32 0.0, %v1285
  %1287 = vdwg.mxu0
  %1288 = vmatpush.msra.mxu0 0.0
  %1289 = vmatpush.msra.mxu0 0.0
  %1290 = vmatpush.msra.mxu0 0.0
  %1291 = vmatpush.msra.mxu0 0.0
  %1292 = vmatpush.msra.mxu0 0.0
  %1293 = vmatpush.msra.mxu0 0.0
  %1294 = vmatpush.msra.mxu0 0.0
  %1295 = vmatpush.msra.mxu0 0.0
  %1296 = vmatpush.msra.mxu0 0.0
  %1297 = vmatpush.msra.mxu0 0.0
  %1298 = vmatpush.msra.mxu0 0.0
  %1299 = vmatpush.msra.mxu0 0.0
  %1300 = vmatpush.msra.mxu0 0.0
  %1301 = vmatpush.msra.mxu0 0.0
  %1302 = vmatpush.msra.mxu0 0.0
  %1303 = vmatpush.msra.mxu0 %v1255
  %1304 = vmatmul.f32.gmra.mxu0 %v1266
  %v1305 = vpop.f32.mrf.mxu0
  %v1306 = vadd.f32 0.0, %v1305
  %1307 = vdwg.mxu0
  %1308 = vmatpush.msra.mxu0 0.0
  %1309 = vmatpush.msra.mxu0 0.0
  %1310 = vmatpush.msra.mxu0 0.0
  %1311 = vmatpush.msra.mxu0 0.0
  %1312 = vmatpush.msra.mxu0 0.0
  %1313 = vmatpush.msra.mxu0 0.0
  %1314 = vmatpush.msra.mxu0 0.0
  %1315 = vmatpush.msra.mxu0 0.0
  %1316 = vmatpush.msra.mxu0 0.0
  %1317 = vmatpush.msra.mxu0 0.0
  %1318 = vmatpush.msra.mxu0 0.0
  %1319 = vmatpush.msra.mxu0 0.0
  %1320 = vmatpush.msra.mxu0 0.0
  %1321 = vmatpush.msra.mxu0 0.0
  %1322 = vmatpush.msra.mxu0 0.0
  %1323 = vmatpush.msra.mxu0 %v1256
  %1324 = vmatmul.f32.gmra.mxu0 %v1266
  %v1325 = vpop.f32.mrf.mxu0
  %v1326 = vadd.f32 0.0, %v1325
  %1327 = vdwg.mxu0
  %1328 = vmatpush.msra.mxu0 0.0
  %1329 = vmatpush.msra.mxu0 0.0
  %1330 = vmatpush.msra.mxu0 0.0
  %1331 = vmatpush.msra.mxu0 0.0
  %1332 = vmatpush.msra.mxu0 0.0
  %1333 = vmatpush.msra.mxu0 0.0
  %1334 = vmatpush.msra.mxu0 0.0
  %1335 = vmatpush.msra.mxu0 0.0
  %1336 = vmatpush.msra.mxu0 0.0
  %1337 = vmatpush.msra.mxu0 0.0
  %1338 = vmatpush.msra.mxu0 0.0
  %1339 = vmatpush.msra.mxu0 0.0
  %1340 = vmatpush.msra.mxu0 0.0
  %1341 = vmatpush.msra.mxu0 0.0
  %1342 = vmatpush.msra.mxu0 0.0
  %1343 = vmatpush.msra.mxu0 %v1257
  %1344 = vmatmul.f32.gmra.mxu0 %v1266
  %v1345 = vpop.f32.mrf.mxu0
  %v1346 = vadd.f32 0.0, %v1345
  %1347 = vdwg.mxu0
  %1348 = vmatpush.msra.mxu0 0.0
  %1349 = vmatpush.msra.mxu0 0.0
  %1350 = vmatpush.msra.mxu0 0.0
  %1351 = vmatpush.msra.mxu0 0.0
  %1352 = vmatpush.msra.mxu0 0.0
  %1353 = vmatpush.msra.mxu0 0.0
  %1354 = vmatpush.msra.mxu0 0.0
  %1355 = vmatpush.msra.mxu0 0.0
  %1356 = vmatpush.msra.mxu0 0.0
  %1357 = vmatpush.msra.mxu0 0.0
  %1358 = vmatpush.msra.mxu0 0.0
  %1359 = vmatpush.msra.mxu0 0.0
  %1360 = vmatpush.msra.mxu0 0.0
  %1361 = vmatpush.msra.mxu0 0.0
  %1362 = vmatpush.msra.mxu0 0.0
  %1363 = vmatpush.msra.mxu0 %v1258
  %1364 = vmatmul.f32.gmra.mxu0 %v1266
  %v1365 = vpop.f32.mrf.mxu0
  %v1366 = vadd.f32 0.0, %v1365
  %1367 = vdwg.mxu0
  %1368 = vmatpush.msra.mxu0 0.0
  %1369 = vmatpush.msra.mxu0 0.0
  %1370 = vmatpush.msra.mxu0 0.0
  %1371 = vmatpush.msra.mxu0 0.0
  %1372 = vmatpush.msra.mxu0 0.0
  %1373 = vmatpush.msra.mxu0 0.0
  %1374 = vmatpush.msra.mxu0 0.0
  %1375 = vmatpush.msra.mxu0 0.0
  %1376 = vmatpush.msra.mxu0 0.0
  %1377 = vmatpush.msra.mxu0 0.0
  %1378 = vmatpush.msra.mxu0 0.0
  %1379 = vmatpush.msra.mxu0 0.0
  %1380 = vmatpush.msra.mxu0 0.0
  %1381 = vmatpush.msra.mxu0 0.0
  %1382 = vmatpush.msra.mxu0 0.0
  %1383 = vmatpush.msra.mxu0 %v1252
  %1384 = vmatmul.f32.gmra.mxu0 %v1266
  %v1385 = vpop.f32.mrf.mxu0
  %v1386 = vadd.f32 0.0, %v1385
  %1387 = vdwg.mxu0
  %v1388 = vadd.f32 %v1233, %v1286
  %v1389 = vadd.f32 %v1234, %v1306
  %v1390 = vadd.f32 %v1235, %v1326
  %v1391 = vadd.f32 %v1236, %v1346
  %v1392 = vadd.f32 %v1237, %v1366
  %v1393 = vadd.f32 %v1238, %v1386
  %v1394 = vld [vmem:[%s2] sm:$0xff]
  %1396 = vset.pattern.permute.xlu0 0
  %1397 = vperm.xlu0 %1396, %v1394
  %v1398 = vpop.permute.xlu0 %1397
  %v1400 = vadd.f32 %v1388, %v1398
  %v1401 = vadd.f32 %v1389, %v1398
  %v1402 = vadd.f32 %v1390, %v1398
  %v1403 = vadd.f32 %v1391, %v1398
  %v1404 = vadd.f32 %v1392, %v1398
  %v1405 = vadd.f32 %v1393, %v1398
  %v1406 = vld [vmem:[%s5] sm:$0x3f]
  %v1408 = vperm.slane %v1406, 0
  %v1409 = vperm.slane %v1406, 1
  %v1410 = vperm.slane %v1406, 2
  %v1411 = vperm.slane %v1406, 3
  %v1412 = vperm.slane %v1406, 4
  %v1413 = vperm.slane %v1406, 5
  %v1420 = vmul.f32 %v1400, %v1408
  %v1421 = vmul.f32 %v1401, %v1409
  %v1422 = vmul.f32 %v1402, %v1410
  %v1423 = vmul.f32 %v1403, %v1411
  %v1424 = vmul.f32 %v1404, %v1412
  %v1425 = vmul.f32 %v1405, %v1413
  %v1426 = vadd.f32 %v1420, %v1421
  %v1427 = vadd.f32 %v1426, %v1422
  %v1428 = vadd.f32 %v1427, %v1423
  %v1429 = vadd.f32 %v1428, %v1424
  %v1430 = vsel %vm62, %v1425, 0.0
  %v1431 = vadd.f32 %v1429, %v1430
  %1432 = vadd.xlane.f32.xlu0 %v1431
  %v1433 = vpop.xlane.xlu0 %1432
  %v1434 = vmul.f32 %v1433, 0.001953125
  %v1435 = vsub.f32 %v1400, %v1434
  %v1436 = vsub.f32 %v1401, %v1434
  %v1437 = vsub.f32 %v1402, %v1434
  %v1438 = vsub.f32 %v1403, %v1434
  %v1439 = vsub.f32 %v1404, %v1434
  %v1440 = vsub.f32 %v1405, %v1434
  %v1441 = vmul.f32 %v1435, %v1408
  %v1442 = vmul.f32 %v1436, %v1409
  %v1443 = vmul.f32 %v1437, %v1410
  %v1444 = vmul.f32 %v1438, %v1411
  %v1445 = vmul.f32 %v1439, %v1412
  %v1446 = vmul.f32 %v1440, %v1413
  %v1447 = vmul.f32 %v1441, %v1441
  %v1448 = vmul.f32 %v1442, %v1442
  %v1449 = vmul.f32 %v1443, %v1443
  %v1450 = vmul.f32 %v1444, %v1444
  %v1451 = vmul.f32 %v1445, %v1445
  %v1452 = vmul.f32 %v1446, %v1446
  %v1453 = vadd.f32 %v1447, %v1448
  %v1454 = vadd.f32 %v1453, %v1449
  %v1455 = vadd.f32 %v1454, %v1450
  %v1456 = vadd.f32 %v1455, %v1451
  %v1457 = vsel %vm62, %v1452, 0.0
  %v1458 = vadd.f32 %v1456, %v1457
  %1459 = vadd.xlane.f32.xlu0 %v1458
  %v1460 = vpop.xlane.xlu0 %1459
  %v1461 = vmul.f32 %v1460, 0.001953125
  %v1462 = vadd.f32 %v1461, 1e-05
  %v1463 = vrsqrt.pop %v1462
  %v1464 = vmul.f32 %v1463, %v1462
  %v1465 = vmul.f32 %v1464, %v1463
  %v1466 = vmul.f32 0.5, %v1465
  %v1467 = vsub.f32 1.5, %v1466
  %v1468 = vmul.f32 %v1463, %v1467
  %vm1469 = vweird.f32 %v1462
  %vm1470 = vweird.f32 %v1463
  %vm1471 = vmor %vm1469, %vm1470
  %v1472 = vsel %vm1471, %v1463, %v1468
  %v1473 = vmul.f32 %v1435, %v1472
  %v1474 = vmul.f32 %v1436, %v1472
  %v1475 = vmul.f32 %v1437, %v1472
  %v1476 = vmul.f32 %v1438, %v1472
  %v1477 = vmul.f32 %v1439, %v1472
  %v1478 = vmul.f32 %v1440, %v1472
  %v1479 = vld [vmem:[%s3] sm:$0xff]
  %1481 = vset.pattern.permute.xlu0 0
  %1482 = vperm.xlu0 %1481, %v1479
  %v1483 = vpop.permute.xlu0 %1482
  %v1485 = vmul.f32 %v1473, %v1483
  %v1486 = vmul.f32 %v1474, %v1483
  %v1487 = vmul.f32 %v1475, %v1483
  %v1488 = vmul.f32 %v1476, %v1483
  %v1489 = vmul.f32 %v1477, %v1483
  %v1490 = vmul.f32 %v1478, %v1483
  %v1491 = vld [vmem:[%s4] sm:$0xff]
  %1493 = vset.pattern.permute.xlu0 0
  %1494 = vperm.xlu0 %1493, %v1491
  %v1495 = vpop.permute.xlu0 %1494
  %v1497 = vadd.f32 %v1485, %v1495
  %v1498 = vadd.f32 %v1486, %v1495
  %v1499 = vadd.f32 %v1487, %v1495
  %v1500 = vadd.f32 %v1488, %v1495
  %v1501 = vadd.f32 %v1489, %v1495
  %v1502 = vadd.f32 %v1490, %v1495
  %v1503 = vmax.f32 %v1497, 0.0
  %v1504 = vmax.f32 %v1498, 0.0
  %v1505 = vmax.f32 %v1499, 0.0
  %v1506 = vmax.f32 %v1500, 0.0
  %v1507 = vmax.f32 %v1501, 0.0
  %v1508 = vmax.f32 %v1502, 0.0
  %v1509 = vmul.f32 %v1503, %v1408
  %v1510 = vmul.f32 %v1504, %v1409
  %v1511 = vmul.f32 %v1505, %v1410
  %v1512 = vmul.f32 %v1506, %v1411
  %v1513 = vmul.f32 %v1507, %v1412
  %v1514 = vmul.f32 %v1508, %v1413
  %1515 = vst [vmem:[%s6] sm:$0xff] %v1509
  %1516 = vst [vmem:[%s6 + $0x8] sm:$0xff] %v1510
  %1517 = vst [vmem:[%s6 + $0x10] sm:$0xff] %v1511
  %1518 = vst [vmem:[%s6 + $0x18] sm:$0xff] %v1512
  %1519 = vst [vmem:[%s6 + $0x20] sm:$0xff] %v1513
  %1520 = vst.msk [vmem:[%s6 + $0x28] sm:$0xff] %vm62, %v1514
  // Predicated region
  $region26: #{network_gen_auto_forward.7} parent=0 // pred_check
    _
  $region27: #{network_gen_auto_forward.7} parent=0 // pred_check_branch
    %1522 = sbr.rel (0) target = $region29
  $region28: #{network_gen_auto_forward.7} parent=0 // pred_region
    _
  $region29: #{network_gen_auto_forward.7} parent=0 // pred_fallthru
    _
  // Predicated region
  $region30: #{network_gen_auto_forward.7} parent=0 // pred_check
    _
  $region31: #{network_gen_auto_forward.7} parent=0 // pred_check_branch
    %1524 = sbr.rel (0) target = $region33
  $region32: #{network_gen_auto_forward.7} parent=0 // pred_region
    _
  $region33: #{network_gen_auto_forward.7} parent=0 // pred_fallthru
    _

// kernel: network_gen_auto_forward.8
$region0: #{network_gen_auto_forward.8}
  #allocation0 [shape = 'u32[]', space=smem, size = 0x4, offset = 0x4, fixed_abs, tag = 'smem constant byte address 0x4 - core index']
  #allocation1 [shape = 'u32[72,128]{1,0:T(1,128)}', space=vmem, size = 0x9000, scoped, tag = 'internal scratch']
  %s0 = inlined_call_operand.vmem [shape: f32[8,2382], index: 0, kind: input, shape index: {}]
  %s1 = inlined_call_operand.vmem [shape: f32[9,8,8], index: 1, kind: input, shape index: {}]
  %s2 = inlined_call_operand.vmem [shape: f32[8,1], index: 2, kind: input, shape index: {}]
  %s3 = inlined_call_operand.vmem [shape: f32[8,1], index: 3, kind: input, shape index: {}]
  %s4 = inlined_call_operand.vmem [shape: f32[8,1], index: 4, kind: input, shape index: {}]
  %s5 = inlined_call_operand.vmem [shape: f32[1,2312], index: 5, kind: input, shape index: {}]
  %s6 = inlined_call_operand.vmem [shape: f32[8,2312], index: 6, kind: output, shape index: {}]
  %s7 = sld [smem:[#allocation0]]
  $region34: #{network_gen_auto_forward.8} parent=0
    _
  %s9 = ssub.s32 1, %s7
  %s10 = scalar_select 0, %s9, %s7
  // Predicated region
  $region2: #{network_gen_auto_forward.8} parent=0 // pred_check
    _
  $region3: #{network_gen_auto_forward.8} parent=0 // pred_check_branch
    %12 = sbr.rel (0) target = $region5
  $region4: #{network_gen_auto_forward.8} parent=0 // pred_region
    _
  $region5: #{network_gen_auto_forward.8} parent=0 // pred_fallthru
    _
  // Predicated region
  $region6: #{network_gen_auto_forward.8} parent=0 // pred_check
    _
  $region7: #{network_gen_auto_forward.8} parent=0 // pred_check_branch
    %14 = sbr.rel (0) target = $region9
  $region8: #{network_gen_auto_forward.8} parent=0 // pred_region
    _
  $region9: #{network_gen_auto_forward.8} parent=0 // pred_fallthru
    _
  // Predicated region
  $region10: #{network_gen_auto_forward.8} parent=0 // pred_check
    _
  $region11: #{network_gen_auto_forward.8} parent=0 // pred_check_branch
    %16 = sbr.rel (0) target = $region13
  $region12: #{network_gen_auto_forward.8} parent=0 // pred_region
    _
  $region13: #{network_gen_auto_forward.8} parent=0 // pred_fallthru
    _
  // Predicated region
  $region14: #{network_gen_auto_forward.8} parent=0 // pred_check
    _
  $region15: #{network_gen_auto_forward.8} parent=0 // pred_check_branch
    %18 = sbr.rel (0) target = $region17
  $region16: #{network_gen_auto_forward.8} parent=0 // pred_region
    _
  $region17: #{network_gen_auto_forward.8} parent=0 // pred_fallthru
    _
  // Predicated region
  $region18: #{network_gen_auto_forward.8} parent=0 // pred_check
    _
  $region19: #{network_gen_auto_forward.8} parent=0 // pred_check_branch
    %20 = sbr.rel (0) target = $region21
  $region20: #{network_gen_auto_forward.8} parent=0 // pred_region
    _
  $region21: #{network_gen_auto_forward.8} parent=0 // pred_fallthru
    _
  // Predicated region
  $region22: #{network_gen_auto_forward.8} parent=0 // pred_check
    _
  $region23: #{network_gen_auto_forward.8} parent=0 // pred_check_branch
    %22 = sbr.rel (0) target = $region25
  $region24: #{network_gen_auto_forward.8} parent=0 // pred_region
    _
  $region25: #{network_gen_auto_forward.8} parent=0 // pred_fallthru
    _
  %v23 = vld [vmem:[%s1] sm:$0xff]
  %v24 = vld [vmem:[%s0] sm:$0xff]
  %v25 = vld [vmem:[%s0 + $0x8] sm:$0xff]
  %v26 = vld [vmem:[%s0 + $0x10] sm:$0xff]
  %v27 = vld [vmem:[%s0 + $0x18] sm:$0xff]
  %v28 = vld [vmem:[%s0 + $0x20] sm:$0xff]
  %v29 = vld [vmem:[%s0 + $0x28] sm:$0xff]
  %v30 = vld [vmem:[%s0 + $0x30] sm:$0xff]
  %v31 = vld [vmem:[%s0 + $0x38] sm:$0xff]
  %v32 = vld [vmem:[%s0 + $0x40] sm:$0xff]
  %v33 = vld [vmem:[%s0 + $0x48] sm:$0xff]
  %v34 = vld [vmem:[%s0 + $0x50] sm:$0xff]
  %v35 = vld [vmem:[%s0 + $0x58] sm:$0xff]
  %v36 = vld [vmem:[%s0 + $0x60] sm:$0xff]
  %v37 = vld [vmem:[%s0 + $0x68] sm:$0xff]
  %v38 = vld [vmem:[%s0 + $0x70] sm:$0xff]
  %v39 = vld [vmem:[%s0 + $0x78] sm:$0xff]
  %v40 = vld [vmem:[%s0 + $0x80] sm:$0xff]
  %v41 = vld [vmem:[%s0 + $0x88] sm:$0xff]
  %v42 = vld [vmem:[%s0 + $0x90] sm:$0xff]
  %s43 = scalar_lea.vmem %s1, 8
  %v44 = vld [vmem:[%s43] sm:$0xff]
  %64 = vrot.lane.b32.xlu0 %v24, 127
  %v65 = vpop.permute.xlu0 %64
  %66 = vrot.lane.b32.xlu0 %v25, 127
  %v67 = vpop.permute.xlu0 %66
  %68 = vrot.lane.b32.xlu0 %v26, 127
  %v69 = vpop.permute.xlu0 %68
  %70 = vrot.lane.b32.xlu0 %v27, 127
  %v71 = vpop.permute.xlu0 %70
  %72 = vrot.lane.b32.xlu0 %v28, 127
  %v73 = vpop.permute.xlu0 %72
  %74 = vrot.lane.b32.xlu0 %v29, 127
  %v75 = vpop.permute.xlu0 %74
  %76 = vrot.lane.b32.xlu0 %v30, 127
  %v77 = vpop.permute.xlu0 %76
  %78 = vrot.lane.b32.xlu0 %v31, 127
  %v79 = vpop.permute.xlu0 %78
  %80 = vrot.lane.b32.xlu0 %v32, 127
  %v81 = vpop.permute.xlu0 %80
  %82 = vrot.lane.b32.xlu0 %v33, 127
  %v83 = vpop.permute.xlu0 %82
  %84 = vrot.lane.b32.xlu0 %v34, 127
  %v85 = vpop.permute.xlu0 %84
  %86 = vrot.lane.b32.xlu0 %v35, 127
  %v87 = vpop.permute.xlu0 %86
  %88 = vrot.lane.b32.xlu0 %v36, 127
  %v89 = vpop.permute.xlu0 %88
  %90 = vrot.lane.b32.xlu0 %v37, 127
  %v91 = vpop.permute.xlu0 %90
  %92 = vrot.lane.b32.xlu0 %v38, 127
  %v93 = vpop.permute.xlu0 %92
  %94 = vrot.lane.b32.xlu0 %v39, 127
  %v95 = vpop.permute.xlu0 %94
  %96 = vrot.lane.b32.xlu0 %v40, 127
  %v97 = vpop.permute.xlu0 %96
  %98 = vrot.lane.b32.xlu0 %v41, 127
  %v99 = vpop.permute.xlu0 %98
  %100 = vrot.lane.b32.xlu0 %v42, 127
  %v101 = vpop.permute.xlu0 %100
  %vm102 = vcmask 1039360
  %v103 = vsel %vm102, %v65, %v67
  %v104 = vsel %vm102, %v67, %v69
  %v105 = vsel %vm102, %v69, %v71
  %v106 = vsel %vm102, %v71, %v73
  %v107 = vsel %vm102, %v73, %v75
  %v108 = vsel %vm102, %v75, %v77
  %v109 = vsel %vm102, %v77, %v79
  %v110 = vsel %vm102, %v79, %v81
  %v111 = vsel %vm102, %v81, %v83
  %v112 = vsel %vm102, %v83, %v85
  %v113 = vsel %vm102, %v85, %v87
  %v114 = vsel %vm102, %v87, %v89
  %v115 = vsel %vm102, %v89, %v91
  %v116 = vsel %vm102, %v91, %v93
  %v117 = vsel %vm102, %v93, %v95
  %v118 = vsel %vm102, %v95, %v97
  %v119 = vsel %vm102, %v97, %v99
  %v120 = vsel %vm102, %v99, %v101
  %vm140 = vcmask 64512
  %v142 = vsel %vm140, %v44, 0
  %144 = vmatpush.msra.mxu0 0.0
  %145 = vmatpush.msra.mxu0 0.0
  %146 = vmatpush.msra.mxu0 0.0
  %147 = vmatpush.msra.mxu0 0.0
  %148 = vmatpush.msra.mxu0 0.0
  %149 = vmatpush.msra.mxu0 0.0
  %150 = vmatpush.msra.mxu0 0.0
  %151 = vmatpush.msra.mxu0 0.0
  %152 = vmatpush.msra.mxu0 0.0
  %153 = vmatpush.msra.mxu0 0.0
  %154 = vmatpush.msra.mxu0 0.0
  %155 = vmatpush.msra.mxu0 0.0
  %156 = vmatpush.msra.mxu0 0.0
  %157 = vmatpush.msra.mxu0 0.0
  %158 = vmatpush.msra.mxu0 0.0
  %159 = vmatpush.msra.mxu0 %v103
  %160 = vmatmul.f32.gmra.mxu0 %v142
  %v161 = vpop.f32.mrf.mxu0
  %v162 = vadd.f32 0.0, %v161
  %163 = vdwg.mxu0
  %164 = vmatpush.msra.mxu0 0.0
  %165 = vmatpush.msra.mxu0 0.0
  %166 = vmatpush.msra.mxu0 0.0
  %167 = vmatpush.msra.mxu0 0.0
  %168 = vmatpush.msra.mxu0 0.0
  %169 = vmatpush.msra.mxu0 0.0
  %170 = vmatpush.msra.mxu0 0.0
  %171 = vmatpush.msra.mxu0 0.0
  %172 = vmatpush.msra.mxu0 0.0
  %173 = vmatpush.msra.mxu0 0.0
  %174 = vmatpush.msra.mxu0 0.0
  %175 = vmatpush.msra.mxu0 0.0
  %176 = vmatpush.msra.mxu0 0.0
  %177 = vmatpush.msra.mxu0 0.0
  %178 = vmatpush.msra.mxu0 0.0
  %179 = vmatpush.msra.mxu0 %v104
  %180 = vmatmul.f32.gmra.mxu0 %v142
  %v181 = vpop.f32.mrf.mxu0
  %v182 = vadd.f32 0.0, %v181
  %183 = vdwg.mxu0
  %184 = vmatpush.msra.mxu0 0.0
  %185 = vmatpush.msra.mxu0 0.0
  %186 = vmatpush.msra.mxu0 0.0
  %187 = vmatpush.msra.mxu0 0.0
  %188 = vmatpush.msra.mxu0 0.0
  %189 = vmatpush.msra.mxu0 0.0
  %190 = vmatpush.msra.mxu0 0.0
  %191 = vmatpush.msra.mxu0 0.0
  %192 = vmatpush.msra.mxu0 0.0
  %193 = vmatpush.msra.mxu0 0.0
  %194 = vmatpush.msra.mxu0 0.0
  %195 = vmatpush.msra.mxu0 0.0
  %196 = vmatpush.msra.mxu0 0.0
  %197 = vmatpush.msra.mxu0 0.0
  %198 = vmatpush.msra.mxu0 0.0
  %199 = vmatpush.msra.mxu0 %v105
  %200 = vmatmul.f32.gmra.mxu0 %v142
  %v201 = vpop.f32.mrf.mxu0
  %v202 = vadd.f32 0.0, %v201
  %203 = vdwg.mxu0
  %204 = vmatpush.msra.mxu0 0.0
  %205 = vmatpush.msra.mxu0 0.0
  %206 = vmatpush.msra.mxu0 0.0
  %207 = vmatpush.msra.mxu0 0.0
  %208 = vmatpush.msra.mxu0 0.0
  %209 = vmatpush.msra.mxu0 0.0
  %210 = vmatpush.msra.mxu0 0.0
  %211 = vmatpush.msra.mxu0 0.0
  %212 = vmatpush.msra.mxu0 0.0
  %213 = vmatpush.msra.mxu0 0.0
  %214 = vmatpush.msra.mxu0 0.0
  %215 = vmatpush.msra.mxu0 0.0
  %216 = vmatpush.msra.mxu0 0.0
  %217 = vmatpush.msra.mxu0 0.0
  %218 = vmatpush.msra.mxu0 0.0
  %219 = vmatpush.msra.mxu0 %v106
  %220 = vmatmul.f32.gmra.mxu0 %v142
  %v221 = vpop.f32.mrf.mxu0
  %v222 = vadd.f32 0.0, %v221
  %223 = vdwg.mxu0
  %224 = vmatpush.msra.mxu0 0.0
  %225 = vmatpush.msra.mxu0 0.0
  %226 = vmatpush.msra.mxu0 0.0
  %227 = vmatpush.msra.mxu0 0.0
  %228 = vmatpush.msra.mxu0 0.0
  %229 = vmatpush.msra.mxu0 0.0
  %230 = vmatpush.msra.mxu0 0.0
  %231 = vmatpush.msra.mxu0 0.0
  %232 = vmatpush.msra.mxu0 0.0
  %233 = vmatpush.msra.mxu0 0.0
  %234 = vmatpush.msra.mxu0 0.0
  %235 = vmatpush.msra.mxu0 0.0
  %236 = vmatpush.msra.mxu0 0.0
  %237 = vmatpush.msra.mxu0 0.0
  %238 = vmatpush.msra.mxu0 0.0
  %239 = vmatpush.msra.mxu0 %v107
  %240 = vmatmul.f32.gmra.mxu0 %v142
  %v241 = vpop.f32.mrf.mxu0
  %v242 = vadd.f32 0.0, %v241
  %243 = vdwg.mxu0
  %244 = vmatpush.msra.mxu0 0.0
  %245 = vmatpush.msra.mxu0 0.0
  %246 = vmatpush.msra.mxu0 0.0
  %247 = vmatpush.msra.mxu0 0.0
  %248 = vmatpush.msra.mxu0 0.0
  %249 = vmatpush.msra.mxu0 0.0
  %250 = vmatpush.msra.mxu0 0.0
  %251 = vmatpush.msra.mxu0 0.0
  %252 = vmatpush.msra.mxu0 0.0
  %253 = vmatpush.msra.mxu0 0.0
  %254 = vmatpush.msra.mxu0 0.0
  %255 = vmatpush.msra.mxu0 0.0
  %256 = vmatpush.msra.mxu0 0.0
  %257 = vmatpush.msra.mxu0 0.0
  %258 = vmatpush.msra.mxu0 0.0
  %259 = vmatpush.msra.mxu0 %v108
  %260 = vmatmul.f32.gmra.mxu0 %v142
  %v261 = vpop.f32.mrf.mxu0
  %v262 = vadd.f32 0.0, %v261
  %263 = vdwg.mxu0
  %264 = vmatpush.msra.mxu0 0.0
  %265 = vmatpush.msra.mxu0 0.0
  %266 = vmatpush.msra.mxu0 0.0
  %267 = vmatpush.msra.mxu0 0.0
  %268 = vmatpush.msra.mxu0 0.0
  %269 = vmatpush.msra.mxu0 0.0
  %270 = vmatpush.msra.mxu0 0.0
  %271 = vmatpush.msra.mxu0 0.0
  %272 = vmatpush.msra.mxu0 0.0
  %273 = vmatpush.msra.mxu0 0.0
  %274 = vmatpush.msra.mxu0 0.0
  %275 = vmatpush.msra.mxu0 0.0
  %276 = vmatpush.msra.mxu0 0.0
  %277 = vmatpush.msra.mxu0 0.0
  %278 = vmatpush.msra.mxu0 0.0
  %279 = vmatpush.msra.mxu0 %v109
  %280 = vmatmul.f32.gmra.mxu0 %v142
  %v281 = vpop.f32.mrf.mxu0
  %v282 = vadd.f32 0.0, %v281
  %283 = vdwg.mxu0
  %284 = vmatpush.msra.mxu0 0.0
  %285 = vmatpush.msra.mxu0 0.0
  %286 = vmatpush.msra.mxu0 0.0
  %287 = vmatpush.msra.mxu0 0.0
  %288 = vmatpush.msra.mxu0 0.0
  %289 = vmatpush.msra.mxu0 0.0
  %290 = vmatpush.msra.mxu0 0.0
  %291 = vmatpush.msra.mxu0 0.0
  %292 = vmatpush.msra.mxu0 0.0
  %293 = vmatpush.msra.mxu0 0.0
  %294 = vmatpush.msra.mxu0 0.0
  %295 = vmatpush.msra.mxu0 0.0
  %296 = vmatpush.msra.mxu0 0.0
  %297 = vmatpush.msra.mxu0 0.0
  %298 = vmatpush.msra.mxu0 0.0
  %299 = vmatpush.msra.mxu0 %v110
  %300 = vmatmul.f32.gmra.mxu0 %v142
  %v301 = vpop.f32.mrf.mxu0
  %v302 = vadd.f32 0.0, %v301
  %303 = vdwg.mxu0
  %304 = vmatpush.msra.mxu0 0.0
  %305 = vmatpush.msra.mxu0 0.0
  %306 = vmatpush.msra.mxu0 0.0
  %307 = vmatpush.msra.mxu0 0.0
  %308 = vmatpush.msra.mxu0 0.0
  %309 = vmatpush.msra.mxu0 0.0
  %310 = vmatpush.msra.mxu0 0.0
  %311 = vmatpush.msra.mxu0 0.0
  %312 = vmatpush.msra.mxu0 0.0
  %313 = vmatpush.msra.mxu0 0.0
  %314 = vmatpush.msra.mxu0 0.0
  %315 = vmatpush.msra.mxu0 0.0
  %316 = vmatpush.msra.mxu0 0.0
  %317 = vmatpush.msra.mxu0 0.0
  %318 = vmatpush.msra.mxu0 0.0
  %319 = vmatpush.msra.mxu0 %v111
  %320 = vmatmul.f32.gmra.mxu0 %v142
  %v321 = vpop.f32.mrf.mxu0
  %v322 = vadd.f32 0.0, %v321
  %323 = vdwg.mxu0
  %324 = vmatpush.msra.mxu0 0.0
  %325 = vmatpush.msra.mxu0 0.0
  %326 = vmatpush.msra.mxu0 0.0
  %327 = vmatpush.msra.mxu0 0.0
  %328 = vmatpush.msra.mxu0 0.0
  %329 = vmatpush.msra.mxu0 0.0
  %330 = vmatpush.msra.mxu0 0.0
  %331 = vmatpush.msra.mxu0 0.0
  %332 = vmatpush.msra.mxu0 0.0
  %333 = vmatpush.msra.mxu0 0.0
  %334 = vmatpush.msra.mxu0 0.0
  %335 = vmatpush.msra.mxu0 0.0
  %336 = vmatpush.msra.mxu0 0.0
  %337 = vmatpush.msra.mxu0 0.0
  %338 = vmatpush.msra.mxu0 0.0
  %339 = vmatpush.msra.mxu0 %v112
  %340 = vmatmul.f32.gmra.mxu0 %v142
  %v341 = vpop.f32.mrf.mxu0
  %v342 = vadd.f32 0.0, %v341
  %343 = vdwg.mxu0
  %344 = vmatpush.msra.mxu0 0.0
  %345 = vmatpush.msra.mxu0 0.0
  %346 = vmatpush.msra.mxu0 0.0
  %347 = vmatpush.msra.mxu0 0.0
  %348 = vmatpush.msra.mxu0 0.0
  %349 = vmatpush.msra.mxu0 0.0
  %350 = vmatpush.msra.mxu0 0.0
  %351 = vmatpush.msra.mxu0 0.0
  %352 = vmatpush.msra.mxu0 0.0
  %353 = vmatpush.msra.mxu0 0.0
  %354 = vmatpush.msra.mxu0 0.0
  %355 = vmatpush.msra.mxu0 0.0
  %356 = vmatpush.msra.mxu0 0.0
  %357 = vmatpush.msra.mxu0 0.0
  %358 = vmatpush.msra.mxu0 0.0
  %359 = vmatpush.msra.mxu0 %v113
  %360 = vmatmul.f32.gmra.mxu0 %v142
  %v361 = vpop.f32.mrf.mxu0
  %v362 = vadd.f32 0.0, %v361
  %363 = vdwg.mxu0
  %364 = vmatpush.msra.mxu0 0.0
  %365 = vmatpush.msra.mxu0 0.0
  %366 = vmatpush.msra.mxu0 0.0
  %367 = vmatpush.msra.mxu0 0.0
  %368 = vmatpush.msra.mxu0 0.0
  %369 = vmatpush.msra.mxu0 0.0
  %370 = vmatpush.msra.mxu0 0.0
  %371 = vmatpush.msra.mxu0 0.0
  %372 = vmatpush.msra.mxu0 0.0
  %373 = vmatpush.msra.mxu0 0.0
  %374 = vmatpush.msra.mxu0 0.0
  %375 = vmatpush.msra.mxu0 0.0
  %376 = vmatpush.msra.mxu0 0.0
  %377 = vmatpush.msra.mxu0 0.0
  %378 = vmatpush.msra.mxu0 0.0
  %379 = vmatpush.msra.mxu0 %v114
  %380 = vmatmul.f32.gmra.mxu0 %v142
  %v381 = vpop.f32.mrf.mxu0
  %v382 = vadd.f32 0.0, %v381
  %383 = vdwg.mxu0
  %384 = vmatpush.msra.mxu0 0.0
  %385 = vmatpush.msra.mxu0 0.0
  %386 = vmatpush.msra.mxu0 0.0
  %387 = vmatpush.msra.mxu0 0.0
  %388 = vmatpush.msra.mxu0 0.0
  %389 = vmatpush.msra.mxu0 0.0
  %390 = vmatpush.msra.mxu0 0.0
  %391 = vmatpush.msra.mxu0 0.0
  %392 = vmatpush.msra.mxu0 0.0
  %393 = vmatpush.msra.mxu0 0.0
  %394 = vmatpush.msra.mxu0 0.0
  %395 = vmatpush.msra.mxu0 0.0
  %396 = vmatpush.msra.mxu0 0.0
  %397 = vmatpush.msra.mxu0 0.0
  %398 = vmatpush.msra.mxu0 0.0
  %399 = vmatpush.msra.mxu0 %v115
  %400 = vmatmul.f32.gmra.mxu0 %v142
  %v401 = vpop.f32.mrf.mxu0
  %v402 = vadd.f32 0.0, %v401
  %403 = vdwg.mxu0
  %404 = vmatpush.msra.mxu0 0.0
  %405 = vmatpush.msra.mxu0 0.0
  %406 = vmatpush.msra.mxu0 0.0
  %407 = vmatpush.msra.mxu0 0.0
  %408 = vmatpush.msra.mxu0 0.0
  %409 = vmatpush.msra.mxu0 0.0
  %410 = vmatpush.msra.mxu0 0.0
  %411 = vmatpush.msra.mxu0 0.0
  %412 = vmatpush.msra.mxu0 0.0
  %413 = vmatpush.msra.mxu0 0.0
  %414 = vmatpush.msra.mxu0 0.0
  %415 = vmatpush.msra.mxu0 0.0
  %416 = vmatpush.msra.mxu0 0.0
  %417 = vmatpush.msra.mxu0 0.0
  %418 = vmatpush.msra.mxu0 0.0
  %419 = vmatpush.msra.mxu0 %v116
  %420 = vmatmul.f32.gmra.mxu0 %v142
  %v421 = vpop.f32.mrf.mxu0
  %v422 = vadd.f32 0.0, %v421
  %423 = vdwg.mxu0
  %424 = vmatpush.msra.mxu0 0.0
  %425 = vmatpush.msra.mxu0 0.0
  %426 = vmatpush.msra.mxu0 0.0
  %427 = vmatpush.msra.mxu0 0.0
  %428 = vmatpush.msra.mxu0 0.0
  %429 = vmatpush.msra.mxu0 0.0
  %430 = vmatpush.msra.mxu0 0.0
  %431 = vmatpush.msra.mxu0 0.0
  %432 = vmatpush.msra.mxu0 0.0
  %433 = vmatpush.msra.mxu0 0.0
  %434 = vmatpush.msra.mxu0 0.0
  %435 = vmatpush.msra.mxu0 0.0
  %436 = vmatpush.msra.mxu0 0.0
  %437 = vmatpush.msra.mxu0 0.0
  %438 = vmatpush.msra.mxu0 0.0
  %439 = vmatpush.msra.mxu0 %v117
  %440 = vmatmul.f32.gmra.mxu0 %v142
  %v441 = vpop.f32.mrf.mxu0
  %v442 = vadd.f32 0.0, %v441
  %443 = vdwg.mxu0
  %444 = vmatpush.msra.mxu0 0.0
  %445 = vmatpush.msra.mxu0 0.0
  %446 = vmatpush.msra.mxu0 0.0
  %447 = vmatpush.msra.mxu0 0.0
  %448 = vmatpush.msra.mxu0 0.0
  %449 = vmatpush.msra.mxu0 0.0
  %450 = vmatpush.msra.mxu0 0.0
  %451 = vmatpush.msra.mxu0 0.0
  %452 = vmatpush.msra.mxu0 0.0
  %453 = vmatpush.msra.mxu0 0.0
  %454 = vmatpush.msra.mxu0 0.0
  %455 = vmatpush.msra.mxu0 0.0
  %456 = vmatpush.msra.mxu0 0.0
  %457 = vmatpush.msra.mxu0 0.0
  %458 = vmatpush.msra.mxu0 0.0
  %459 = vmatpush.msra.mxu0 %v118
  %460 = vmatmul.f32.gmra.mxu0 %v142
  %v461 = vpop.f32.mrf.mxu0
  %v462 = vadd.f32 0.0, %v461
  %463 = vdwg.mxu0
  %464 = vmatpush.msra.mxu0 0.0
  %465 = vmatpush.msra.mxu0 0.0
  %466 = vmatpush.msra.mxu0 0.0
  %467 = vmatpush.msra.mxu0 0.0
  %468 = vmatpush.msra.mxu0 0.0
  %469 = vmatpush.msra.mxu0 0.0
  %470 = vmatpush.msra.mxu0 0.0
  %471 = vmatpush.msra.mxu0 0.0
  %472 = vmatpush.msra.mxu0 0.0
  %473 = vmatpush.msra.mxu0 0.0
  %474 = vmatpush.msra.mxu0 0.0
  %475 = vmatpush.msra.mxu0 0.0
  %476 = vmatpush.msra.mxu0 0.0
  %477 = vmatpush.msra.mxu0 0.0
  %478 = vmatpush.msra.mxu0 0.0
  %479 = vmatpush.msra.mxu0 %v119
  %480 = vmatmul.f32.gmra.mxu0 %v142
  %v481 = vpop.f32.mrf.mxu0
  %v482 = vadd.f32 0.0, %v481
  %483 = vdwg.mxu0
  %484 = vmatpush.msra.mxu0 0.0
  %485 = vmatpush.msra.mxu0 0.0
  %486 = vmatpush.msra.mxu0 0.0
  %487 = vmatpush.msra.mxu0 0.0
  %488 = vmatpush.msra.mxu0 0.0
  %489 = vmatpush.msra.mxu0 0.0
  %490 = vmatpush.msra.mxu0 0.0
  %491 = vmatpush.msra.mxu0 0.0
  %492 = vmatpush.msra.mxu0 0.0
  %493 = vmatpush.msra.mxu0 0.0
  %494 = vmatpush.msra.mxu0 0.0
  %495 = vmatpush.msra.mxu0 0.0
  %496 = vmatpush.msra.mxu0 0.0
  %497 = vmatpush.msra.mxu0 0.0
  %498 = vmatpush.msra.mxu0 0.0
  %499 = vmatpush.msra.mxu0 %v120
  %500 = vmatmul.f32.gmra.mxu0 %v142
  %v501 = vpop.f32.mrf.mxu0
  %v502 = vadd.f32 0.0, %v501
  %503 = vdwg.mxu0
  %504 = vmatpush.msra.mxu0 0.0
  %505 = vmatpush.msra.mxu0 0.0
  %506 = vmatpush.msra.mxu0 0.0
  %507 = vmatpush.msra.mxu0 0.0
  %508 = vmatpush.msra.mxu0 0.0
  %509 = vmatpush.msra.mxu0 0.0
  %510 = vmatpush.msra.mxu0 0.0
  %511 = vmatpush.msra.mxu0 0.0
  %512 = vmatpush.msra.mxu0 0.0
  %513 = vmatpush.msra.mxu0 0.0
  %514 = vmatpush.msra.mxu0 0.0
  %515 = vmatpush.msra.mxu0 0.0
  %516 = vmatpush.msra.mxu0 0.0
  %517 = vmatpush.msra.mxu0 0.0
  %518 = vmatpush.msra.mxu0 0.0
  %519 = vmatpush.msra.mxu0 %v101
  %520 = vmatmul.f32.gmra.mxu0 %v142
  %v521 = vpop.f32.mrf.mxu0
  %v522 = vadd.f32 0.0, %v521
  %523 = vdwg.mxu0
  %v525 = vsel %vm140, %v23, 0
  %527 = vmatpush.msra.mxu0 0.0
  %528 = vmatpush.msra.mxu0 0.0
  %529 = vmatpush.msra.mxu0 0.0
  %530 = vmatpush.msra.mxu0 0.0
  %531 = vmatpush.msra.mxu0 0.0
  %532 = vmatpush.msra.mxu0 0.0
  %533 = vmatpush.msra.mxu0 0.0
  %534 = vmatpush.msra.mxu0 0.0
  %535 = vmatpush.msra.mxu0 0.0
  %536 = vmatpush.msra.mxu0 0.0
  %537 = vmatpush.msra.mxu0 0.0
  %538 = vmatpush.msra.mxu0 0.0
  %539 = vmatpush.msra.mxu0 0.0
  %540 = vmatpush.msra.mxu0 0.0
  %541 = vmatpush.msra.mxu0 0.0
  %542 = vmatpush.msra.mxu0 %v24
  %543 = vmatmul.f32.gmra.mxu0 %v525
  %v544 = vpop.f32.mrf.mxu0
  %v545 = vadd.f32 %v162, %v544
  %546 = vdwg.mxu0
  %547 = vmatpush.msra.mxu0 0.0
  %548 = vmatpush.msra.mxu0 0.0
  %549 = vmatpush.msra.mxu0 0.0
  %550 = vmatpush.msra.mxu0 0.0
  %551 = vmatpush.msra.mxu0 0.0
  %552 = vmatpush.msra.mxu0 0.0
  %553 = vmatpush.msra.mxu0 0.0
  %554 = vmatpush.msra.mxu0 0.0
  %555 = vmatpush.msra.mxu0 0.0
  %556 = vmatpush.msra.mxu0 0.0
  %557 = vmatpush.msra.mxu0 0.0
  %558 = vmatpush.msra.mxu0 0.0
  %559 = vmatpush.msra.mxu0 0.0
  %560 = vmatpush.msra.mxu0 0.0
  %561 = vmatpush.msra.mxu0 0.0
  %562 = vmatpush.msra.mxu0 %v25
  %563 = vmatmul.f32.gmra.mxu0 %v525
  %v564 = vpop.f32.mrf.mxu0
  %v565 = vadd.f32 %v182, %v564
  %566 = vdwg.mxu0
  %567 = vmatpush.msra.mxu0 0.0
  %568 = vmatpush.msra.mxu0 0.0
  %569 = vmatpush.msra.mxu0 0.0
  %570 = vmatpush.msra.mxu0 0.0
  %571 = vmatpush.msra.mxu0 0.0
  %572 = vmatpush.msra.mxu0 0.0
  %573 = vmatpush.msra.mxu0 0.0
  %574 = vmatpush.msra.mxu0 0.0
  %575 = vmatpush.msra.mxu0 0.0
  %576 = vmatpush.msra.mxu0 0.0
  %577 = vmatpush.msra.mxu0 0.0
  %578 = vmatpush.msra.mxu0 0.0
  %579 = vmatpush.msra.mxu0 0.0
  %580 = vmatpush.msra.mxu0 0.0
  %581 = vmatpush.msra.mxu0 0.0
  %582 = vmatpush.msra.mxu0 %v26
  %583 = vmatmul.f32.gmra.mxu0 %v525
  %v584 = vpop.f32.mrf.mxu0
  %v585 = vadd.f32 %v202, %v584
  %586 = vdwg.mxu0
  %587 = vmatpush.msra.mxu0 0.0
  %588 = vmatpush.msra.mxu0 0.0
  %589 = vmatpush.msra.mxu0 0.0
  %590 = vmatpush.msra.mxu0 0.0
  %591 = vmatpush.msra.mxu0 0.0
  %592 = vmatpush.msra.mxu0 0.0
  %593 = vmatpush.msra.mxu0 0.0
  %594 = vmatpush.msra.mxu0 0.0
  %595 = vmatpush.msra.mxu0 0.0
  %596 = vmatpush.msra.mxu0 0.0
  %597 = vmatpush.msra.mxu0 0.0
  %598 = vmatpush.msra.mxu0 0.0
  %599 = vmatpush.msra.mxu0 0.0
  %600 = vmatpush.msra.mxu0 0.0
  %601 = vmatpush.msra.mxu0 0.0
  %602 = vmatpush.msra.mxu0 %v27
  %603 = vmatmul.f32.gmra.mxu0 %v525
  %v604 = vpop.f32.mrf.mxu0
  %v605 = vadd.f32 %v222, %v604
  %606 = vdwg.mxu0
  %607 = vmatpush.msra.mxu0 0.0
  %608 = vmatpush.msra.mxu0 0.0
  %609 = vmatpush.msra.mxu0 0.0
  %610 = vmatpush.msra.mxu0 0.0
  %611 = vmatpush.msra.mxu0 0.0
  %612 = vmatpush.msra.mxu0 0.0
  %613 = vmatpush.msra.mxu0 0.0
  %614 = vmatpush.msra.mxu0 0.0
  %615 = vmatpush.msra.mxu0 0.0
  %616 = vmatpush.msra.mxu0 0.0
  %617 = vmatpush.msra.mxu0 0.0
  %618 = vmatpush.msra.mxu0 0.0
  %619 = vmatpush.msra.mxu0 0.0
  %620 = vmatpush.msra.mxu0 0.0
  %621 = vmatpush.msra.mxu0 0.0
  %622 = vmatpush.msra.mxu0 %v28
  %623 = vmatmul.f32.gmra.mxu0 %v525
  %v624 = vpop.f32.mrf.mxu0
  %v625 = vadd.f32 %v242, %v624
  %626 = vdwg.mxu0
  %627 = vmatpush.msra.mxu0 0.0
  %628 = vmatpush.msra.mxu0 0.0
  %629 = vmatpush.msra.mxu0 0.0
  %630 = vmatpush.msra.mxu0 0.0
  %631 = vmatpush.msra.mxu0 0.0
  %632 = vmatpush.msra.mxu0 0.0
  %633 = vmatpush.msra.mxu0 0.0
  %634 = vmatpush.msra.mxu0 0.0
  %635 = vmatpush.msra.mxu0 0.0
  %636 = vmatpush.msra.mxu0 0.0
  %637 = vmatpush.msra.mxu0 0.0
  %638 = vmatpush.msra.mxu0 0.0
  %639 = vmatpush.msra.mxu0 0.0
  %640 = vmatpush.msra.mxu0 0.0
  %641 = vmatpush.msra.mxu0 0.0
  %642 = vmatpush.msra.mxu0 %v29
  %643 = vmatmul.f32.gmra.mxu0 %v525
  %v644 = vpop.f32.mrf.mxu0
  %v645 = vadd.f32 %v262, %v644
  %646 = vdwg.mxu0
  %647 = vmatpush.msra.mxu0 0.0
  %648 = vmatpush.msra.mxu0 0.0
  %649 = vmatpush.msra.mxu0 0.0
  %650 = vmatpush.msra.mxu0 0.0
  %651 = vmatpush.msra.mxu0 0.0
  %652 = vmatpush.msra.mxu0 0.0
  %653 = vmatpush.msra.mxu0 0.0
  %654 = vmatpush.msra.mxu0 0.0
  %655 = vmatpush.msra.mxu0 0.0
  %656 = vmatpush.msra.mxu0 0.0
  %657 = vmatpush.msra.mxu0 0.0
  %658 = vmatpush.msra.mxu0 0.0
  %659 = vmatpush.msra.mxu0 0.0
  %660 = vmatpush.msra.mxu0 0.0
  %661 = vmatpush.msra.mxu0 0.0
  %662 = vmatpush.msra.mxu0 %v30
  %663 = vmatmul.f32.gmra.mxu0 %v525
  %v664 = vpop.f32.mrf.mxu0
  %v665 = vadd.f32 %v282, %v664
  %666 = vdwg.mxu0
  %667 = vmatpush.msra.mxu0 0.0
  %668 = vmatpush.msra.mxu0 0.0
  %669 = vmatpush.msra.mxu0 0.0
  %670 = vmatpush.msra.mxu0 0.0
  %671 = vmatpush.msra.mxu0 0.0
  %672 = vmatpush.msra.mxu0 0.0
  %673 = vmatpush.msra.mxu0 0.0
  %674 = vmatpush.msra.mxu0 0.0
  %675 = vmatpush.msra.mxu0 0.0
  %676 = vmatpush.msra.mxu0 0.0
  %677 = vmatpush.msra.mxu0 0.0
  %678 = vmatpush.msra.mxu0 0.0
  %679 = vmatpush.msra.mxu0 0.0
  %680 = vmatpush.msra.mxu0 0.0
  %681 = vmatpush.msra.mxu0 0.0
  %682 = vmatpush.msra.mxu0 %v31
  %683 = vmatmul.f32.gmra.mxu0 %v525
  %v684 = vpop.f32.mrf.mxu0
  %v685 = vadd.f32 %v302, %v684
  %686 = vdwg.mxu0
  %687 = vmatpush.msra.mxu0 0.0
  %688 = vmatpush.msra.mxu0 0.0
  %689 = vmatpush.msra.mxu0 0.0
  %690 = vmatpush.msra.mxu0 0.0
  %691 = vmatpush.msra.mxu0 0.0
  %692 = vmatpush.msra.mxu0 0.0
  %693 = vmatpush.msra.mxu0 0.0
  %694 = vmatpush.msra.mxu0 0.0
  %695 = vmatpush.msra.mxu0 0.0
  %696 = vmatpush.msra.mxu0 0.0
  %697 = vmatpush.msra.mxu0 0.0
  %698 = vmatpush.msra.mxu0 0.0
  %699 = vmatpush.msra.mxu0 0.0
  %700 = vmatpush.msra.mxu0 0.0
  %701 = vmatpush.msra.mxu0 0.0
  %702 = vmatpush.msra.mxu0 %v32
  %703 = vmatmul.f32.gmra.mxu0 %v525
  %v704 = vpop.f32.mrf.mxu0
  %v705 = vadd.f32 %v322, %v704
  %706 = vdwg.mxu0
  %707 = vmatpush.msra.mxu0 0.0
  %708 = vmatpush.msra.mxu0 0.0
  %709 = vmatpush.msra.mxu0 0.0
  %710 = vmatpush.msra.mxu0 0.0
  %711 = vmatpush.msra.mxu0 0.0
  %712 = vmatpush.msra.mxu0 0.0
  %713 = vmatpush.msra.mxu0 0.0
  %714 = vmatpush.msra.mxu0 0.0
  %715 = vmatpush.msra.mxu0 0.0
  %716 = vmatpush.msra.mxu0 0.0
  %717 = vmatpush.msra.mxu0 0.0
  %718 = vmatpush.msra.mxu0 0.0
  %719 = vmatpush.msra.mxu0 0.0
  %720 = vmatpush.msra.mxu0 0.0
  %721 = vmatpush.msra.mxu0 0.0
  %722 = vmatpush.msra.mxu0 %v33
  %723 = vmatmul.f32.gmra.mxu0 %v525
  %v724 = vpop.f32.mrf.mxu0
  %v725 = vadd.f32 %v342, %v724
  %726 = vdwg.mxu0
  %727 = vmatpush.msra.mxu0 0.0
  %728 = vmatpush.msra.mxu0 0.0
  %729 = vmatpush.msra.mxu0 0.0
  %730 = vmatpush.msra.mxu0 0.0
  %731 = vmatpush.msra.mxu0 0.0
  %732 = vmatpush.msra.mxu0 0.0
  %733 = vmatpush.msra.mxu0 0.0
  %734 = vmatpush.msra.mxu0 0.0
  %735 = vmatpush.msra.mxu0 0.0
  %736 = vmatpush.msra.mxu0 0.0
  %737 = vmatpush.msra.mxu0 0.0
  %738 = vmatpush.msra.mxu0 0.0
  %739 = vmatpush.msra.mxu0 0.0
  %740 = vmatpush.msra.mxu0 0.0
  %741 = vmatpush.msra.mxu0 0.0
  %742 = vmatpush.msra.mxu0 %v34
  %743 = vmatmul.f32.gmra.mxu0 %v525
  %v744 = vpop.f32.mrf.mxu0
  %v745 = vadd.f32 %v362, %v744
  %746 = vdwg.mxu0
  %747 = vmatpush.msra.mxu0 0.0
  %748 = vmatpush.msra.mxu0 0.0
  %749 = vmatpush.msra.mxu0 0.0
  %750 = vmatpush.msra.mxu0 0.0
  %751 = vmatpush.msra.mxu0 0.0
  %752 = vmatpush.msra.mxu0 0.0
  %753 = vmatpush.msra.mxu0 0.0
  %754 = vmatpush.msra.mxu0 0.0
  %755 = vmatpush.msra.mxu0 0.0
  %756 = vmatpush.msra.mxu0 0.0
  %757 = vmatpush.msra.mxu0 0.0
  %758 = vmatpush.msra.mxu0 0.0
  %759 = vmatpush.msra.mxu0 0.0
  %760 = vmatpush.msra.mxu0 0.0
  %761 = vmatpush.msra.mxu0 0.0
  %762 = vmatpush.msra.mxu0 %v35
  %763 = vmatmul.f32.gmra.mxu0 %v525
  %v764 = vpop.f32.mrf.mxu0
  %v765 = vadd.f32 %v382, %v764
  %766 = vdwg.mxu0
  %767 = vmatpush.msra.mxu0 0.0
  %768 = vmatpush.msra.mxu0 0.0
  %769 = vmatpush.msra.mxu0 0.0
  %770 = vmatpush.msra.mxu0 0.0
  %771 = vmatpush.msra.mxu0 0.0
  %772 = vmatpush.msra.mxu0 0.0
  %773 = vmatpush.msra.mxu0 0.0
  %774 = vmatpush.msra.mxu0 0.0
  %775 = vmatpush.msra.mxu0 0.0
  %776 = vmatpush.msra.mxu0 0.0
  %777 = vmatpush.msra.mxu0 0.0
  %778 = vmatpush.msra.mxu0 0.0
  %779 = vmatpush.msra.mxu0 0.0
  %780 = vmatpush.msra.mxu0 0.0
  %781 = vmatpush.msra.mxu0 0.0
  %782 = vmatpush.msra.mxu0 %v36
  %783 = vmatmul.f32.gmra.mxu0 %v525
  %v784 = vpop.f32.mrf.mxu0
  %v785 = vadd.f32 %v402, %v784
  %786 = vdwg.mxu0
  %787 = vmatpush.msra.mxu0 0.0
  %788 = vmatpush.msra.mxu0 0.0
  %789 = vmatpush.msra.mxu0 0.0
  %790 = vmatpush.msra.mxu0 0.0
  %791 = vmatpush.msra.mxu0 0.0
  %792 = vmatpush.msra.mxu0 0.0
  %793 = vmatpush.msra.mxu0 0.0
  %794 = vmatpush.msra.mxu0 0.0
  %795 = vmatpush.msra.mxu0 0.0
  %796 = vmatpush.msra.mxu0 0.0
  %797 = vmatpush.msra.mxu0 0.0
  %798 = vmatpush.msra.mxu0 0.0
  %799 = vmatpush.msra.mxu0 0.0
  %800 = vmatpush.msra.mxu0 0.0
  %801 = vmatpush.msra.mxu0 0.0
  %802 = vmatpush.msra.mxu0 %v37
  %803 = vmatmul.f32.gmra.mxu0 %v525
  %v804 = vpop.f32.mrf.mxu0
  %v805 = vadd.f32 %v422, %v804
  %806 = vdwg.mxu0
  %807 = vmatpush.msra.mxu0 0.0
  %808 = vmatpush.msra.mxu0 0.0
  %809 = vmatpush.msra.mxu0 0.0
  %810 = vmatpush.msra.mxu0 0.0
  %811 = vmatpush.msra.mxu0 0.0
  %812 = vmatpush.msra.mxu0 0.0
  %813 = vmatpush.msra.mxu0 0.0
  %814 = vmatpush.msra.mxu0 0.0
  %815 = vmatpush.msra.mxu0 0.0
  %816 = vmatpush.msra.mxu0 0.0
  %817 = vmatpush.msra.mxu0 0.0
  %818 = vmatpush.msra.mxu0 0.0
  %819 = vmatpush.msra.mxu0 0.0
  %820 = vmatpush.msra.mxu0 0.0
  %821 = vmatpush.msra.mxu0 0.0
  %822 = vmatpush.msra.mxu0 %v38
  %823 = vmatmul.f32.gmra.mxu0 %v525
  %v824 = vpop.f32.mrf.mxu0
  %v825 = vadd.f32 %v442, %v824
  %826 = vdwg.mxu0
  %827 = vmatpush.msra.mxu0 0.0
  %828 = vmatpush.msra.mxu0 0.0
  %829 = vmatpush.msra.mxu0 0.0
  %830 = vmatpush.msra.mxu0 0.0
  %831 = vmatpush.msra.mxu0 0.0
  %832 = vmatpush.msra.mxu0 0.0
  %833 = vmatpush.msra.mxu0 0.0
  %834 = vmatpush.msra.mxu0 0.0
  %835 = vmatpush.msra.mxu0 0.0
  %836 = vmatpush.msra.mxu0 0.0
  %837 = vmatpush.msra.mxu0 0.0
  %838 = vmatpush.msra.mxu0 0.0
  %839 = vmatpush.msra.mxu0 0.0
  %840 = vmatpush.msra.mxu0 0.0
  %841 = vmatpush.msra.mxu0 0.0
  %842 = vmatpush.msra.mxu0 %v39
  %843 = vmatmul.f32.gmra.mxu0 %v525
  %v844 = vpop.f32.mrf.mxu0
  %v845 = vadd.f32 %v462, %v844
  %846 = vdwg.mxu0
  %847 = vmatpush.msra.mxu0 0.0
  %848 = vmatpush.msra.mxu0 0.0
  %849 = vmatpush.msra.mxu0 0.0
  %850 = vmatpush.msra.mxu0 0.0
  %851 = vmatpush.msra.mxu0 0.0
  %852 = vmatpush.msra.mxu0 0.0
  %853 = vmatpush.msra.mxu0 0.0
  %854 = vmatpush.msra.mxu0 0.0
  %855 = vmatpush.msra.mxu0 0.0
  %856 = vmatpush.msra.mxu0 0.0
  %857 = vmatpush.msra.mxu0 0.0
  %858 = vmatpush.msra.mxu0 0.0
  %859 = vmatpush.msra.mxu0 0.0
  %860 = vmatpush.msra.mxu0 0.0
  %861 = vmatpush.msra.mxu0 0.0
  %862 = vmatpush.msra.mxu0 %v40
  %863 = vmatmul.f32.gmra.mxu0 %v525
  %v864 = vpop.f32.mrf.mxu0
  %v865 = vadd.f32 %v482, %v864
  %866 = vdwg.mxu0
  %867 = vmatpush.msra.mxu0 0.0
  %868 = vmatpush.msra.mxu0 0.0
  %869 = vmatpush.msra.mxu0 0.0
  %870 = vmatpush.msra.mxu0 0.0
  %871 = vmatpush.msra.mxu0 0.0
  %872 = vmatpush.msra.mxu0 0.0
  %873 = vmatpush.msra.mxu0 0.0
  %874 = vmatpush.msra.mxu0 0.0
  %875 = vmatpush.msra.mxu0 0.0
  %876 = vmatpush.msra.mxu0 0.0
  %877 = vmatpush.msra.mxu0 0.0
  %878 = vmatpush.msra.mxu0 0.0
  %879 = vmatpush.msra.mxu0 0.0
  %880 = vmatpush.msra.mxu0 0.0
  %881 = vmatpush.msra.mxu0 0.0
  %882 = vmatpush.msra.mxu0 %v41
  %883 = vmatmul.f32.gmra.mxu0 %v525
  %v884 = vpop.f32.mrf.mxu0
  %v885 = vadd.f32 %v502, %v884
  %886 = vdwg.mxu0
  %887 = vmatpush.msra.mxu0 0.0
  %888 = vmatpush.msra.mxu0 0.0
  %889 = vmatpush.msra.mxu0 0.0
  %890 = vmatpush.msra.mxu0 0.0
  %891 = vmatpush.msra.mxu0 0.0
  %892 = vmatpush.msra.mxu0 0.0
  %893 = vmatpush.msra.mxu0 0.0
  %894 = vmatpush.msra.mxu0 0.0
  %895 = vmatpush.msra.mxu0 0.0
  %896 = vmatpush.msra.mxu0 0.0
  %897 = vmatpush.msra.mxu0 0.0
  %898 = vmatpush.msra.mxu0 0.0
  %899 = vmatpush.msra.mxu0 0.0
  %900 = vmatpush.msra.mxu0 0.0
  %901 = vmatpush.msra.mxu0 0.0
  %902 = vmatpush.msra.mxu0 %v42
  %903 = vmatmul.f32.gmra.mxu0 %v525
  %v904 = vpop.f32.mrf.mxu0
  %v905 = vadd.f32 %v522, %v904
  %906 = vdwg.mxu0
  %s907 = scalar_lea.vmem %s1, 16
  %v908 = vld [vmem:[%s907] sm:$0xff]
  %909 = vrot.lane.b32.xlu0 %v24, 126
  %v910 = vpop.permute.xlu0 %909
  %911 = vrot.lane.b32.xlu0 %v25, 126
  %v912 = vpop.permute.xlu0 %911
  %913 = vrot.lane.b32.xlu0 %v26, 126
  %v914 = vpop.permute.xlu0 %913
  %915 = vrot.lane.b32.xlu0 %v27, 126
  %v916 = vpop.permute.xlu0 %915
  %917 = vrot.lane.b32.xlu0 %v28, 126
  %v918 = vpop.permute.xlu0 %917
  %919 = vrot.lane.b32.xlu0 %v29, 126
  %v920 = vpop.permute.xlu0 %919
  %921 = vrot.lane.b32.xlu0 %v30, 126
  %v922 = vpop.permute.xlu0 %921
  %923 = vrot.lane.b32.xlu0 %v31, 126
  %v924 = vpop.permute.xlu0 %923
  %925 = vrot.lane.b32.xlu0 %v32, 126
  %v926 = vpop.permute.xlu0 %925
  %927 = vrot.lane.b32.xlu0 %v33, 126
  %v928 = vpop.permute.xlu0 %927
  %929 = vrot.lane.b32.xlu0 %v34, 126
  %v930 = vpop.permute.xlu0 %929
  %931 = vrot.lane.b32.xlu0 %v35, 126
  %v932 = vpop.permute.xlu0 %931
  %933 = vrot.lane.b32.xlu0 %v36, 126
  %v934 = vpop.permute.xlu0 %933
  %935 = vrot.lane.b32.xlu0 %v37, 126
  %v936 = vpop.permute.xlu0 %935
  %937 = vrot.lane.b32.xlu0 %v38, 126
  %v938 = vpop.permute.xlu0 %937
  %939 = vrot.lane.b32.xlu0 %v39, 126
  %v940 = vpop.permute.xlu0 %939
  %941 = vrot.lane.b32.xlu0 %v40, 126
  %v942 = vpop.permute.xlu0 %941
  %943 = vrot.lane.b32.xlu0 %v41, 126
  %v944 = vpop.permute.xlu0 %943
  %945 = vrot.lane.b32.xlu0 %v42, 126
  %v946 = vpop.permute.xlu0 %945
  %vm947 = vcmask 1031168
  %v948 = vsel %vm947, %v910, %v912
  %v949 = vsel %vm947, %v912, %v914
  %v950 = vsel %vm947, %v914, %v916
  %v951 = vsel %vm947, %v916, %v918
  %v952 = vsel %vm947, %v918, %v920
  %v953 = vsel %vm947, %v920, %v922
  %v954 = vsel %vm947, %v922, %v924
  %v955 = vsel %vm947, %v924, %v926
  %v956 = vsel %vm947, %v926, %v928
  %v957 = vsel %vm947, %v928, %v930
  %v958 = vsel %vm947, %v930, %v932
  %v959 = vsel %vm947, %v932, %v934
  %v960 = vsel %vm947, %v934, %v936
  %v961 = vsel %vm947, %v936, %v938
  %v962 = vsel %vm947, %v938, %v940
  %v963 = vsel %vm947, %v940, %v942
  %v964 = vsel %vm947, %v942, %v944
  %v965 = vsel %vm947, %v944, %v946
  %v986 = vsel %vm140, %v908, 0
  %988 = vmatpush.msra.mxu0 0.0
  %989 = vmatpush.msra.mxu0 0.0
  %990 = vmatpush.msra.mxu0 0.0
  %991 = vmatpush.msra.mxu0 0.0
  %992 = vmatpush.msra.mxu0 0.0
  %993 = vmatpush.msra.mxu0 0.0
  %994 = vmatpush.msra.mxu0 0.0
  %995 = vmatpush.msra.mxu0 0.0
  %996 = vmatpush.msra.mxu0 0.0
  %997 = vmatpush.msra.mxu0 0.0
  %998 = vmatpush.msra.mxu0 0.0
  %999 = vmatpush.msra.mxu0 0.0
  %1000 = vmatpush.msra.mxu0 0.0
  %1001 = vmatpush.msra.mxu0 0.0
  %1002 = vmatpush.msra.mxu0 0.0
  %1003 = vmatpush.msra.mxu0 %v948
  %1004 = vmatmul.f32.gmra.mxu0 %v986
  %v1005 = vpop.f32.mrf.mxu0
  %v1006 = vadd.f32 0.0, %v1005
  %1007 = vdwg.mxu0
  %1008 = vmatpush.msra.mxu0 0.0
  %1009 = vmatpush.msra.mxu0 0.0
  %1010 = vmatpush.msra.mxu0 0.0
  %1011 = vmatpush.msra.mxu0 0.0
  %1012 = vmatpush.msra.mxu0 0.0
  %1013 = vmatpush.msra.mxu0 0.0
  %1014 = vmatpush.msra.mxu0 0.0
  %1015 = vmatpush.msra.mxu0 0.0
  %1016 = vmatpush.msra.mxu0 0.0
  %1017 = vmatpush.msra.mxu0 0.0
  %1018 = vmatpush.msra.mxu0 0.0
  %1019 = vmatpush.msra.mxu0 0.0
  %1020 = vmatpush.msra.mxu0 0.0
  %1021 = vmatpush.msra.mxu0 0.0
  %1022 = vmatpush.msra.mxu0 0.0
  %1023 = vmatpush.msra.mxu0 %v949
  %1024 = vmatmul.f32.gmra.mxu0 %v986
  %v1025 = vpop.f32.mrf.mxu0
  %v1026 = vadd.f32 0.0, %v1025
  %1027 = vdwg.mxu0
  %1028 = vmatpush.msra.mxu0 0.0
  %1029 = vmatpush.msra.mxu0 0.0
  %1030 = vmatpush.msra.mxu0 0.0
  %1031 = vmatpush.msra.mxu0 0.0
  %1032 = vmatpush.msra.mxu0 0.0
  %1033 = vmatpush.msra.mxu0 0.0
  %1034 = vmatpush.msra.mxu0 0.0
  %1035 = vmatpush.msra.mxu0 0.0
  %1036 = vmatpush.msra.mxu0 0.0
  %1037 = vmatpush.msra.mxu0 0.0
  %1038 = vmatpush.msra.mxu0 0.0
  %1039 = vmatpush.msra.mxu0 0.0
  %1040 = vmatpush.msra.mxu0 0.0
  %1041 = vmatpush.msra.mxu0 0.0
  %1042 = vmatpush.msra.mxu0 0.0
  %1043 = vmatpush.msra.mxu0 %v950
  %1044 = vmatmul.f32.gmra.mxu0 %v986
  %v1045 = vpop.f32.mrf.mxu0
  %v1046 = vadd.f32 0.0, %v1045
  %1047 = vdwg.mxu0
  %1048 = vmatpush.msra.mxu0 0.0
  %1049 = vmatpush.msra.mxu0 0.0
  %1050 = vmatpush.msra.mxu0 0.0
  %1051 = vmatpush.msra.mxu0 0.0
  %1052 = vmatpush.msra.mxu0 0.0
  %1053 = vmatpush.msra.mxu0 0.0
  %1054 = vmatpush.msra.mxu0 0.0
  %1055 = vmatpush.msra.mxu0 0.0
  %1056 = vmatpush.msra.mxu0 0.0
  %1057 = vmatpush.msra.mxu0 0.0
  %1058 = vmatpush.msra.mxu0 0.0
  %1059 = vmatpush.msra.mxu0 0.0
  %1060 = vmatpush.msra.mxu0 0.0
  %1061 = vmatpush.msra.mxu0 0.0
  %1062 = vmatpush.msra.mxu0 0.0
  %1063 = vmatpush.msra.mxu0 %v951
  %1064 = vmatmul.f32.gmra.mxu0 %v986
  %v1065 = vpop.f32.mrf.mxu0
  %v1066 = vadd.f32 0.0, %v1065
  %1067 = vdwg.mxu0
  %1068 = vmatpush.msra.mxu0 0.0
  %1069 = vmatpush.msra.mxu0 0.0
  %1070 = vmatpush.msra.mxu0 0.0
  %1071 = vmatpush.msra.mxu0 0.0
  %1072 = vmatpush.msra.mxu0 0.0
  %1073 = vmatpush.msra.mxu0 0.0
  %1074 = vmatpush.msra.mxu0 0.0
  %1075 = vmatpush.msra.mxu0 0.0
  %1076 = vmatpush.msra.mxu0 0.0
  %1077 = vmatpush.msra.mxu0 0.0
  %1078 = vmatpush.msra.mxu0 0.0
  %1079 = vmatpush.msra.mxu0 0.0
  %1080 = vmatpush.msra.mxu0 0.0
  %1081 = vmatpush.msra.mxu0 0.0
  %1082 = vmatpush.msra.mxu0 0.0
  %1083 = vmatpush.msra.mxu0 %v952
  %1084 = vmatmul.f32.gmra.mxu0 %v986
  %v1085 = vpop.f32.mrf.mxu0
  %v1086 = vadd.f32 0.0, %v1085
  %1087 = vdwg.mxu0
  %1088 = vmatpush.msra.mxu0 0.0
  %1089 = vmatpush.msra.mxu0 0.0
  %1090 = vmatpush.msra.mxu0 0.0
  %1091 = vmatpush.msra.mxu0 0.0
  %1092 = vmatpush.msra.mxu0 0.0
  %1093 = vmatpush.msra.mxu0 0.0
  %1094 = vmatpush.msra.mxu0 0.0
  %1095 = vmatpush.msra.mxu0 0.0
  %1096 = vmatpush.msra.mxu0 0.0
  %1097 = vmatpush.msra.mxu0 0.0
  %1098 = vmatpush.msra.mxu0 0.0
  %1099 = vmatpush.msra.mxu0 0.0
  %1100 = vmatpush.msra.mxu0 0.0
  %1101 = vmatpush.msra.mxu0 0.0
  %1102 = vmatpush.msra.mxu0 0.0
  %1103 = vmatpush.msra.mxu0 %v953
  %1104 = vmatmul.f32.gmra.mxu0 %v986
  %v1105 = vpop.f32.mrf.mxu0
  %v1106 = vadd.f32 0.0, %v1105
  %1107 = vdwg.mxu0
  %1108 = vmatpush.msra.mxu0 0.0
  %1109 = vmatpush.msra.mxu0 0.0
  %1110 = vmatpush.msra.mxu0 0.0
  %1111 = vmatpush.msra.mxu0 0.0
  %1112 = vmatpush.msra.mxu0 0.0
  %1113 = vmatpush.msra.mxu0 0.0
  %1114 = vmatpush.msra.mxu0 0.0
  %1115 = vmatpush.msra.mxu0 0.0
  %1116 = vmatpush.msra.mxu0 0.0
  %1117 = vmatpush.msra.mxu0 0.0
  %1118 = vmatpush.msra.mxu0 0.0
  %1119 = vmatpush.msra.mxu0 0.0
  %1120 = vmatpush.msra.mxu0 0.0
  %1121 = vmatpush.msra.mxu0 0.0
  %1122 = vmatpush.msra.mxu0 0.0
  %1123 = vmatpush.msra.mxu0 %v954
  %1124 = vmatmul.f32.gmra.mxu0 %v986
  %v1125 = vpop.f32.mrf.mxu0
  %v1126 = vadd.f32 0.0, %v1125
  %1127 = vdwg.mxu0
  %1128 = vmatpush.msra.mxu0 0.0
  %1129 = vmatpush.msra.mxu0 0.0
  %1130 = vmatpush.msra.mxu0 0.0
  %1131 = vmatpush.msra.mxu0 0.0
  %1132 = vmatpush.msra.mxu0 0.0
  %1133 = vmatpush.msra.mxu0 0.0
  %1134 = vmatpush.msra.mxu0 0.0
  %1135 = vmatpush.msra.mxu0 0.0
  %1136 = vmatpush.msra.mxu0 0.0
  %1137 = vmatpush.msra.mxu0 0.0
  %1138 = vmatpush.msra.mxu0 0.0
  %1139 = vmatpush.msra.mxu0 0.0
  %1140 = vmatpush.msra.mxu0 0.0
  %1141 = vmatpush.msra.mxu0 0.0
  %1142 = vmatpush.msra.mxu0 0.0
  %1143 = vmatpush.msra.mxu0 %v955
  %1144 = vmatmul.f32.gmra.mxu0 %v986
  %v1145 = vpop.f32.mrf.mxu0
  %v1146 = vadd.f32 0.0, %v1145
  %1147 = vdwg.mxu0
  %1148 = vmatpush.msra.mxu0 0.0
  %1149 = vmatpush.msra.mxu0 0.0
  %1150 = vmatpush.msra.mxu0 0.0
  %1151 = vmatpush.msra.mxu0 0.0
  %1152 = vmatpush.msra.mxu0 0.0
  %1153 = vmatpush.msra.mxu0 0.0
  %1154 = vmatpush.msra.mxu0 0.0
  %1155 = vmatpush.msra.mxu0 0.0
  %1156 = vmatpush.msra.mxu0 0.0
  %1157 = vmatpush.msra.mxu0 0.0
  %1158 = vmatpush.msra.mxu0 0.0
  %1159 = vmatpush.msra.mxu0 0.0
  %1160 = vmatpush.msra.mxu0 0.0
  %1161 = vmatpush.msra.mxu0 0.0
  %1162 = vmatpush.msra.mxu0 0.0
  %1163 = vmatpush.msra.mxu0 %v956
  %1164 = vmatmul.f32.gmra.mxu0 %v986
  %v1165 = vpop.f32.mrf.mxu0
  %v1166 = vadd.f32 0.0, %v1165
  %1167 = vdwg.mxu0
  %1168 = vmatpush.msra.mxu0 0.0
  %1169 = vmatpush.msra.mxu0 0.0
  %1170 = vmatpush.msra.mxu0 0.0
  %1171 = vmatpush.msra.mxu0 0.0
  %1172 = vmatpush.msra.mxu0 0.0
  %1173 = vmatpush.msra.mxu0 0.0
  %1174 = vmatpush.msra.mxu0 0.0
  %1175 = vmatpush.msra.mxu0 0.0
  %1176 = vmatpush.msra.mxu0 0.0
  %1177 = vmatpush.msra.mxu0 0.0
  %1178 = vmatpush.msra.mxu0 0.0
  %1179 = vmatpush.msra.mxu0 0.0
  %1180 = vmatpush.msra.mxu0 0.0
  %1181 = vmatpush.msra.mxu0 0.0
  %1182 = vmatpush.msra.mxu0 0.0
  %1183 = vmatpush.msra.mxu0 %v957
  %1184 = vmatmul.f32.gmra.mxu0 %v986
  %v1185 = vpop.f32.mrf.mxu0
  %v1186 = vadd.f32 0.0, %v1185
  %1187 = vdwg.mxu0
  %1188 = vmatpush.msra.mxu0 0.0
  %1189 = vmatpush.msra.mxu0 0.0
  %1190 = vmatpush.msra.mxu0 0.0
  %1191 = vmatpush.msra.mxu0 0.0
  %1192 = vmatpush.msra.mxu0 0.0
  %1193 = vmatpush.msra.mxu0 0.0
  %1194 = vmatpush.msra.mxu0 0.0
  %1195 = vmatpush.msra.mxu0 0.0
  %1196 = vmatpush.msra.mxu0 0.0
  %1197 = vmatpush.msra.mxu0 0.0
  %1198 = vmatpush.msra.mxu0 0.0
  %1199 = vmatpush.msra.mxu0 0.0
  %1200 = vmatpush.msra.mxu0 0.0
  %1201 = vmatpush.msra.mxu0 0.0
  %1202 = vmatpush.msra.mxu0 0.0
  %1203 = vmatpush.msra.mxu0 %v958
  %1204 = vmatmul.f32.gmra.mxu0 %v986
  %v1205 = vpop.f32.mrf.mxu0
  %v1206 = vadd.f32 0.0, %v1205
  %1207 = vdwg.mxu0
  %1208 = vmatpush.msra.mxu0 0.0
  %1209 = vmatpush.msra.mxu0 0.0
  %1210 = vmatpush.msra.mxu0 0.0
  %1211 = vmatpush.msra.mxu0 0.0
  %1212 = vmatpush.msra.mxu0 0.0
  %1213 = vmatpush.msra.mxu0 0.0
  %1214 = vmatpush.msra.mxu0 0.0
  %1215 = vmatpush.msra.mxu0 0.0
  %1216 = vmatpush.msra.mxu0 0.0
  %1217 = vmatpush.msra.mxu0 0.0
  %1218 = vmatpush.msra.mxu0 0.0
  %1219 = vmatpush.msra.mxu0 0.0
  %1220 = vmatpush.msra.mxu0 0.0
  %1221 = vmatpush.msra.mxu0 0.0
  %1222 = vmatpush.msra.mxu0 0.0
  %1223 = vmatpush.msra.mxu0 %v959
  %1224 = vmatmul.f32.gmra.mxu0 %v986
  %v1225 = vpop.f32.mrf.mxu0
  %v1226 = vadd.f32 0.0, %v1225
  %1227 = vdwg.mxu0
  %1228 = vmatpush.msra.mxu0 0.0
  %1229 = vmatpush.msra.mxu0 0.0
  %1230 = vmatpush.msra.mxu0 0.0
  %1231 = vmatpush.msra.mxu0 0.0
  %1232 = vmatpush.msra.mxu0 0.0
  %1233 = vmatpush.msra.mxu0 0.0
  %1234 = vmatpush.msra.mxu0 0.0
  %1235 = vmatpush.msra.mxu0 0.0
  %1236 = vmatpush.msra.mxu0 0.0
  %1237 = vmatpush.msra.mxu0 0.0
  %1238 = vmatpush.msra.mxu0 0.0
  %1239 = vmatpush.msra.mxu0 0.0
  %1240 = vmatpush.msra.mxu0 0.0
  %1241 = vmatpush.msra.mxu0 0.0
  %1242 = vmatpush.msra.mxu0 0.0
  %1243 = vmatpush.msra.mxu0 %v960
  %1244 = vmatmul.f32.gmra.mxu0 %v986
  %v1245 = vpop.f32.mrf.mxu0
  %v1246 = vadd.f32 0.0, %v1245
  %1247 = vdwg.mxu0
  %1248 = vmatpush.msra.mxu0 0.0
  %1249 = vmatpush.msra.mxu0 0.0
  %1250 = vmatpush.msra.mxu0 0.0
  %1251 = vmatpush.msra.mxu0 0.0
  %1252 = vmatpush.msra.mxu0 0.0
  %1253 = vmatpush.msra.mxu0 0.0
  %1254 = vmatpush.msra.mxu0 0.0
  %1255 = vmatpush.msra.mxu0 0.0
  %1256 = vmatpush.msra.mxu0 0.0
  %1257 = vmatpush.msra.mxu0 0.0
  %1258 = vmatpush.msra.mxu0 0.0
  %1259 = vmatpush.msra.mxu0 0.0
  %1260 = vmatpush.msra.mxu0 0.0
  %1261 = vmatpush.msra.mxu0 0.0
  %1262 = vmatpush.msra.mxu0 0.0
  %1263 = vmatpush.msra.mxu0 %v961
  %1264 = vmatmul.f32.gmra.mxu0 %v986
  %v1265 = vpop.f32.mrf.mxu0
  %v1266 = vadd.f32 0.0, %v1265
  %1267 = vdwg.mxu0
  %1268 = vmatpush.msra.mxu0 0.0
  %1269 = vmatpush.msra.mxu0 0.0
  %1270 = vmatpush.msra.mxu0 0.0
  %1271 = vmatpush.msra.mxu0 0.0
  %1272 = vmatpush.msra.mxu0 0.0
  %1273 = vmatpush.msra.mxu0 0.0
  %1274 = vmatpush.msra.mxu0 0.0
  %1275 = vmatpush.msra.mxu0 0.0
  %1276 = vmatpush.msra.mxu0 0.0
  %1277 = vmatpush.msra.mxu0 0.0
  %1278 = vmatpush.msra.mxu0 0.0
  %1279 = vmatpush.msra.mxu0 0.0
  %1280 = vmatpush.msra.mxu0 0.0
  %1281 = vmatpush.msra.mxu0 0.0
  %1282 = vmatpush.msra.mxu0 0.0
  %1283 = vmatpush.msra.mxu0 %v962
  %1284 = vmatmul.f32.gmra.mxu0 %v986
  %v1285 = vpop.f32.mrf.mxu0
  %v1286 = vadd.f32 0.0, %v1285
  %1287 = vdwg.mxu0
  %1288 = vmatpush.msra.mxu0 0.0
  %1289 = vmatpush.msra.mxu0 0.0
  %1290 = vmatpush.msra.mxu0 0.0
  %1291 = vmatpush.msra.mxu0 0.0
  %1292 = vmatpush.msra.mxu0 0.0
  %1293 = vmatpush.msra.mxu0 0.0
  %1294 = vmatpush.msra.mxu0 0.0
  %1295 = vmatpush.msra.mxu0 0.0
  %1296 = vmatpush.msra.mxu0 0.0
  %1297 = vmatpush.msra.mxu0 0.0
  %1298 = vmatpush.msra.mxu0 0.0
  %1299 = vmatpush.msra.mxu0 0.0
  %1300 = vmatpush.msra.mxu0 0.0
  %1301 = vmatpush.msra.mxu0 0.0
  %1302 = vmatpush.msra.mxu0 0.0
  %1303 = vmatpush.msra.mxu0 %v963
  %1304 = vmatmul.f32.gmra.mxu0 %v986
  %v1305 = vpop.f32.mrf.mxu0
  %v1306 = vadd.f32 0.0, %v1305
  %1307 = vdwg.mxu0
  %1308 = vmatpush.msra.mxu0 0.0
  %1309 = vmatpush.msra.mxu0 0.0
  %1310 = vmatpush.msra.mxu0 0.0
  %1311 = vmatpush.msra.mxu0 0.0
  %1312 = vmatpush.msra.mxu0 0.0
  %1313 = vmatpush.msra.mxu0 0.0
  %1314 = vmatpush.msra.mxu0 0.0
  %1315 = vmatpush.msra.mxu0 0.0
  %1316 = vmatpush.msra.mxu0 0.0
  %1317 = vmatpush.msra.mxu0 0.0
  %1318 = vmatpush.msra.mxu0 0.0
  %1319 = vmatpush.msra.mxu0 0.0
  %1320 = vmatpush.msra.mxu0 0.0
  %1321 = vmatpush.msra.mxu0 0.0
  %1322 = vmatpush.msra.mxu0 0.0
  %1323 = vmatpush.msra.mxu0 %v964
  %1324 = vmatmul.f32.gmra.mxu0 %v986
  %v1325 = vpop.f32.mrf.mxu0
  %v1326 = vadd.f32 0.0, %v1325
  %1327 = vdwg.mxu0
  %1328 = vmatpush.msra.mxu0 0.0
  %1329 = vmatpush.msra.mxu0 0.0
  %1330 = vmatpush.msra.mxu0 0.0
  %1331 = vmatpush.msra.mxu0 0.0
  %1332 = vmatpush.msra.mxu0 0.0
  %1333 = vmatpush.msra.mxu0 0.0
  %1334 = vmatpush.msra.mxu0 0.0
  %1335 = vmatpush.msra.mxu0 0.0
  %1336 = vmatpush.msra.mxu0 0.0
  %1337 = vmatpush.msra.mxu0 0.0
  %1338 = vmatpush.msra.mxu0 0.0
  %1339 = vmatpush.msra.mxu0 0.0
  %1340 = vmatpush.msra.mxu0 0.0
  %1341 = vmatpush.msra.mxu0 0.0
  %1342 = vmatpush.msra.mxu0 0.0
  %1343 = vmatpush.msra.mxu0 %v965
  %1344 = vmatmul.f32.gmra.mxu0 %v986
  %v1345 = vpop.f32.mrf.mxu0
  %v1346 = vadd.f32 0.0, %v1345
  %1347 = vdwg.mxu0
  %1348 = vmatpush.msra.mxu0 0.0
  %1349 = vmatpush.msra.mxu0 0.0
  %1350 = vmatpush.msra.mxu0 0.0
  %1351 = vmatpush.msra.mxu0 0.0
  %1352 = vmatpush.msra.mxu0 0.0
  %1353 = vmatpush.msra.mxu0 0.0
  %1354 = vmatpush.msra.mxu0 0.0
  %1355 = vmatpush.msra.mxu0 0.0
  %1356 = vmatpush.msra.mxu0 0.0
  %1357 = vmatpush.msra.mxu0 0.0
  %1358 = vmatpush.msra.mxu0 0.0
  %1359 = vmatpush.msra.mxu0 0.0
  %1360 = vmatpush.msra.mxu0 0.0
  %1361 = vmatpush.msra.mxu0 0.0
  %1362 = vmatpush.msra.mxu0 0.0
  %1363 = vmatpush.msra.mxu0 %v946
  %1364 = vmatmul.f32.gmra.mxu0 %v986
  %v1365 = vpop.f32.mrf.mxu0
  %v1366 = vadd.f32 0.0, %v1365
  %1367 = vdwg.mxu0
  %v1368 = vadd.f32 %v545, %v1006
  %v1369 = vadd.f32 %v565, %v1026
  %v1370 = vadd.f32 %v585, %v1046
  %v1371 = vadd.f32 %v605, %v1066
  %v1372 = vadd.f32 %v625, %v1086
  %v1373 = vadd.f32 %v645, %v1106
  %v1374 = vadd.f32 %v665, %v1126
  %v1375 = vadd.f32 %v685, %v1146
  %v1376 = vadd.f32 %v705, %v1166
  %v1377 = vadd.f32 %v725, %v1186
  %v1378 = vadd.f32 %v745, %v1206
  %v1379 = vadd.f32 %v765, %v1226
  %v1380 = vadd.f32 %v785, %v1246
  %v1381 = vadd.f32 %v805, %v1266
  %v1382 = vadd.f32 %v825, %v1286
  %v1383 = vadd.f32 %v845, %v1306
  %v1384 = vadd.f32 %v865, %v1326
  %v1385 = vadd.f32 %v885, %v1346
  %v1386 = vadd.f32 %v905, %v1366
  %s1387 = scalar_lea.vmem %s1, 24
  %v1388 = vld [vmem:[%s1387] sm:$0xff]
  %1389 = vrot.lane.b32.xlu0 %v24, 94
  %v1390 = vpop.permute.xlu0 %1389
  %1391 = vrot.lane.b32.xlu0 %v25, 94
  %v1392 = vpop.permute.xlu0 %1391
  %1393 = vrot.lane.b32.xlu0 %v26, 94
  %v1394 = vpop.permute.xlu0 %1393
  %1395 = vrot.lane.b32.xlu0 %v27, 94
  %v1396 = vpop.permute.xlu0 %1395
  %1397 = vrot.lane.b32.xlu0 %v28, 94
  %v1398 = vpop.permute.xlu0 %1397
  %1399 = vrot.lane.b32.xlu0 %v29, 94
  %v1400 = vpop.permute.xlu0 %1399
  %1401 = vrot.lane.b32.xlu0 %v30, 94
  %v1402 = vpop.permute.xlu0 %1401
  %1403 = vrot.lane.b32.xlu0 %v31, 94
  %v1404 = vpop.permute.xlu0 %1403
  %1405 = vrot.lane.b32.xlu0 %v32, 94
  %v1406 = vpop.permute.xlu0 %1405
  %1407 = vrot.lane.b32.xlu0 %v33, 94
  %v1408 = vpop.permute.xlu0 %1407
  %1409 = vrot.lane.b32.xlu0 %v34, 94
  %v1410 = vpop.permute.xlu0 %1409
  %1411 = vrot.lane.b32.xlu0 %v35, 94
  %v1412 = vpop.permute.xlu0 %1411
  %1413 = vrot.lane.b32.xlu0 %v36, 94
  %v1414 = vpop.permute.xlu0 %1413
  %1415 = vrot.lane.b32.xlu0 %v37, 94
  %v1416 = vpop.permute.xlu0 %1415
  %1417 = vrot.lane.b32.xlu0 %v38, 94
  %v1418 = vpop.permute.xlu0 %1417
  %1419 = vrot.lane.b32.xlu0 %v39, 94
  %v1420 = vpop.permute.xlu0 %1419
  %1421 = vrot.lane.b32.xlu0 %v40, 94
  %v1422 = vpop.permute.xlu0 %1421
  %1423 = vrot.lane.b32.xlu0 %v41, 94
  %v1424 = vpop.permute.xlu0 %1423
  %1425 = vrot.lane.b32.xlu0 %v42, 94
  %v1426 = vpop.permute.xlu0 %1425
  %vm1427 = vcmask 769024
  %v1428 = vsel %vm1427, %v1390, %v1392
  %v1429 = vsel %vm1427, %v1392, %v1394
  %v1430 = vsel %vm1427, %v1394, %v1396
  %v1431 = vsel %vm1427, %v1396, %v1398
  %v1432 = vsel %vm1427, %v1398, %v1400
  %v1433 = vsel %vm1427, %v1400, %v1402
  %v1434 = vsel %vm1427, %v1402, %v1404
  %v1435 = vsel %vm1427, %v1404, %v1406
  %v1436 = vsel %vm1427, %v1406, %v1408
  %v1437 = vsel %vm1427, %v1408, %v1410
  %v1438 = vsel %vm1427, %v1410, %v1412
  %v1439 = vsel %vm1427, %v1412, %v1414
  %v1440 = vsel %vm1427, %v1414, %v1416
  %v1441 = vsel %vm1427, %v1416, %v1418
  %v1442 = vsel %vm1427, %v1418, %v1420
  %v1443 = vsel %vm1427, %v1420, %v1422
  %v1444 = vsel %vm1427, %v1422, %v1424
  %v1445 = vsel %vm1427, %v1424, %v1426
  %v1466 = vsel %vm140, %v1388, 0
  %1468 = vmatpush.msra.mxu0 0.0
  %1469 = vmatpush.msra.mxu0 0.0
  %1470 = vmatpush.msra.mxu0 0.0
  %1471 = vmatpush.msra.mxu0 0.0
  %1472 = vmatpush.msra.mxu0 0.0
  %1473 = vmatpush.msra.mxu0 0.0
  %1474 = vmatpush.msra.mxu0 0.0
  %1475 = vmatpush.msra.mxu0 0.0
  %1476 = vmatpush.msra.mxu0 0.0
  %1477 = vmatpush.msra.mxu0 0.0
  %1478 = vmatpush.msra.mxu0 0.0
  %1479 = vmatpush.msra.mxu0 0.0
  %1480 = vmatpush.msra.mxu0 0.0
  %1481 = vmatpush.msra.mxu0 0.0
  %1482 = vmatpush.msra.mxu0 0.0
  %1483 = vmatpush.msra.mxu0 %v1428
  %1484 = vmatmul.f32.gmra.mxu0 %v1466
  %v1485 = vpop.f32.mrf.mxu0
  %v1486 = vadd.f32 0.0, %v1485
  %1487 = vdwg.mxu0
  %1488 = vmatpush.msra.mxu0 0.0
  %1489 = vmatpush.msra.mxu0 0.0
  %1490 = vmatpush.msra.mxu0 0.0
  %1491 = vmatpush.msra.mxu0 0.0
  %1492 = vmatpush.msra.mxu0 0.0
  %1493 = vmatpush.msra.mxu0 0.0
  %1494 = vmatpush.msra.mxu0 0.0
  %1495 = vmatpush.msra.mxu0 0.0
  %1496 = vmatpush.msra.mxu0 0.0
  %1497 = vmatpush.msra.mxu0 0.0
  %1498 = vmatpush.msra.mxu0 0.0
  %1499 = vmatpush.msra.mxu0 0.0
  %1500 = vmatpush.msra.mxu0 0.0
  %1501 = vmatpush.msra.mxu0 0.0
  %1502 = vmatpush.msra.mxu0 0.0
  %1503 = vmatpush.msra.mxu0 %v1429
  %1504 = vmatmul.f32.gmra.mxu0 %v1466
  %v1505 = vpop.f32.mrf.mxu0
  %v1506 = vadd.f32 0.0, %v1505
  %1507 = vdwg.mxu0
  %1508 = vmatpush.msra.mxu0 0.0
  %1509 = vmatpush.msra.mxu0 0.0
  %1510 = vmatpush.msra.mxu0 0.0
  %1511 = vmatpush.msra.mxu0 0.0
  %1512 = vmatpush.msra.mxu0 0.0
  %1513 = vmatpush.msra.mxu0 0.0
  %1514 = vmatpush.msra.mxu0 0.0
  %1515 = vmatpush.msra.mxu0 0.0
  %1516 = vmatpush.msra.mxu0 0.0
  %1517 = vmatpush.msra.mxu0 0.0
  %1518 = vmatpush.msra.mxu0 0.0
  %1519 = vmatpush.msra.mxu0 0.0
  %1520 = vmatpush.msra.mxu0 0.0
  %1521 = vmatpush.msra.mxu0 0.0
  %1522 = vmatpush.msra.mxu0 0.0
  %1523 = vmatpush.msra.mxu0 %v1430
  %1524 = vmatmul.f32.gmra.mxu0 %v1466
  %v1525 = vpop.f32.mrf.mxu0
  %v1526 = vadd.f32 0.0, %v1525
  %1527 = vdwg.mxu0
  %1528 = vmatpush.msra.mxu0 0.0
  %1529 = vmatpush.msra.mxu0 0.0
  %1530 = vmatpush.msra.mxu0 0.0
  %1531 = vmatpush.msra.mxu0 0.0
  %1532 = vmatpush.msra.mxu0 0.0
  %1533 = vmatpush.msra.mxu0 0.0
  %1534 = vmatpush.msra.mxu0 0.0
  %1535 = vmatpush.msra.mxu0 0.0
  %1536 = vmatpush.msra.mxu0 0.0
  %1537 = vmatpush.msra.mxu0 0.0
  %1538 = vmatpush.msra.mxu0 0.0
  %1539 = vmatpush.msra.mxu0 0.0
  %1540 = vmatpush.msra.mxu0 0.0
  %1541 = vmatpush.msra.mxu0 0.0
  %1542 = vmatpush.msra.mxu0 0.0
  %1543 = vmatpush.msra.mxu0 %v1431
  %1544 = vmatmul.f32.gmra.mxu0 %v1466
  %v1545 = vpop.f32.mrf.mxu0
  %v1546 = vadd.f32 0.0, %v1545
  %1547 = vdwg.mxu0
  %1548 = vmatpush.msra.mxu0 0.0
  %1549 = vmatpush.msra.mxu0 0.0
  %1550 = vmatpush.msra.mxu0 0.0
  %1551 = vmatpush.msra.mxu0 0.0
  %1552 = vmatpush.msra.mxu0 0.0
  %1553 = vmatpush.msra.mxu0 0.0
  %1554 = vmatpush.msra.mxu0 0.0
  %1555 = vmatpush.msra.mxu0 0.0
  %1556 = vmatpush.msra.mxu0 0.0
  %1557 = vmatpush.msra.mxu0 0.0
  %1558 = vmatpush.msra.mxu0 0.0
  %1559 = vmatpush.msra.mxu0 0.0
  %1560 = vmatpush.msra.mxu0 0.0
  %1561 = vmatpush.msra.mxu0 0.0
  %1562 = vmatpush.msra.mxu0 0.0
  %1563 = vmatpush.msra.mxu0 %v1432
  %1564 = vmatmul.f32.gmra.mxu0 %v1466
  %v1565 = vpop.f32.mrf.mxu0
  %v1566 = vadd.f32 0.0, %v1565
  %1567 = vdwg.mxu0
  %1568 = vmatpush.msra.mxu0 0.0
  %1569 = vmatpush.msra.mxu0 0.0
  %1570 = vmatpush.msra.mxu0 0.0
  %1571 = vmatpush.msra.mxu0 0.0
  %1572 = vmatpush.msra.mxu0 0.0
  %1573 = vmatpush.msra.mxu0 0.0
  %1574 = vmatpush.msra.mxu0 0.0
  %1575 = vmatpush.msra.mxu0 0.0
  %1576 = vmatpush.msra.mxu0 0.0
  %1577 = vmatpush.msra.mxu0 0.0
  %1578 = vmatpush.msra.mxu0 0.0
  %1579 = vmatpush.msra.mxu0 0.0
  %1580 = vmatpush.msra.mxu0 0.0
  %1581 = vmatpush.msra.mxu0 0.0
  %1582 = vmatpush.msra.mxu0 0.0
  %1583 = vmatpush.msra.mxu0 %v1433
  %1584 = vmatmul.f32.gmra.mxu0 %v1466
  %v1585 = vpop.f32.mrf.mxu0
  %v1586 = vadd.f32 0.0, %v1585
  %1587 = vdwg.mxu0
  %1588 = vmatpush.msra.mxu0 0.0
  %1589 = vmatpush.msra.mxu0 0.0
  %1590 = vmatpush.msra.mxu0 0.0
  %1591 = vmatpush.msra.mxu0 0.0
  %1592 = vmatpush.msra.mxu0 0.0
  %1593 = vmatpush.msra.mxu0 0.0
  %1594 = vmatpush.msra.mxu0 0.0
  %1595 = vmatpush.msra.mxu0 0.0
  %1596 = vmatpush.msra.mxu0 0.0
  %1597 = vmatpush.msra.mxu0 0.0
  %1598 = vmatpush.msra.mxu0 0.0
  %1599 = vmatpush.msra.mxu0 0.0
  %1600 = vmatpush.msra.mxu0 0.0
  %1601 = vmatpush.msra.mxu0 0.0
  %1602 = vmatpush.msra.mxu0 0.0
  %1603 = vmatpush.msra.mxu0 %v1434
  %1604 = vmatmul.f32.gmra.mxu0 %v1466
  %v1605 = vpop.f32.mrf.mxu0
  %v1606 = vadd.f32 0.0, %v1605
  %1607 = vdwg.mxu0
  %1608 = vmatpush.msra.mxu0 0.0
  %1609 = vmatpush.msra.mxu0 0.0
  %1610 = vmatpush.msra.mxu0 0.0
  %1611 = vmatpush.msra.mxu0 0.0
  %1612 = vmatpush.msra.mxu0 0.0
  %1613 = vmatpush.msra.mxu0 0.0
  %1614 = vmatpush.msra.mxu0 0.0
  %1615 = vmatpush.msra.mxu0 0.0
  %1616 = vmatpush.msra.mxu0 0.0
  %1617 = vmatpush.msra.mxu0 0.0
  %1618 = vmatpush.msra.mxu0 0.0
  %1619 = vmatpush.msra.mxu0 0.0
  %1620 = vmatpush.msra.mxu0 0.0
  %1621 = vmatpush.msra.mxu0 0.0
  %1622 = vmatpush.msra.mxu0 0.0
  %1623 = vmatpush.msra.mxu0 %v1435
  %1624 = vmatmul.f32.gmra.mxu0 %v1466
  %v1625 = vpop.f32.mrf.mxu0
  %v1626 = vadd.f32 0.0, %v1625
  %1627 = vdwg.mxu0
  %1628 = vmatpush.msra.mxu0 0.0
  %1629 = vmatpush.msra.mxu0 0.0
  %1630 = vmatpush.msra.mxu0 0.0
  %1631 = vmatpush.msra.mxu0 0.0
  %1632 = vmatpush.msra.mxu0 0.0
  %1633 = vmatpush.msra.mxu0 0.0
  %1634 = vmatpush.msra.mxu0 0.0
  %1635 = vmatpush.msra.mxu0 0.0
  %1636 = vmatpush.msra.mxu0 0.0
  %1637 = vmatpush.msra.mxu0 0.0
  %1638 = vmatpush.msra.mxu0 0.0
  %1639 = vmatpush.msra.mxu0 0.0
  %1640 = vmatpush.msra.mxu0 0.0
  %1641 = vmatpush.msra.mxu0 0.0
  %1642 = vmatpush.msra.mxu0 0.0
  %1643 = vmatpush.msra.mxu0 %v1436
  %1644 = vmatmul.f32.gmra.mxu0 %v1466
  %v1645 = vpop.f32.mrf.mxu0
  %v1646 = vadd.f32 0.0, %v1645
  %1647 = vdwg.mxu0
  %1648 = vmatpush.msra.mxu0 0.0
  %1649 = vmatpush.msra.mxu0 0.0
  %1650 = vmatpush.msra.mxu0 0.0
  %1651 = vmatpush.msra.mxu0 0.0
  %1652 = vmatpush.msra.mxu0 0.0
  %1653 = vmatpush.msra.mxu0 0.0
  %1654 = vmatpush.msra.mxu0 0.0
  %1655 = vmatpush.msra.mxu0 0.0
  %1656 = vmatpush.msra.mxu0 0.0
  %1657 = vmatpush.msra.mxu0 0.0
  %1658 = vmatpush.msra.mxu0 0.0
  %1659 = vmatpush.msra.mxu0 0.0
  %1660 = vmatpush.msra.mxu0 0.0
  %1661 = vmatpush.msra.mxu0 0.0
  %1662 = vmatpush.msra.mxu0 0.0
  %1663 = vmatpush.msra.mxu0 %v1437
  %1664 = vmatmul.f32.gmra.mxu0 %v1466
  %v1665 = vpop.f32.mrf.mxu0
  %v1666 = vadd.f32 0.0, %v1665
  %1667 = vdwg.mxu0
  %1668 = vmatpush.msra.mxu0 0.0
  %1669 = vmatpush.msra.mxu0 0.0
  %1670 = vmatpush.msra.mxu0 0.0
  %1671 = vmatpush.msra.mxu0 0.0
  %1672 = vmatpush.msra.mxu0 0.0
  %1673 = vmatpush.msra.mxu0 0.0
  %1674 = vmatpush.msra.mxu0 0.0
  %1675 = vmatpush.msra.mxu0 0.0
  %1676 = vmatpush.msra.mxu0 0.0
  %1677 = vmatpush.msra.mxu0 0.0
  %1678 = vmatpush.msra.mxu0 0.0
  %1679 = vmatpush.msra.mxu0 0.0
  %1680 = vmatpush.msra.mxu0 0.0
  %1681 = vmatpush.msra.mxu0 0.0
  %1682 = vmatpush.msra.mxu0 0.0
  %1683 = vmatpush.msra.mxu0 %v1438
  %1684 = vmatmul.f32.gmra.mxu0 %v1466
  %v1685 = vpop.f32.mrf.mxu0
  %v1686 = vadd.f32 0.0, %v1685
  %1687 = vdwg.mxu0
  %1688 = vmatpush.msra.mxu0 0.0
  %1689 = vmatpush.msra.mxu0 0.0
  %1690 = vmatpush.msra.mxu0 0.0
  %1691 = vmatpush.msra.mxu0 0.0
  %1692 = vmatpush.msra.mxu0 0.0
  %1693 = vmatpush.msra.mxu0 0.0
  %1694 = vmatpush.msra.mxu0 0.0
  %1695 = vmatpush.msra.mxu0 0.0
  %1696 = vmatpush.msra.mxu0 0.0
  %1697 = vmatpush.msra.mxu0 0.0
  %1698 = vmatpush.msra.mxu0 0.0
  %1699 = vmatpush.msra.mxu0 0.0
  %1700 = vmatpush.msra.mxu0 0.0
  %1701 = vmatpush.msra.mxu0 0.0
  %1702 = vmatpush.msra.mxu0 0.0
  %1703 = vmatpush.msra.mxu0 %v1439
  %1704 = vmatmul.f32.gmra.mxu0 %v1466
  %v1705 = vpop.f32.mrf.mxu0
  %v1706 = vadd.f32 0.0, %v1705
  %1707 = vdwg.mxu0
  %1708 = vmatpush.msra.mxu0 0.0
  %1709 = vmatpush.msra.mxu0 0.0
  %1710 = vmatpush.msra.mxu0 0.0
  %1711 = vmatpush.msra.mxu0 0.0
  %1712 = vmatpush.msra.mxu0 0.0
  %1713 = vmatpush.msra.mxu0 0.0
  %1714 = vmatpush.msra.mxu0 0.0
  %1715 = vmatpush.msra.mxu0 0.0
  %1716 = vmatpush.msra.mxu0 0.0
  %1717 = vmatpush.msra.mxu0 0.0
  %1718 = vmatpush.msra.mxu0 0.0
  %1719 = vmatpush.msra.mxu0 0.0
  %1720 = vmatpush.msra.mxu0 0.0
  %1721 = vmatpush.msra.mxu0 0.0
  %1722 = vmatpush.msra.mxu0 0.0
  %1723 = vmatpush.msra.mxu0 %v1440
  %1724 = vmatmul.f32.gmra.mxu0 %v1466
  %v1725 = vpop.f32.mrf.mxu0
  %v1726 = vadd.f32 0.0, %v1725
  %1727 = vdwg.mxu0
  %1728 = vmatpush.msra.mxu0 0.0
  %1729 = vmatpush.msra.mxu0 0.0
  %1730 = vmatpush.msra.mxu0 0.0
  %1731 = vmatpush.msra.mxu0 0.0
  %1732 = vmatpush.msra.mxu0 0.0
  %1733 = vmatpush.msra.mxu0 0.0
  %1734 = vmatpush.msra.mxu0 0.0
  %1735 = vmatpush.msra.mxu0 0.0
  %1736 = vmatpush.msra.mxu0 0.0
  %1737 = vmatpush.msra.mxu0 0.0
  %1738 = vmatpush.msra.mxu0 0.0
  %1739 = vmatpush.msra.mxu0 0.0
  %1740 = vmatpush.msra.mxu0 0.0
  %1741 = vmatpush.msra.mxu0 0.0
  %1742 = vmatpush.msra.mxu0 0.0
  %1743 = vmatpush.msra.mxu0 %v1441
  %1744 = vmatmul.f32.gmra.mxu0 %v1466
  %v1745 = vpop.f32.mrf.mxu0
  %v1746 = vadd.f32 0.0, %v1745
  %1747 = vdwg.mxu0
  %1748 = vmatpush.msra.mxu0 0.0
  %1749 = vmatpush.msra.mxu0 0.0
  %1750 = vmatpush.msra.mxu0 0.0
  %1751 = vmatpush.msra.mxu0 0.0
  %1752 = vmatpush.msra.mxu0 0.0
  %1753 = vmatpush.msra.mxu0 0.0
  %1754 = vmatpush.msra.mxu0 0.0
  %1755 = vmatpush.msra.mxu0 0.0
  %1756 = vmatpush.msra.mxu0 0.0
  %1757 = vmatpush.msra.mxu0 0.0
  %1758 = vmatpush.msra.mxu0 0.0
  %1759 = vmatpush.msra.mxu0 0.0
  %1760 = vmatpush.msra.mxu0 0.0
  %1761 = vmatpush.msra.mxu0 0.0
  %1762 = vmatpush.msra.mxu0 0.0
  %1763 = vmatpush.msra.mxu0 %v1442
  %1764 = vmatmul.f32.gmra.mxu0 %v1466
  %v1765 = vpop.f32.mrf.mxu0
  %v1766 = vadd.f32 0.0, %v1765
  %1767 = vdwg.mxu0
  %1768 = vmatpush.msra.mxu0 0.0
  %1769 = vmatpush.msra.mxu0 0.0
  %1770 = vmatpush.msra.mxu0 0.0
  %1771 = vmatpush.msra.mxu0 0.0
  %1772 = vmatpush.msra.mxu0 0.0
  %1773 = vmatpush.msra.mxu0 0.0
  %1774 = vmatpush.msra.mxu0 0.0
  %1775 = vmatpush.msra.mxu0 0.0
  %1776 = vmatpush.msra.mxu0 0.0
  %1777 = vmatpush.msra.mxu0 0.0
  %1778 = vmatpush.msra.mxu0 0.0
  %1779 = vmatpush.msra.mxu0 0.0
  %1780 = vmatpush.msra.mxu0 0.0
  %1781 = vmatpush.msra.mxu0 0.0
  %1782 = vmatpush.msra.mxu0 0.0
  %1783 = vmatpush.msra.mxu0 %v1443
  %1784 = vmatmul.f32.gmra.mxu0 %v1466
  %v1785 = vpop.f32.mrf.mxu0
  %v1786 = vadd.f32 0.0, %v1785
  %1787 = vdwg.mxu0
  %1788 = vmatpush.msra.mxu0 0.0
  %1789 = vmatpush.msra.mxu0 0.0
  %1790 = vmatpush.msra.mxu0 0.0
  %1791 = vmatpush.msra.mxu0 0.0
  %1792 = vmatpush.msra.mxu0 0.0
  %1793 = vmatpush.msra.mxu0 0.0
  %1794 = vmatpush.msra.mxu0 0.0
  %1795 = vmatpush.msra.mxu0 0.0
  %1796 = vmatpush.msra.mxu0 0.0
  %1797 = vmatpush.msra.mxu0 0.0
  %1798 = vmatpush.msra.mxu0 0.0
  %1799 = vmatpush.msra.mxu0 0.0
  %1800 = vmatpush.msra.mxu0 0.0
  %1801 = vmatpush.msra.mxu0 0.0
  %1802 = vmatpush.msra.mxu0 0.0
  %1803 = vmatpush.msra.mxu0 %v1444
  %1804 = vmatmul.f32.gmra.mxu0 %v1466
  %v1805 = vpop.f32.mrf.mxu0
  %v1806 = vadd.f32 0.0, %v1805
  %1807 = vdwg.mxu0
  %1808 = vmatpush.msra.mxu0 0.0
  %1809 = vmatpush.msra.mxu0 0.0
  %1810 = vmatpush.msra.mxu0 0.0
  %1811 = vmatpush.msra.mxu0 0.0
  %1812 = vmatpush.msra.mxu0 0.0
  %1813 = vmatpush.msra.mxu0 0.0
  %1814 = vmatpush.msra.mxu0 0.0
  %1815 = vmatpush.msra.mxu0 0.0
  %1816 = vmatpush.msra.mxu0 0.0
  %1817 = vmatpush.msra.mxu0 0.0
  %1818 = vmatpush.msra.mxu0 0.0
  %1819 = vmatpush.msra.mxu0 0.0
  %1820 = vmatpush.msra.mxu0 0.0
  %1821 = vmatpush.msra.mxu0 0.0
  %1822 = vmatpush.msra.mxu0 0.0
  %1823 = vmatpush.msra.mxu0 %v1445
  %1824 = vmatmul.f32.gmra.mxu0 %v1466
  %v1825 = vpop.f32.mrf.mxu0
  %v1826 = vadd.f32 0.0, %v1825
  %1827 = vdwg.mxu0
  %1828 = vmatpush.msra.mxu0 0.0
  %1829 = vmatpush.msra.mxu0 0.0
  %1830 = vmatpush.msra.mxu0 0.0
  %1831 = vmatpush.msra.mxu0 0.0
  %1832 = vmatpush.msra.mxu0 0.0
  %1833 = vmatpush.msra.mxu0 0.0
  %1834 = vmatpush.msra.mxu0 0.0
  %1835 = vmatpush.msra.mxu0 0.0
  %1836 = vmatpush.msra.mxu0 0.0
  %1837 = vmatpush.msra.mxu0 0.0
  %1838 = vmatpush.msra.mxu0 0.0
  %1839 = vmatpush.msra.mxu0 0.0
  %1840 = vmatpush.msra.mxu0 0.0
  %1841 = vmatpush.msra.mxu0 0.0
  %1842 = vmatpush.msra.mxu0 0.0
  %1843 = vmatpush.msra.mxu0 %v1426
  %1844 = vmatmul.f32.gmra.mxu0 %v1466
  %v1845 = vpop.f32.mrf.mxu0
  %v1846 = vadd.f32 0.0, %v1845
  %1847 = vdwg.mxu0
  %v1848 = vadd.f32 %v1368, %v1486
  %v1849 = vadd.f32 %v1369, %v1506
  %v1850 = vadd.f32 %v1370, %v1526
  %v1851 = vadd.f32 %v1371, %v1546
  %v1852 = vadd.f32 %v1372, %v1566
  %v1853 = vadd.f32 %v1373, %v1586
  %v1854 = vadd.f32 %v1374, %v1606
  %v1855 = vadd.f32 %v1375, %v1626
  %v1856 = vadd.f32 %v1376, %v1646
  %v1857 = vadd.f32 %v1377, %v1666
  %v1858 = vadd.f32 %v1378, %v1686
  %v1859 = vadd.f32 %v1379, %v1706
  %v1860 = vadd.f32 %v1380, %v1726
  %v1861 = vadd.f32 %v1381, %v1746
  %v1862 = vadd.f32 %v1382, %v1766
  %v1863 = vadd.f32 %v1383, %v1786
  %v1864 = vadd.f32 %v1384, %v1806
  %v1865 = vadd.f32 %v1385, %v1826
  %v1866 = vadd.f32 %v1386, %v1846
  %s1867 = scalar_lea.vmem %s1, 32
  %v1868 = vld [vmem:[%s1867] sm:$0xff]
  %1869 = vrot.lane.b32.xlu0 %v24, 93
  %v1870 = vpop.permute.xlu0 %1869
  %1871 = vrot.lane.b32.xlu0 %v25, 93
  %v1872 = vpop.permute.xlu0 %1871
  %1873 = vrot.lane.b32.xlu0 %v26, 93
  %v1874 = vpop.permute.xlu0 %1873
  %1875 = vrot.lane.b32.xlu0 %v27, 93
  %v1876 = vpop.permute.xlu0 %1875
  %1877 = vrot.lane.b32.xlu0 %v28, 93
  %v1878 = vpop.permute.xlu0 %1877
  %1879 = vrot.lane.b32.xlu0 %v29, 93
  %v1880 = vpop.permute.xlu0 %1879
  %1881 = vrot.lane.b32.xlu0 %v30, 93
  %v1882 = vpop.permute.xlu0 %1881
  %1883 = vrot.lane.b32.xlu0 %v31, 93
  %v1884 = vpop.permute.xlu0 %1883
  %1885 = vrot.lane.b32.xlu0 %v32, 93
  %v1886 = vpop.permute.xlu0 %1885
  %1887 = vrot.lane.b32.xlu0 %v33, 93
  %v1888 = vpop.permute.xlu0 %1887
  %1889 = vrot.lane.b32.xlu0 %v34, 93
  %v1890 = vpop.permute.xlu0 %1889
  %1891 = vrot.lane.b32.xlu0 %v35, 93
  %v1892 = vpop.permute.xlu0 %1891
  %1893 = vrot.lane.b32.xlu0 %v36, 93
  %v1894 = vpop.permute.xlu0 %1893
  %1895 = vrot.lane.b32.xlu0 %v37, 93
  %v1896 = vpop.permute.xlu0 %1895
  %1897 = vrot.lane.b32.xlu0 %v38, 93
  %v1898 = vpop.permute.xlu0 %1897
  %1899 = vrot.lane.b32.xlu0 %v39, 93
  %v1900 = vpop.permute.xlu0 %1899
  %1901 = vrot.lane.b32.xlu0 %v40, 93
  %v1902 = vpop.permute.xlu0 %1901
  %1903 = vrot.lane.b32.xlu0 %v41, 93
  %v1904 = vpop.permute.xlu0 %1903
  %1905 = vrot.lane.b32.xlu0 %v42, 93
  %v1906 = vpop.permute.xlu0 %1905
  %vm1907 = vcmask 760832
  %v1908 = vsel %vm1907, %v1870, %v1872
  %v1909 = vsel %vm1907, %v1872, %v1874
  %v1910 = vsel %vm1907, %v1874, %v1876
  %v1911 = vsel %vm1907, %v1876, %v1878
  %v1912 = vsel %vm1907, %v1878, %v1880
  %v1913 = vsel %vm1907, %v1880, %v1882
  %v1914 = vsel %vm1907, %v1882, %v1884
  %v1915 = vsel %vm1907, %v1884, %v1886
  %v1916 = vsel %vm1907, %v1886, %v1888
  %v1917 = vsel %vm1907, %v1888, %v1890
  %v1918 = vsel %vm1907, %v1890, %v1892
  %v1919 = vsel %vm1907, %v1892, %v1894
  %v1920 = vsel %vm1907, %v1894, %v1896
  %v1921 = vsel %vm1907, %v1896, %v1898
  %v1922 = vsel %vm1907, %v1898, %v1900
  %v1923 = vsel %vm1907, %v1900, %v1902
  %v1924 = vsel %vm1907, %v1902, %v1904
  %v1925 = vsel %vm1907, %v1904, %v1906
  %v1946 = vsel %vm140, %v1868, 0
  %1948 = vmatpush.msra.mxu0 0.0
  %1949 = vmatpush.msra.mxu0 0.0
  %1950 = vmatpush.msra.mxu0 0.0
  %1951 = vmatpush.msra.mxu0 0.0
  %1952 = vmatpush.msra.mxu0 0.0
  %1953 = vmatpush.msra.mxu0 0.0
  %1954 = vmatpush.msra.mxu0 0.0
  %1955 = vmatpush.msra.mxu0 0.0
  %1956 = vmatpush.msra.mxu0 0.0
  %1957 = vmatpush.msra.mxu0 0.0
  %1958 = vmatpush.msra.mxu0 0.0
  %1959 = vmatpush.msra.mxu0 0.0
  %1960 = vmatpush.msra.mxu0 0.0
  %1961 = vmatpush.msra.mxu0 0.0
  %1962 = vmatpush.msra.mxu0 0.0
  %1963 = vmatpush.msra.mxu0 %v1908
  %1964 = vmatmul.f32.gmra.mxu0 %v1946
  %v1965 = vpop.f32.mrf.mxu0
  %v1966 = vadd.f32 0.0, %v1965
  %1967 = vdwg.mxu0
  %1968 = vmatpush.msra.mxu0 0.0
  %1969 = vmatpush.msra.mxu0 0.0
  %1970 = vmatpush.msra.mxu0 0.0
  %1971 = vmatpush.msra.mxu0 0.0
  %1972 = vmatpush.msra.mxu0 0.0
  %1973 = vmatpush.msra.mxu0 0.0
  %1974 = vmatpush.msra.mxu0 0.0
  %1975 = vmatpush.msra.mxu0 0.0
  %1976 = vmatpush.msra.mxu0 0.0
  %1977 = vmatpush.msra.mxu0 0.0
  %1978 = vmatpush.msra.mxu0 0.0
  %1979 = vmatpush.msra.mxu0 0.0
  %1980 = vmatpush.msra.mxu0 0.0
  %1981 = vmatpush.msra.mxu0 0.0
  %1982 = vmatpush.msra.mxu0 0.0
  %1983 = vmatpush.msra.mxu0 %v1909
  %1984 = vmatmul.f32.gmra.mxu0 %v1946
  %v1985 = vpop.f32.mrf.mxu0
  %v1986 = vadd.f32 0.0, %v1985
  %1987 = vdwg.mxu0
  %1988 = vmatpush.msra.mxu0 0.0
  %1989 = vmatpush.msra.mxu0 0.0
  %1990 = vmatpush.msra.mxu0 0.0
  %1991 = vmatpush.msra.mxu0 0.0
  %1992 = vmatpush.msra.mxu0 0.0
  %1993 = vmatpush.msra.mxu0 0.0
  %1994 = vmatpush.msra.mxu0 0.0
  %1995 = vmatpush.msra.mxu0 0.0
  %1996 = vmatpush.msra.mxu0 0.0
  %1997 = vmatpush.msra.mxu0 0.0
  %1998 = vmatpush.msra.mxu0 0.0
  %1999 = vmatpush.msra.mxu0 0.0
  %2000 = vmatpush.msra.mxu0 0.0
  %2001 = vmatpush.msra.mxu0 0.0
  %2002 = vmatpush.msra.mxu0 0.0
  %2003 = vmatpush.msra.mxu0 %v1910
  %2004 = vmatmul.f32.gmra.mxu0 %v1946
  %v2005 = vpop.f32.mrf.mxu0
  %v2006 = vadd.f32 0.0, %v2005
  %2007 = vdwg.mxu0
  %2008 = vmatpush.msra.mxu0 0.0
  %2009 = vmatpush.msra.mxu0 0.0
  %2010 = vmatpush.msra.mxu0 0.0
  %2011 = vmatpush.msra.mxu0 0.0
  %2012 = vmatpush.msra.mxu0 0.0
  %2013 = vmatpush.msra.mxu0 0.0
  %2014 = vmatpush.msra.mxu0 0.0
  %2015 = vmatpush.msra.mxu0 0.0
  %2016 = vmatpush.msra.mxu0 0.0
  %2017 = vmatpush.msra.mxu0 0.0
  %2018 = vmatpush.msra.mxu0 0.0
  %2019 = vmatpush.msra.mxu0 0.0
  %2020 = vmatpush.msra.mxu0 0.0
  %2021 = vmatpush.msra.mxu0 0.0
  %2022 = vmatpush.msra.mxu0 0.0
  %2023 = vmatpush.msra.mxu0 %v1911
  %2024 = vmatmul.f32.gmra.mxu0 %v1946
  %v2025 = vpop.f32.mrf.mxu0
  %v2026 = vadd.f32 0.0, %v2025
  %2027 = vdwg.mxu0
  %2028 = vmatpush.msra.mxu0 0.0
  %2029 = vmatpush.msra.mxu0 0.0
  %2030 = vmatpush.msra.mxu0 0.0
  %2031 = vmatpush.msra.mxu0 0.0
  %2032 = vmatpush.msra.mxu0 0.0
  %2033 = vmatpush.msra.mxu0 0.0
  %2034 = vmatpush.msra.mxu0 0.0
  %2035 = vmatpush.msra.mxu0 0.0
  %2036 = vmatpush.msra.mxu0 0.0
  %2037 = vmatpush.msra.mxu0 0.0
  %2038 = vmatpush.msra.mxu0 0.0
  %2039 = vmatpush.msra.mxu0 0.0
  %2040 = vmatpush.msra.mxu0 0.0
  %2041 = vmatpush.msra.mxu0 0.0
  %2042 = vmatpush.msra.mxu0 0.0
  %2043 = vmatpush.msra.mxu0 %v1912
  %2044 = vmatmul.f32.gmra.mxu0 %v1946
  %v2045 = vpop.f32.mrf.mxu0
  %v2046 = vadd.f32 0.0, %v2045
  %2047 = vdwg.mxu0
  %2048 = vmatpush.msra.mxu0 0.0
  %2049 = vmatpush.msra.mxu0 0.0
  %2050 = vmatpush.msra.mxu0 0.0
  %2051 = vmatpush.msra.mxu0 0.0
  %2052 = vmatpush.msra.mxu0 0.0
  %2053 = vmatpush.msra.mxu0 0.0
  %2054 = vmatpush.msra.mxu0 0.0
  %2055 = vmatpush.msra.mxu0 0.0
  %2056 = vmatpush.msra.mxu0 0.0
  %2057 = vmatpush.msra.mxu0 0.0
  %2058 = vmatpush.msra.mxu0 0.0
  %2059 = vmatpush.msra.mxu0 0.0
  %2060 = vmatpush.msra.mxu0 0.0
  %2061 = vmatpush.msra.mxu0 0.0
  %2062 = vmatpush.msra.mxu0 0.0
  %2063 = vmatpush.msra.mxu0 %v1913
  %2064 = vmatmul.f32.gmra.mxu0 %v1946
  %v2065 = vpop.f32.mrf.mxu0
  %v2066 = vadd.f32 0.0, %v2065
  %2067 = vdwg.mxu0
  %2068 = vmatpush.msra.mxu0 0.0
  %2069 = vmatpush.msra.mxu0 0.0
  %2070 = vmatpush.msra.mxu0 0.0
  %2071 = vmatpush.msra.mxu0 0.0
  %2072 = vmatpush.msra.mxu0 0.0
  %2073 = vmatpush.msra.mxu0 0.0
  %2074 = vmatpush.msra.mxu0 0.0
  %2075 = vmatpush.msra.mxu0 0.0
  %2076 = vmatpush.msra.mxu0 0.0
  %2077 = vmatpush.msra.mxu0 0.0
  %2078 = vmatpush.msra.mxu0 0.0
  %2079 = vmatpush.msra.mxu0 0.0
  %2080 = vmatpush.msra.mxu0 0.0
  %2081 = vmatpush.msra.mxu0 0.0
  %2082 = vmatpush.msra.mxu0 0.0
  %2083 = vmatpush.msra.mxu0 %v1914
  %2084 = vmatmul.f32.gmra.mxu0 %v1946
  %v2085 = vpop.f32.mrf.mxu0
  %v2086 = vadd.f32 0.0, %v2085
  %2087 = vdwg.mxu0
  %2088 = vmatpush.msra.mxu0 0.0
  %2089 = vmatpush.msra.mxu0 0.0
  %2090 = vmatpush.msra.mxu0 0.0
  %2091 = vmatpush.msra.mxu0 0.0
  %2092 = vmatpush.msra.mxu0 0.0
  %2093 = vmatpush.msra.mxu0 0.0
  %2094 = vmatpush.msra.mxu0 0.0
  %2095 = vmatpush.msra.mxu0 0.0
  %2096 = vmatpush.msra.mxu0 0.0
  %2097 = vmatpush.msra.mxu0 0.0
  %2098 = vmatpush.msra.mxu0 0.0
  %2099 = vmatpush.msra.mxu0 0.0
  %2100 = vmatpush.msra.mxu0 0.0
  %2101 = vmatpush.msra.mxu0 0.0
  %2102 = vmatpush.msra.mxu0 0.0
  %2103 = vmatpush.msra.mxu0 %v1915
  %2104 = vmatmul.f32.gmra.mxu0 %v1946
  %v2105 = vpop.f32.mrf.mxu0
  %v2106 = vadd.f32 0.0, %v2105
  %2107 = vdwg.mxu0
  %2108 = vmatpush.msra.mxu0 0.0
  %2109 = vmatpush.msra.mxu0 0.0
  %2110 = vmatpush.msra.mxu0 0.0
  %2111 = vmatpush.msra.mxu0 0.0
  %2112 = vmatpush.msra.mxu0 0.0
  %2113 = vmatpush.msra.mxu0 0.0
  %2114 = vmatpush.msra.mxu0 0.0
  %2115 = vmatpush.msra.mxu0 0.0
  %2116 = vmatpush.msra.mxu0 0.0
  %2117 = vmatpush.msra.mxu0 0.0
  %2118 = vmatpush.msra.mxu0 0.0
  %2119 = vmatpush.msra.mxu0 0.0
  %2120 = vmatpush.msra.mxu0 0.0
  %2121 = vmatpush.msra.mxu0 0.0
  %2122 = vmatpush.msra.mxu0 0.0
  %2123 = vmatpush.msra.mxu0 %v1916
  %2124 = vmatmul.f32.gmra.mxu0 %v1946
  %v2125 = vpop.f32.mrf.mxu0
  %v2126 = vadd.f32 0.0, %v2125
  %2127 = vdwg.mxu0
  %2128 = vmatpush.msra.mxu0 0.0
  %2129 = vmatpush.msra.mxu0 0.0
  %2130 = vmatpush.msra.mxu0 0.0
  %2131 = vmatpush.msra.mxu0 0.0
  %2132 = vmatpush.msra.mxu0 0.0
  %2133 = vmatpush.msra.mxu0 0.0
  %2134 = vmatpush.msra.mxu0 0.0
  %2135 = vmatpush.msra.mxu0 0.0
  %2136 = vmatpush.msra.mxu0 0.0
  %2137 = vmatpush.msra.mxu0 0.0
  %2138 = vmatpush.msra.mxu0 0.0
  %2139 = vmatpush.msra.mxu0 0.0
  %2140 = vmatpush.msra.mxu0 0.0
  %2141 = vmatpush.msra.mxu0 0.0
  %2142 = vmatpush.msra.mxu0 0.0
  %2143 = vmatpush.msra.mxu0 %v1917
  %2144 = vmatmul.f32.gmra.mxu0 %v1946
  %v2145 = vpop.f32.mrf.mxu0
  %v2146 = vadd.f32 0.0, %v2145
  %2147 = vdwg.mxu0
  %2148 = vmatpush.msra.mxu0 0.0
  %2149 = vmatpush.msra.mxu0 0.0
  %2150 = vmatpush.msra.mxu0 0.0
  %2151 = vmatpush.msra.mxu0 0.0
  %2152 = vmatpush.msra.mxu0 0.0
  %2153 = vmatpush.msra.mxu0 0.0
  %2154 = vmatpush.msra.mxu0 0.0
  %2155 = vmatpush.msra.mxu0 0.0
  %2156 = vmatpush.msra.mxu0 0.0
  %2157 = vmatpush.msra.mxu0 0.0
  %2158 = vmatpush.msra.mxu0 0.0
  %2159 = vmatpush.msra.mxu0 0.0
  %2160 = vmatpush.msra.mxu0 0.0
  %2161 = vmatpush.msra.mxu0 0.0
  %2162 = vmatpush.msra.mxu0 0.0
  %2163 = vmatpush.msra.mxu0 %v1918
  %2164 = vmatmul.f32.gmra.mxu0 %v1946
  %v2165 = vpop.f32.mrf.mxu0
  %v2166 = vadd.f32 0.0, %v2165
  %2167 = vdwg.mxu0
  %2168 = vmatpush.msra.mxu0 0.0
  %2169 = vmatpush.msra.mxu0 0.0
  %2170 = vmatpush.msra.mxu0 0.0
  %2171 = vmatpush.msra.mxu0 0.0
  %2172 = vmatpush.msra.mxu0 0.0
  %2173 = vmatpush.msra.mxu0 0.0
  %2174 = vmatpush.msra.mxu0 0.0
  %2175 = vmatpush.msra.mxu0 0.0
  %2176 = vmatpush.msra.mxu0 0.0
  %2177 = vmatpush.msra.mxu0 0.0
  %2178 = vmatpush.msra.mxu0 0.0
  %2179 = vmatpush.msra.mxu0 0.0
  %2180 = vmatpush.msra.mxu0 0.0
  %2181 = vmatpush.msra.mxu0 0.0
  %2182 = vmatpush.msra.mxu0 0.0
  %2183 = vmatpush.msra.mxu0 %v1919
  %2184 = vmatmul.f32.gmra.mxu0 %v1946
  %v2185 = vpop.f32.mrf.mxu0
  %v2186 = vadd.f32 0.0, %v2185
  %2187 = vdwg.mxu0
  %2188 = vmatpush.msra.mxu0 0.0
  %2189 = vmatpush.msra.mxu0 0.0
  %2190 = vmatpush.msra.mxu0 0.0
  %2191 = vmatpush.msra.mxu0 0.0
  %2192 = vmatpush.msra.mxu0 0.0
  %2193 = vmatpush.msra.mxu0 0.0
  %2194 = vmatpush.msra.mxu0 0.0
  %2195 = vmatpush.msra.mxu0 0.0
  %2196 = vmatpush.msra.mxu0 0.0
  %2197 = vmatpush.msra.mxu0 0.0
  %2198 = vmatpush.msra.mxu0 0.0
  %2199 = vmatpush.msra.mxu0 0.0
  %2200 = vmatpush.msra.mxu0 0.0
  %2201 = vmatpush.msra.mxu0 0.0
  %2202 = vmatpush.msra.mxu0 0.0
  %2203 = vmatpush.msra.mxu0 %v1920
  %2204 = vmatmul.f32.gmra.mxu0 %v1946
  %v2205 = vpop.f32.mrf.mxu0
  %v2206 = vadd.f32 0.0, %v2205
  %2207 = vdwg.mxu0
  %2208 = vmatpush.msra.mxu0 0.0
  %2209 = vmatpush.msra.mxu0 0.0
  %2210 = vmatpush.msra.mxu0 0.0
  %2211 = vmatpush.msra.mxu0 0.0
  %2212 = vmatpush.msra.mxu0 0.0
  %2213 = vmatpush.msra.mxu0 0.0
  %2214 = vmatpush.msra.mxu0 0.0
  %2215 = vmatpush.msra.mxu0 0.0
  %2216 = vmatpush.msra.mxu0 0.0
  %2217 = vmatpush.msra.mxu0 0.0
  %2218 = vmatpush.msra.mxu0 0.0
  %2219 = vmatpush.msra.mxu0 0.0
  %2220 = vmatpush.msra.mxu0 0.0
  %2221 = vmatpush.msra.mxu0 0.0
  %2222 = vmatpush.msra.mxu0 0.0
  %2223 = vmatpush.msra.mxu0 %v1921
  %2224 = vmatmul.f32.gmra.mxu0 %v1946
  %v2225 = vpop.f32.mrf.mxu0
  %v2226 = vadd.f32 0.0, %v2225
  %2227 = vdwg.mxu0
  %2228 = vmatpush.msra.mxu0 0.0
  %2229 = vmatpush.msra.mxu0 0.0
  %2230 = vmatpush.msra.mxu0 0.0
  %2231 = vmatpush.msra.mxu0 0.0
  %2232 = vmatpush.msra.mxu0 0.0
  %2233 = vmatpush.msra.mxu0 0.0
  %2234 = vmatpush.msra.mxu0 0.0
  %2235 = vmatpush.msra.mxu0 0.0
  %2236 = vmatpush.msra.mxu0 0.0
  %2237 = vmatpush.msra.mxu0 0.0
  %2238 = vmatpush.msra.mxu0 0.0
  %2239 = vmatpush.msra.mxu0 0.0
  %2240 = vmatpush.msra.mxu0 0.0
  %2241 = vmatpush.msra.mxu0 0.0
  %2242 = vmatpush.msra.mxu0 0.0
  %2243 = vmatpush.msra.mxu0 %v1922
  %2244 = vmatmul.f32.gmra.mxu0 %v1946
  %v2245 = vpop.f32.mrf.mxu0
  %v2246 = vadd.f32 0.0, %v2245
  %2247 = vdwg.mxu0
  %2248 = vmatpush.msra.mxu0 0.0
  %2249 = vmatpush.msra.mxu0 0.0
  %2250 = vmatpush.msra.mxu0 0.0
  %2251 = vmatpush.msra.mxu0 0.0
  %2252 = vmatpush.msra.mxu0 0.0
  %2253 = vmatpush.msra.mxu0 0.0
  %2254 = vmatpush.msra.mxu0 0.0
  %2255 = vmatpush.msra.mxu0 0.0
  %2256 = vmatpush.msra.mxu0 0.0
  %2257 = vmatpush.msra.mxu0 0.0
  %2258 = vmatpush.msra.mxu0 0.0
  %2259 = vmatpush.msra.mxu0 0.0
  %2260 = vmatpush.msra.mxu0 0.0
  %2261 = vmatpush.msra.mxu0 0.0
  %2262 = vmatpush.msra.mxu0 0.0
  %2263 = vmatpush.msra.mxu0 %v1923
  %2264 = vmatmul.f32.gmra.mxu0 %v1946
  %v2265 = vpop.f32.mrf.mxu0
  %v2266 = vadd.f32 0.0, %v2265
  %2267 = vdwg.mxu0
  %2268 = vmatpush.msra.mxu0 0.0
  %2269 = vmatpush.msra.mxu0 0.0
  %2270 = vmatpush.msra.mxu0 0.0
  %2271 = vmatpush.msra.mxu0 0.0
  %2272 = vmatpush.msra.mxu0 0.0
  %2273 = vmatpush.msra.mxu0 0.0
  %2274 = vmatpush.msra.mxu0 0.0
  %2275 = vmatpush.msra.mxu0 0.0
  %2276 = vmatpush.msra.mxu0 0.0
  %2277 = vmatpush.msra.mxu0 0.0
  %2278 = vmatpush.msra.mxu0 0.0
  %2279 = vmatpush.msra.mxu0 0.0
  %2280 = vmatpush.msra.mxu0 0.0
  %2281 = vmatpush.msra.mxu0 0.0
  %2282 = vmatpush.msra.mxu0 0.0
  %2283 = vmatpush.msra.mxu0 %v1924
  %2284 = vmatmul.f32.gmra.mxu0 %v1946
  %v2285 = vpop.f32.mrf.mxu0
  %v2286 = vadd.f32 0.0, %v2285
  %2287 = vdwg.mxu0
  %2288 = vmatpush.msra.mxu0 0.0
  %2289 = vmatpush.msra.mxu0 0.0
  %2290 = vmatpush.msra.mxu0 0.0
  %2291 = vmatpush.msra.mxu0 0.0
  %2292 = vmatpush.msra.mxu0 0.0
  %2293 = vmatpush.msra.mxu0 0.0
  %2294 = vmatpush.msra.mxu0 0.0
  %2295 = vmatpush.msra.mxu0 0.0
  %2296 = vmatpush.msra.mxu0 0.0
  %2297 = vmatpush.msra.mxu0 0.0
  %2298 = vmatpush.msra.mxu0 0.0
  %2299 = vmatpush.msra.mxu0 0.0
  %2300 = vmatpush.msra.mxu0 0.0
  %2301 = vmatpush.msra.mxu0 0.0
  %2302 = vmatpush.msra.mxu0 0.0
  %2303 = vmatpush.msra.mxu0 %v1925
  %2304 = vmatmul.f32.gmra.mxu0 %v1946
  %v2305 = vpop.f32.mrf.mxu0
  %v2306 = vadd.f32 0.0, %v2305
  %2307 = vdwg.mxu0
  %2308 = vmatpush.msra.mxu0 0.0
  %2309 = vmatpush.msra.mxu0 0.0
  %2310 = vmatpush.msra.mxu0 0.0
  %2311 = vmatpush.msra.mxu0 0.0
  %2312 = vmatpush.msra.mxu0 0.0
  %2313 = vmatpush.msra.mxu0 0.0
  %2314 = vmatpush.msra.mxu0 0.0
  %2315 = vmatpush.msra.mxu0 0.0
  %2316 = vmatpush.msra.mxu0 0.0
  %2317 = vmatpush.msra.mxu0 0.0
  %2318 = vmatpush.msra.mxu0 0.0
  %2319 = vmatpush.msra.mxu0 0.0
  %2320 = vmatpush.msra.mxu0 0.0
  %2321 = vmatpush.msra.mxu0 0.0
  %2322 = vmatpush.msra.mxu0 0.0
  %2323 = vmatpush.msra.mxu0 %v1906
  %2324 = vmatmul.f32.gmra.mxu0 %v1946
  %v2325 = vpop.f32.mrf.mxu0
  %v2326 = vadd.f32 0.0, %v2325
  %2327 = vdwg.mxu0
  %v2328 = vadd.f32 %v1848, %v1966
  %v2329 = vadd.f32 %v1849, %v1986
  %v2330 = vadd.f32 %v1850, %v2006
  %v2331 = vadd.f32 %v1851, %v2026
  %v2332 = vadd.f32 %v1852, %v2046
  %v2333 = vadd.f32 %v1853, %v2066
  %v2334 = vadd.f32 %v1854, %v2086
  %v2335 = vadd.f32 %v1855, %v2106
  %v2336 = vadd.f32 %v1856, %v2126
  %v2337 = vadd.f32 %v1857, %v2146
  %v2338 = vadd.f32 %v1858, %v2166
  %v2339 = vadd.f32 %v1859, %v2186
  %v2340 = vadd.f32 %v1860, %v2206
  %v2341 = vadd.f32 %v1861, %v2226
  %v2342 = vadd.f32 %v1862, %v2246
  %v2343 = vadd.f32 %v1863, %v2266
  %v2344 = vadd.f32 %v1864, %v2286
  %v2345 = vadd.f32 %v1865, %v2306
  %v2346 = vadd.f32 %v1866, %v2326
  %s2347 = scalar_lea.vmem %s1, 40
  %v2348 = vld [vmem:[%s2347] sm:$0xff]
  %2349 = vrot.lane.b32.xlu0 %v24, 92
  %v2350 = vpop.permute.xlu0 %2349
  %2351 = vrot.lane.b32.xlu0 %v25, 92
  %v2352 = vpop.permute.xlu0 %2351
  %2353 = vrot.lane.b32.xlu0 %v26, 92
  %v2354 = vpop.permute.xlu0 %2353
  %2355 = vrot.lane.b32.xlu0 %v27, 92
  %v2356 = vpop.permute.xlu0 %2355
  %2357 = vrot.lane.b32.xlu0 %v28, 92
  %v2358 = vpop.permute.xlu0 %2357
  %2359 = vrot.lane.b32.xlu0 %v29, 92
  %v2360 = vpop.permute.xlu0 %2359
  %2361 = vrot.lane.b32.xlu0 %v30, 92
  %v2362 = vpop.permute.xlu0 %2361
  %2363 = vrot.lane.b32.xlu0 %v31, 92
  %v2364 = vpop.permute.xlu0 %2363
  %2365 = vrot.lane.b32.xlu0 %v32, 92
  %v2366 = vpop.permute.xlu0 %2365
  %2367 = vrot.lane.b32.xlu0 %v33, 92
  %v2368 = vpop.permute.xlu0 %2367
  %2369 = vrot.lane.b32.xlu0 %v34, 92
  %v2370 = vpop.permute.xlu0 %2369
  %2371 = vrot.lane.b32.xlu0 %v35, 92
  %v2372 = vpop.permute.xlu0 %2371
  %2373 = vrot.lane.b32.xlu0 %v36, 92
  %v2374 = vpop.permute.xlu0 %2373
  %2375 = vrot.lane.b32.xlu0 %v37, 92
  %v2376 = vpop.permute.xlu0 %2375
  %2377 = vrot.lane.b32.xlu0 %v38, 92
  %v2378 = vpop.permute.xlu0 %2377
  %2379 = vrot.lane.b32.xlu0 %v39, 92
  %v2380 = vpop.permute.xlu0 %2379
  %2381 = vrot.lane.b32.xlu0 %v40, 92
  %v2382 = vpop.permute.xlu0 %2381
  %2383 = vrot.lane.b32.xlu0 %v41, 92
  %v2384 = vpop.permute.xlu0 %2383
  %2385 = vrot.lane.b32.xlu0 %v42, 92
  %v2386 = vpop.permute.xlu0 %2385
  %vm2387 = vcmask 752640
  %v2388 = vsel %vm2387, %v2350, %v2352
  %v2389 = vsel %vm2387, %v2352, %v2354
  %v2390 = vsel %vm2387, %v2354, %v2356
  %v2391 = vsel %vm2387, %v2356, %v2358
  %v2392 = vsel %vm2387, %v2358, %v2360
  %v2393 = vsel %vm2387, %v2360, %v2362
  %v2394 = vsel %vm2387, %v2362, %v2364
  %v2395 = vsel %vm2387, %v2364, %v2366
  %v2396 = vsel %vm2387, %v2366, %v2368
  %v2397 = vsel %vm2387, %v2368, %v2370
  %v2398 = vsel %vm2387, %v2370, %v2372
  %v2399 = vsel %vm2387, %v2372, %v2374
  %v2400 = vsel %vm2387, %v2374, %v2376
  %v2401 = vsel %vm2387, %v2376, %v2378
  %v2402 = vsel %vm2387, %v2378, %v2380
  %v2403 = vsel %vm2387, %v2380, %v2382
  %v2404 = vsel %vm2387, %v2382, %v2384
  %v2405 = vsel %vm2387, %v2384, %v2386
  %v2426 = vsel %vm140, %v2348, 0
  %2428 = vmatpush.msra.mxu0 0.0
  %2429 = vmatpush.msra.mxu0 0.0
  %2430 = vmatpush.msra.mxu0 0.0
  %2431 = vmatpush.msra.mxu0 0.0
  %2432 = vmatpush.msra.mxu0 0.0
  %2433 = vmatpush.msra.mxu0 0.0
  %2434 = vmatpush.msra.mxu0 0.0
  %2435 = vmatpush.msra.mxu0 0.0
  %2436 = vmatpush.msra.mxu0 0.0
  %2437 = vmatpush.msra.mxu0 0.0
  %2438 = vmatpush.msra.mxu0 0.0
  %2439 = vmatpush.msra.mxu0 0.0
  %2440 = vmatpush.msra.mxu0 0.0
  %2441 = vmatpush.msra.mxu0 0.0
  %2442 = vmatpush.msra.mxu0 0.0
  %2443 = vmatpush.msra.mxu0 %v2388
  %2444 = vmatmul.f32.gmra.mxu0 %v2426
  %v2445 = vpop.f32.mrf.mxu0
  %v2446 = vadd.f32 0.0, %v2445
  %2447 = vdwg.mxu0
  %2448 = vmatpush.msra.mxu0 0.0
  %2449 = vmatpush.msra.mxu0 0.0
  %2450 = vmatpush.msra.mxu0 0.0
  %2451 = vmatpush.msra.mxu0 0.0
  %2452 = vmatpush.msra.mxu0 0.0
  %2453 = vmatpush.msra.mxu0 0.0
  %2454 = vmatpush.msra.mxu0 0.0
  %2455 = vmatpush.msra.mxu0 0.0
  %2456 = vmatpush.msra.mxu0 0.0
  %2457 = vmatpush.msra.mxu0 0.0
  %2458 = vmatpush.msra.mxu0 0.0
  %2459 = vmatpush.msra.mxu0 0.0
  %2460 = vmatpush.msra.mxu0 0.0
  %2461 = vmatpush.msra.mxu0 0.0
  %2462 = vmatpush.msra.mxu0 0.0
  %2463 = vmatpush.msra.mxu0 %v2389
  %2464 = vmatmul.f32.gmra.mxu0 %v2426
  %v2465 = vpop.f32.mrf.mxu0
  %v2466 = vadd.f32 0.0, %v2465
  %2467 = vdwg.mxu0
  %2468 = vmatpush.msra.mxu0 0.0
  %2469 = vmatpush.msra.mxu0 0.0
  %2470 = vmatpush.msra.mxu0 0.0
  %2471 = vmatpush.msra.mxu0 0.0
  %2472 = vmatpush.msra.mxu0 0.0
  %2473 = vmatpush.msra.mxu0 0.0
  %2474 = vmatpush.msra.mxu0 0.0
  %2475 = vmatpush.msra.mxu0 0.0
  %2476 = vmatpush.msra.mxu0 0.0
  %2477 = vmatpush.msra.mxu0 0.0
  %2478 = vmatpush.msra.mxu0 0.0
  %2479 = vmatpush.msra.mxu0 0.0
  %2480 = vmatpush.msra.mxu0 0.0
  %2481 = vmatpush.msra.mxu0 0.0
  %2482 = vmatpush.msra.mxu0 0.0
  %2483 = vmatpush.msra.mxu0 %v2390
  %2484 = vmatmul.f32.gmra.mxu0 %v2426
  %v2485 = vpop.f32.mrf.mxu0
  %v2486 = vadd.f32 0.0, %v2485
  %2487 = vdwg.mxu0
  %2488 = vmatpush.msra.mxu0 0.0
  %2489 = vmatpush.msra.mxu0 0.0
  %2490 = vmatpush.msra.mxu0 0.0
  %2491 = vmatpush.msra.mxu0 0.0
  %2492 = vmatpush.msra.mxu0 0.0
  %2493 = vmatpush.msra.mxu0 0.0
  %2494 = vmatpush.msra.mxu0 0.0
  %2495 = vmatpush.msra.mxu0 0.0
  %2496 = vmatpush.msra.mxu0 0.0
  %2497 = vmatpush.msra.mxu0 0.0
  %2498 = vmatpush.msra.mxu0 0.0
  %2499 = vmatpush.msra.mxu0 0.0
  %2500 = vmatpush.msra.mxu0 0.0
  %2501 = vmatpush.msra.mxu0 0.0
  %2502 = vmatpush.msra.mxu0 0.0
  %2503 = vmatpush.msra.mxu0 %v2391
  %2504 = vmatmul.f32.gmra.mxu0 %v2426
  %v2505 = vpop.f32.mrf.mxu0
  %v2506 = vadd.f32 0.0, %v2505
  %2507 = vdwg.mxu0
  %2508 = vmatpush.msra.mxu0 0.0
  %2509 = vmatpush.msra.mxu0 0.0
  %2510 = vmatpush.msra.mxu0 0.0
  %2511 = vmatpush.msra.mxu0 0.0
  %2512 = vmatpush.msra.mxu0 0.0
  %2513 = vmatpush.msra.mxu0 0.0
  %2514 = vmatpush.msra.mxu0 0.0
  %2515 = vmatpush.msra.mxu0 0.0
  %2516 = vmatpush.msra.mxu0 0.0
  %2517 = vmatpush.msra.mxu0 0.0
  %2518 = vmatpush.msra.mxu0 0.0
  %2519 = vmatpush.msra.mxu0 0.0
  %2520 = vmatpush.msra.mxu0 0.0
  %2521 = vmatpush.msra.mxu0 0.0
  %2522 = vmatpush.msra.mxu0 0.0
  %2523 = vmatpush.msra.mxu0 %v2392
  %2524 = vmatmul.f32.gmra.mxu0 %v2426
  %v2525 = vpop.f32.mrf.mxu0
  %v2526 = vadd.f32 0.0, %v2525
  %2527 = vdwg.mxu0
  %2528 = vmatpush.msra.mxu0 0.0
  %2529 = vmatpush.msra.mxu0 0.0
  %2530 = vmatpush.msra.mxu0 0.0
  %2531 = vmatpush.msra.mxu0 0.0
  %2532 = vmatpush.msra.mxu0 0.0
  %2533 = vmatpush.msra.mxu0 0.0
  %2534 = vmatpush.msra.mxu0 0.0
  %2535 = vmatpush.msra.mxu0 0.0
  %2536 = vmatpush.msra.mxu0 0.0
  %2537 = vmatpush.msra.mxu0 0.0
  %2538 = vmatpush.msra.mxu0 0.0
  %2539 = vmatpush.msra.mxu0 0.0
  %2540 = vmatpush.msra.mxu0 0.0
  %2541 = vmatpush.msra.mxu0 0.0
  %2542 = vmatpush.msra.mxu0 0.0
  %2543 = vmatpush.msra.mxu0 %v2393
  %2544 = vmatmul.f32.gmra.mxu0 %v2426
  %v2545 = vpop.f32.mrf.mxu0
  %v2546 = vadd.f32 0.0, %v2545
  %2547 = vdwg.mxu0
  %2548 = vmatpush.msra.mxu0 0.0
  %2549 = vmatpush.msra.mxu0 0.0
  %2550 = vmatpush.msra.mxu0 0.0
  %2551 = vmatpush.msra.mxu0 0.0
  %2552 = vmatpush.msra.mxu0 0.0
  %2553 = vmatpush.msra.mxu0 0.0
  %2554 = vmatpush.msra.mxu0 0.0
  %2555 = vmatpush.msra.mxu0 0.0
  %2556 = vmatpush.msra.mxu0 0.0
  %2557 = vmatpush.msra.mxu0 0.0
  %2558 = vmatpush.msra.mxu0 0.0
  %2559 = vmatpush.msra.mxu0 0.0
  %2560 = vmatpush.msra.mxu0 0.0
  %2561 = vmatpush.msra.mxu0 0.0
  %2562 = vmatpush.msra.mxu0 0.0
  %2563 = vmatpush.msra.mxu0 %v2394
  %2564 = vmatmul.f32.gmra.mxu0 %v2426
  %v2565 = vpop.f32.mrf.mxu0
  %v2566 = vadd.f32 0.0, %v2565
  %2567 = vdwg.mxu0
  %2568 = vmatpush.msra.mxu0 0.0
  %2569 = vmatpush.msra.mxu0 0.0
  %2570 = vmatpush.msra.mxu0 0.0
  %2571 = vmatpush.msra.mxu0 0.0
  %2572 = vmatpush.msra.mxu0 0.0
  %2573 = vmatpush.msra.mxu0 0.0
  %2574 = vmatpush.msra.mxu0 0.0
  %2575 = vmatpush.msra.mxu0 0.0
  %2576 = vmatpush.msra.mxu0 0.0
  %2577 = vmatpush.msra.mxu0 0.0
  %2578 = vmatpush.msra.mxu0 0.0
  %2579 = vmatpush.msra.mxu0 0.0
  %2580 = vmatpush.msra.mxu0 0.0
  %2581 = vmatpush.msra.mxu0 0.0
  %2582 = vmatpush.msra.mxu0 0.0
  %2583 = vmatpush.msra.mxu0 %v2395
  %2584 = vmatmul.f32.gmra.mxu0 %v2426
  %v2585 = vpop.f32.mrf.mxu0
  %v2586 = vadd.f32 0.0, %v2585
  %2587 = vdwg.mxu0
  %2588 = vmatpush.msra.mxu0 0.0
  %2589 = vmatpush.msra.mxu0 0.0
  %2590 = vmatpush.msra.mxu0 0.0
  %2591 = vmatpush.msra.mxu0 0.0
  %2592 = vmatpush.msra.mxu0 0.0
  %2593 = vmatpush.msra.mxu0 0.0
  %2594 = vmatpush.msra.mxu0 0.0
  %2595 = vmatpush.msra.mxu0 0.0
  %2596 = vmatpush.msra.mxu0 0.0
  %2597 = vmatpush.msra.mxu0 0.0
  %2598 = vmatpush.msra.mxu0 0.0
  %2599 = vmatpush.msra.mxu0 0.0
  %2600 = vmatpush.msra.mxu0 0.0
  %2601 = vmatpush.msra.mxu0 0.0
  %2602 = vmatpush.msra.mxu0 0.0
  %2603 = vmatpush.msra.mxu0 %v2396
  %2604 = vmatmul.f32.gmra.mxu0 %v2426
  %v2605 = vpop.f32.mrf.mxu0
  %v2606 = vadd.f32 0.0, %v2605
  %2607 = vdwg.mxu0
  %2608 = vmatpush.msra.mxu0 0.0
  %2609 = vmatpush.msra.mxu0 0.0
  %2610 = vmatpush.msra.mxu0 0.0
  %2611 = vmatpush.msra.mxu0 0.0
  %2612 = vmatpush.msra.mxu0 0.0
  %2613 = vmatpush.msra.mxu0 0.0
  %2614 = vmatpush.msra.mxu0 0.0
  %2615 = vmatpush.msra.mxu0 0.0
  %2616 = vmatpush.msra.mxu0 0.0
  %2617 = vmatpush.msra.mxu0 0.0
  %2618 = vmatpush.msra.mxu0 0.0
  %2619 = vmatpush.msra.mxu0 0.0
  %2620 = vmatpush.msra.mxu0 0.0
  %2621 = vmatpush.msra.mxu0 0.0
  %2622 = vmatpush.msra.mxu0 0.0
  %2623 = vmatpush.msra.mxu0 %v2397
  %2624 = vmatmul.f32.gmra.mxu0 %v2426
  %v2625 = vpop.f32.mrf.mxu0
  %v2626 = vadd.f32 0.0, %v2625
  %2627 = vdwg.mxu0
  %2628 = vmatpush.msra.mxu0 0.0
  %2629 = vmatpush.msra.mxu0 0.0
  %2630 = vmatpush.msra.mxu0 0.0
  %2631 = vmatpush.msra.mxu0 0.0
  %2632 = vmatpush.msra.mxu0 0.0
  %2633 = vmatpush.msra.mxu0 0.0
  %2634 = vmatpush.msra.mxu0 0.0
  %2635 = vmatpush.msra.mxu0 0.0
  %2636 = vmatpush.msra.mxu0 0.0
  %2637 = vmatpush.msra.mxu0 0.0
  %2638 = vmatpush.msra.mxu0 0.0
  %2639 = vmatpush.msra.mxu0 0.0
  %2640 = vmatpush.msra.mxu0 0.0
  %2641 = vmatpush.msra.mxu0 0.0
  %2642 = vmatpush.msra.mxu0 0.0
  %2643 = vmatpush.msra.mxu0 %v2398
  %2644 = vmatmul.f32.gmra.mxu0 %v2426
  %v2645 = vpop.f32.mrf.mxu0
  %v2646 = vadd.f32 0.0, %v2645
  %2647 = vdwg.mxu0
  %2648 = vmatpush.msra.mxu0 0.0
  %2649 = vmatpush.msra.mxu0 0.0
  %2650 = vmatpush.msra.mxu0 0.0
  %2651 = vmatpush.msra.mxu0 0.0
  %2652 = vmatpush.msra.mxu0 0.0
  %2653 = vmatpush.msra.mxu0 0.0
  %2654 = vmatpush.msra.mxu0 0.0
  %2655 = vmatpush.msra.mxu0 0.0
  %2656 = vmatpush.msra.mxu0 0.0
  %2657 = vmatpush.msra.mxu0 0.0
  %2658 = vmatpush.msra.mxu0 0.0
  %2659 = vmatpush.msra.mxu0 0.0
  %2660 = vmatpush.msra.mxu0 0.0
  %2661 = vmatpush.msra.mxu0 0.0
  %2662 = vmatpush.msra.mxu0 0.0
  %2663 = vmatpush.msra.mxu0 %v2399
  %2664 = vmatmul.f32.gmra.mxu0 %v2426
  %v2665 = vpop.f32.mrf.mxu0
  %v2666 = vadd.f32 0.0, %v2665
  %2667 = vdwg.mxu0
  %2668 = vmatpush.msra.mxu0 0.0
  %2669 = vmatpush.msra.mxu0 0.0
  %2670 = vmatpush.msra.mxu0 0.0
  %2671 = vmatpush.msra.mxu0 0.0
  %2672 = vmatpush.msra.mxu0 0.0
  %2673 = vmatpush.msra.mxu0 0.0
  %2674 = vmatpush.msra.mxu0 0.0
  %2675 = vmatpush.msra.mxu0 0.0
  %2676 = vmatpush.msra.mxu0 0.0
  %2677 = vmatpush.msra.mxu0 0.0
  %2678 = vmatpush.msra.mxu0 0.0
  %2679 = vmatpush.msra.mxu0 0.0
  %2680 = vmatpush.msra.mxu0 0.0
  %2681 = vmatpush.msra.mxu0 0.0
  %2682 = vmatpush.msra.mxu0 0.0
  %2683 = vmatpush.msra.mxu0 %v2400
  %2684 = vmatmul.f32.gmra.mxu0 %v2426
  %v2685 = vpop.f32.mrf.mxu0
  %v2686 = vadd.f32 0.0, %v2685
  %2687 = vdwg.mxu0
  %2688 = vmatpush.msra.mxu0 0.0
  %2689 = vmatpush.msra.mxu0 0.0
  %2690 = vmatpush.msra.mxu0 0.0
  %2691 = vmatpush.msra.mxu0 0.0
  %2692 = vmatpush.msra.mxu0 0.0
  %2693 = vmatpush.msra.mxu0 0.0
  %2694 = vmatpush.msra.mxu0 0.0
  %2695 = vmatpush.msra.mxu0 0.0
  %2696 = vmatpush.msra.mxu0 0.0
  %2697 = vmatpush.msra.mxu0 0.0
  %2698 = vmatpush.msra.mxu0 0.0
  %2699 = vmatpush.msra.mxu0 0.0
  %2700 = vmatpush.msra.mxu0 0.0
  %2701 = vmatpush.msra.mxu0 0.0
  %2702 = vmatpush.msra.mxu0 0.0
  %2703 = vmatpush.msra.mxu0 %v2401
  %2704 = vmatmul.f32.gmra.mxu0 %v2426
  %v2705 = vpop.f32.mrf.mxu0
  %v2706 = vadd.f32 0.0, %v2705
  %2707 = vdwg.mxu0
  %2708 = vmatpush.msra.mxu0 0.0
  %2709 = vmatpush.msra.mxu0 0.0
  %2710 = vmatpush.msra.mxu0 0.0
  %2711 = vmatpush.msra.mxu0 0.0
  %2712 = vmatpush.msra.mxu0 0.0
  %2713 = vmatpush.msra.mxu0 0.0
  %2714 = vmatpush.msra.mxu0 0.0
  %2715 = vmatpush.msra.mxu0 0.0
  %2716 = vmatpush.msra.mxu0 0.0
  %2717 = vmatpush.msra.mxu0 0.0
  %2718 = vmatpush.msra.mxu0 0.0
  %2719 = vmatpush.msra.mxu0 0.0
  %2720 = vmatpush.msra.mxu0 0.0
  %2721 = vmatpush.msra.mxu0 0.0
  %2722 = vmatpush.msra.mxu0 0.0
  %2723 = vmatpush.msra.mxu0 %v2402
  %2724 = vmatmul.f32.gmra.mxu0 %v2426
  %v2725 = vpop.f32.mrf.mxu0
  %v2726 = vadd.f32 0.0, %v2725
  %2727 = vdwg.mxu0
  %2728 = vmatpush.msra.mxu0 0.0
  %2729 = vmatpush.msra.mxu0 0.0
  %2730 = vmatpush.msra.mxu0 0.0
  %2731 = vmatpush.msra.mxu0 0.0
  %2732 = vmatpush.msra.mxu0 0.0
  %2733 = vmatpush.msra.mxu0 0.0
  %2734 = vmatpush.msra.mxu0 0.0
  %2735 = vmatpush.msra.mxu0 0.0
  %2736 = vmatpush.msra.mxu0 0.0
  %2737 = vmatpush.msra.mxu0 0.0
  %2738 = vmatpush.msra.mxu0 0.0
  %2739 = vmatpush.msra.mxu0 0.0
  %2740 = vmatpush.msra.mxu0 0.0
  %2741 = vmatpush.msra.mxu0 0.0
  %2742 = vmatpush.msra.mxu0 0.0
  %2743 = vmatpush.msra.mxu0 %v2403
  %2744 = vmatmul.f32.gmra.mxu0 %v2426
  %v2745 = vpop.f32.mrf.mxu0
  %v2746 = vadd.f32 0.0, %v2745
  %2747 = vdwg.mxu0
  %2748 = vmatpush.msra.mxu0 0.0
  %2749 = vmatpush.msra.mxu0 0.0
  %2750 = vmatpush.msra.mxu0 0.0
  %2751 = vmatpush.msra.mxu0 0.0
  %2752 = vmatpush.msra.mxu0 0.0
  %2753 = vmatpush.msra.mxu0 0.0
  %2754 = vmatpush.msra.mxu0 0.0
  %2755 = vmatpush.msra.mxu0 0.0
  %2756 = vmatpush.msra.mxu0 0.0
  %2757 = vmatpush.msra.mxu0 0.0
  %2758 = vmatpush.msra.mxu0 0.0
  %2759 = vmatpush.msra.mxu0 0.0
  %2760 = vmatpush.msra.mxu0 0.0
  %2761 = vmatpush.msra.mxu0 0.0
  %2762 = vmatpush.msra.mxu0 0.0
  %2763 = vmatpush.msra.mxu0 %v2404
  %2764 = vmatmul.f32.gmra.mxu0 %v2426
  %v2765 = vpop.f32.mrf.mxu0
  %v2766 = vadd.f32 0.0, %v2765
  %2767 = vdwg.mxu0
  %2768 = vmatpush.msra.mxu0 0.0
  %2769 = vmatpush.msra.mxu0 0.0
  %2770 = vmatpush.msra.mxu0 0.0
  %2771 = vmatpush.msra.mxu0 0.0
  %2772 = vmatpush.msra.mxu0 0.0
  %2773 = vmatpush.msra.mxu0 0.0
  %2774 = vmatpush.msra.mxu0 0.0
  %2775 = vmatpush.msra.mxu0 0.0
  %2776 = vmatpush.msra.mxu0 0.0
  %2777 = vmatpush.msra.mxu0 0.0
  %2778 = vmatpush.msra.mxu0 0.0
  %2779 = vmatpush.msra.mxu0 0.0
  %2780 = vmatpush.msra.mxu0 0.0
  %2781 = vmatpush.msra.mxu0 0.0
  %2782 = vmatpush.msra.mxu0 0.0
  %2783 = vmatpush.msra.mxu0 %v2405
  %2784 = vmatmul.f32.gmra.mxu0 %v2426
  %v2785 = vpop.f32.mrf.mxu0
  %v2786 = vadd.f32 0.0, %v2785
  %2787 = vdwg.mxu0
  %2788 = vmatpush.msra.mxu0 0.0
  %2789 = vmatpush.msra.mxu0 0.0
  %2790 = vmatpush.msra.mxu0 0.0
  %2791 = vmatpush.msra.mxu0 0.0
  %2792 = vmatpush.msra.mxu0 0.0
  %2793 = vmatpush.msra.mxu0 0.0
  %2794 = vmatpush.msra.mxu0 0.0
  %2795 = vmatpush.msra.mxu0 0.0
  %2796 = vmatpush.msra.mxu0 0.0
  %2797 = vmatpush.msra.mxu0 0.0
  %2798 = vmatpush.msra.mxu0 0.0
  %2799 = vmatpush.msra.mxu0 0.0
  %2800 = vmatpush.msra.mxu0 0.0
  %2801 = vmatpush.msra.mxu0 0.0
  %2802 = vmatpush.msra.mxu0 0.0
  %2803 = vmatpush.msra.mxu0 %v2386
  %2804 = vmatmul.f32.gmra.mxu0 %v2426
  %v2805 = vpop.f32.mrf.mxu0
  %v2806 = vadd.f32 0.0, %v2805
  %2807 = vdwg.mxu0
  %v2808 = vadd.f32 %v2328, %v2446
  %v2809 = vadd.f32 %v2329, %v2466
  %v2810 = vadd.f32 %v2330, %v2486
  %v2811 = vadd.f32 %v2331, %v2506
  %v2812 = vadd.f32 %v2332, %v2526
  %v2813 = vadd.f32 %v2333, %v2546
  %v2814 = vadd.f32 %v2334, %v2566
  %v2815 = vadd.f32 %v2335, %v2586
  %v2816 = vadd.f32 %v2336, %v2606
  %v2817 = vadd.f32 %v2337, %v2626
  %v2818 = vadd.f32 %v2338, %v2646
  %v2819 = vadd.f32 %v2339, %v2666
  %v2820 = vadd.f32 %v2340, %v2686
  %v2821 = vadd.f32 %v2341, %v2706
  %v2822 = vadd.f32 %v2342, %v2726
  %v2823 = vadd.f32 %v2343, %v2746
  %v2824 = vadd.f32 %v2344, %v2766
  %v2825 = vadd.f32 %v2345, %v2786
  %v2826 = vadd.f32 %v2346, %v2806
  %s2827 = scalar_lea.vmem %s1, 48
  %v2828 = vld [vmem:[%s2827] sm:$0xff]
  %2829 = vrot.lane.b32.xlu0 %v24, 60
  %v2830 = vpop.permute.xlu0 %2829
  %2831 = vrot.lane.b32.xlu0 %v25, 60
  %v2832 = vpop.permute.xlu0 %2831
  %2833 = vrot.lane.b32.xlu0 %v26, 60
  %v2834 = vpop.permute.xlu0 %2833
  %2835 = vrot.lane.b32.xlu0 %v27, 60
  %v2836 = vpop.permute.xlu0 %2835
  %2837 = vrot.lane.b32.xlu0 %v28, 60
  %v2838 = vpop.permute.xlu0 %2837
  %2839 = vrot.lane.b32.xlu0 %v29, 60
  %v2840 = vpop.permute.xlu0 %2839
  %2841 = vrot.lane.b32.xlu0 %v30, 60
  %v2842 = vpop.permute.xlu0 %2841
  %2843 = vrot.lane.b32.xlu0 %v31, 60
  %v2844 = vpop.permute.xlu0 %2843
  %2845 = vrot.lane.b32.xlu0 %v32, 60
  %v2846 = vpop.permute.xlu0 %2845
  %2847 = vrot.lane.b32.xlu0 %v33, 60
  %v2848 = vpop.permute.xlu0 %2847
  %2849 = vrot.lane.b32.xlu0 %v34, 60
  %v2850 = vpop.permute.xlu0 %2849
  %2851 = vrot.lane.b32.xlu0 %v35, 60
  %v2852 = vpop.permute.xlu0 %2851
  %2853 = vrot.lane.b32.xlu0 %v36, 60
  %v2854 = vpop.permute.xlu0 %2853
  %2855 = vrot.lane.b32.xlu0 %v37, 60
  %v2856 = vpop.permute.xlu0 %2855
  %2857 = vrot.lane.b32.xlu0 %v38, 60
  %v2858 = vpop.permute.xlu0 %2857
  %2859 = vrot.lane.b32.xlu0 %v39, 60
  %v2860 = vpop.permute.xlu0 %2859
  %2861 = vrot.lane.b32.xlu0 %v40, 60
  %v2862 = vpop.permute.xlu0 %2861
  %2863 = vrot.lane.b32.xlu0 %v41, 60
  %v2864 = vpop.permute.xlu0 %2863
  %2865 = vrot.lane.b32.xlu0 %v42, 60
  %v2866 = vpop.permute.xlu0 %2865
  %vm2867 = vcmask 490496
  %v2868 = vsel %vm2867, %v2830, %v2832
  %v2869 = vsel %vm2867, %v2832, %v2834
  %v2870 = vsel %vm2867, %v2834, %v2836
  %v2871 = vsel %vm2867, %v2836, %v2838
  %v2872 = vsel %vm2867, %v2838, %v2840
  %v2873 = vsel %vm2867, %v2840, %v2842
  %v2874 = vsel %vm2867, %v2842, %v2844
  %v2875 = vsel %vm2867, %v2844, %v2846
  %v2876 = vsel %vm2867, %v2846, %v2848
  %v2877 = vsel %vm2867, %v2848, %v2850
  %v2878 = vsel %vm2867, %v2850, %v2852
  %v2879 = vsel %vm2867, %v2852, %v2854
  %v2880 = vsel %vm2867, %v2854, %v2856
  %v2881 = vsel %vm2867, %v2856, %v2858
  %v2882 = vsel %vm2867, %v2858, %v2860
  %v2883 = vsel %vm2867, %v2860, %v2862
  %v2884 = vsel %vm2867, %v2862, %v2864
  %v2885 = vsel %vm2867, %v2864, %v2866
  %v2906 = vsel %vm140, %v2828, 0
  %2908 = vmatpush.msra.mxu0 0.0
  %2909 = vmatpush.msra.mxu0 0.0
  %2910 = vmatpush.msra.mxu0 0.0
  %2911 = vmatpush.msra.mxu0 0.0
  %2912 = vmatpush.msra.mxu0 0.0
  %2913 = vmatpush.msra.mxu0 0.0
  %2914 = vmatpush.msra.mxu0 0.0
  %2915 = vmatpush.msra.mxu0 0.0
  %2916 = vmatpush.msra.mxu0 0.0
  %2917 = vmatpush.msra.mxu0 0.0
  %2918 = vmatpush.msra.mxu0 0.0
  %2919 = vmatpush.msra.mxu0 0.0
  %2920 = vmatpush.msra.mxu0 0.0
  %2921 = vmatpush.msra.mxu0 0.0
  %2922 = vmatpush.msra.mxu0 0.0
  %2923 = vmatpush.msra.mxu0 %v2868
  %2924 = vmatmul.f32.gmra.mxu0 %v2906
  %v2925 = vpop.f32.mrf.mxu0
  %v2926 = vadd.f32 0.0, %v2925
  %2927 = vdwg.mxu0
  %2928 = vmatpush.msra.mxu0 0.0
  %2929 = vmatpush.msra.mxu0 0.0
  %2930 = vmatpush.msra.mxu0 0.0
  %2931 = vmatpush.msra.mxu0 0.0
  %2932 = vmatpush.msra.mxu0 0.0
  %2933 = vmatpush.msra.mxu0 0.0
  %2934 = vmatpush.msra.mxu0 0.0
  %2935 = vmatpush.msra.mxu0 0.0
  %2936 = vmatpush.msra.mxu0 0.0
  %2937 = vmatpush.msra.mxu0 0.0
  %2938 = vmatpush.msra.mxu0 0.0
  %2939 = vmatpush.msra.mxu0 0.0
  %2940 = vmatpush.msra.mxu0 0.0
  %2941 = vmatpush.msra.mxu0 0.0
  %2942 = vmatpush.msra.mxu0 0.0
  %2943 = vmatpush.msra.mxu0 %v2869
  %2944 = vmatmul.f32.gmra.mxu0 %v2906
  %v2945 = vpop.f32.mrf.mxu0
  %v2946 = vadd.f32 0.0, %v2945
  %2947 = vdwg.mxu0
  %2948 = vmatpush.msra.mxu0 0.0
  %2949 = vmatpush.msra.mxu0 0.0
  %2950 = vmatpush.msra.mxu0 0.0
  %2951 = vmatpush.msra.mxu0 0.0
  %2952 = vmatpush.msra.mxu0 0.0
  %2953 = vmatpush.msra.mxu0 0.0
  %2954 = vmatpush.msra.mxu0 0.0
  %2955 = vmatpush.msra.mxu0 0.0
  %2956 = vmatpush.msra.mxu0 0.0
  %2957 = vmatpush.msra.mxu0 0.0
  %2958 = vmatpush.msra.mxu0 0.0
  %2959 = vmatpush.msra.mxu0 0.0
  %2960 = vmatpush.msra.mxu0 0.0
  %2961 = vmatpush.msra.mxu0 0.0
  %2962 = vmatpush.msra.mxu0 0.0
  %2963 = vmatpush.msra.mxu0 %v2870
  %2964 = vmatmul.f32.gmra.mxu0 %v2906
  %v2965 = vpop.f32.mrf.mxu0
  %v2966 = vadd.f32 0.0, %v2965
  %2967 = vdwg.mxu0
  %2968 = vmatpush.msra.mxu0 0.0
  %2969 = vmatpush.msra.mxu0 0.0
  %2970 = vmatpush.msra.mxu0 0.0
  %2971 = vmatpush.msra.mxu0 0.0
  %2972 = vmatpush.msra.mxu0 0.0
  %2973 = vmatpush.msra.mxu0 0.0
  %2974 = vmatpush.msra.mxu0 0.0
  %2975 = vmatpush.msra.mxu0 0.0
  %2976 = vmatpush.msra.mxu0 0.0
  %2977 = vmatpush.msra.mxu0 0.0
  %2978 = vmatpush.msra.mxu0 0.0
  %2979 = vmatpush.msra.mxu0 0.0
  %2980 = vmatpush.msra.mxu0 0.0
  %2981 = vmatpush.msra.mxu0 0.0
  %2982 = vmatpush.msra.mxu0 0.0
  %2983 = vmatpush.msra.mxu0 %v2871
  %2984 = vmatmul.f32.gmra.mxu0 %v2906
  %v2985 = vpop.f32.mrf.mxu0
  %v2986 = vadd.f32 0.0, %v2985
  %2987 = vdwg.mxu0
  %2988 = vmatpush.msra.mxu0 0.0
  %2989 = vmatpush.msra.mxu0 0.0
  %2990 = vmatpush.msra.mxu0 0.0
  %2991 = vmatpush.msra.mxu0 0.0
  %2992 = vmatpush.msra.mxu0 0.0
  %2993 = vmatpush.msra.mxu0 0.0
  %2994 = vmatpush.msra.mxu0 0.0
  %2995 = vmatpush.msra.mxu0 0.0
  %2996 = vmatpush.msra.mxu0 0.0
  %2997 = vmatpush.msra.mxu0 0.0
  %2998 = vmatpush.msra.mxu0 0.0
  %2999 = vmatpush.msra.mxu0 0.0
  %3000 = vmatpush.msra.mxu0 0.0
  %3001 = vmatpush.msra.mxu0 0.0
  %3002 = vmatpush.msra.mxu0 0.0
  %3003 = vmatpush.msra.mxu0 %v2872
  %3004 = vmatmul.f32.gmra.mxu0 %v2906
  %v3005 = vpop.f32.mrf.mxu0
  %v3006 = vadd.f32 0.0, %v3005
  %3007 = vdwg.mxu0
  %3008 = vmatpush.msra.mxu0 0.0
  %3009 = vmatpush.msra.mxu0 0.0
  %3010 = vmatpush.msra.mxu0 0.0
  %3011 = vmatpush.msra.mxu0 0.0
  %3012 = vmatpush.msra.mxu0 0.0
  %3013 = vmatpush.msra.mxu0 0.0
  %3014 = vmatpush.msra.mxu0 0.0
  %3015 = vmatpush.msra.mxu0 0.0
  %3016 = vmatpush.msra.mxu0 0.0
  %3017 = vmatpush.msra.mxu0 0.0
  %3018 = vmatpush.msra.mxu0 0.0
  %3019 = vmatpush.msra.mxu0 0.0
  %3020 = vmatpush.msra.mxu0 0.0
  %3021 = vmatpush.msra.mxu0 0.0
  %3022 = vmatpush.msra.mxu0 0.0
  %3023 = vmatpush.msra.mxu0 %v2873
  %3024 = vmatmul.f32.gmra.mxu0 %v2906
  %v3025 = vpop.f32.mrf.mxu0
  %v3026 = vadd.f32 0.0, %v3025
  %3027 = vdwg.mxu0
  %3028 = vmatpush.msra.mxu0 0.0
  %3029 = vmatpush.msra.mxu0 0.0
  %3030 = vmatpush.msra.mxu0 0.0
  %3031 = vmatpush.msra.mxu0 0.0
  %3032 = vmatpush.msra.mxu0 0.0
  %3033 = vmatpush.msra.mxu0 0.0
  %3034 = vmatpush.msra.mxu0 0.0
  %3035 = vmatpush.msra.mxu0 0.0
  %3036 = vmatpush.msra.mxu0 0.0
  %3037 = vmatpush.msra.mxu0 0.0
  %3038 = vmatpush.msra.mxu0 0.0
  %3039 = vmatpush.msra.mxu0 0.0
  %3040 = vmatpush.msra.mxu0 0.0
  %3041 = vmatpush.msra.mxu0 0.0
  %3042 = vmatpush.msra.mxu0 0.0
  %3043 = vmatpush.msra.mxu0 %v2874
  %3044 = vmatmul.f32.gmra.mxu0 %v2906
  %v3045 = vpop.f32.mrf.mxu0
  %v3046 = vadd.f32 0.0, %v3045
  %3047 = vdwg.mxu0
  %3048 = vmatpush.msra.mxu0 0.0
  %3049 = vmatpush.msra.mxu0 0.0
  %3050 = vmatpush.msra.mxu0 0.0
  %3051 = vmatpush.msra.mxu0 0.0
  %3052 = vmatpush.msra.mxu0 0.0
  %3053 = vmatpush.msra.mxu0 0.0
  %3054 = vmatpush.msra.mxu0 0.0
  %3055 = vmatpush.msra.mxu0 0.0
  %3056 = vmatpush.msra.mxu0 0.0
  %3057 = vmatpush.msra.mxu0 0.0
  %3058 = vmatpush.msra.mxu0 0.0
  %3059 = vmatpush.msra.mxu0 0.0
  %3060 = vmatpush.msra.mxu0 0.0
  %3061 = vmatpush.msra.mxu0 0.0
  %3062 = vmatpush.msra.mxu0 0.0
  %3063 = vmatpush.msra.mxu0 %v2875
  %3064 = vmatmul.f32.gmra.mxu0 %v2906
  %v3065 = vpop.f32.mrf.mxu0
  %v3066 = vadd.f32 0.0, %v3065
  %3067 = vdwg.mxu0
  %3068 = vmatpush.msra.mxu0 0.0
  %3069 = vmatpush.msra.mxu0 0.0
  %3070 = vmatpush.msra.mxu0 0.0
  %3071 = vmatpush.msra.mxu0 0.0
  %3072 = vmatpush.msra.mxu0 0.0
  %3073 = vmatpush.msra.mxu0 0.0
  %3074 = vmatpush.msra.mxu0 0.0
  %3075 = vmatpush.msra.mxu0 0.0
  %3076 = vmatpush.msra.mxu0 0.0
  %3077 = vmatpush.msra.mxu0 0.0
  %3078 = vmatpush.msra.mxu0 0.0
  %3079 = vmatpush.msra.mxu0 0.0
  %3080 = vmatpush.msra.mxu0 0.0
  %3081 = vmatpush.msra.mxu0 0.0
  %3082 = vmatpush.msra.mxu0 0.0
  %3083 = vmatpush.msra.mxu0 %v2876
  %3084 = vmatmul.f32.gmra.mxu0 %v2906
  %v3085 = vpop.f32.mrf.mxu0
  %v3086 = vadd.f32 0.0, %v3085
  %3087 = vdwg.mxu0
  %3088 = vmatpush.msra.mxu0 0.0
  %3089 = vmatpush.msra.mxu0 0.0
  %3090 = vmatpush.msra.mxu0 0.0
  %3091 = vmatpush.msra.mxu0 0.0
  %3092 = vmatpush.msra.mxu0 0.0
  %3093 = vmatpush.msra.mxu0 0.0
  %3094 = vmatpush.msra.mxu0 0.0
  %3095 = vmatpush.msra.mxu0 0.0
  %3096 = vmatpush.msra.mxu0 0.0
  %3097 = vmatpush.msra.mxu0 0.0
  %3098 = vmatpush.msra.mxu0 0.0
  %3099 = vmatpush.msra.mxu0 0.0
  %3100 = vmatpush.msra.mxu0 0.0
  %3101 = vmatpush.msra.mxu0 0.0
  %3102 = vmatpush.msra.mxu0 0.0
  %3103 = vmatpush.msra.mxu0 %v2877
  %3104 = vmatmul.f32.gmra.mxu0 %v2906
  %v3105 = vpop.f32.mrf.mxu0
  %v3106 = vadd.f32 0.0, %v3105
  %3107 = vdwg.mxu0
  %3108 = vmatpush.msra.mxu0 0.0
  %3109 = vmatpush.msra.mxu0 0.0
  %3110 = vmatpush.msra.mxu0 0.0
  %3111 = vmatpush.msra.mxu0 0.0
  %3112 = vmatpush.msra.mxu0 0.0
  %3113 = vmatpush.msra.mxu0 0.0
  %3114 = vmatpush.msra.mxu0 0.0
  %3115 = vmatpush.msra.mxu0 0.0
  %3116 = vmatpush.msra.mxu0 0.0
  %3117 = vmatpush.msra.mxu0 0.0
  %3118 = vmatpush.msra.mxu0 0.0
  %3119 = vmatpush.msra.mxu0 0.0
  %3120 = vmatpush.msra.mxu0 0.0
  %3121 = vmatpush.msra.mxu0 0.0
  %3122 = vmatpush.msra.mxu0 0.0
  %3123 = vmatpush.msra.mxu0 %v2878
  %3124 = vmatmul.f32.gmra.mxu0 %v2906
  %v3125 = vpop.f32.mrf.mxu0
  %v3126 = vadd.f32 0.0, %v3125
  %3127 = vdwg.mxu0
  %3128 = vmatpush.msra.mxu0 0.0
  %3129 = vmatpush.msra.mxu0 0.0
  %3130 = vmatpush.msra.mxu0 0.0
  %3131 = vmatpush.msra.mxu0 0.0
  %3132 = vmatpush.msra.mxu0 0.0
  %3133 = vmatpush.msra.mxu0 0.0
  %3134 = vmatpush.msra.mxu0 0.0
  %3135 = vmatpush.msra.mxu0 0.0
  %3136 = vmatpush.msra.mxu0 0.0
  %3137 = vmatpush.msra.mxu0 0.0
  %3138 = vmatpush.msra.mxu0 0.0
  %3139 = vmatpush.msra.mxu0 0.0
  %3140 = vmatpush.msra.mxu0 0.0
  %3141 = vmatpush.msra.mxu0 0.0
  %3142 = vmatpush.msra.mxu0 0.0
  %3143 = vmatpush.msra.mxu0 %v2879
  %3144 = vmatmul.f32.gmra.mxu0 %v2906
  %v3145 = vpop.f32.mrf.mxu0
  %v3146 = vadd.f32 0.0, %v3145
  %3147 = vdwg.mxu0
  %3148 = vmatpush.msra.mxu0 0.0
  %3149 = vmatpush.msra.mxu0 0.0
  %3150 = vmatpush.msra.mxu0 0.0
  %3151 = vmatpush.msra.mxu0 0.0
  %3152 = vmatpush.msra.mxu0 0.0
  %3153 = vmatpush.msra.mxu0 0.0
  %3154 = vmatpush.msra.mxu0 0.0
  %3155 = vmatpush.msra.mxu0 0.0
  %3156 = vmatpush.msra.mxu0 0.0
  %3157 = vmatpush.msra.mxu0 0.0
  %3158 = vmatpush.msra.mxu0 0.0
  %3159 = vmatpush.msra.mxu0 0.0
  %3160 = vmatpush.msra.mxu0 0.0
  %3161 = vmatpush.msra.mxu0 0.0
  %3162 = vmatpush.msra.mxu0 0.0
  %3163 = vmatpush.msra.mxu0 %v2880
  %3164 = vmatmul.f32.gmra.mxu0 %v2906
  %v3165 = vpop.f32.mrf.mxu0
  %v3166 = vadd.f32 0.0, %v3165
  %3167 = vdwg.mxu0
  %3168 = vmatpush.msra.mxu0 0.0
  %3169 = vmatpush.msra.mxu0 0.0
  %3170 = vmatpush.msra.mxu0 0.0
  %3171 = vmatpush.msra.mxu0 0.0
  %3172 = vmatpush.msra.mxu0 0.0
  %3173 = vmatpush.msra.mxu0 0.0
  %3174 = vmatpush.msra.mxu0 0.0
  %3175 = vmatpush.msra.mxu0 0.0
  %3176 = vmatpush.msra.mxu0 0.0
  %3177 = vmatpush.msra.mxu0 0.0
  %3178 = vmatpush.msra.mxu0 0.0
  %3179 = vmatpush.msra.mxu0 0.0
  %3180 = vmatpush.msra.mxu0 0.0
  %3181 = vmatpush.msra.mxu0 0.0
  %3182 = vmatpush.msra.mxu0 0.0
  %3183 = vmatpush.msra.mxu0 %v2881
  %3184 = vmatmul.f32.gmra.mxu0 %v2906
  %v3185 = vpop.f32.mrf.mxu0
  %v3186 = vadd.f32 0.0, %v3185
  %3187 = vdwg.mxu0
  %3188 = vmatpush.msra.mxu0 0.0
  %3189 = vmatpush.msra.mxu0 0.0
  %3190 = vmatpush.msra.mxu0 0.0
  %3191 = vmatpush.msra.mxu0 0.0
  %3192 = vmatpush.msra.mxu0 0.0
  %3193 = vmatpush.msra.mxu0 0.0
  %3194 = vmatpush.msra.mxu0 0.0
  %3195 = vmatpush.msra.mxu0 0.0
  %3196 = vmatpush.msra.mxu0 0.0
  %3197 = vmatpush.msra.mxu0 0.0
  %3198 = vmatpush.msra.mxu0 0.0
  %3199 = vmatpush.msra.mxu0 0.0
  %3200 = vmatpush.msra.mxu0 0.0
  %3201 = vmatpush.msra.mxu0 0.0
  %3202 = vmatpush.msra.mxu0 0.0
  %3203 = vmatpush.msra.mxu0 %v2882
  %3204 = vmatmul.f32.gmra.mxu0 %v2906
  %v3205 = vpop.f32.mrf.mxu0
  %v3206 = vadd.f32 0.0, %v3205
  %3207 = vdwg.mxu0
  %3208 = vmatpush.msra.mxu0 0.0
  %3209 = vmatpush.msra.mxu0 0.0
  %3210 = vmatpush.msra.mxu0 0.0
  %3211 = vmatpush.msra.mxu0 0.0
  %3212 = vmatpush.msra.mxu0 0.0
  %3213 = vmatpush.msra.mxu0 0.0
  %3214 = vmatpush.msra.mxu0 0.0
  %3215 = vmatpush.msra.mxu0 0.0
  %3216 = vmatpush.msra.mxu0 0.0
  %3217 = vmatpush.msra.mxu0 0.0
  %3218 = vmatpush.msra.mxu0 0.0
  %3219 = vmatpush.msra.mxu0 0.0
  %3220 = vmatpush.msra.mxu0 0.0
  %3221 = vmatpush.msra.mxu0 0.0
  %3222 = vmatpush.msra.mxu0 0.0
  %3223 = vmatpush.msra.mxu0 %v2883
  %3224 = vmatmul.f32.gmra.mxu0 %v2906
  %v3225 = vpop.f32.mrf.mxu0
  %v3226 = vadd.f32 0.0, %v3225
  %3227 = vdwg.mxu0
  %3228 = vmatpush.msra.mxu0 0.0
  %3229 = vmatpush.msra.mxu0 0.0
  %3230 = vmatpush.msra.mxu0 0.0
  %3231 = vmatpush.msra.mxu0 0.0
  %3232 = vmatpush.msra.mxu0 0.0
  %3233 = vmatpush.msra.mxu0 0.0
  %3234 = vmatpush.msra.mxu0 0.0
  %3235 = vmatpush.msra.mxu0 0.0
  %3236 = vmatpush.msra.mxu0 0.0
  %3237 = vmatpush.msra.mxu0 0.0
  %3238 = vmatpush.msra.mxu0 0.0
  %3239 = vmatpush.msra.mxu0 0.0
  %3240 = vmatpush.msra.mxu0 0.0
  %3241 = vmatpush.msra.mxu0 0.0
  %3242 = vmatpush.msra.mxu0 0.0
  %3243 = vmatpush.msra.mxu0 %v2884
  %3244 = vmatmul.f32.gmra.mxu0 %v2906
  %v3245 = vpop.f32.mrf.mxu0
  %v3246 = vadd.f32 0.0, %v3245
  %3247 = vdwg.mxu0
  %3248 = vmatpush.msra.mxu0 0.0
  %3249 = vmatpush.msra.mxu0 0.0
  %3250 = vmatpush.msra.mxu0 0.0
  %3251 = vmatpush.msra.mxu0 0.0
  %3252 = vmatpush.msra.mxu0 0.0
  %3253 = vmatpush.msra.mxu0 0.0
  %3254 = vmatpush.msra.mxu0 0.0
  %3255 = vmatpush.msra.mxu0 0.0
  %3256 = vmatpush.msra.mxu0 0.0
  %3257 = vmatpush.msra.mxu0 0.0
  %3258 = vmatpush.msra.mxu0 0.0
  %3259 = vmatpush.msra.mxu0 0.0
  %3260 = vmatpush.msra.mxu0 0.0
  %3261 = vmatpush.msra.mxu0 0.0
  %3262 = vmatpush.msra.mxu0 0.0
  %3263 = vmatpush.msra.mxu0 %v2885
  %3264 = vmatmul.f32.gmra.mxu0 %v2906
  %v3265 = vpop.f32.mrf.mxu0
  %v3266 = vadd.f32 0.0, %v3265
  %3267 = vdwg.mxu0
  %3268 = vmatpush.msra.mxu0 0.0
  %3269 = vmatpush.msra.mxu0 0.0
  %3270 = vmatpush.msra.mxu0 0.0
  %3271 = vmatpush.msra.mxu0 0.0
  %3272 = vmatpush.msra.mxu0 0.0
  %3273 = vmatpush.msra.mxu0 0.0
  %3274 = vmatpush.msra.mxu0 0.0
  %3275 = vmatpush.msra.mxu0 0.0
  %3276 = vmatpush.msra.mxu0 0.0
  %3277 = vmatpush.msra.mxu0 0.0
  %3278 = vmatpush.msra.mxu0 0.0
  %3279 = vmatpush.msra.mxu0 0.0
  %3280 = vmatpush.msra.mxu0 0.0
  %3281 = vmatpush.msra.mxu0 0.0
  %3282 = vmatpush.msra.mxu0 0.0
  %3283 = vmatpush.msra.mxu0 %v2866
  %3284 = vmatmul.f32.gmra.mxu0 %v2906
  %v3285 = vpop.f32.mrf.mxu0
  %v3286 = vadd.f32 0.0, %v3285
  %3287 = vdwg.mxu0
  %v3288 = vadd.f32 %v2808, %v2926
  %v3289 = vadd.f32 %v2809, %v2946
  %v3290 = vadd.f32 %v2810, %v2966
  %v3291 = vadd.f32 %v2811, %v2986
  %v3292 = vadd.f32 %v2812, %v3006
  %v3293 = vadd.f32 %v2813, %v3026
  %v3294 = vadd.f32 %v2814, %v3046
  %v3295 = vadd.f32 %v2815, %v3066
  %v3296 = vadd.f32 %v2816, %v3086
  %v3297 = vadd.f32 %v2817, %v3106
  %v3298 = vadd.f32 %v2818, %v3126
  %v3299 = vadd.f32 %v2819, %v3146
  %v3300 = vadd.f32 %v2820, %v3166
  %v3301 = vadd.f32 %v2821, %v3186
  %v3302 = vadd.f32 %v2822, %v3206
  %v3303 = vadd.f32 %v2823, %v3226
  %v3304 = vadd.f32 %v2824, %v3246
  %v3305 = vadd.f32 %v2825, %v3266
  %v3306 = vadd.f32 %v2826, %v3286
  %s3307 = scalar_lea.vmem %s1, 56
  %v3308 = vld [vmem:[%s3307] sm:$0xff]
  %3309 = vrot.lane.b32.xlu0 %v24, 59
  %v3310 = vpop.permute.xlu0 %3309
  %3311 = vrot.lane.b32.xlu0 %v25, 59
  %v3312 = vpop.permute.xlu0 %3311
  %3313 = vrot.lane.b32.xlu0 %v26, 59
  %v3314 = vpop.permute.xlu0 %3313
  %3315 = vrot.lane.b32.xlu0 %v27, 59
  %v3316 = vpop.permute.xlu0 %3315
  %3317 = vrot.lane.b32.xlu0 %v28, 59
  %v3318 = vpop.permute.xlu0 %3317
  %3319 = vrot.lane.b32.xlu0 %v29, 59
  %v3320 = vpop.permute.xlu0 %3319
  %3321 = vrot.lane.b32.xlu0 %v30, 59
  %v3322 = vpop.permute.xlu0 %3321
  %3323 = vrot.lane.b32.xlu0 %v31, 59
  %v3324 = vpop.permute.xlu0 %3323
  %3325 = vrot.lane.b32.xlu0 %v32, 59
  %v3326 = vpop.permute.xlu0 %3325
  %3327 = vrot.lane.b32.xlu0 %v33, 59
  %v3328 = vpop.permute.xlu0 %3327
  %3329 = vrot.lane.b32.xlu0 %v34, 59
  %v3330 = vpop.permute.xlu0 %3329
  %3331 = vrot.lane.b32.xlu0 %v35, 59
  %v3332 = vpop.permute.xlu0 %3331
  %3333 = vrot.lane.b32.xlu0 %v36, 59
  %v3334 = vpop.permute.xlu0 %3333
  %3335 = vrot.lane.b32.xlu0 %v37, 59
  %v3336 = vpop.permute.xlu0 %3335
  %3337 = vrot.lane.b32.xlu0 %v38, 59
  %v3338 = vpop.permute.xlu0 %3337
  %3339 = vrot.lane.b32.xlu0 %v39, 59
  %v3340 = vpop.permute.xlu0 %3339
  %3341 = vrot.lane.b32.xlu0 %v40, 59
  %v3342 = vpop.permute.xlu0 %3341
  %3343 = vrot.lane.b32.xlu0 %v41, 59
  %v3344 = vpop.permute.xlu0 %3343
  %3345 = vrot.lane.b32.xlu0 %v42, 59
  %v3346 = vpop.permute.xlu0 %3345
  %vm3347 = vcmask 482304
  %v3348 = vsel %vm3347, %v3310, %v3312
  %v3349 = vsel %vm3347, %v3312, %v3314
  %v3350 = vsel %vm3347, %v3314, %v3316
  %v3351 = vsel %vm3347, %v3316, %v3318
  %v3352 = vsel %vm3347, %v3318, %v3320
  %v3353 = vsel %vm3347, %v3320, %v3322
  %v3354 = vsel %vm3347, %v3322, %v3324
  %v3355 = vsel %vm3347, %v3324, %v3326
  %v3356 = vsel %vm3347, %v3326, %v3328
  %v3357 = vsel %vm3347, %v3328, %v3330
  %v3358 = vsel %vm3347, %v3330, %v3332
  %v3359 = vsel %vm3347, %v3332, %v3334
  %v3360 = vsel %vm3347, %v3334, %v3336
  %v3361 = vsel %vm3347, %v3336, %v3338
  %v3362 = vsel %vm3347, %v3338, %v3340
  %v3363 = vsel %vm3347, %v3340, %v3342
  %v3364 = vsel %vm3347, %v3342, %v3344
  %v3365 = vsel %vm3347, %v3344, %v3346
  %v3386 = vsel %vm140, %v3308, 0
  %3388 = vmatpush.msra.mxu0 0.0
  %3389 = vmatpush.msra.mxu0 0.0
  %3390 = vmatpush.msra.mxu0 0.0
  %3391 = vmatpush.msra.mxu0 0.0
  %3392 = vmatpush.msra.mxu0 0.0
  %3393 = vmatpush.msra.mxu0 0.0
  %3394 = vmatpush.msra.mxu0 0.0
  %3395 = vmatpush.msra.mxu0 0.0
  %3396 = vmatpush.msra.mxu0 0.0
  %3397 = vmatpush.msra.mxu0 0.0
  %3398 = vmatpush.msra.mxu0 0.0
  %3399 = vmatpush.msra.mxu0 0.0
  %3400 = vmatpush.msra.mxu0 0.0
  %3401 = vmatpush.msra.mxu0 0.0
  %3402 = vmatpush.msra.mxu0 0.0
  %3403 = vmatpush.msra.mxu0 %v3348
  %3404 = vmatmul.f32.gmra.mxu0 %v3386
  %v3405 = vpop.f32.mrf.mxu0
  %v3406 = vadd.f32 0.0, %v3405
  %3407 = vdwg.mxu0
  %3408 = vmatpush.msra.mxu0 0.0
  %3409 = vmatpush.msra.mxu0 0.0
  %3410 = vmatpush.msra.mxu0 0.0
  %3411 = vmatpush.msra.mxu0 0.0
  %3412 = vmatpush.msra.mxu0 0.0
  %3413 = vmatpush.msra.mxu0 0.0
  %3414 = vmatpush.msra.mxu0 0.0
  %3415 = vmatpush.msra.mxu0 0.0
  %3416 = vmatpush.msra.mxu0 0.0
  %3417 = vmatpush.msra.mxu0 0.0
  %3418 = vmatpush.msra.mxu0 0.0
  %3419 = vmatpush.msra.mxu0 0.0
  %3420 = vmatpush.msra.mxu0 0.0
  %3421 = vmatpush.msra.mxu0 0.0
  %3422 = vmatpush.msra.mxu0 0.0
  %3423 = vmatpush.msra.mxu0 %v3349
  %3424 = vmatmul.f32.gmra.mxu0 %v3386
  %v3425 = vpop.f32.mrf.mxu0
  %v3426 = vadd.f32 0.0, %v3425
  %3427 = vdwg.mxu0
  %3428 = vmatpush.msra.mxu0 0.0
  %3429 = vmatpush.msra.mxu0 0.0
  %3430 = vmatpush.msra.mxu0 0.0
  %3431 = vmatpush.msra.mxu0 0.0
  %3432 = vmatpush.msra.mxu0 0.0
  %3433 = vmatpush.msra.mxu0 0.0
  %3434 = vmatpush.msra.mxu0 0.0
  %3435 = vmatpush.msra.mxu0 0.0
  %3436 = vmatpush.msra.mxu0 0.0
  %3437 = vmatpush.msra.mxu0 0.0
  %3438 = vmatpush.msra.mxu0 0.0
  %3439 = vmatpush.msra.mxu0 0.0
  %3440 = vmatpush.msra.mxu0 0.0
  %3441 = vmatpush.msra.mxu0 0.0
  %3442 = vmatpush.msra.mxu0 0.0
  %3443 = vmatpush.msra.mxu0 %v3350
  %3444 = vmatmul.f32.gmra.mxu0 %v3386
  %v3445 = vpop.f32.mrf.mxu0
  %v3446 = vadd.f32 0.0, %v3445
  %3447 = vdwg.mxu0
  %3448 = vmatpush.msra.mxu0 0.0
  %3449 = vmatpush.msra.mxu0 0.0
  %3450 = vmatpush.msra.mxu0 0.0
  %3451 = vmatpush.msra.mxu0 0.0
  %3452 = vmatpush.msra.mxu0 0.0
  %3453 = vmatpush.msra.mxu0 0.0
  %3454 = vmatpush.msra.mxu0 0.0
  %3455 = vmatpush.msra.mxu0 0.0
  %3456 = vmatpush.msra.mxu0 0.0
  %3457 = vmatpush.msra.mxu0 0.0
  %3458 = vmatpush.msra.mxu0 0.0
  %3459 = vmatpush.msra.mxu0 0.0
  %3460 = vmatpush.msra.mxu0 0.0
  %3461 = vmatpush.msra.mxu0 0.0
  %3462 = vmatpush.msra.mxu0 0.0
  %3463 = vmatpush.msra.mxu0 %v3351
  %3464 = vmatmul.f32.gmra.mxu0 %v3386
  %v3465 = vpop.f32.mrf.mxu0
  %v3466 = vadd.f32 0.0, %v3465
  %3467 = vdwg.mxu0
  %3468 = vmatpush.msra.mxu0 0.0
  %3469 = vmatpush.msra.mxu0 0.0
  %3470 = vmatpush.msra.mxu0 0.0
  %3471 = vmatpush.msra.mxu0 0.0
  %3472 = vmatpush.msra.mxu0 0.0
  %3473 = vmatpush.msra.mxu0 0.0
  %3474 = vmatpush.msra.mxu0 0.0
  %3475 = vmatpush.msra.mxu0 0.0
  %3476 = vmatpush.msra.mxu0 0.0
  %3477 = vmatpush.msra.mxu0 0.0
  %3478 = vmatpush.msra.mxu0 0.0
  %3479 = vmatpush.msra.mxu0 0.0
  %3480 = vmatpush.msra.mxu0 0.0
  %3481 = vmatpush.msra.mxu0 0.0
  %3482 = vmatpush.msra.mxu0 0.0
  %3483 = vmatpush.msra.mxu0 %v3352
  %3484 = vmatmul.f32.gmra.mxu0 %v3386
  %v3485 = vpop.f32.mrf.mxu0
  %v3486 = vadd.f32 0.0, %v3485
  %3487 = vdwg.mxu0
  %3488 = vmatpush.msra.mxu0 0.0
  %3489 = vmatpush.msra.mxu0 0.0
  %3490 = vmatpush.msra.mxu0 0.0
  %3491 = vmatpush.msra.mxu0 0.0
  %3492 = vmatpush.msra.mxu0 0.0
  %3493 = vmatpush.msra.mxu0 0.0
  %3494 = vmatpush.msra.mxu0 0.0
  %3495 = vmatpush.msra.mxu0 0.0
  %3496 = vmatpush.msra.mxu0 0.0
  %3497 = vmatpush.msra.mxu0 0.0
  %3498 = vmatpush.msra.mxu0 0.0
  %3499 = vmatpush.msra.mxu0 0.0
  %3500 = vmatpush.msra.mxu0 0.0
  %3501 = vmatpush.msra.mxu0 0.0
  %3502 = vmatpush.msra.mxu0 0.0
  %3503 = vmatpush.msra.mxu0 %v3353
  %3504 = vmatmul.f32.gmra.mxu0 %v3386
  %v3505 = vpop.f32.mrf.mxu0
  %v3506 = vadd.f32 0.0, %v3505
  %3507 = vdwg.mxu0
  %3508 = vmatpush.msra.mxu0 0.0
  %3509 = vmatpush.msra.mxu0 0.0
  %3510 = vmatpush.msra.mxu0 0.0
  %3511 = vmatpush.msra.mxu0 0.0
  %3512 = vmatpush.msra.mxu0 0.0
  %3513 = vmatpush.msra.mxu0 0.0
  %3514 = vmatpush.msra.mxu0 0.0
  %3515 = vmatpush.msra.mxu0 0.0
  %3516 = vmatpush.msra.mxu0 0.0
  %3517 = vmatpush.msra.mxu0 0.0
  %3518 = vmatpush.msra.mxu0 0.0
  %3519 = vmatpush.msra.mxu0 0.0
  %3520 = vmatpush.msra.mxu0 0.0
  %3521 = vmatpush.msra.mxu0 0.0
  %3522 = vmatpush.msra.mxu0 0.0
  %3523 = vmatpush.msra.mxu0 %v3354
  %3524 = vmatmul.f32.gmra.mxu0 %v3386
  %v3525 = vpop.f32.mrf.mxu0
  %v3526 = vadd.f32 0.0, %v3525
  %3527 = vdwg.mxu0
  %3528 = vmatpush.msra.mxu0 0.0
  %3529 = vmatpush.msra.mxu0 0.0
  %3530 = vmatpush.msra.mxu0 0.0
  %3531 = vmatpush.msra.mxu0 0.0
  %3532 = vmatpush.msra.mxu0 0.0
  %3533 = vmatpush.msra.mxu0 0.0
  %3534 = vmatpush.msra.mxu0 0.0
  %3535 = vmatpush.msra.mxu0 0.0
  %3536 = vmatpush.msra.mxu0 0.0
  %3537 = vmatpush.msra.mxu0 0.0
  %3538 = vmatpush.msra.mxu0 0.0
  %3539 = vmatpush.msra.mxu0 0.0
  %3540 = vmatpush.msra.mxu0 0.0
  %3541 = vmatpush.msra.mxu0 0.0
  %3542 = vmatpush.msra.mxu0 0.0
  %3543 = vmatpush.msra.mxu0 %v3355
  %3544 = vmatmul.f32.gmra.mxu0 %v3386
  %v3545 = vpop.f32.mrf.mxu0
  %v3546 = vadd.f32 0.0, %v3545
  %3547 = vdwg.mxu0
  %3548 = vmatpush.msra.mxu0 0.0
  %3549 = vmatpush.msra.mxu0 0.0
  %3550 = vmatpush.msra.mxu0 0.0
  %3551 = vmatpush.msra.mxu0 0.0
  %3552 = vmatpush.msra.mxu0 0.0
  %3553 = vmatpush.msra.mxu0 0.0
  %3554 = vmatpush.msra.mxu0 0.0
  %3555 = vmatpush.msra.mxu0 0.0
  %3556 = vmatpush.msra.mxu0 0.0
  %3557 = vmatpush.msra.mxu0 0.0
  %3558 = vmatpush.msra.mxu0 0.0
  %3559 = vmatpush.msra.mxu0 0.0
  %3560 = vmatpush.msra.mxu0 0.0
  %3561 = vmatpush.msra.mxu0 0.0
  %3562 = vmatpush.msra.mxu0 0.0
  %3563 = vmatpush.msra.mxu0 %v3356
  %3564 = vmatmul.f32.gmra.mxu0 %v3386
  %v3565 = vpop.f32.mrf.mxu0
  %v3566 = vadd.f32 0.0, %v3565
  %3567 = vdwg.mxu0
  %3568 = vmatpush.msra.mxu0 0.0
  %3569 = vmatpush.msra.mxu0 0.0
  %3570 = vmatpush.msra.mxu0 0.0
  %3571 = vmatpush.msra.mxu0 0.0
  %3572 = vmatpush.msra.mxu0 0.0
  %3573 = vmatpush.msra.mxu0 0.0
  %3574 = vmatpush.msra.mxu0 0.0
  %3575 = vmatpush.msra.mxu0 0.0
  %3576 = vmatpush.msra.mxu0 0.0
  %3577 = vmatpush.msra.mxu0 0.0
  %3578 = vmatpush.msra.mxu0 0.0
  %3579 = vmatpush.msra.mxu0 0.0
  %3580 = vmatpush.msra.mxu0 0.0
  %3581 = vmatpush.msra.mxu0 0.0
  %3582 = vmatpush.msra.mxu0 0.0
  %3583 = vmatpush.msra.mxu0 %v3357
  %3584 = vmatmul.f32.gmra.mxu0 %v3386
  %v3585 = vpop.f32.mrf.mxu0
  %v3586 = vadd.f32 0.0, %v3585
  %3587 = vdwg.mxu0
  %3588 = vmatpush.msra.mxu0 0.0
  %3589 = vmatpush.msra.mxu0 0.0
  %3590 = vmatpush.msra.mxu0 0.0
  %3591 = vmatpush.msra.mxu0 0.0
  %3592 = vmatpush.msra.mxu0 0.0
  %3593 = vmatpush.msra.mxu0 0.0
  %3594 = vmatpush.msra.mxu0 0.0
  %3595 = vmatpush.msra.mxu0 0.0
  %3596 = vmatpush.msra.mxu0 0.0
  %3597 = vmatpush.msra.mxu0 0.0
  %3598 = vmatpush.msra.mxu0 0.0
  %3599 = vmatpush.msra.mxu0 0.0
  %3600 = vmatpush.msra.mxu0 0.0
  %3601 = vmatpush.msra.mxu0 0.0
  %3602 = vmatpush.msra.mxu0 0.0
  %3603 = vmatpush.msra.mxu0 %v3358
  %3604 = vmatmul.f32.gmra.mxu0 %v3386
  %v3605 = vpop.f32.mrf.mxu0
  %v3606 = vadd.f32 0.0, %v3605
  %3607 = vdwg.mxu0
  %3608 = vmatpush.msra.mxu0 0.0
  %3609 = vmatpush.msra.mxu0 0.0
  %3610 = vmatpush.msra.mxu0 0.0
  %3611 = vmatpush.msra.mxu0 0.0
  %3612 = vmatpush.msra.mxu0 0.0
  %3613 = vmatpush.msra.mxu0 0.0
  %3614 = vmatpush.msra.mxu0 0.0
  %3615 = vmatpush.msra.mxu0 0.0
  %3616 = vmatpush.msra.mxu0 0.0
  %3617 = vmatpush.msra.mxu0 0.0
  %3618 = vmatpush.msra.mxu0 0.0
  %3619 = vmatpush.msra.mxu0 0.0
  %3620 = vmatpush.msra.mxu0 0.0
  %3621 = vmatpush.msra.mxu0 0.0
  %3622 = vmatpush.msra.mxu0 0.0
  %3623 = vmatpush.msra.mxu0 %v3359
  %3624 = vmatmul.f32.gmra.mxu0 %v3386
  %v3625 = vpop.f32.mrf.mxu0
  %v3626 = vadd.f32 0.0, %v3625
  %3627 = vdwg.mxu0
  %3628 = vmatpush.msra.mxu0 0.0
  %3629 = vmatpush.msra.mxu0 0.0
  %3630 = vmatpush.msra.mxu0 0.0
  %3631 = vmatpush.msra.mxu0 0.0
  %3632 = vmatpush.msra.mxu0 0.0
  %3633 = vmatpush.msra.mxu0 0.0
  %3634 = vmatpush.msra.mxu0 0.0
  %3635 = vmatpush.msra.mxu0 0.0
  %3636 = vmatpush.msra.mxu0 0.0
  %3637 = vmatpush.msra.mxu0 0.0
  %3638 = vmatpush.msra.mxu0 0.0
  %3639 = vmatpush.msra.mxu0 0.0
  %3640 = vmatpush.msra.mxu0 0.0
  %3641 = vmatpush.msra.mxu0 0.0
  %3642 = vmatpush.msra.mxu0 0.0
  %3643 = vmatpush.msra.mxu0 %v3360
  %3644 = vmatmul.f32.gmra.mxu0 %v3386
  %v3645 = vpop.f32.mrf.mxu0
  %v3646 = vadd.f32 0.0, %v3645
  %3647 = vdwg.mxu0
  %3648 = vmatpush.msra.mxu0 0.0
  %3649 = vmatpush.msra.mxu0 0.0
  %3650 = vmatpush.msra.mxu0 0.0
  %3651 = vmatpush.msra.mxu0 0.0
  %3652 = vmatpush.msra.mxu0 0.0
  %3653 = vmatpush.msra.mxu0 0.0
  %3654 = vmatpush.msra.mxu0 0.0
  %3655 = vmatpush.msra.mxu0 0.0
  %3656 = vmatpush.msra.mxu0 0.0
  %3657 = vmatpush.msra.mxu0 0.0
  %3658 = vmatpush.msra.mxu0 0.0
  %3659 = vmatpush.msra.mxu0 0.0
  %3660 = vmatpush.msra.mxu0 0.0
  %3661 = vmatpush.msra.mxu0 0.0
  %3662 = vmatpush.msra.mxu0 0.0
  %3663 = vmatpush.msra.mxu0 %v3361
  %3664 = vmatmul.f32.gmra.mxu0 %v3386
  %v3665 = vpop.f32.mrf.mxu0
  %v3666 = vadd.f32 0.0, %v3665
  %3667 = vdwg.mxu0
  %3668 = vmatpush.msra.mxu0 0.0
  %3669 = vmatpush.msra.mxu0 0.0
  %3670 = vmatpush.msra.mxu0 0.0
  %3671 = vmatpush.msra.mxu0 0.0
  %3672 = vmatpush.msra.mxu0 0.0
  %3673 = vmatpush.msra.mxu0 0.0
  %3674 = vmatpush.msra.mxu0 0.0
  %3675 = vmatpush.msra.mxu0 0.0
  %3676 = vmatpush.msra.mxu0 0.0
  %3677 = vmatpush.msra.mxu0 0.0
  %3678 = vmatpush.msra.mxu0 0.0
  %3679 = vmatpush.msra.mxu0 0.0
  %3680 = vmatpush.msra.mxu0 0.0
  %3681 = vmatpush.msra.mxu0 0.0
  %3682 = vmatpush.msra.mxu0 0.0
  %3683 = vmatpush.msra.mxu0 %v3362
  %3684 = vmatmul.f32.gmra.mxu0 %v3386
  %v3685 = vpop.f32.mrf.mxu0
  %v3686 = vadd.f32 0.0, %v3685
  %3687 = vdwg.mxu0
  %3688 = vmatpush.msra.mxu0 0.0
  %3689 = vmatpush.msra.mxu0 0.0
  %3690 = vmatpush.msra.mxu0 0.0
  %3691 = vmatpush.msra.mxu0 0.0
  %3692 = vmatpush.msra.mxu0 0.0
  %3693 = vmatpush.msra.mxu0 0.0
  %3694 = vmatpush.msra.mxu0 0.0
  %3695 = vmatpush.msra.mxu0 0.0
  %3696 = vmatpush.msra.mxu0 0.0
  %3697 = vmatpush.msra.mxu0 0.0
  %3698 = vmatpush.msra.mxu0 0.0
  %3699 = vmatpush.msra.mxu0 0.0
  %3700 = vmatpush.msra.mxu0 0.0
  %3701 = vmatpush.msra.mxu0 0.0
  %3702 = vmatpush.msra.mxu0 0.0
  %3703 = vmatpush.msra.mxu0 %v3363
  %3704 = vmatmul.f32.gmra.mxu0 %v3386
  %v3705 = vpop.f32.mrf.mxu0
  %v3706 = vadd.f32 0.0, %v3705
  %3707 = vdwg.mxu0
  %3708 = vmatpush.msra.mxu0 0.0
  %3709 = vmatpush.msra.mxu0 0.0
  %3710 = vmatpush.msra.mxu0 0.0
  %3711 = vmatpush.msra.mxu0 0.0
  %3712 = vmatpush.msra.mxu0 0.0
  %3713 = vmatpush.msra.mxu0 0.0
  %3714 = vmatpush.msra.mxu0 0.0
  %3715 = vmatpush.msra.mxu0 0.0
  %3716 = vmatpush.msra.mxu0 0.0
  %3717 = vmatpush.msra.mxu0 0.0
  %3718 = vmatpush.msra.mxu0 0.0
  %3719 = vmatpush.msra.mxu0 0.0
  %3720 = vmatpush.msra.mxu0 0.0
  %3721 = vmatpush.msra.mxu0 0.0
  %3722 = vmatpush.msra.mxu0 0.0
  %3723 = vmatpush.msra.mxu0 %v3364
  %3724 = vmatmul.f32.gmra.mxu0 %v3386
  %v3725 = vpop.f32.mrf.mxu0
  %v3726 = vadd.f32 0.0, %v3725
  %3727 = vdwg.mxu0
  %3728 = vmatpush.msra.mxu0 0.0
  %3729 = vmatpush.msra.mxu0 0.0
  %3730 = vmatpush.msra.mxu0 0.0
  %3731 = vmatpush.msra.mxu0 0.0
  %3732 = vmatpush.msra.mxu0 0.0
  %3733 = vmatpush.msra.mxu0 0.0
  %3734 = vmatpush.msra.mxu0 0.0
  %3735 = vmatpush.msra.mxu0 0.0
  %3736 = vmatpush.msra.mxu0 0.0
  %3737 = vmatpush.msra.mxu0 0.0
  %3738 = vmatpush.msra.mxu0 0.0
  %3739 = vmatpush.msra.mxu0 0.0
  %3740 = vmatpush.msra.mxu0 0.0
  %3741 = vmatpush.msra.mxu0 0.0
  %3742 = vmatpush.msra.mxu0 0.0
  %3743 = vmatpush.msra.mxu0 %v3365
  %3744 = vmatmul.f32.gmra.mxu0 %v3386
  %v3745 = vpop.f32.mrf.mxu0
  %v3746 = vadd.f32 0.0, %v3745
  %3747 = vdwg.mxu0
  %3748 = vmatpush.msra.mxu0 0.0
  %3749 = vmatpush.msra.mxu0 0.0
  %3750 = vmatpush.msra.mxu0 0.0
  %3751 = vmatpush.msra.mxu0 0.0
  %3752 = vmatpush.msra.mxu0 0.0
  %3753 = vmatpush.msra.mxu0 0.0
  %3754 = vmatpush.msra.mxu0 0.0
  %3755 = vmatpush.msra.mxu0 0.0
  %3756 = vmatpush.msra.mxu0 0.0
  %3757 = vmatpush.msra.mxu0 0.0
  %3758 = vmatpush.msra.mxu0 0.0
  %3759 = vmatpush.msra.mxu0 0.0
  %3760 = vmatpush.msra.mxu0 0.0
  %3761 = vmatpush.msra.mxu0 0.0
  %3762 = vmatpush.msra.mxu0 0.0
  %3763 = vmatpush.msra.mxu0 %v3346
  %3764 = vmatmul.f32.gmra.mxu0 %v3386
  %v3765 = vpop.f32.mrf.mxu0
  %v3766 = vadd.f32 0.0, %v3765
  %3767 = vdwg.mxu0
  %v3768 = vadd.f32 %v3288, %v3406
  %v3769 = vadd.f32 %v3289, %v3426
  %v3770 = vadd.f32 %v3290, %v3446
  %v3771 = vadd.f32 %v3291, %v3466
  %v3772 = vadd.f32 %v3292, %v3486
  %v3773 = vadd.f32 %v3293, %v3506
  %v3774 = vadd.f32 %v3294, %v3526
  %v3775 = vadd.f32 %v3295, %v3546
  %v3776 = vadd.f32 %v3296, %v3566
  %v3777 = vadd.f32 %v3297, %v3586
  %v3778 = vadd.f32 %v3298, %v3606
  %v3779 = vadd.f32 %v3299, %v3626
  %v3780 = vadd.f32 %v3300, %v3646
  %v3781 = vadd.f32 %v3301, %v3666
  %v3782 = vadd.f32 %v3302, %v3686
  %v3783 = vadd.f32 %v3303, %v3706
  %v3784 = vadd.f32 %v3304, %v3726
  %v3785 = vadd.f32 %v3305, %v3746
  %v3786 = vadd.f32 %v3306, %v3766
  %s3787 = scalar_lea.vmem %s1, 64
  %v3788 = vld [vmem:[%s3787] sm:$0xff]
  %3789 = vrot.lane.b32.xlu0 %v24, 58
  %v3790 = vpop.permute.xlu0 %3789
  %3791 = vrot.lane.b32.xlu0 %v25, 58
  %v3792 = vpop.permute.xlu0 %3791
  %3793 = vrot.lane.b32.xlu0 %v26, 58
  %v3794 = vpop.permute.xlu0 %3793
  %3795 = vrot.lane.b32.xlu0 %v27, 58
  %v3796 = vpop.permute.xlu0 %3795
  %3797 = vrot.lane.b32.xlu0 %v28, 58
  %v3798 = vpop.permute.xlu0 %3797
  %3799 = vrot.lane.b32.xlu0 %v29, 58
  %v3800 = vpop.permute.xlu0 %3799
  %3801 = vrot.lane.b32.xlu0 %v30, 58
  %v3802 = vpop.permute.xlu0 %3801
  %3803 = vrot.lane.b32.xlu0 %v31, 58
  %v3804 = vpop.permute.xlu0 %3803
  %3805 = vrot.lane.b32.xlu0 %v32, 58
  %v3806 = vpop.permute.xlu0 %3805
  %3807 = vrot.lane.b32.xlu0 %v33, 58
  %v3808 = vpop.permute.xlu0 %3807
  %3809 = vrot.lane.b32.xlu0 %v34, 58
  %v3810 = vpop.permute.xlu0 %3809
  %3811 = vrot.lane.b32.xlu0 %v35, 58
  %v3812 = vpop.permute.xlu0 %3811
  %3813 = vrot.lane.b32.xlu0 %v36, 58
  %v3814 = vpop.permute.xlu0 %3813
  %3815 = vrot.lane.b32.xlu0 %v37, 58
  %v3816 = vpop.permute.xlu0 %3815
  %3817 = vrot.lane.b32.xlu0 %v38, 58
  %v3818 = vpop.permute.xlu0 %3817
  %3819 = vrot.lane.b32.xlu0 %v39, 58
  %v3820 = vpop.permute.xlu0 %3819
  %3821 = vrot.lane.b32.xlu0 %v40, 58
  %v3822 = vpop.permute.xlu0 %3821
  %3823 = vrot.lane.b32.xlu0 %v41, 58
  %v3824 = vpop.permute.xlu0 %3823
  %3825 = vrot.lane.b32.xlu0 %v42, 58
  %v3826 = vpop.permute.xlu0 %3825
  %vm3827 = vcmask 474112
  %v3828 = vsel %vm3827, %v3790, %v3792
  %v3829 = vsel %vm3827, %v3792, %v3794
  %v3830 = vsel %vm3827, %v3794, %v3796
  %v3831 = vsel %vm3827, %v3796, %v3798
  %v3832 = vsel %vm3827, %v3798, %v3800
  %v3833 = vsel %vm3827, %v3800, %v3802
  %v3834 = vsel %vm3827, %v3802, %v3804
  %v3835 = vsel %vm3827, %v3804, %v3806
  %v3836 = vsel %vm3827, %v3806, %v3808
  %v3837 = vsel %vm3827, %v3808, %v3810
  %v3838 = vsel %vm3827, %v3810, %v3812
  %v3839 = vsel %vm3827, %v3812, %v3814
  %v3840 = vsel %vm3827, %v3814, %v3816
  %v3841 = vsel %vm3827, %v3816, %v3818
  %v3842 = vsel %vm3827, %v3818, %v3820
  %v3843 = vsel %vm3827, %v3820, %v3822
  %v3844 = vsel %vm3827, %v3822, %v3824
  %v3845 = vsel %vm3827, %v3824, %v3826
  %v3866 = vsel %vm140, %v3788, 0
  %3868 = vmatpush.msra.mxu0 0.0
  %3869 = vmatpush.msra.mxu0 0.0
  %3870 = vmatpush.msra.mxu0 0.0
  %3871 = vmatpush.msra.mxu0 0.0
  %3872 = vmatpush.msra.mxu0 0.0
  %3873 = vmatpush.msra.mxu0 0.0
  %3874 = vmatpush.msra.mxu0 0.0
  %3875 = vmatpush.msra.mxu0 0.0
  %3876 = vmatpush.msra.mxu0 0.0
  %3877 = vmatpush.msra.mxu0 0.0
  %3878 = vmatpush.msra.mxu0 0.0
  %3879 = vmatpush.msra.mxu0 0.0
  %3880 = vmatpush.msra.mxu0 0.0
  %3881 = vmatpush.msra.mxu0 0.0
  %3882 = vmatpush.msra.mxu0 0.0
  %3883 = vmatpush.msra.mxu0 %v3828
  %3884 = vmatmul.f32.gmra.mxu0 %v3866
  %v3885 = vpop.f32.mrf.mxu0
  %v3886 = vadd.f32 0.0, %v3885
  %3887 = vdwg.mxu0
  %3888 = vmatpush.msra.mxu0 0.0
  %3889 = vmatpush.msra.mxu0 0.0
  %3890 = vmatpush.msra.mxu0 0.0
  %3891 = vmatpush.msra.mxu0 0.0
  %3892 = vmatpush.msra.mxu0 0.0
  %3893 = vmatpush.msra.mxu0 0.0
  %3894 = vmatpush.msra.mxu0 0.0
  %3895 = vmatpush.msra.mxu0 0.0
  %3896 = vmatpush.msra.mxu0 0.0
  %3897 = vmatpush.msra.mxu0 0.0
  %3898 = vmatpush.msra.mxu0 0.0
  %3899 = vmatpush.msra.mxu0 0.0
  %3900 = vmatpush.msra.mxu0 0.0
  %3901 = vmatpush.msra.mxu0 0.0
  %3902 = vmatpush.msra.mxu0 0.0
  %3903 = vmatpush.msra.mxu0 %v3829
  %3904 = vmatmul.f32.gmra.mxu0 %v3866
  %v3905 = vpop.f32.mrf.mxu0
  %v3906 = vadd.f32 0.0, %v3905
  %3907 = vdwg.mxu0
  %3908 = vmatpush.msra.mxu0 0.0
  %3909 = vmatpush.msra.mxu0 0.0
  %3910 = vmatpush.msra.mxu0 0.0
  %3911 = vmatpush.msra.mxu0 0.0
  %3912 = vmatpush.msra.mxu0 0.0
  %3913 = vmatpush.msra.mxu0 0.0
  %3914 = vmatpush.msra.mxu0 0.0
  %3915 = vmatpush.msra.mxu0 0.0
  %3916 = vmatpush.msra.mxu0 0.0
  %3917 = vmatpush.msra.mxu0 0.0
  %3918 = vmatpush.msra.mxu0 0.0
  %3919 = vmatpush.msra.mxu0 0.0
  %3920 = vmatpush.msra.mxu0 0.0
  %3921 = vmatpush.msra.mxu0 0.0
  %3922 = vmatpush.msra.mxu0 0.0
  %3923 = vmatpush.msra.mxu0 %v3830
  %3924 = vmatmul.f32.gmra.mxu0 %v3866
  %v3925 = vpop.f32.mrf.mxu0
  %v3926 = vadd.f32 0.0, %v3925
  %3927 = vdwg.mxu0
  %3928 = vmatpush.msra.mxu0 0.0
  %3929 = vmatpush.msra.mxu0 0.0
  %3930 = vmatpush.msra.mxu0 0.0
  %3931 = vmatpush.msra.mxu0 0.0
  %3932 = vmatpush.msra.mxu0 0.0
  %3933 = vmatpush.msra.mxu0 0.0
  %3934 = vmatpush.msra.mxu0 0.0
  %3935 = vmatpush.msra.mxu0 0.0
  %3936 = vmatpush.msra.mxu0 0.0
  %3937 = vmatpush.msra.mxu0 0.0
  %3938 = vmatpush.msra.mxu0 0.0
  %3939 = vmatpush.msra.mxu0 0.0
  %3940 = vmatpush.msra.mxu0 0.0
  %3941 = vmatpush.msra.mxu0 0.0
  %3942 = vmatpush.msra.mxu0 0.0
  %3943 = vmatpush.msra.mxu0 %v3831
  %3944 = vmatmul.f32.gmra.mxu0 %v3866
  %v3945 = vpop.f32.mrf.mxu0
  %v3946 = vadd.f32 0.0, %v3945
  %3947 = vdwg.mxu0
  %3948 = vmatpush.msra.mxu0 0.0
  %3949 = vmatpush.msra.mxu0 0.0
  %3950 = vmatpush.msra.mxu0 0.0
  %3951 = vmatpush.msra.mxu0 0.0
  %3952 = vmatpush.msra.mxu0 0.0
  %3953 = vmatpush.msra.mxu0 0.0
  %3954 = vmatpush.msra.mxu0 0.0
  %3955 = vmatpush.msra.mxu0 0.0
  %3956 = vmatpush.msra.mxu0 0.0
  %3957 = vmatpush.msra.mxu0 0.0
  %3958 = vmatpush.msra.mxu0 0.0
  %3959 = vmatpush.msra.mxu0 0.0
  %3960 = vmatpush.msra.mxu0 0.0
  %3961 = vmatpush.msra.mxu0 0.0
  %3962 = vmatpush.msra.mxu0 0.0
  %3963 = vmatpush.msra.mxu0 %v3832
  %3964 = vmatmul.f32.gmra.mxu0 %v3866
  %v3965 = vpop.f32.mrf.mxu0
  %v3966 = vadd.f32 0.0, %v3965
  %3967 = vdwg.mxu0
  %3968 = vmatpush.msra.mxu0 0.0
  %3969 = vmatpush.msra.mxu0 0.0
  %3970 = vmatpush.msra.mxu0 0.0
  %3971 = vmatpush.msra.mxu0 0.0
  %3972 = vmatpush.msra.mxu0 0.0
  %3973 = vmatpush.msra.mxu0 0.0
  %3974 = vmatpush.msra.mxu0 0.0
  %3975 = vmatpush.msra.mxu0 0.0
  %3976 = vmatpush.msra.mxu0 0.0
  %3977 = vmatpush.msra.mxu0 0.0
  %3978 = vmatpush.msra.mxu0 0.0
  %3979 = vmatpush.msra.mxu0 0.0
  %3980 = vmatpush.msra.mxu0 0.0
  %3981 = vmatpush.msra.mxu0 0.0
  %3982 = vmatpush.msra.mxu0 0.0
  %3983 = vmatpush.msra.mxu0 %v3833
  %3984 = vmatmul.f32.gmra.mxu0 %v3866
  %v3985 = vpop.f32.mrf.mxu0
  %v3986 = vadd.f32 0.0, %v3985
  %3987 = vdwg.mxu0
  %3988 = vmatpush.msra.mxu0 0.0
  %3989 = vmatpush.msra.mxu0 0.0
  %3990 = vmatpush.msra.mxu0 0.0
  %3991 = vmatpush.msra.mxu0 0.0
  %3992 = vmatpush.msra.mxu0 0.0
  %3993 = vmatpush.msra.mxu0 0.0
  %3994 = vmatpush.msra.mxu0 0.0
  %3995 = vmatpush.msra.mxu0 0.0
  %3996 = vmatpush.msra.mxu0 0.0
  %3997 = vmatpush.msra.mxu0 0.0
  %3998 = vmatpush.msra.mxu0 0.0
  %3999 = vmatpush.msra.mxu0 0.0
  %4000 = vmatpush.msra.mxu0 0.0
  %4001 = vmatpush.msra.mxu0 0.0
  %4002 = vmatpush.msra.mxu0 0.0
  %4003 = vmatpush.msra.mxu0 %v3834
  %4004 = vmatmul.f32.gmra.mxu0 %v3866
  %v4005 = vpop.f32.mrf.mxu0
  %v4006 = vadd.f32 0.0, %v4005
  %4007 = vdwg.mxu0
  %4008 = vmatpush.msra.mxu0 0.0
  %4009 = vmatpush.msra.mxu0 0.0
  %4010 = vmatpush.msra.mxu0 0.0
  %4011 = vmatpush.msra.mxu0 0.0
  %4012 = vmatpush.msra.mxu0 0.0
  %4013 = vmatpush.msra.mxu0 0.0
  %4014 = vmatpush.msra.mxu0 0.0
  %4015 = vmatpush.msra.mxu0 0.0
  %4016 = vmatpush.msra.mxu0 0.0
  %4017 = vmatpush.msra.mxu0 0.0
  %4018 = vmatpush.msra.mxu0 0.0
  %4019 = vmatpush.msra.mxu0 0.0
  %4020 = vmatpush.msra.mxu0 0.0
  %4021 = vmatpush.msra.mxu0 0.0
  %4022 = vmatpush.msra.mxu0 0.0
  %4023 = vmatpush.msra.mxu0 %v3835
  %4024 = vmatmul.f32.gmra.mxu0 %v3866
  %v4025 = vpop.f32.mrf.mxu0
  %v4026 = vadd.f32 0.0, %v4025
  %4027 = vdwg.mxu0
  %4028 = vmatpush.msra.mxu0 0.0
  %4029 = vmatpush.msra.mxu0 0.0
  %4030 = vmatpush.msra.mxu0 0.0
  %4031 = vmatpush.msra.mxu0 0.0
  %4032 = vmatpush.msra.mxu0 0.0
  %4033 = vmatpush.msra.mxu0 0.0
  %4034 = vmatpush.msra.mxu0 0.0
  %4035 = vmatpush.msra.mxu0 0.0
  %4036 = vmatpush.msra.mxu0 0.0
  %4037 = vmatpush.msra.mxu0 0.0
  %4038 = vmatpush.msra.mxu0 0.0
  %4039 = vmatpush.msra.mxu0 0.0
  %4040 = vmatpush.msra.mxu0 0.0
  %4041 = vmatpush.msra.mxu0 0.0
  %4042 = vmatpush.msra.mxu0 0.0
  %4043 = vmatpush.msra.mxu0 %v3836
  %4044 = vmatmul.f32.gmra.mxu0 %v3866
  %v4045 = vpop.f32.mrf.mxu0
  %v4046 = vadd.f32 0.0, %v4045
  %4047 = vdwg.mxu0
  %4048 = vmatpush.msra.mxu0 0.0
  %4049 = vmatpush.msra.mxu0 0.0
  %4050 = vmatpush.msra.mxu0 0.0
  %4051 = vmatpush.msra.mxu0 0.0
  %4052 = vmatpush.msra.mxu0 0.0
  %4053 = vmatpush.msra.mxu0 0.0
  %4054 = vmatpush.msra.mxu0 0.0
  %4055 = vmatpush.msra.mxu0 0.0
  %4056 = vmatpush.msra.mxu0 0.0
  %4057 = vmatpush.msra.mxu0 0.0
  %4058 = vmatpush.msra.mxu0 0.0
  %4059 = vmatpush.msra.mxu0 0.0
  %4060 = vmatpush.msra.mxu0 0.0
  %4061 = vmatpush.msra.mxu0 0.0
  %4062 = vmatpush.msra.mxu0 0.0
  %4063 = vmatpush.msra.mxu0 %v3837
  %4064 = vmatmul.f32.gmra.mxu0 %v3866
  %v4065 = vpop.f32.mrf.mxu0
  %v4066 = vadd.f32 0.0, %v4065
  %4067 = vdwg.mxu0
  %4068 = vmatpush.msra.mxu0 0.0
  %4069 = vmatpush.msra.mxu0 0.0
  %4070 = vmatpush.msra.mxu0 0.0
  %4071 = vmatpush.msra.mxu0 0.0
  %4072 = vmatpush.msra.mxu0 0.0
  %4073 = vmatpush.msra.mxu0 0.0
  %4074 = vmatpush.msra.mxu0 0.0
  %4075 = vmatpush.msra.mxu0 0.0
  %4076 = vmatpush.msra.mxu0 0.0
  %4077 = vmatpush.msra.mxu0 0.0
  %4078 = vmatpush.msra.mxu0 0.0
  %4079 = vmatpush.msra.mxu0 0.0
  %4080 = vmatpush.msra.mxu0 0.0
  %4081 = vmatpush.msra.mxu0 0.0
  %4082 = vmatpush.msra.mxu0 0.0
  %4083 = vmatpush.msra.mxu0 %v3838
  %4084 = vmatmul.f32.gmra.mxu0 %v3866
  %v4085 = vpop.f32.mrf.mxu0
  %v4086 = vadd.f32 0.0, %v4085
  %4087 = vdwg.mxu0
  %4088 = vmatpush.msra.mxu0 0.0
  %4089 = vmatpush.msra.mxu0 0.0
  %4090 = vmatpush.msra.mxu0 0.0
  %4091 = vmatpush.msra.mxu0 0.0
  %4092 = vmatpush.msra.mxu0 0.0
  %4093 = vmatpush.msra.mxu0 0.0
  %4094 = vmatpush.msra.mxu0 0.0
  %4095 = vmatpush.msra.mxu0 0.0
  %4096 = vmatpush.msra.mxu0 0.0
  %4097 = vmatpush.msra.mxu0 0.0
  %4098 = vmatpush.msra.mxu0 0.0
  %4099 = vmatpush.msra.mxu0 0.0
  %4100 = vmatpush.msra.mxu0 0.0
  %4101 = vmatpush.msra.mxu0 0.0
  %4102 = vmatpush.msra.mxu0 0.0
  %4103 = vmatpush.msra.mxu0 %v3839
  %4104 = vmatmul.f32.gmra.mxu0 %v3866
  %v4105 = vpop.f32.mrf.mxu0
  %v4106 = vadd.f32 0.0, %v4105
  %4107 = vdwg.mxu0
  %4108 = vmatpush.msra.mxu0 0.0
  %4109 = vmatpush.msra.mxu0 0.0
  %4110 = vmatpush.msra.mxu0 0.0
  %4111 = vmatpush.msra.mxu0 0.0
  %4112 = vmatpush.msra.mxu0 0.0
  %4113 = vmatpush.msra.mxu0 0.0
  %4114 = vmatpush.msra.mxu0 0.0
  %4115 = vmatpush.msra.mxu0 0.0
  %4116 = vmatpush.msra.mxu0 0.0
  %4117 = vmatpush.msra.mxu0 0.0
  %4118 = vmatpush.msra.mxu0 0.0
  %4119 = vmatpush.msra.mxu0 0.0
  %4120 = vmatpush.msra.mxu0 0.0
  %4121 = vmatpush.msra.mxu0 0.0
  %4122 = vmatpush.msra.mxu0 0.0
  %4123 = vmatpush.msra.mxu0 %v3840
  %4124 = vmatmul.f32.gmra.mxu0 %v3866
  %v4125 = vpop.f32.mrf.mxu0
  %v4126 = vadd.f32 0.0, %v4125
  %4127 = vdwg.mxu0
  %4128 = vmatpush.msra.mxu0 0.0
  %4129 = vmatpush.msra.mxu0 0.0
  %4130 = vmatpush.msra.mxu0 0.0
  %4131 = vmatpush.msra.mxu0 0.0
  %4132 = vmatpush.msra.mxu0 0.0
  %4133 = vmatpush.msra.mxu0 0.0
  %4134 = vmatpush.msra.mxu0 0.0
  %4135 = vmatpush.msra.mxu0 0.0
  %4136 = vmatpush.msra.mxu0 0.0
  %4137 = vmatpush.msra.mxu0 0.0
  %4138 = vmatpush.msra.mxu0 0.0
  %4139 = vmatpush.msra.mxu0 0.0
  %4140 = vmatpush.msra.mxu0 0.0
  %4141 = vmatpush.msra.mxu0 0.0
  %4142 = vmatpush.msra.mxu0 0.0
  %4143 = vmatpush.msra.mxu0 %v3841
  %4144 = vmatmul.f32.gmra.mxu0 %v3866
  %v4145 = vpop.f32.mrf.mxu0
  %v4146 = vadd.f32 0.0, %v4145
  %4147 = vdwg.mxu0
  %4148 = vmatpush.msra.mxu0 0.0
  %4149 = vmatpush.msra.mxu0 0.0
  %4150 = vmatpush.msra.mxu0 0.0
  %4151 = vmatpush.msra.mxu0 0.0
  %4152 = vmatpush.msra.mxu0 0.0
  %4153 = vmatpush.msra.mxu0 0.0
  %4154 = vmatpush.msra.mxu0 0.0
  %4155 = vmatpush.msra.mxu0 0.0
  %4156 = vmatpush.msra.mxu0 0.0
  %4157 = vmatpush.msra.mxu0 0.0
  %4158 = vmatpush.msra.mxu0 0.0
  %4159 = vmatpush.msra.mxu0 0.0
  %4160 = vmatpush.msra.mxu0 0.0
  %4161 = vmatpush.msra.mxu0 0.0
  %4162 = vmatpush.msra.mxu0 0.0
  %4163 = vmatpush.msra.mxu0 %v3842
  %4164 = vmatmul.f32.gmra.mxu0 %v3866
  %v4165 = vpop.f32.mrf.mxu0
  %v4166 = vadd.f32 0.0, %v4165
  %4167 = vdwg.mxu0
  %4168 = vmatpush.msra.mxu0 0.0
  %4169 = vmatpush.msra.mxu0 0.0
  %4170 = vmatpush.msra.mxu0 0.0
  %4171 = vmatpush.msra.mxu0 0.0
  %4172 = vmatpush.msra.mxu0 0.0
  %4173 = vmatpush.msra.mxu0 0.0
  %4174 = vmatpush.msra.mxu0 0.0
  %4175 = vmatpush.msra.mxu0 0.0
  %4176 = vmatpush.msra.mxu0 0.0
  %4177 = vmatpush.msra.mxu0 0.0
  %4178 = vmatpush.msra.mxu0 0.0
  %4179 = vmatpush.msra.mxu0 0.0
  %4180 = vmatpush.msra.mxu0 0.0
  %4181 = vmatpush.msra.mxu0 0.0
  %4182 = vmatpush.msra.mxu0 0.0
  %4183 = vmatpush.msra.mxu0 %v3843
  %4184 = vmatmul.f32.gmra.mxu0 %v3866
  %v4185 = vpop.f32.mrf.mxu0
  %v4186 = vadd.f32 0.0, %v4185
  %4187 = vdwg.mxu0
  %4188 = vmatpush.msra.mxu0 0.0
  %4189 = vmatpush.msra.mxu0 0.0
  %4190 = vmatpush.msra.mxu0 0.0
  %4191 = vmatpush.msra.mxu0 0.0
  %4192 = vmatpush.msra.mxu0 0.0
  %4193 = vmatpush.msra.mxu0 0.0
  %4194 = vmatpush.msra.mxu0 0.0
  %4195 = vmatpush.msra.mxu0 0.0
  %4196 = vmatpush.msra.mxu0 0.0
  %4197 = vmatpush.msra.mxu0 0.0
  %4198 = vmatpush.msra.mxu0 0.0
  %4199 = vmatpush.msra.mxu0 0.0
  %4200 = vmatpush.msra.mxu0 0.0
  %4201 = vmatpush.msra.mxu0 0.0
  %4202 = vmatpush.msra.mxu0 0.0
  %4203 = vmatpush.msra.mxu0 %v3844
  %4204 = vmatmul.f32.gmra.mxu0 %v3866
  %v4205 = vpop.f32.mrf.mxu0
  %v4206 = vadd.f32 0.0, %v4205
  %4207 = vdwg.mxu0
  %4208 = vmatpush.msra.mxu0 0.0
  %4209 = vmatpush.msra.mxu0 0.0
  %4210 = vmatpush.msra.mxu0 0.0
  %4211 = vmatpush.msra.mxu0 0.0
  %4212 = vmatpush.msra.mxu0 0.0
  %4213 = vmatpush.msra.mxu0 0.0
  %4214 = vmatpush.msra.mxu0 0.0
  %4215 = vmatpush.msra.mxu0 0.0
  %4216 = vmatpush.msra.mxu0 0.0
  %4217 = vmatpush.msra.mxu0 0.0
  %4218 = vmatpush.msra.mxu0 0.0
  %4219 = vmatpush.msra.mxu0 0.0
  %4220 = vmatpush.msra.mxu0 0.0
  %4221 = vmatpush.msra.mxu0 0.0
  %4222 = vmatpush.msra.mxu0 0.0
  %4223 = vmatpush.msra.mxu0 %v3845
  %4224 = vmatmul.f32.gmra.mxu0 %v3866
  %v4225 = vpop.f32.mrf.mxu0
  %v4226 = vadd.f32 0.0, %v4225
  %4227 = vdwg.mxu0
  %4228 = vmatpush.msra.mxu0 0.0
  %4229 = vmatpush.msra.mxu0 0.0
  %4230 = vmatpush.msra.mxu0 0.0
  %4231 = vmatpush.msra.mxu0 0.0
  %4232 = vmatpush.msra.mxu0 0.0
  %4233 = vmatpush.msra.mxu0 0.0
  %4234 = vmatpush.msra.mxu0 0.0
  %4235 = vmatpush.msra.mxu0 0.0
  %4236 = vmatpush.msra.mxu0 0.0
  %4237 = vmatpush.msra.mxu0 0.0
  %4238 = vmatpush.msra.mxu0 0.0
  %4239 = vmatpush.msra.mxu0 0.0
  %4240 = vmatpush.msra.mxu0 0.0
  %4241 = vmatpush.msra.mxu0 0.0
  %4242 = vmatpush.msra.mxu0 0.0
  %4243 = vmatpush.msra.mxu0 %v3826
  %4244 = vmatmul.f32.gmra.mxu0 %v3866
  %v4245 = vpop.f32.mrf.mxu0
  %v4246 = vadd.f32 0.0, %v4245
  %4247 = vdwg.mxu0
  %v4248 = vadd.f32 %v3768, %v3886
  %v4249 = vadd.f32 %v3769, %v3906
  %v4250 = vadd.f32 %v3770, %v3926
  %v4251 = vadd.f32 %v3771, %v3946
  %v4252 = vadd.f32 %v3772, %v3966
  %v4253 = vadd.f32 %v3773, %v3986
  %v4254 = vadd.f32 %v3774, %v4006
  %v4255 = vadd.f32 %v3775, %v4026
  %v4256 = vadd.f32 %v3776, %v4046
  %v4257 = vadd.f32 %v3777, %v4066
  %v4258 = vadd.f32 %v3778, %v4086
  %v4259 = vadd.f32 %v3779, %v4106
  %v4260 = vadd.f32 %v3780, %v4126
  %v4261 = vadd.f32 %v3781, %v4146
  %v4262 = vadd.f32 %v3782, %v4166
  %v4263 = vadd.f32 %v3783, %v4186
  %v4264 = vadd.f32 %v3784, %v4206
  %v4265 = vadd.f32 %v3785, %v4226
  %v4266 = vadd.f32 %v3786, %v4246
  %v4267 = vld [vmem:[%s2] sm:$0xff]
  %4269 = vset.pattern.permute.xlu0 0
  %4270 = vperm.xlu0 %4269, %v4267
  %v4271 = vpop.permute.xlu0 %4270
  %v4273 = vadd.f32 %v4248, %v4271
  %v4274 = vadd.f32 %v4249, %v4271
  %v4275 = vadd.f32 %v4250, %v4271
  %v4276 = vadd.f32 %v4251, %v4271
  %v4277 = vadd.f32 %v4252, %v4271
  %v4278 = vadd.f32 %v4253, %v4271
  %v4279 = vadd.f32 %v4254, %v4271
  %v4280 = vadd.f32 %v4255, %v4271
  %v4281 = vadd.f32 %v4256, %v4271
  %v4282 = vadd.f32 %v4257, %v4271
  %v4283 = vadd.f32 %v4258, %v4271
  %v4284 = vadd.f32 %v4259, %v4271
  %v4285 = vadd.f32 %v4260, %v4271
  %v4286 = vadd.f32 %v4261, %v4271
  %v4287 = vadd.f32 %v4262, %v4271
  %v4288 = vadd.f32 %v4263, %v4271
  %v4289 = vadd.f32 %v4264, %v4271
  %v4290 = vadd.f32 %v4265, %v4271
  %v4291 = vadd.f32 %v4266, %v4271
  %v4292 = vld [vmem:[%s5] sm:$0xff]
  %v4293 = vld [vmem:[%s5 + $0x8] sm:$0xff]
  %v4294 = vld [vmem:[%s5 + $0x10] sm:$0x7]
  %v4298 = vperm.slane %v4292, 0
  %v4299 = vperm.slane %v4292, 1
  %v4300 = vperm.slane %v4292, 2
  %v4301 = vperm.slane %v4292, 3
  %v4302 = vperm.slane %v4292, 4
  %v4303 = vperm.slane %v4292, 5
  %v4304 = vperm.slane %v4292, 6
  %v4305 = vperm.slane %v4292, 7
  %v4306 = vperm.slane %v4293, 0
  %v4307 = vperm.slane %v4293, 1
  %v4308 = vperm.slane %v4293, 2
  %v4309 = vperm.slane %v4293, 3
  %v4310 = vperm.slane %v4293, 4
  %v4311 = vperm.slane %v4293, 5
  %v4312 = vperm.slane %v4293, 6
  %v4313 = vperm.slane %v4293, 7
  %v4314 = vperm.slane %v4294, 0
  %v4315 = vperm.slane %v4294, 1
  %v4316 = vperm.slane %v4294, 2
  %v4336 = vmul.f32 %v4273, %v4298
  %v4337 = vmul.f32 %v4274, %v4299
  %v4338 = vmul.f32 %v4275, %v4300
  %v4339 = vmul.f32 %v4276, %v4301
  %v4340 = vmul.f32 %v4277, %v4302
  %v4341 = vmul.f32 %v4278, %v4303
  %v4342 = vmul.f32 %v4279, %v4304
  %v4343 = vmul.f32 %v4280, %v4305
  %v4344 = vmul.f32 %v4281, %v4306
  %v4345 = vmul.f32 %v4282, %v4307
  %v4346 = vmul.f32 %v4283, %v4308
  %v4347 = vmul.f32 %v4284, %v4309
  %v4348 = vmul.f32 %v4285, %v4310
  %v4349 = vmul.f32 %v4286, %v4311
  %v4350 = vmul.f32 %v4287, %v4312
  %v4351 = vmul.f32 %v4288, %v4313
  %v4352 = vmul.f32 %v4289, %v4314
  %v4353 = vmul.f32 %v4290, %v4315
  %v4354 = vmul.f32 %v4291, %v4316
  %v4355 = vadd.f32 %v4336, %v4337
  %v4356 = vadd.f32 %v4355, %v4338
  %v4357 = vadd.f32 %v4356, %v4339
  %v4358 = vadd.f32 %v4357, %v4340
  %v4359 = vadd.f32 %v4358, %v4341
  %v4360 = vadd.f32 %v4359, %v4342
  %v4361 = vadd.f32 %v4360, %v4343
  %v4362 = vadd.f32 %v4361, %v4344
  %v4363 = vadd.f32 %v4362, %v4345
  %v4364 = vadd.f32 %v4363, %v4346
  %v4365 = vadd.f32 %v4364, %v4347
  %v4366 = vadd.f32 %v4365, %v4348
  %v4367 = vadd.f32 %v4366, %v4349
  %v4368 = vadd.f32 %v4367, %v4350
  %v4369 = vadd.f32 %v4368, %v4351
  %v4370 = vadd.f32 %v4369, %v4352
  %v4371 = vadd.f32 %v4370, %v4353
  %v4372 = vsel %vm140, %v4354, 0.0
  %v4373 = vadd.f32 %v4371, %v4372
  %4374 = vadd.xlane.f32.xlu0 %v4373
  %v4375 = vpop.xlane.xlu0 %4374
  %v4376 = vmul.f32 %v4375, 0.00048828125
  %v4377 = vsub.f32 %v4273, %v4376
  %v4378 = vsub.f32 %v4274, %v4376
  %v4379 = vsub.f32 %v4275, %v4376
  %v4380 = vsub.f32 %v4276, %v4376
  %v4381 = vsub.f32 %v4277, %v4376
  %v4382 = vsub.f32 %v4278, %v4376
  %v4383 = vsub.f32 %v4279, %v4376
  %v4384 = vsub.f32 %v4280, %v4376
  %v4385 = vsub.f32 %v4281, %v4376
  %v4386 = vsub.f32 %v4282, %v4376
  %v4387 = vsub.f32 %v4283, %v4376
  %v4388 = vsub.f32 %v4284, %v4376
  %v4389 = vsub.f32 %v4285, %v4376
  %v4390 = vsub.f32 %v4286, %v4376
  %v4391 = vsub.f32 %v4287, %v4376
  %v4392 = vsub.f32 %v4288, %v4376
  %v4393 = vsub.f32 %v4289, %v4376
  %v4394 = vsub.f32 %v4290, %v4376
  %v4395 = vsub.f32 %v4291, %v4376
  %v4396 = vmul.f32 %v4377, %v4298
  %v4397 = vmul.f32 %v4378, %v4299
  %v4398 = vmul.f32 %v4379, %v4300
  %v4399 = vmul.f32 %v4380, %v4301
  %v4400 = vmul.f32 %v4381, %v4302
  %v4401 = vmul.f32 %v4382, %v4303
  %v4402 = vmul.f32 %v4383, %v4304
  %v4403 = vmul.f32 %v4384, %v4305
  %v4404 = vmul.f32 %v4385, %v4306
  %v4405 = vmul.f32 %v4386, %v4307
  %v4406 = vmul.f32 %v4387, %v4308
  %v4407 = vmul.f32 %v4388, %v4309
  %v4408 = vmul.f32 %v4389, %v4310
  %v4409 = vmul.f32 %v4390, %v4311
  %v4410 = vmul.f32 %v4391, %v4312
  %v4411 = vmul.f32 %v4392, %v4313
  %v4412 = vmul.f32 %v4393, %v4314
  %v4413 = vmul.f32 %v4394, %v4315
  %v4414 = vmul.f32 %v4395, %v4316
  %v4415 = vmul.f32 %v4396, %v4396
  %v4416 = vmul.f32 %v4397, %v4397
  %v4417 = vmul.f32 %v4398, %v4398
  %v4418 = vmul.f32 %v4399, %v4399
  %v4419 = vmul.f32 %v4400, %v4400
  %v4420 = vmul.f32 %v4401, %v4401
  %v4421 = vmul.f32 %v4402, %v4402
  %v4422 = vmul.f32 %v4403, %v4403
  %v4423 = vmul.f32 %v4404, %v4404
  %v4424 = vmul.f32 %v4405, %v4405
  %v4425 = vmul.f32 %v4406, %v4406
  %v4426 = vmul.f32 %v4407, %v4407
  %v4427 = vmul.f32 %v4408, %v4408
  %v4428 = vmul.f32 %v4409, %v4409
  %v4429 = vmul.f32 %v4410, %v4410
  %v4430 = vmul.f32 %v4411, %v4411
  %v4431 = vmul.f32 %v4412, %v4412
  %v4432 = vmul.f32 %v4413, %v4413
  %v4433 = vmul.f32 %v4414, %v4414
  %v4434 = vadd.f32 %v4415, %v4416
  %v4435 = vadd.f32 %v4434, %v4417
  %v4436 = vadd.f32 %v4435, %v4418
  %v4437 = vadd.f32 %v4436, %v4419
  %v4438 = vadd.f32 %v4437, %v4420
  %v4439 = vadd.f32 %v4438, %v4421
  %v4440 = vadd.f32 %v4439, %v4422
  %v4441 = vadd.f32 %v4440, %v4423
  %v4442 = vadd.f32 %v4441, %v4424
  %v4443 = vadd.f32 %v4442, %v4425
  %v4444 = vadd.f32 %v4443, %v4426
  %v4445 = vadd.f32 %v4444, %v4427
  %v4446 = vadd.f32 %v4445, %v4428
  %v4447 = vadd.f32 %v4446, %v4429
  %v4448 = vadd.f32 %v4447, %v4430
  %v4449 = vadd.f32 %v4448, %v4431
  %v4450 = vadd.f32 %v4449, %v4432
  %v4451 = vsel %vm140, %v4433, 0.0
  %v4452 = vadd.f32 %v4450, %v4451
  %4453 = vadd.xlane.f32.xlu0 %v4452
  %v4454 = vpop.xlane.xlu0 %4453
  %v4455 = vmul.f32 %v4454, 0.00048828125
  %v4456 = vadd.f32 %v4455, 1e-05
  %v4457 = vrsqrt.pop %v4456
  %v4458 = vmul.f32 %v4457, %v4456
  %v4459 = vmul.f32 %v4458, %v4457
  %v4460 = vmul.f32 0.5, %v4459
  %v4461 = vsub.f32 1.5, %v4460
  %v4462 = vmul.f32 %v4457, %v4461
  %vm4463 = vweird.f32 %v4456
  %vm4464 = vweird.f32 %v4457
  %vm4465 = vmor %vm4463, %vm4464
  %v4466 = vsel %vm4465, %v4457, %v4462
  %v4467 = vmul.f32 %v4377, %v4466
  %v4468 = vmul.f32 %v4378, %v4466
  %v4469 = vmul.f32 %v4379, %v4466
  %v4470 = vmul.f32 %v4380, %v4466
  %v4471 = vmul.f32 %v4381, %v4466
  %v4472 = vmul.f32 %v4382, %v4466
  %v4473 = vmul.f32 %v4383, %v4466
  %v4474 = vmul.f32 %v4384, %v4466
  %v4475 = vmul.f32 %v4385, %v4466
  %v4476 = vmul.f32 %v4386, %v4466
  %v4477 = vmul.f32 %v4387, %v4466
  %v4478 = vmul.f32 %v4388, %v4466
  %v4479 = vmul.f32 %v4389, %v4466
  %v4480 = vmul.f32 %v4390, %v4466
  %v4481 = vmul.f32 %v4391, %v4466
  %v4482 = vmul.f32 %v4392, %v4466
  %v4483 = vmul.f32 %v4393, %v4466
  %v4484 = vmul.f32 %v4394, %v4466
  %v4485 = vmul.f32 %v4395, %v4466
  %v4486 = vld [vmem:[%s3] sm:$0xff]
  %4488 = vset.pattern.permute.xlu0 0
  %4489 = vperm.xlu0 %4488, %v4486
  %v4490 = vpop.permute.xlu0 %4489
  %v4492 = vmul.f32 %v4467, %v4490
  %v4493 = vmul.f32 %v4468, %v4490
  %v4494 = vmul.f32 %v4469, %v4490
  %v4495 = vmul.f32 %v4470, %v4490
  %v4496 = vmul.f32 %v4471, %v4490
  %v4497 = vmul.f32 %v4472, %v4490
  %v4498 = vmul.f32 %v4473, %v4490
  %v4499 = vmul.f32 %v4474, %v4490
  %v4500 = vmul.f32 %v4475, %v4490
  %v4501 = vmul.f32 %v4476, %v4490
  %v4502 = vmul.f32 %v4477, %v4490
  %v4503 = vmul.f32 %v4478, %v4490
  %v4504 = vmul.f32 %v4479, %v4490
  %v4505 = vmul.f32 %v4480, %v4490
  %v4506 = vmul.f32 %v4481, %v4490
  %v4507 = vmul.f32 %v4482, %v4490
  %v4508 = vmul.f32 %v4483, %v4490
  %v4509 = vmul.f32 %v4484, %v4490
  %v4510 = vmul.f32 %v4485, %v4490
  %v4511 = vld [vmem:[%s4] sm:$0xff]
  %4513 = vset.pattern.permute.xlu0 0
  %4514 = vperm.xlu0 %4513, %v4511
  %v4515 = vpop.permute.xlu0 %4514
  %v4517 = vadd.f32 %v4492, %v4515
  %v4518 = vadd.f32 %v4493, %v4515
  %v4519 = vadd.f32 %v4494, %v4515
  %v4520 = vadd.f32 %v4495, %v4515
  %v4521 = vadd.f32 %v4496, %v4515
  %v4522 = vadd.f32 %v4497, %v4515
  %v4523 = vadd.f32 %v4498, %v4515
  %v4524 = vadd.f32 %v4499, %v4515
  %v4525 = vadd.f32 %v4500, %v4515
  %v4526 = vadd.f32 %v4501, %v4515
  %v4527 = vadd.f32 %v4502, %v4515
  %v4528 = vadd.f32 %v4503, %v4515
  %v4529 = vadd.f32 %v4504, %v4515
  %v4530 = vadd.f32 %v4505, %v4515
  %v4531 = vadd.f32 %v4506, %v4515
  %v4532 = vadd.f32 %v4507, %v4515
  %v4533 = vadd.f32 %v4508, %v4515
  %v4534 = vadd.f32 %v4509, %v4515
  %v4535 = vadd.f32 %v4510, %v4515
  %v4536 = vmax.f32 %v4517, 0.0
  %v4537 = vmax.f32 %v4518, 0.0
  %v4538 = vmax.f32 %v4519, 0.0
  %v4539 = vmax.f32 %v4520, 0.0
  %v4540 = vmax.f32 %v4521, 0.0
  %v4541 = vmax.f32 %v4522, 0.0
  %v4542 = vmax.f32 %v4523, 0.0
  %v4543 = vmax.f32 %v4524, 0.0
  %v4544 = vmax.f32 %v4525, 0.0
  %v4545 = vmax.f32 %v4526, 0.0
  %v4546 = vmax.f32 %v4527, 0.0
  %v4547 = vmax.f32 %v4528, 0.0
  %v4548 = vmax.f32 %v4529, 0.0
  %v4549 = vmax.f32 %v4530, 0.0
  %v4550 = vmax.f32 %v4531, 0.0
  %v4551 = vmax.f32 %v4532, 0.0
  %v4552 = vmax.f32 %v4533, 0.0
  %v4553 = vmax.f32 %v4534, 0.0
  %v4554 = vmax.f32 %v4535, 0.0
  %v4555 = vmul.f32 %v4536, %v4298
  %v4556 = vmul.f32 %v4537, %v4299
  %v4557 = vmul.f32 %v4538, %v4300
  %v4558 = vmul.f32 %v4539, %v4301
  %v4559 = vmul.f32 %v4540, %v4302
  %v4560 = vmul.f32 %v4541, %v4303
  %v4561 = vmul.f32 %v4542, %v4304
  %v4562 = vmul.f32 %v4543, %v4305
  %v4563 = vmul.f32 %v4544, %v4306
  %v4564 = vmul.f32 %v4545, %v4307
  %v4565 = vmul.f32 %v4546, %v4308
  %v4566 = vmul.f32 %v4547, %v4309
  %v4567 = vmul.f32 %v4548, %v4310
  %v4568 = vmul.f32 %v4549, %v4311
  %v4569 = vmul.f32 %v4550, %v4312
  %v4570 = vmul.f32 %v4551, %v4313
  %v4571 = vmul.f32 %v4552, %v4314
  %v4572 = vmul.f32 %v4553, %v4315
  %v4573 = vmul.f32 %v4554, %v4316
  %4574 = vst [vmem:[%s6] sm:$0xff] %v4555
  %4575 = vst [vmem:[%s6 + $0x8] sm:$0xff] %v4556
  %4576 = vst [vmem:[%s6 + $0x10] sm:$0xff] %v4557
  %4577 = vst [vmem:[%s6 + $0x18] sm:$0xff] %v4558
  %4578 = vst [vmem:[%s6 + $0x20] sm:$0xff] %v4559
  %4579 = vst [vmem:[%s6 + $0x28] sm:$0xff] %v4560
  %4580 = vst [vmem:[%s6 + $0x30] sm:$0xff] %v4561
  %4581 = vst [vmem:[%s6 + $0x38] sm:$0xff] %v4562
  %4582 = vst [vmem:[%s6 + $0x40] sm:$0xff] %v4563
  %4583 = vst [vmem:[%s6 + $0x48] sm:$0xff] %v4564
  %4584 = vst [vmem:[%s6 + $0x50] sm:$0xff] %v4565
  %4585 = vst [vmem:[%s6 + $0x58] sm:$0xff] %v4566
  %4586 = vst [vmem:[%s6 + $0x60] sm:$0xff] %v4567
  %4587 = vst [vmem:[%s6 + $0x68] sm:$0xff] %v4568
  %4588 = vst [vmem:[%s6 + $0x70] sm:$0xff] %v4569
  %4589 = vst [vmem:[%s6 + $0x78] sm:$0xff] %v4570
  %4590 = vst [vmem:[%s6 + $0x80] sm:$0xff] %v4571
  %4591 = vst [vmem:[%s6 + $0x88] sm:$0xff] %v4572
  %4592 = vst.msk [vmem:[%s6 + $0x90] sm:$0xff] %vm140, %v4573
  // Predicated region
  $region26: #{network_gen_auto_forward.8} parent=0 // pred_check
    _
  $region27: #{network_gen_auto_forward.8} parent=0 // pred_check_branch
    %4594 = sbr.rel (0) target = $region29
  $region28: #{network_gen_auto_forward.8} parent=0 // pred_region
    _
  $region29: #{network_gen_auto_forward.8} parent=0 // pred_fallthru
    _
  // Predicated region
  $region30: #{network_gen_auto_forward.8} parent=0 // pred_check
    _
  $region31: #{network_gen_auto_forward.8} parent=0 // pred_check_branch
    %4596 = sbr.rel (0) target = $region33
  $region32: #{network_gen_auto_forward.8} parent=0 // pred_region
    _
  $region33: #{network_gen_auto_forward.8} parent=0 // pred_fallthru
    _

// kernel: network_gen_auto_forward.9
$region0: #{network_gen_auto_forward.9}
  #allocation0 [shape = 'u32[]', space=smem, size = 0x4, offset = 0x4, fixed_abs, tag = 'smem constant byte address 0x4 - core index']
  #allocation1 [shape = 'u32[72,128]{1,0:T(1,128)}', space=vmem, size = 0x9000, scoped, tag = 'internal scratch']
  #allocation2 [shape = 'f32[8,2382]{1,0:T(8,128)}', space=vmem, size = 0x13000, scoped, tag = 'scratch operand']
  %s0 = inlined_call_operand.vmem [shape: f32[8,2382], index: 0, kind: input, shape index: {}]
  %s1 = inlined_call_operand.vmem [shape: f32[9,3,8], index: 1, kind: input, shape index: {}]
  %s2 = inlined_call_operand.vmem [shape: f32[3,1], index: 2, kind: input, shape index: {}]
  %s3 = inlined_call_operand.vmem [shape: f32[8,1], index: 3, kind: input, shape index: {}]
  %s4 = inlined_call_operand.vmem [shape: f32[8,1], index: 4, kind: input, shape index: {}]
  %s5 = inlined_call_operand.vmem [shape: f32[1,2382], index: 5, kind: input, shape index: {}]
  %s6 = inlined_call_operand.vmem [shape: f32[3,2312], index: 6, kind: output, shape index: {}]
  %s7 = sld [smem:[#allocation0]]
  $region34: #{network_gen_auto_forward.9} parent=0
    _
  %s9 = ssub.s32 1, %s7
  %s10 = scalar_select 0, %s9, %s7
  // Predicated region
  $region2: #{network_gen_auto_forward.9} parent=0 // pred_check
    _
  $region3: #{network_gen_auto_forward.9} parent=0 // pred_check_branch
    %12 = sbr.rel (0) target = $region5
  $region4: #{network_gen_auto_forward.9} parent=0 // pred_region
    _
  $region5: #{network_gen_auto_forward.9} parent=0 // pred_fallthru
    _
  // Predicated region
  $region6: #{network_gen_auto_forward.9} parent=0 // pred_check
    _
  $region7: #{network_gen_auto_forward.9} parent=0 // pred_check_branch
    %14 = sbr.rel (0) target = $region9
  $region8: #{network_gen_auto_forward.9} parent=0 // pred_region
    _
  $region9: #{network_gen_auto_forward.9} parent=0 // pred_fallthru
    _
  // Predicated region
  $region10: #{network_gen_auto_forward.9} parent=0 // pred_check
    _
  $region11: #{network_gen_auto_forward.9} parent=0 // pred_check_branch
    %16 = sbr.rel (0) target = $region13
  $region12: #{network_gen_auto_forward.9} parent=0 // pred_region
    _
  $region13: #{network_gen_auto_forward.9} parent=0 // pred_fallthru
    _
  // Predicated region
  $region14: #{network_gen_auto_forward.9} parent=0 // pred_check
    _
  $region15: #{network_gen_auto_forward.9} parent=0 // pred_check_branch
    %18 = sbr.rel (0) target = $region17
  $region16: #{network_gen_auto_forward.9} parent=0 // pred_region
    _
  $region17: #{network_gen_auto_forward.9} parent=0 // pred_fallthru
    _
  // Predicated region
  $region18: #{network_gen_auto_forward.9} parent=0 // pred_check
    _
  $region19: #{network_gen_auto_forward.9} parent=0 // pred_check_branch
    %20 = sbr.rel (0) target = $region21
  $region20: #{network_gen_auto_forward.9} parent=0 // pred_region
    _
  $region21: #{network_gen_auto_forward.9} parent=0 // pred_fallthru
    _
  // Predicated region
  $region22: #{network_gen_auto_forward.9} parent=0 // pred_check
    _
  $region23: #{network_gen_auto_forward.9} parent=0 // pred_check_branch
    %22 = sbr.rel (0) target = $region25
  $region24: #{network_gen_auto_forward.9} parent=0 // pred_region
    _
  $region25: #{network_gen_auto_forward.9} parent=0 // pred_fallthru
    _
  %v23 = vld [vmem:[%s0] sm:$0xff]
  %v24 = vld [vmem:[%s0 + $0x8] sm:$0xff]
  %v25 = vld [vmem:[%s0 + $0x10] sm:$0xff]
  %v26 = vld [vmem:[%s0 + $0x18] sm:$0xff]
  %v27 = vld [vmem:[%s0 + $0x20] sm:$0xff]
  %v28 = vld [vmem:[%s0 + $0x28] sm:$0xff]
  %v29 = vld [vmem:[%s0 + $0x30] sm:$0xff]
  %v30 = vld [vmem:[%s0 + $0x38] sm:$0xff]
  %v31 = vld [vmem:[%s0 + $0x40] sm:$0xff]
  %v32 = vld [vmem:[%s0 + $0x48] sm:$0xff]
  %v33 = vld [vmem:[%s0 + $0x50] sm:$0xff]
  %v34 = vld [vmem:[%s0 + $0x58] sm:$0xff]
  %v35 = vld [vmem:[%s0 + $0x60] sm:$0xff]
  %v36 = vld [vmem:[%s0 + $0x68] sm:$0xff]
  %v37 = vld [vmem:[%s0 + $0x70] sm:$0xff]
  %v38 = vld [vmem:[%s0 + $0x78] sm:$0xff]
  %v39 = vld [vmem:[%s0 + $0x80] sm:$0xff]
  %v40 = vld [vmem:[%s0 + $0x88] sm:$0xff]
  %v41 = vld [vmem:[%s0 + $0x90] sm:$0xff]
  %v42 = vld [vmem:[%s5] sm:$0xff]
  %v43 = vld [vmem:[%s5 + $0x8] sm:$0xff]
  %v44 = vld [vmem:[%s5 + $0x10] sm:$0x7]
  %v48 = vperm.slane %v42, 0
  %v49 = vperm.slane %v42, 1
  %v50 = vperm.slane %v42, 2
  %v51 = vperm.slane %v42, 3
  %v52 = vperm.slane %v42, 4
  %v53 = vperm.slane %v42, 5
  %v54 = vperm.slane %v42, 6
  %v55 = vperm.slane %v42, 7
  %v56 = vperm.slane %v43, 0
  %v57 = vperm.slane %v43, 1
  %v58 = vperm.slane %v43, 2
  %v59 = vperm.slane %v43, 3
  %v60 = vperm.slane %v43, 4
  %v61 = vperm.slane %v43, 5
  %v62 = vperm.slane %v43, 6
  %v63 = vperm.slane %v43, 7
  %v64 = vperm.slane %v44, 0
  %v65 = vperm.slane %v44, 1
  %v66 = vperm.slane %v44, 2
  %v86 = vmul.f32 %v23, %v48
  %v87 = vmul.f32 %v24, %v49
  %v88 = vmul.f32 %v25, %v50
  %v89 = vmul.f32 %v26, %v51
  %v90 = vmul.f32 %v27, %v52
  %v91 = vmul.f32 %v28, %v53
  %v92 = vmul.f32 %v29, %v54
  %v93 = vmul.f32 %v30, %v55
  %v94 = vmul.f32 %v31, %v56
  %v95 = vmul.f32 %v32, %v57
  %v96 = vmul.f32 %v33, %v58
  %v97 = vmul.f32 %v34, %v59
  %v98 = vmul.f32 %v35, %v60
  %v99 = vmul.f32 %v36, %v61
  %v100 = vmul.f32 %v37, %v62
  %v101 = vmul.f32 %v38, %v63
  %v102 = vmul.f32 %v39, %v64
  %v103 = vmul.f32 %v40, %v65
  %v104 = vmul.f32 %v41, %v66
  %v105 = vadd.f32 %v86, %v87
  %v106 = vadd.f32 %v105, %v88
  %v107 = vadd.f32 %v106, %v89
  %v108 = vadd.f32 %v107, %v90
  %v109 = vadd.f32 %v108, %v91
  %v110 = vadd.f32 %v109, %v92
  %v111 = vadd.f32 %v110, %v93
  %v112 = vadd.f32 %v111, %v94
  %v113 = vadd.f32 %v112, %v95
  %v114 = vadd.f32 %v113, %v96
  %v115 = vadd.f32 %v114, %v97
  %v116 = vadd.f32 %v115, %v98
  %v117 = vadd.f32 %v116, %v99
  %v118 = vadd.f32 %v117, %v100
  %v119 = vadd.f32 %v118, %v101
  %v120 = vadd.f32 %v119, %v102
  %v121 = vadd.f32 %v120, %v103
  %vm122 = vcmask 637952
  %v123 = vsel %vm122, %v104, 0.0
  %v124 = vadd.f32 %v121, %v123
  %125 = vadd.xlane.f32.xlu0 %v124
  %v126 = vpop.xlane.xlu0 %125
  %v127 = vmul.f32 %v126, 0.00048828125
  %v128 = vsub.f32 %v23, %v127
  %v129 = vsub.f32 %v24, %v127
  %v130 = vsub.f32 %v25, %v127
  %v131 = vsub.f32 %v26, %v127
  %v132 = vsub.f32 %v27, %v127
  %v133 = vsub.f32 %v28, %v127
  %v134 = vsub.f32 %v29, %v127
  %v135 = vsub.f32 %v30, %v127
  %v136 = vsub.f32 %v31, %v127
  %v137 = vsub.f32 %v32, %v127
  %v138 = vsub.f32 %v33, %v127
  %v139 = vsub.f32 %v34, %v127
  %v140 = vsub.f32 %v35, %v127
  %v141 = vsub.f32 %v36, %v127
  %v142 = vsub.f32 %v37, %v127
  %v143 = vsub.f32 %v38, %v127
  %v144 = vsub.f32 %v39, %v127
  %v145 = vsub.f32 %v40, %v127
  %v146 = vsub.f32 %v41, %v127
  %v147 = vmul.f32 %v128, %v48
  %v148 = vmul.f32 %v129, %v49
  %v149 = vmul.f32 %v130, %v50
  %v150 = vmul.f32 %v131, %v51
  %v151 = vmul.f32 %v132, %v52
  %v152 = vmul.f32 %v133, %v53
  %v153 = vmul.f32 %v134, %v54
  %v154 = vmul.f32 %v135, %v55
  %v155 = vmul.f32 %v136, %v56
  %v156 = vmul.f32 %v137, %v57
  %v157 = vmul.f32 %v138, %v58
  %v158 = vmul.f32 %v139, %v59
  %v159 = vmul.f32 %v140, %v60
  %v160 = vmul.f32 %v141, %v61
  %v161 = vmul.f32 %v142, %v62
  %v162 = vmul.f32 %v143, %v63
  %v163 = vmul.f32 %v144, %v64
  %v164 = vmul.f32 %v145, %v65
  %v165 = vmul.f32 %v146, %v66
  %v166 = vmul.f32 %v147, %v147
  %v167 = vmul.f32 %v148, %v148
  %v168 = vmul.f32 %v149, %v149
  %v169 = vmul.f32 %v150, %v150
  %v170 = vmul.f32 %v151, %v151
  %v171 = vmul.f32 %v152, %v152
  %v172 = vmul.f32 %v153, %v153
  %v173 = vmul.f32 %v154, %v154
  %v174 = vmul.f32 %v155, %v155
  %v175 = vmul.f32 %v156, %v156
  %v176 = vmul.f32 %v157, %v157
  %v177 = vmul.f32 %v158, %v158
  %v178 = vmul.f32 %v159, %v159
  %v179 = vmul.f32 %v160, %v160
  %v180 = vmul.f32 %v161, %v161
  %v181 = vmul.f32 %v162, %v162
  %v182 = vmul.f32 %v163, %v163
  %v183 = vmul.f32 %v164, %v164
  %v184 = vmul.f32 %v165, %v165
  %v185 = vadd.f32 %v166, %v167
  %v186 = vadd.f32 %v185, %v168
  %v187 = vadd.f32 %v186, %v169
  %v188 = vadd.f32 %v187, %v170
  %v189 = vadd.f32 %v188, %v171
  %v190 = vadd.f32 %v189, %v172
  %v191 = vadd.f32 %v190, %v173
  %v192 = vadd.f32 %v191, %v174
  %v193 = vadd.f32 %v192, %v175
  %v194 = vadd.f32 %v193, %v176
  %v195 = vadd.f32 %v194, %v177
  %v196 = vadd.f32 %v195, %v178
  %v197 = vadd.f32 %v196, %v179
  %v198 = vadd.f32 %v197, %v180
  %v199 = vadd.f32 %v198, %v181
  %v200 = vadd.f32 %v199, %v182
  %v201 = vadd.f32 %v200, %v183
  %v202 = vsel %vm122, %v184, 0.0
  %v203 = vadd.f32 %v201, %v202
  %204 = vadd.xlane.f32.xlu0 %v203
  %v205 = vpop.xlane.xlu0 %204
  %v206 = vmul.f32 %v205, 0.00048828125
  %v207 = vadd.f32 %v206, 1e-05
  %v208 = vrsqrt.pop %v207
  %v209 = vmul.f32 %v208, %v207
  %v210 = vmul.f32 %v209, %v208
  %v211 = vmul.f32 0.5, %v210
  %v212 = vsub.f32 1.5, %v211
  %v213 = vmul.f32 %v208, %v212
  %vm214 = vweird.f32 %v207
  %vm215 = vweird.f32 %v208
  %vm216 = vmor %vm214, %vm215
  %v217 = vsel %vm216, %v208, %v213
  %v218 = vmul.f32 %v128, %v217
  %v219 = vmul.f32 %v129, %v217
  %v220 = vmul.f32 %v130, %v217
  %v221 = vmul.f32 %v131, %v217
  %v222 = vmul.f32 %v132, %v217
  %v223 = vmul.f32 %v133, %v217
  %v224 = vmul.f32 %v134, %v217
  %v225 = vmul.f32 %v135, %v217
  %v226 = vmul.f32 %v136, %v217
  %v227 = vmul.f32 %v137, %v217
  %v228 = vmul.f32 %v138, %v217
  %v229 = vmul.f32 %v139, %v217
  %v230 = vmul.f32 %v140, %v217
  %v231 = vmul.f32 %v141, %v217
  %v232 = vmul.f32 %v142, %v217
  %v233 = vmul.f32 %v143, %v217
  %v234 = vmul.f32 %v144, %v217
  %v235 = vmul.f32 %v145, %v217
  %v236 = vmul.f32 %v146, %v217
  %v237 = vld [vmem:[%s3] sm:$0xff]
  %239 = vset.pattern.permute.xlu0 0
  %240 = vperm.xlu0 %239, %v237
  %v241 = vpop.permute.xlu0 %240
  %v243 = vmul.f32 %v218, %v241
  %v244 = vmul.f32 %v219, %v241
  %v245 = vmul.f32 %v220, %v241
  %v246 = vmul.f32 %v221, %v241
  %v247 = vmul.f32 %v222, %v241
  %v248 = vmul.f32 %v223, %v241
  %v249 = vmul.f32 %v224, %v241
  %v250 = vmul.f32 %v225, %v241
  %v251 = vmul.f32 %v226, %v241
  %v252 = vmul.f32 %v227, %v241
  %v253 = vmul.f32 %v228, %v241
  %v254 = vmul.f32 %v229, %v241
  %v255 = vmul.f32 %v230, %v241
  %v256 = vmul.f32 %v231, %v241
  %v257 = vmul.f32 %v232, %v241
  %v258 = vmul.f32 %v233, %v241
  %v259 = vmul.f32 %v234, %v241
  %v260 = vmul.f32 %v235, %v241
  %v261 = vmul.f32 %v236, %v241
  %v262 = vld [vmem:[%s4] sm:$0xff]
  %264 = vset.pattern.permute.xlu0 0
  %265 = vperm.xlu0 %264, %v262
  %v266 = vpop.permute.xlu0 %265
  %v268 = vadd.f32 %v243, %v266
  %v269 = vadd.f32 %v244, %v266
  %v270 = vadd.f32 %v245, %v266
  %v271 = vadd.f32 %v246, %v266
  %v272 = vadd.f32 %v247, %v266
  %v273 = vadd.f32 %v248, %v266
  %v274 = vadd.f32 %v249, %v266
  %v275 = vadd.f32 %v250, %v266
  %v276 = vadd.f32 %v251, %v266
  %v277 = vadd.f32 %v252, %v266
  %v278 = vadd.f32 %v253, %v266
  %v279 = vadd.f32 %v254, %v266
  %v280 = vadd.f32 %v255, %v266
  %v281 = vadd.f32 %v256, %v266
  %v282 = vadd.f32 %v257, %v266
  %v283 = vadd.f32 %v258, %v266
  %v284 = vadd.f32 %v259, %v266
  %v285 = vadd.f32 %v260, %v266
  %v286 = vadd.f32 %v261, %v266
  %v287 = vmax.f32 %v268, 0.0
  %v288 = vmax.f32 %v269, 0.0
  %v289 = vmax.f32 %v270, 0.0
  %v290 = vmax.f32 %v271, 0.0
  %v291 = vmax.f32 %v272, 0.0
  %v292 = vmax.f32 %v273, 0.0
  %v293 = vmax.f32 %v274, 0.0
  %v294 = vmax.f32 %v275, 0.0
  %v295 = vmax.f32 %v276, 0.0
  %v296 = vmax.f32 %v277, 0.0
  %v297 = vmax.f32 %v278, 0.0
  %v298 = vmax.f32 %v279, 0.0
  %v299 = vmax.f32 %v280, 0.0
  %v300 = vmax.f32 %v281, 0.0
  %v301 = vmax.f32 %v282, 0.0
  %v302 = vmax.f32 %v283, 0.0
  %v303 = vmax.f32 %v284, 0.0
  %v304 = vmax.f32 %v285, 0.0
  %v305 = vmax.f32 %v286, 0.0
  %v306 = vmul.f32 %v287, %v48
  %v307 = vmul.f32 %v288, %v49
  %v308 = vmul.f32 %v289, %v50
  %v309 = vmul.f32 %v290, %v51
  %v310 = vmul.f32 %v291, %v52
  %v311 = vmul.f32 %v292, %v53
  %v312 = vmul.f32 %v293, %v54
  %v313 = vmul.f32 %v294, %v55
  %v314 = vmul.f32 %v295, %v56
  %v315 = vmul.f32 %v296, %v57
  %v316 = vmul.f32 %v297, %v58
  %v317 = vmul.f32 %v298, %v59
  %v318 = vmul.f32 %v299, %v60
  %v319 = vmul.f32 %v300, %v61
  %v320 = vmul.f32 %v301, %v62
  %v321 = vmul.f32 %v302, %v63
  %v322 = vmul.f32 %v303, %v64
  %v323 = vmul.f32 %v304, %v65
  %v324 = vmul.f32 %v305, %v66
  %325 = vst [vmem:[#allocation2] sm:$0xff] %v306
  %326 = vst [vmem:[#allocation2 + $0x8] sm:$0xff] %v307
  %327 = vst [vmem:[#allocation2 + $0x10] sm:$0xff] %v308
  %328 = vst [vmem:[#allocation2 + $0x18] sm:$0xff] %v309
  %329 = vst [vmem:[#allocation2 + $0x20] sm:$0xff] %v310
  %330 = vst [vmem:[#allocation2 + $0x28] sm:$0xff] %v311
  %331 = vst [vmem:[#allocation2 + $0x30] sm:$0xff] %v312
  %332 = vst [vmem:[#allocation2 + $0x38] sm:$0xff] %v313
  %333 = vst [vmem:[#allocation2 + $0x40] sm:$0xff] %v314
  %334 = vst [vmem:[#allocation2 + $0x48] sm:$0xff] %v315
  %335 = vst [vmem:[#allocation2 + $0x50] sm:$0xff] %v316
  %336 = vst [vmem:[#allocation2 + $0x58] sm:$0xff] %v317
  %337 = vst [vmem:[#allocation2 + $0x60] sm:$0xff] %v318
  %338 = vst [vmem:[#allocation2 + $0x68] sm:$0xff] %v319
  %339 = vst [vmem:[#allocation2 + $0x70] sm:$0xff] %v320
  %340 = vst [vmem:[#allocation2 + $0x78] sm:$0xff] %v321
  %341 = vst [vmem:[#allocation2 + $0x80] sm:$0xff] %v322
  %342 = vst [vmem:[#allocation2 + $0x88] sm:$0xff] %v323
  %343 = vst.msk [vmem:[#allocation2 + $0x90] sm:$0xff] %vm122, %v324
  %v344 = vld [vmem:[%s1] sm:$0x7]
  %v345 = vld [vmem:[#allocation2] sm:$0xff]
  %v346 = vld [vmem:[#allocation2 + $0x8] sm:$0xff]
  %v347 = vld [vmem:[#allocation2 + $0x10] sm:$0xff]
  %v348 = vld [vmem:[#allocation2 + $0x18] sm:$0xff]
  %v349 = vld [vmem:[#allocation2 + $0x20] sm:$0xff]
  %v350 = vld [vmem:[#allocation2 + $0x28] sm:$0xff]
  %v351 = vld [vmem:[#allocation2 + $0x30] sm:$0xff]
  %v352 = vld [vmem:[#allocation2 + $0x38] sm:$0xff]
  %v353 = vld [vmem:[#allocation2 + $0x40] sm:$0xff]
  %v354 = vld [vmem:[#allocation2 + $0x48] sm:$0xff]
  %v355 = vld [vmem:[#allocation2 + $0x50] sm:$0xff]
  %v356 = vld [vmem:[#allocation2 + $0x58] sm:$0xff]
  %v357 = vld [vmem:[#allocation2 + $0x60] sm:$0xff]
  %v358 = vld [vmem:[#allocation2 + $0x68] sm:$0xff]
  %v359 = vld [vmem:[#allocation2 + $0x70] sm:$0xff]
  %v360 = vld [vmem:[#allocation2 + $0x78] sm:$0xff]
  %v361 = vld [vmem:[#allocation2 + $0x80] sm:$0xff]
  %v362 = vld [vmem:[#allocation2 + $0x88] sm:$0xff]
  %v363 = vld [vmem:[#allocation2 + $0x90] sm:$0xff]
  %s364 = scalar_lea.vmem %s1, 4
  %v365 = vld [vmem:[%s364] sm:$0x7]
  %385 = vrot.lane.b32.xlu0 %v345, 127
  %v386 = vpop.permute.xlu0 %385
  %387 = vrot.lane.b32.xlu0 %v346, 127
  %v388 = vpop.permute.xlu0 %387
  %389 = vrot.lane.b32.xlu0 %v347, 127
  %v390 = vpop.permute.xlu0 %389
  %391 = vrot.lane.b32.xlu0 %v348, 127
  %v392 = vpop.permute.xlu0 %391
  %393 = vrot.lane.b32.xlu0 %v349, 127
  %v394 = vpop.permute.xlu0 %393
  %395 = vrot.lane.b32.xlu0 %v350, 127
  %v396 = vpop.permute.xlu0 %395
  %397 = vrot.lane.b32.xlu0 %v351, 127
  %v398 = vpop.permute.xlu0 %397
  %399 = vrot.lane.b32.xlu0 %v352, 127
  %v400 = vpop.permute.xlu0 %399
  %401 = vrot.lane.b32.xlu0 %v353, 127
  %v402 = vpop.permute.xlu0 %401
  %403 = vrot.lane.b32.xlu0 %v354, 127
  %v404 = vpop.permute.xlu0 %403
  %405 = vrot.lane.b32.xlu0 %v355, 127
  %v406 = vpop.permute.xlu0 %405
  %407 = vrot.lane.b32.xlu0 %v356, 127
  %v408 = vpop.permute.xlu0 %407
  %409 = vrot.lane.b32.xlu0 %v357, 127
  %v410 = vpop.permute.xlu0 %409
  %411 = vrot.lane.b32.xlu0 %v358, 127
  %v412 = vpop.permute.xlu0 %411
  %413 = vrot.lane.b32.xlu0 %v359, 127
  %v414 = vpop.permute.xlu0 %413
  %415 = vrot.lane.b32.xlu0 %v360, 127
  %v416 = vpop.permute.xlu0 %415
  %417 = vrot.lane.b32.xlu0 %v361, 127
  %v418 = vpop.permute.xlu0 %417
  %419 = vrot.lane.b32.xlu0 %v362, 127
  %v420 = vpop.permute.xlu0 %419
  %421 = vrot.lane.b32.xlu0 %v363, 127
  %v422 = vpop.permute.xlu0 %421
  %vm423 = vcmask 1039360
  %v424 = vsel %vm423, %v386, %v388
  %v425 = vsel %vm423, %v388, %v390
  %v426 = vsel %vm423, %v390, %v392
  %v427 = vsel %vm423, %v392, %v394
  %v428 = vsel %vm423, %v394, %v396
  %v429 = vsel %vm423, %v396, %v398
  %v430 = vsel %vm423, %v398, %v400
  %v431 = vsel %vm423, %v400, %v402
  %v432 = vsel %vm423, %v402, %v404
  %v433 = vsel %vm423, %v404, %v406
  %v434 = vsel %vm423, %v406, %v408
  %v435 = vsel %vm423, %v408, %v410
  %v436 = vsel %vm423, %v410, %v412
  %v437 = vsel %vm423, %v412, %v414
  %v438 = vsel %vm423, %v414, %v416
  %v439 = vsel %vm423, %v416, %v418
  %v440 = vsel %vm423, %v418, %v420
  %v441 = vsel %vm423, %v420, %v422
  %vm461 = vcmask 64512
  %v463 = vsel %vm461, %v365, 0
  %465 = vmatpush.msra.mxu0 0.0
  %466 = vmatpush.msra.mxu0 0.0
  %467 = vmatpush.msra.mxu0 0.0
  %468 = vmatpush.msra.mxu0 0.0
  %469 = vmatpush.msra.mxu0 0.0
  %470 = vmatpush.msra.mxu0 0.0
  %471 = vmatpush.msra.mxu0 0.0
  %472 = vmatpush.msra.mxu0 0.0
  %473 = vmatpush.msra.mxu0 0.0
  %474 = vmatpush.msra.mxu0 0.0
  %475 = vmatpush.msra.mxu0 0.0
  %476 = vmatpush.msra.mxu0 0.0
  %477 = vmatpush.msra.mxu0 0.0
  %478 = vmatpush.msra.mxu0 0.0
  %479 = vmatpush.msra.mxu0 0.0
  %480 = vmatpush.msra.mxu0 %v424
  %481 = vmatmul.f32.gmra.mxu0 %v463
  %v482 = vpop.f32.mrf.mxu0
  %v483 = vadd.f32 0.0, %v482
  %484 = vdwg.mxu0
  %485 = vmatpush.msra.mxu0 0.0
  %486 = vmatpush.msra.mxu0 0.0
  %487 = vmatpush.msra.mxu0 0.0
  %488 = vmatpush.msra.mxu0 0.0
  %489 = vmatpush.msra.mxu0 0.0
  %490 = vmatpush.msra.mxu0 0.0
  %491 = vmatpush.msra.mxu0 0.0
  %492 = vmatpush.msra.mxu0 0.0
  %493 = vmatpush.msra.mxu0 0.0
  %494 = vmatpush.msra.mxu0 0.0
  %495 = vmatpush.msra.mxu0 0.0
  %496 = vmatpush.msra.mxu0 0.0
  %497 = vmatpush.msra.mxu0 0.0
  %498 = vmatpush.msra.mxu0 0.0
  %499 = vmatpush.msra.mxu0 0.0
  %500 = vmatpush.msra.mxu0 %v425
  %501 = vmatmul.f32.gmra.mxu0 %v463
  %v502 = vpop.f32.mrf.mxu0
  %v503 = vadd.f32 0.0, %v502
  %504 = vdwg.mxu0
  %505 = vmatpush.msra.mxu0 0.0
  %506 = vmatpush.msra.mxu0 0.0
  %507 = vmatpush.msra.mxu0 0.0
  %508 = vmatpush.msra.mxu0 0.0
  %509 = vmatpush.msra.mxu0 0.0
  %510 = vmatpush.msra.mxu0 0.0
  %511 = vmatpush.msra.mxu0 0.0
  %512 = vmatpush.msra.mxu0 0.0
  %513 = vmatpush.msra.mxu0 0.0
  %514 = vmatpush.msra.mxu0 0.0
  %515 = vmatpush.msra.mxu0 0.0
  %516 = vmatpush.msra.mxu0 0.0
  %517 = vmatpush.msra.mxu0 0.0
  %518 = vmatpush.msra.mxu0 0.0
  %519 = vmatpush.msra.mxu0 0.0
  %520 = vmatpush.msra.mxu0 %v426
  %521 = vmatmul.f32.gmra.mxu0 %v463
  %v522 = vpop.f32.mrf.mxu0
  %v523 = vadd.f32 0.0, %v522
  %524 = vdwg.mxu0
  %525 = vmatpush.msra.mxu0 0.0
  %526 = vmatpush.msra.mxu0 0.0
  %527 = vmatpush.msra.mxu0 0.0
  %528 = vmatpush.msra.mxu0 0.0
  %529 = vmatpush.msra.mxu0 0.0
  %530 = vmatpush.msra.mxu0 0.0
  %531 = vmatpush.msra.mxu0 0.0
  %532 = vmatpush.msra.mxu0 0.0
  %533 = vmatpush.msra.mxu0 0.0
  %534 = vmatpush.msra.mxu0 0.0
  %535 = vmatpush.msra.mxu0 0.0
  %536 = vmatpush.msra.mxu0 0.0
  %537 = vmatpush.msra.mxu0 0.0
  %538 = vmatpush.msra.mxu0 0.0
  %539 = vmatpush.msra.mxu0 0.0
  %540 = vmatpush.msra.mxu0 %v427
  %541 = vmatmul.f32.gmra.mxu0 %v463
  %v542 = vpop.f32.mrf.mxu0
  %v543 = vadd.f32 0.0, %v542
  %544 = vdwg.mxu0
  %545 = vmatpush.msra.mxu0 0.0
  %546 = vmatpush.msra.mxu0 0.0
  %547 = vmatpush.msra.mxu0 0.0
  %548 = vmatpush.msra.mxu0 0.0
  %549 = vmatpush.msra.mxu0 0.0
  %550 = vmatpush.msra.mxu0 0.0
  %551 = vmatpush.msra.mxu0 0.0
  %552 = vmatpush.msra.mxu0 0.0
  %553 = vmatpush.msra.mxu0 0.0
  %554 = vmatpush.msra.mxu0 0.0
  %555 = vmatpush.msra.mxu0 0.0
  %556 = vmatpush.msra.mxu0 0.0
  %557 = vmatpush.msra.mxu0 0.0
  %558 = vmatpush.msra.mxu0 0.0
  %559 = vmatpush.msra.mxu0 0.0
  %560 = vmatpush.msra.mxu0 %v428
  %561 = vmatmul.f32.gmra.mxu0 %v463
  %v562 = vpop.f32.mrf.mxu0
  %v563 = vadd.f32 0.0, %v562
  %564 = vdwg.mxu0
  %565 = vmatpush.msra.mxu0 0.0
  %566 = vmatpush.msra.mxu0 0.0
  %567 = vmatpush.msra.mxu0 0.0
  %568 = vmatpush.msra.mxu0 0.0
  %569 = vmatpush.msra.mxu0 0.0
  %570 = vmatpush.msra.mxu0 0.0
  %571 = vmatpush.msra.mxu0 0.0
  %572 = vmatpush.msra.mxu0 0.0
  %573 = vmatpush.msra.mxu0 0.0
  %574 = vmatpush.msra.mxu0 0.0
  %575 = vmatpush.msra.mxu0 0.0
  %576 = vmatpush.msra.mxu0 0.0
  %577 = vmatpush.msra.mxu0 0.0
  %578 = vmatpush.msra.mxu0 0.0
  %579 = vmatpush.msra.mxu0 0.0
  %580 = vmatpush.msra.mxu0 %v429
  %581 = vmatmul.f32.gmra.mxu0 %v463
  %v582 = vpop.f32.mrf.mxu0
  %v583 = vadd.f32 0.0, %v582
  %584 = vdwg.mxu0
  %585 = vmatpush.msra.mxu0 0.0
  %586 = vmatpush.msra.mxu0 0.0
  %587 = vmatpush.msra.mxu0 0.0
  %588 = vmatpush.msra.mxu0 0.0
  %589 = vmatpush.msra.mxu0 0.0
  %590 = vmatpush.msra.mxu0 0.0
  %591 = vmatpush.msra.mxu0 0.0
  %592 = vmatpush.msra.mxu0 0.0
  %593 = vmatpush.msra.mxu0 0.0
  %594 = vmatpush.msra.mxu0 0.0
  %595 = vmatpush.msra.mxu0 0.0
  %596 = vmatpush.msra.mxu0 0.0
  %597 = vmatpush.msra.mxu0 0.0
  %598 = vmatpush.msra.mxu0 0.0
  %599 = vmatpush.msra.mxu0 0.0
  %600 = vmatpush.msra.mxu0 %v430
  %601 = vmatmul.f32.gmra.mxu0 %v463
  %v602 = vpop.f32.mrf.mxu0
  %v603 = vadd.f32 0.0, %v602
  %604 = vdwg.mxu0
  %605 = vmatpush.msra.mxu0 0.0
  %606 = vmatpush.msra.mxu0 0.0
  %607 = vmatpush.msra.mxu0 0.0
  %608 = vmatpush.msra.mxu0 0.0
  %609 = vmatpush.msra.mxu0 0.0
  %610 = vmatpush.msra.mxu0 0.0
  %611 = vmatpush.msra.mxu0 0.0
  %612 = vmatpush.msra.mxu0 0.0
  %613 = vmatpush.msra.mxu0 0.0
  %614 = vmatpush.msra.mxu0 0.0
  %615 = vmatpush.msra.mxu0 0.0
  %616 = vmatpush.msra.mxu0 0.0
  %617 = vmatpush.msra.mxu0 0.0
  %618 = vmatpush.msra.mxu0 0.0
  %619 = vmatpush.msra.mxu0 0.0
  %620 = vmatpush.msra.mxu0 %v431
  %621 = vmatmul.f32.gmra.mxu0 %v463
  %v622 = vpop.f32.mrf.mxu0
  %v623 = vadd.f32 0.0, %v622
  %624 = vdwg.mxu0
  %625 = vmatpush.msra.mxu0 0.0
  %626 = vmatpush.msra.mxu0 0.0
  %627 = vmatpush.msra.mxu0 0.0
  %628 = vmatpush.msra.mxu0 0.0
  %629 = vmatpush.msra.mxu0 0.0
  %630 = vmatpush.msra.mxu0 0.0
  %631 = vmatpush.msra.mxu0 0.0
  %632 = vmatpush.msra.mxu0 0.0
  %633 = vmatpush.msra.mxu0 0.0
  %634 = vmatpush.msra.mxu0 0.0
  %635 = vmatpush.msra.mxu0 0.0
  %636 = vmatpush.msra.mxu0 0.0
  %637 = vmatpush.msra.mxu0 0.0
  %638 = vmatpush.msra.mxu0 0.0
  %639 = vmatpush.msra.mxu0 0.0
  %640 = vmatpush.msra.mxu0 %v432
  %641 = vmatmul.f32.gmra.mxu0 %v463
  %v642 = vpop.f32.mrf.mxu0
  %v643 = vadd.f32 0.0, %v642
  %644 = vdwg.mxu0
  %645 = vmatpush.msra.mxu0 0.0
  %646 = vmatpush.msra.mxu0 0.0
  %647 = vmatpush.msra.mxu0 0.0
  %648 = vmatpush.msra.mxu0 0.0
  %649 = vmatpush.msra.mxu0 0.0
  %650 = vmatpush.msra.mxu0 0.0
  %651 = vmatpush.msra.mxu0 0.0
  %652 = vmatpush.msra.mxu0 0.0
  %653 = vmatpush.msra.mxu0 0.0
  %654 = vmatpush.msra.mxu0 0.0
  %655 = vmatpush.msra.mxu0 0.0
  %656 = vmatpush.msra.mxu0 0.0
  %657 = vmatpush.msra.mxu0 0.0
  %658 = vmatpush.msra.mxu0 0.0
  %659 = vmatpush.msra.mxu0 0.0
  %660 = vmatpush.msra.mxu0 %v433
  %661 = vmatmul.f32.gmra.mxu0 %v463
  %v662 = vpop.f32.mrf.mxu0
  %v663 = vadd.f32 0.0, %v662
  %664 = vdwg.mxu0
  %665 = vmatpush.msra.mxu0 0.0
  %666 = vmatpush.msra.mxu0 0.0
  %667 = vmatpush.msra.mxu0 0.0
  %668 = vmatpush.msra.mxu0 0.0
  %669 = vmatpush.msra.mxu0 0.0
  %670 = vmatpush.msra.mxu0 0.0
  %671 = vmatpush.msra.mxu0 0.0
  %672 = vmatpush.msra.mxu0 0.0
  %673 = vmatpush.msra.mxu0 0.0
  %674 = vmatpush.msra.mxu0 0.0
  %675 = vmatpush.msra.mxu0 0.0
  %676 = vmatpush.msra.mxu0 0.0
  %677 = vmatpush.msra.mxu0 0.0
  %678 = vmatpush.msra.mxu0 0.0
  %679 = vmatpush.msra.mxu0 0.0
  %680 = vmatpush.msra.mxu0 %v434
  %681 = vmatmul.f32.gmra.mxu0 %v463
  %v682 = vpop.f32.mrf.mxu0
  %v683 = vadd.f32 0.0, %v682
  %684 = vdwg.mxu0
  %685 = vmatpush.msra.mxu0 0.0
  %686 = vmatpush.msra.mxu0 0.0
  %687 = vmatpush.msra.mxu0 0.0
  %688 = vmatpush.msra.mxu0 0.0
  %689 = vmatpush.msra.mxu0 0.0
  %690 = vmatpush.msra.mxu0 0.0
  %691 = vmatpush.msra.mxu0 0.0
  %692 = vmatpush.msra.mxu0 0.0
  %693 = vmatpush.msra.mxu0 0.0
  %694 = vmatpush.msra.mxu0 0.0
  %695 = vmatpush.msra.mxu0 0.0
  %696 = vmatpush.msra.mxu0 0.0
  %697 = vmatpush.msra.mxu0 0.0
  %698 = vmatpush.msra.mxu0 0.0
  %699 = vmatpush.msra.mxu0 0.0
  %700 = vmatpush.msra.mxu0 %v435
  %701 = vmatmul.f32.gmra.mxu0 %v463
  %v702 = vpop.f32.mrf.mxu0
  %v703 = vadd.f32 0.0, %v702
  %704 = vdwg.mxu0
  %705 = vmatpush.msra.mxu0 0.0
  %706 = vmatpush.msra.mxu0 0.0
  %707 = vmatpush.msra.mxu0 0.0
  %708 = vmatpush.msra.mxu0 0.0
  %709 = vmatpush.msra.mxu0 0.0
  %710 = vmatpush.msra.mxu0 0.0
  %711 = vmatpush.msra.mxu0 0.0
  %712 = vmatpush.msra.mxu0 0.0
  %713 = vmatpush.msra.mxu0 0.0
  %714 = vmatpush.msra.mxu0 0.0
  %715 = vmatpush.msra.mxu0 0.0
  %716 = vmatpush.msra.mxu0 0.0
  %717 = vmatpush.msra.mxu0 0.0
  %718 = vmatpush.msra.mxu0 0.0
  %719 = vmatpush.msra.mxu0 0.0
  %720 = vmatpush.msra.mxu0 %v436
  %721 = vmatmul.f32.gmra.mxu0 %v463
  %v722 = vpop.f32.mrf.mxu0
  %v723 = vadd.f32 0.0, %v722
  %724 = vdwg.mxu0
  %725 = vmatpush.msra.mxu0 0.0
  %726 = vmatpush.msra.mxu0 0.0
  %727 = vmatpush.msra.mxu0 0.0
  %728 = vmatpush.msra.mxu0 0.0
  %729 = vmatpush.msra.mxu0 0.0
  %730 = vmatpush.msra.mxu0 0.0
  %731 = vmatpush.msra.mxu0 0.0
  %732 = vmatpush.msra.mxu0 0.0
  %733 = vmatpush.msra.mxu0 0.0
  %734 = vmatpush.msra.mxu0 0.0
  %735 = vmatpush.msra.mxu0 0.0
  %736 = vmatpush.msra.mxu0 0.0
  %737 = vmatpush.msra.mxu0 0.0
  %738 = vmatpush.msra.mxu0 0.0
  %739 = vmatpush.msra.mxu0 0.0
  %740 = vmatpush.msra.mxu0 %v437
  %741 = vmatmul.f32.gmra.mxu0 %v463
  %v742 = vpop.f32.mrf.mxu0
  %v743 = vadd.f32 0.0, %v742
  %744 = vdwg.mxu0
  %745 = vmatpush.msra.mxu0 0.0
  %746 = vmatpush.msra.mxu0 0.0
  %747 = vmatpush.msra.mxu0 0.0
  %748 = vmatpush.msra.mxu0 0.0
  %749 = vmatpush.msra.mxu0 0.0
  %750 = vmatpush.msra.mxu0 0.0
  %751 = vmatpush.msra.mxu0 0.0
  %752 = vmatpush.msra.mxu0 0.0
  %753 = vmatpush.msra.mxu0 0.0
  %754 = vmatpush.msra.mxu0 0.0
  %755 = vmatpush.msra.mxu0 0.0
  %756 = vmatpush.msra.mxu0 0.0
  %757 = vmatpush.msra.mxu0 0.0
  %758 = vmatpush.msra.mxu0 0.0
  %759 = vmatpush.msra.mxu0 0.0
  %760 = vmatpush.msra.mxu0 %v438
  %761 = vmatmul.f32.gmra.mxu0 %v463
  %v762 = vpop.f32.mrf.mxu0
  %v763 = vadd.f32 0.0, %v762
  %764 = vdwg.mxu0
  %765 = vmatpush.msra.mxu0 0.0
  %766 = vmatpush.msra.mxu0 0.0
  %767 = vmatpush.msra.mxu0 0.0
  %768 = vmatpush.msra.mxu0 0.0
  %769 = vmatpush.msra.mxu0 0.0
  %770 = vmatpush.msra.mxu0 0.0
  %771 = vmatpush.msra.mxu0 0.0
  %772 = vmatpush.msra.mxu0 0.0
  %773 = vmatpush.msra.mxu0 0.0
  %774 = vmatpush.msra.mxu0 0.0
  %775 = vmatpush.msra.mxu0 0.0
  %776 = vmatpush.msra.mxu0 0.0
  %777 = vmatpush.msra.mxu0 0.0
  %778 = vmatpush.msra.mxu0 0.0
  %779 = vmatpush.msra.mxu0 0.0
  %780 = vmatpush.msra.mxu0 %v439
  %781 = vmatmul.f32.gmra.mxu0 %v463
  %v782 = vpop.f32.mrf.mxu0
  %v783 = vadd.f32 0.0, %v782
  %784 = vdwg.mxu0
  %785 = vmatpush.msra.mxu0 0.0
  %786 = vmatpush.msra.mxu0 0.0
  %787 = vmatpush.msra.mxu0 0.0
  %788 = vmatpush.msra.mxu0 0.0
  %789 = vmatpush.msra.mxu0 0.0
  %790 = vmatpush.msra.mxu0 0.0
  %791 = vmatpush.msra.mxu0 0.0
  %792 = vmatpush.msra.mxu0 0.0
  %793 = vmatpush.msra.mxu0 0.0
  %794 = vmatpush.msra.mxu0 0.0
  %795 = vmatpush.msra.mxu0 0.0
  %796 = vmatpush.msra.mxu0 0.0
  %797 = vmatpush.msra.mxu0 0.0
  %798 = vmatpush.msra.mxu0 0.0
  %799 = vmatpush.msra.mxu0 0.0
  %800 = vmatpush.msra.mxu0 %v440
  %801 = vmatmul.f32.gmra.mxu0 %v463
  %v802 = vpop.f32.mrf.mxu0
  %v803 = vadd.f32 0.0, %v802
  %804 = vdwg.mxu0
  %805 = vmatpush.msra.mxu0 0.0
  %806 = vmatpush.msra.mxu0 0.0
  %807 = vmatpush.msra.mxu0 0.0
  %808 = vmatpush.msra.mxu0 0.0
  %809 = vmatpush.msra.mxu0 0.0
  %810 = vmatpush.msra.mxu0 0.0
  %811 = vmatpush.msra.mxu0 0.0
  %812 = vmatpush.msra.mxu0 0.0
  %813 = vmatpush.msra.mxu0 0.0
  %814 = vmatpush.msra.mxu0 0.0
  %815 = vmatpush.msra.mxu0 0.0
  %816 = vmatpush.msra.mxu0 0.0
  %817 = vmatpush.msra.mxu0 0.0
  %818 = vmatpush.msra.mxu0 0.0
  %819 = vmatpush.msra.mxu0 0.0
  %820 = vmatpush.msra.mxu0 %v441
  %821 = vmatmul.f32.gmra.mxu0 %v463
  %v822 = vpop.f32.mrf.mxu0
  %v823 = vadd.f32 0.0, %v822
  %824 = vdwg.mxu0
  %825 = vmatpush.msra.mxu0 0.0
  %826 = vmatpush.msra.mxu0 0.0
  %827 = vmatpush.msra.mxu0 0.0
  %828 = vmatpush.msra.mxu0 0.0
  %829 = vmatpush.msra.mxu0 0.0
  %830 = vmatpush.msra.mxu0 0.0
  %831 = vmatpush.msra.mxu0 0.0
  %832 = vmatpush.msra.mxu0 0.0
  %833 = vmatpush.msra.mxu0 0.0
  %834 = vmatpush.msra.mxu0 0.0
  %835 = vmatpush.msra.mxu0 0.0
  %836 = vmatpush.msra.mxu0 0.0
  %837 = vmatpush.msra.mxu0 0.0
  %838 = vmatpush.msra.mxu0 0.0
  %839 = vmatpush.msra.mxu0 0.0
  %840 = vmatpush.msra.mxu0 %v422
  %841 = vmatmul.f32.gmra.mxu0 %v463
  %v842 = vpop.f32.mrf.mxu0
  %v843 = vadd.f32 0.0, %v842
  %844 = vdwg.mxu0
  %v846 = vsel %vm461, %v344, 0
  %848 = vmatpush.msra.mxu0 0.0
  %849 = vmatpush.msra.mxu0 0.0
  %850 = vmatpush.msra.mxu0 0.0
  %851 = vmatpush.msra.mxu0 0.0
  %852 = vmatpush.msra.mxu0 0.0
  %853 = vmatpush.msra.mxu0 0.0
  %854 = vmatpush.msra.mxu0 0.0
  %855 = vmatpush.msra.mxu0 0.0
  %856 = vmatpush.msra.mxu0 0.0
  %857 = vmatpush.msra.mxu0 0.0
  %858 = vmatpush.msra.mxu0 0.0
  %859 = vmatpush.msra.mxu0 0.0
  %860 = vmatpush.msra.mxu0 0.0
  %861 = vmatpush.msra.mxu0 0.0
  %862 = vmatpush.msra.mxu0 0.0
  %863 = vmatpush.msra.mxu0 %v345
  %864 = vmatmul.f32.gmra.mxu0 %v846
  %v865 = vpop.f32.mrf.mxu0
  %v866 = vadd.f32 %v483, %v865
  %867 = vdwg.mxu0
  %868 = vmatpush.msra.mxu0 0.0
  %869 = vmatpush.msra.mxu0 0.0
  %870 = vmatpush.msra.mxu0 0.0
  %871 = vmatpush.msra.mxu0 0.0
  %872 = vmatpush.msra.mxu0 0.0
  %873 = vmatpush.msra.mxu0 0.0
  %874 = vmatpush.msra.mxu0 0.0
  %875 = vmatpush.msra.mxu0 0.0
  %876 = vmatpush.msra.mxu0 0.0
  %877 = vmatpush.msra.mxu0 0.0
  %878 = vmatpush.msra.mxu0 0.0
  %879 = vmatpush.msra.mxu0 0.0
  %880 = vmatpush.msra.mxu0 0.0
  %881 = vmatpush.msra.mxu0 0.0
  %882 = vmatpush.msra.mxu0 0.0
  %883 = vmatpush.msra.mxu0 %v346
  %884 = vmatmul.f32.gmra.mxu0 %v846
  %v885 = vpop.f32.mrf.mxu0
  %v886 = vadd.f32 %v503, %v885
  %887 = vdwg.mxu0
  %888 = vmatpush.msra.mxu0 0.0
  %889 = vmatpush.msra.mxu0 0.0
  %890 = vmatpush.msra.mxu0 0.0
  %891 = vmatpush.msra.mxu0 0.0
  %892 = vmatpush.msra.mxu0 0.0
  %893 = vmatpush.msra.mxu0 0.0
  %894 = vmatpush.msra.mxu0 0.0
  %895 = vmatpush.msra.mxu0 0.0
  %896 = vmatpush.msra.mxu0 0.0
  %897 = vmatpush.msra.mxu0 0.0
  %898 = vmatpush.msra.mxu0 0.0
  %899 = vmatpush.msra.mxu0 0.0
  %900 = vmatpush.msra.mxu0 0.0
  %901 = vmatpush.msra.mxu0 0.0
  %902 = vmatpush.msra.mxu0 0.0
  %903 = vmatpush.msra.mxu0 %v347
  %904 = vmatmul.f32.gmra.mxu0 %v846
  %v905 = vpop.f32.mrf.mxu0
  %v906 = vadd.f32 %v523, %v905
  %907 = vdwg.mxu0
  %908 = vmatpush.msra.mxu0 0.0
  %909 = vmatpush.msra.mxu0 0.0
  %910 = vmatpush.msra.mxu0 0.0
  %911 = vmatpush.msra.mxu0 0.0
  %912 = vmatpush.msra.mxu0 0.0
  %913 = vmatpush.msra.mxu0 0.0
  %914 = vmatpush.msra.mxu0 0.0
  %915 = vmatpush.msra.mxu0 0.0
  %916 = vmatpush.msra.mxu0 0.0
  %917 = vmatpush.msra.mxu0 0.0
  %918 = vmatpush.msra.mxu0 0.0
  %919 = vmatpush.msra.mxu0 0.0
  %920 = vmatpush.msra.mxu0 0.0
  %921 = vmatpush.msra.mxu0 0.0
  %922 = vmatpush.msra.mxu0 0.0
  %923 = vmatpush.msra.mxu0 %v348
  %924 = vmatmul.f32.gmra.mxu0 %v846
  %v925 = vpop.f32.mrf.mxu0
  %v926 = vadd.f32 %v543, %v925
  %927 = vdwg.mxu0
  %928 = vmatpush.msra.mxu0 0.0
  %929 = vmatpush.msra.mxu0 0.0
  %930 = vmatpush.msra.mxu0 0.0
  %931 = vmatpush.msra.mxu0 0.0
  %932 = vmatpush.msra.mxu0 0.0
  %933 = vmatpush.msra.mxu0 0.0
  %934 = vmatpush.msra.mxu0 0.0
  %935 = vmatpush.msra.mxu0 0.0
  %936 = vmatpush.msra.mxu0 0.0
  %937 = vmatpush.msra.mxu0 0.0
  %938 = vmatpush.msra.mxu0 0.0
  %939 = vmatpush.msra.mxu0 0.0
  %940 = vmatpush.msra.mxu0 0.0
  %941 = vmatpush.msra.mxu0 0.0
  %942 = vmatpush.msra.mxu0 0.0
  %943 = vmatpush.msra.mxu0 %v349
  %944 = vmatmul.f32.gmra.mxu0 %v846
  %v945 = vpop.f32.mrf.mxu0
  %v946 = vadd.f32 %v563, %v945
  %947 = vdwg.mxu0
  %948 = vmatpush.msra.mxu0 0.0
  %949 = vmatpush.msra.mxu0 0.0
  %950 = vmatpush.msra.mxu0 0.0
  %951 = vmatpush.msra.mxu0 0.0
  %952 = vmatpush.msra.mxu0 0.0
  %953 = vmatpush.msra.mxu0 0.0
  %954 = vmatpush.msra.mxu0 0.0
  %955 = vmatpush.msra.mxu0 0.0
  %956 = vmatpush.msra.mxu0 0.0
  %957 = vmatpush.msra.mxu0 0.0
  %958 = vmatpush.msra.mxu0 0.0
  %959 = vmatpush.msra.mxu0 0.0
  %960 = vmatpush.msra.mxu0 0.0
  %961 = vmatpush.msra.mxu0 0.0
  %962 = vmatpush.msra.mxu0 0.0
  %963 = vmatpush.msra.mxu0 %v350
  %964 = vmatmul.f32.gmra.mxu0 %v846
  %v965 = vpop.f32.mrf.mxu0
  %v966 = vadd.f32 %v583, %v965
  %967 = vdwg.mxu0
  %968 = vmatpush.msra.mxu0 0.0
  %969 = vmatpush.msra.mxu0 0.0
  %970 = vmatpush.msra.mxu0 0.0
  %971 = vmatpush.msra.mxu0 0.0
  %972 = vmatpush.msra.mxu0 0.0
  %973 = vmatpush.msra.mxu0 0.0
  %974 = vmatpush.msra.mxu0 0.0
  %975 = vmatpush.msra.mxu0 0.0
  %976 = vmatpush.msra.mxu0 0.0
  %977 = vmatpush.msra.mxu0 0.0
  %978 = vmatpush.msra.mxu0 0.0
  %979 = vmatpush.msra.mxu0 0.0
  %980 = vmatpush.msra.mxu0 0.0
  %981 = vmatpush.msra.mxu0 0.0
  %982 = vmatpush.msra.mxu0 0.0
  %983 = vmatpush.msra.mxu0 %v351
  %984 = vmatmul.f32.gmra.mxu0 %v846
  %v985 = vpop.f32.mrf.mxu0
  %v986 = vadd.f32 %v603, %v985
  %987 = vdwg.mxu0
  %988 = vmatpush.msra.mxu0 0.0
  %989 = vmatpush.msra.mxu0 0.0
  %990 = vmatpush.msra.mxu0 0.0
  %991 = vmatpush.msra.mxu0 0.0
  %992 = vmatpush.msra.mxu0 0.0
  %993 = vmatpush.msra.mxu0 0.0
  %994 = vmatpush.msra.mxu0 0.0
  %995 = vmatpush.msra.mxu0 0.0
  %996 = vmatpush.msra.mxu0 0.0
  %997 = vmatpush.msra.mxu0 0.0
  %998 = vmatpush.msra.mxu0 0.0
  %999 = vmatpush.msra.mxu0 0.0
  %1000 = vmatpush.msra.mxu0 0.0
  %1001 = vmatpush.msra.mxu0 0.0
  %1002 = vmatpush.msra.mxu0 0.0
  %1003 = vmatpush.msra.mxu0 %v352
  %1004 = vmatmul.f32.gmra.mxu0 %v846
  %v1005 = vpop.f32.mrf.mxu0
  %v1006 = vadd.f32 %v623, %v1005
  %1007 = vdwg.mxu0
  %1008 = vmatpush.msra.mxu0 0.0
  %1009 = vmatpush.msra.mxu0 0.0
  %1010 = vmatpush.msra.mxu0 0.0
  %1011 = vmatpush.msra.mxu0 0.0
  %1012 = vmatpush.msra.mxu0 0.0
  %1013 = vmatpush.msra.mxu0 0.0
  %1014 = vmatpush.msra.mxu0 0.0
  %1015 = vmatpush.msra.mxu0 0.0
  %1016 = vmatpush.msra.mxu0 0.0
  %1017 = vmatpush.msra.mxu0 0.0
  %1018 = vmatpush.msra.mxu0 0.0
  %1019 = vmatpush.msra.mxu0 0.0
  %1020 = vmatpush.msra.mxu0 0.0
  %1021 = vmatpush.msra.mxu0 0.0
  %1022 = vmatpush.msra.mxu0 0.0
  %1023 = vmatpush.msra.mxu0 %v353
  %1024 = vmatmul.f32.gmra.mxu0 %v846
  %v1025 = vpop.f32.mrf.mxu0
  %v1026 = vadd.f32 %v643, %v1025
  %1027 = vdwg.mxu0
  %1028 = vmatpush.msra.mxu0 0.0
  %1029 = vmatpush.msra.mxu0 0.0
  %1030 = vmatpush.msra.mxu0 0.0
  %1031 = vmatpush.msra.mxu0 0.0
  %1032 = vmatpush.msra.mxu0 0.0
  %1033 = vmatpush.msra.mxu0 0.0
  %1034 = vmatpush.msra.mxu0 0.0
  %1035 = vmatpush.msra.mxu0 0.0
  %1036 = vmatpush.msra.mxu0 0.0
  %1037 = vmatpush.msra.mxu0 0.0
  %1038 = vmatpush.msra.mxu0 0.0
  %1039 = vmatpush.msra.mxu0 0.0
  %1040 = vmatpush.msra.mxu0 0.0
  %1041 = vmatpush.msra.mxu0 0.0
  %1042 = vmatpush.msra.mxu0 0.0
  %1043 = vmatpush.msra.mxu0 %v354
  %1044 = vmatmul.f32.gmra.mxu0 %v846
  %v1045 = vpop.f32.mrf.mxu0
  %v1046 = vadd.f32 %v663, %v1045
  %1047 = vdwg.mxu0
  %1048 = vmatpush.msra.mxu0 0.0
  %1049 = vmatpush.msra.mxu0 0.0
  %1050 = vmatpush.msra.mxu0 0.0
  %1051 = vmatpush.msra.mxu0 0.0
  %1052 = vmatpush.msra.mxu0 0.0
  %1053 = vmatpush.msra.mxu0 0.0
  %1054 = vmatpush.msra.mxu0 0.0
  %1055 = vmatpush.msra.mxu0 0.0
  %1056 = vmatpush.msra.mxu0 0.0
  %1057 = vmatpush.msra.mxu0 0.0
  %1058 = vmatpush.msra.mxu0 0.0
  %1059 = vmatpush.msra.mxu0 0.0
  %1060 = vmatpush.msra.mxu0 0.0
  %1061 = vmatpush.msra.mxu0 0.0
  %1062 = vmatpush.msra.mxu0 0.0
  %1063 = vmatpush.msra.mxu0 %v355
  %1064 = vmatmul.f32.gmra.mxu0 %v846
  %v1065 = vpop.f32.mrf.mxu0
  %v1066 = vadd.f32 %v683, %v1065
  %1067 = vdwg.mxu0
  %1068 = vmatpush.msra.mxu0 0.0
  %1069 = vmatpush.msra.mxu0 0.0
  %1070 = vmatpush.msra.mxu0 0.0
  %1071 = vmatpush.msra.mxu0 0.0
  %1072 = vmatpush.msra.mxu0 0.0
  %1073 = vmatpush.msra.mxu0 0.0
  %1074 = vmatpush.msra.mxu0 0.0
  %1075 = vmatpush.msra.mxu0 0.0
  %1076 = vmatpush.msra.mxu0 0.0
  %1077 = vmatpush.msra.mxu0 0.0
  %1078 = vmatpush.msra.mxu0 0.0
  %1079 = vmatpush.msra.mxu0 0.0
  %1080 = vmatpush.msra.mxu0 0.0
  %1081 = vmatpush.msra.mxu0 0.0
  %1082 = vmatpush.msra.mxu0 0.0
  %1083 = vmatpush.msra.mxu0 %v356
  %1084 = vmatmul.f32.gmra.mxu0 %v846
  %v1085 = vpop.f32.mrf.mxu0
  %v1086 = vadd.f32 %v703, %v1085
  %1087 = vdwg.mxu0
  %1088 = vmatpush.msra.mxu0 0.0
  %1089 = vmatpush.msra.mxu0 0.0
  %1090 = vmatpush.msra.mxu0 0.0
  %1091 = vmatpush.msra.mxu0 0.0
  %1092 = vmatpush.msra.mxu0 0.0
  %1093 = vmatpush.msra.mxu0 0.0
  %1094 = vmatpush.msra.mxu0 0.0
  %1095 = vmatpush.msra.mxu0 0.0
  %1096 = vmatpush.msra.mxu0 0.0
  %1097 = vmatpush.msra.mxu0 0.0
  %1098 = vmatpush.msra.mxu0 0.0
  %1099 = vmatpush.msra.mxu0 0.0
  %1100 = vmatpush.msra.mxu0 0.0
  %1101 = vmatpush.msra.mxu0 0.0
  %1102 = vmatpush.msra.mxu0 0.0
  %1103 = vmatpush.msra.mxu0 %v357
  %1104 = vmatmul.f32.gmra.mxu0 %v846
  %v1105 = vpop.f32.mrf.mxu0
  %v1106 = vadd.f32 %v723, %v1105
  %1107 = vdwg.mxu0
  %1108 = vmatpush.msra.mxu0 0.0
  %1109 = vmatpush.msra.mxu0 0.0
  %1110 = vmatpush.msra.mxu0 0.0
  %1111 = vmatpush.msra.mxu0 0.0
  %1112 = vmatpush.msra.mxu0 0.0
  %1113 = vmatpush.msra.mxu0 0.0
  %1114 = vmatpush.msra.mxu0 0.0
  %1115 = vmatpush.msra.mxu0 0.0
  %1116 = vmatpush.msra.mxu0 0.0
  %1117 = vmatpush.msra.mxu0 0.0
  %1118 = vmatpush.msra.mxu0 0.0
  %1119 = vmatpush.msra.mxu0 0.0
  %1120 = vmatpush.msra.mxu0 0.0
  %1121 = vmatpush.msra.mxu0 0.0
  %1122 = vmatpush.msra.mxu0 0.0
  %1123 = vmatpush.msra.mxu0 %v358
  %1124 = vmatmul.f32.gmra.mxu0 %v846
  %v1125 = vpop.f32.mrf.mxu0
  %v1126 = vadd.f32 %v743, %v1125
  %1127 = vdwg.mxu0
  %1128 = vmatpush.msra.mxu0 0.0
  %1129 = vmatpush.msra.mxu0 0.0
  %1130 = vmatpush.msra.mxu0 0.0
  %1131 = vmatpush.msra.mxu0 0.0
  %1132 = vmatpush.msra.mxu0 0.0
  %1133 = vmatpush.msra.mxu0 0.0
  %1134 = vmatpush.msra.mxu0 0.0
  %1135 = vmatpush.msra.mxu0 0.0
  %1136 = vmatpush.msra.mxu0 0.0
  %1137 = vmatpush.msra.mxu0 0.0
  %1138 = vmatpush.msra.mxu0 0.0
  %1139 = vmatpush.msra.mxu0 0.0
  %1140 = vmatpush.msra.mxu0 0.0
  %1141 = vmatpush.msra.mxu0 0.0
  %1142 = vmatpush.msra.mxu0 0.0
  %1143 = vmatpush.msra.mxu0 %v359
  %1144 = vmatmul.f32.gmra.mxu0 %v846
  %v1145 = vpop.f32.mrf.mxu0
  %v1146 = vadd.f32 %v763, %v1145
  %1147 = vdwg.mxu0
  %1148 = vmatpush.msra.mxu0 0.0
  %1149 = vmatpush.msra.mxu0 0.0
  %1150 = vmatpush.msra.mxu0 0.0
  %1151 = vmatpush.msra.mxu0 0.0
  %1152 = vmatpush.msra.mxu0 0.0
  %1153 = vmatpush.msra.mxu0 0.0
  %1154 = vmatpush.msra.mxu0 0.0
  %1155 = vmatpush.msra.mxu0 0.0
  %1156 = vmatpush.msra.mxu0 0.0
  %1157 = vmatpush.msra.mxu0 0.0
  %1158 = vmatpush.msra.mxu0 0.0
  %1159 = vmatpush.msra.mxu0 0.0
  %1160 = vmatpush.msra.mxu0 0.0
  %1161 = vmatpush.msra.mxu0 0.0
  %1162 = vmatpush.msra.mxu0 0.0
  %1163 = vmatpush.msra.mxu0 %v360
  %1164 = vmatmul.f32.gmra.mxu0 %v846
  %v1165 = vpop.f32.mrf.mxu0
  %v1166 = vadd.f32 %v783, %v1165
  %1167 = vdwg.mxu0
  %1168 = vmatpush.msra.mxu0 0.0
  %1169 = vmatpush.msra.mxu0 0.0
  %1170 = vmatpush.msra.mxu0 0.0
  %1171 = vmatpush.msra.mxu0 0.0
  %1172 = vmatpush.msra.mxu0 0.0
  %1173 = vmatpush.msra.mxu0 0.0
  %1174 = vmatpush.msra.mxu0 0.0
  %1175 = vmatpush.msra.mxu0 0.0
  %1176 = vmatpush.msra.mxu0 0.0
  %1177 = vmatpush.msra.mxu0 0.0
  %1178 = vmatpush.msra.mxu0 0.0
  %1179 = vmatpush.msra.mxu0 0.0
  %1180 = vmatpush.msra.mxu0 0.0
  %1181 = vmatpush.msra.mxu0 0.0
  %1182 = vmatpush.msra.mxu0 0.0
  %1183 = vmatpush.msra.mxu0 %v361
  %1184 = vmatmul.f32.gmra.mxu0 %v846
  %v1185 = vpop.f32.mrf.mxu0
  %v1186 = vadd.f32 %v803, %v1185
  %1187 = vdwg.mxu0
  %1188 = vmatpush.msra.mxu0 0.0
  %1189 = vmatpush.msra.mxu0 0.0
  %1190 = vmatpush.msra.mxu0 0.0
  %1191 = vmatpush.msra.mxu0 0.0
  %1192 = vmatpush.msra.mxu0 0.0
  %1193 = vmatpush.msra.mxu0 0.0
  %1194 = vmatpush.msra.mxu0 0.0
  %1195 = vmatpush.msra.mxu0 0.0
  %1196 = vmatpush.msra.mxu0 0.0
  %1197 = vmatpush.msra.mxu0 0.0
  %1198 = vmatpush.msra.mxu0 0.0
  %1199 = vmatpush.msra.mxu0 0.0
  %1200 = vmatpush.msra.mxu0 0.0
  %1201 = vmatpush.msra.mxu0 0.0
  %1202 = vmatpush.msra.mxu0 0.0
  %1203 = vmatpush.msra.mxu0 %v362
  %1204 = vmatmul.f32.gmra.mxu0 %v846
  %v1205 = vpop.f32.mrf.mxu0
  %v1206 = vadd.f32 %v823, %v1205
  %1207 = vdwg.mxu0
  %1208 = vmatpush.msra.mxu0 0.0
  %1209 = vmatpush.msra.mxu0 0.0
  %1210 = vmatpush.msra.mxu0 0.0
  %1211 = vmatpush.msra.mxu0 0.0
  %1212 = vmatpush.msra.mxu0 0.0
  %1213 = vmatpush.msra.mxu0 0.0
  %1214 = vmatpush.msra.mxu0 0.0
  %1215 = vmatpush.msra.mxu0 0.0
  %1216 = vmatpush.msra.mxu0 0.0
  %1217 = vmatpush.msra.mxu0 0.0
  %1218 = vmatpush.msra.mxu0 0.0
  %1219 = vmatpush.msra.mxu0 0.0
  %1220 = vmatpush.msra.mxu0 0.0
  %1221 = vmatpush.msra.mxu0 0.0
  %1222 = vmatpush.msra.mxu0 0.0
  %1223 = vmatpush.msra.mxu0 %v363
  %1224 = vmatmul.f32.gmra.mxu0 %v846
  %v1225 = vpop.f32.mrf.mxu0
  %v1226 = vadd.f32 %v843, %v1225
  %1227 = vdwg.mxu0
  %s1228 = scalar_lea.vmem %s1, 8
  %v1229 = vld [vmem:[%s1228] sm:$0x7]
  %1230 = vrot.lane.b32.xlu0 %v345, 126
  %v1231 = vpop.permute.xlu0 %1230
  %1232 = vrot.lane.b32.xlu0 %v346, 126
  %v1233 = vpop.permute.xlu0 %1232
  %1234 = vrot.lane.b32.xlu0 %v347, 126
  %v1235 = vpop.permute.xlu0 %1234
  %1236 = vrot.lane.b32.xlu0 %v348, 126
  %v1237 = vpop.permute.xlu0 %1236
  %1238 = vrot.lane.b32.xlu0 %v349, 126
  %v1239 = vpop.permute.xlu0 %1238
  %1240 = vrot.lane.b32.xlu0 %v350, 126
  %v1241 = vpop.permute.xlu0 %1240
  %1242 = vrot.lane.b32.xlu0 %v351, 126
  %v1243 = vpop.permute.xlu0 %1242
  %1244 = vrot.lane.b32.xlu0 %v352, 126
  %v1245 = vpop.permute.xlu0 %1244
  %1246 = vrot.lane.b32.xlu0 %v353, 126
  %v1247 = vpop.permute.xlu0 %1246
  %1248 = vrot.lane.b32.xlu0 %v354, 126
  %v1249 = vpop.permute.xlu0 %1248
  %1250 = vrot.lane.b32.xlu0 %v355, 126
  %v1251 = vpop.permute.xlu0 %1250
  %1252 = vrot.lane.b32.xlu0 %v356, 126
  %v1253 = vpop.permute.xlu0 %1252
  %1254 = vrot.lane.b32.xlu0 %v357, 126
  %v1255 = vpop.permute.xlu0 %1254
  %1256 = vrot.lane.b32.xlu0 %v358, 126
  %v1257 = vpop.permute.xlu0 %1256
  %1258 = vrot.lane.b32.xlu0 %v359, 126
  %v1259 = vpop.permute.xlu0 %1258
  %1260 = vrot.lane.b32.xlu0 %v360, 126
  %v1261 = vpop.permute.xlu0 %1260
  %1262 = vrot.lane.b32.xlu0 %v361, 126
  %v1263 = vpop.permute.xlu0 %1262
  %1264 = vrot.lane.b32.xlu0 %v362, 126
  %v1265 = vpop.permute.xlu0 %1264
  %1266 = vrot.lane.b32.xlu0 %v363, 126
  %v1267 = vpop.permute.xlu0 %1266
  %vm1268 = vcmask 1031168
  %v1269 = vsel %vm1268, %v1231, %v1233
  %v1270 = vsel %vm1268, %v1233, %v1235
  %v1271 = vsel %vm1268, %v1235, %v1237
  %v1272 = vsel %vm1268, %v1237, %v1239
  %v1273 = vsel %vm1268, %v1239, %v1241
  %v1274 = vsel %vm1268, %v1241, %v1243
  %v1275 = vsel %vm1268, %v1243, %v1245
  %v1276 = vsel %vm1268, %v1245, %v1247
  %v1277 = vsel %vm1268, %v1247, %v1249
  %v1278 = vsel %vm1268, %v1249, %v1251
  %v1279 = vsel %vm1268, %v1251, %v1253
  %v1280 = vsel %vm1268, %v1253, %v1255
  %v1281 = vsel %vm1268, %v1255, %v1257
  %v1282 = vsel %vm1268, %v1257, %v1259
  %v1283 = vsel %vm1268, %v1259, %v1261
  %v1284 = vsel %vm1268, %v1261, %v1263
  %v1285 = vsel %vm1268, %v1263, %v1265
  %v1286 = vsel %vm1268, %v1265, %v1267
  %v1307 = vsel %vm461, %v1229, 0
  %1309 = vmatpush.msra.mxu0 0.0
  %1310 = vmatpush.msra.mxu0 0.0
  %1311 = vmatpush.msra.mxu0 0.0
  %1312 = vmatpush.msra.mxu0 0.0
  %1313 = vmatpush.msra.mxu0 0.0
  %1314 = vmatpush.msra.mxu0 0.0
  %1315 = vmatpush.msra.mxu0 0.0
  %1316 = vmatpush.msra.mxu0 0.0
  %1317 = vmatpush.msra.mxu0 0.0
  %1318 = vmatpush.msra.mxu0 0.0
  %1319 = vmatpush.msra.mxu0 0.0
  %1320 = vmatpush.msra.mxu0 0.0
  %1321 = vmatpush.msra.mxu0 0.0
  %1322 = vmatpush.msra.mxu0 0.0
  %1323 = vmatpush.msra.mxu0 0.0
  %1324 = vmatpush.msra.mxu0 %v1269
  %1325 = vmatmul.f32.gmra.mxu0 %v1307
  %v1326 = vpop.f32.mrf.mxu0
  %v1327 = vadd.f32 0.0, %v1326
  %1328 = vdwg.mxu0
  %1329 = vmatpush.msra.mxu0 0.0
  %1330 = vmatpush.msra.mxu0 0.0
  %1331 = vmatpush.msra.mxu0 0.0
  %1332 = vmatpush.msra.mxu0 0.0
  %1333 = vmatpush.msra.mxu0 0.0
  %1334 = vmatpush.msra.mxu0 0.0
  %1335 = vmatpush.msra.mxu0 0.0
  %1336 = vmatpush.msra.mxu0 0.0
  %1337 = vmatpush.msra.mxu0 0.0
  %1338 = vmatpush.msra.mxu0 0.0
  %1339 = vmatpush.msra.mxu0 0.0
  %1340 = vmatpush.msra.mxu0 0.0
  %1341 = vmatpush.msra.mxu0 0.0
  %1342 = vmatpush.msra.mxu0 0.0
  %1343 = vmatpush.msra.mxu0 0.0
  %1344 = vmatpush.msra.mxu0 %v1270
  %1345 = vmatmul.f32.gmra.mxu0 %v1307
  %v1346 = vpop.f32.mrf.mxu0
  %v1347 = vadd.f32 0.0, %v1346
  %1348 = vdwg.mxu0
  %1349 = vmatpush.msra.mxu0 0.0
  %1350 = vmatpush.msra.mxu0 0.0
  %1351 = vmatpush.msra.mxu0 0.0
  %1352 = vmatpush.msra.mxu0 0.0
  %1353 = vmatpush.msra.mxu0 0.0
  %1354 = vmatpush.msra.mxu0 0.0
  %1355 = vmatpush.msra.mxu0 0.0
  %1356 = vmatpush.msra.mxu0 0.0
  %1357 = vmatpush.msra.mxu0 0.0
  %1358 = vmatpush.msra.mxu0 0.0
  %1359 = vmatpush.msra.mxu0 0.0
  %1360 = vmatpush.msra.mxu0 0.0
  %1361 = vmatpush.msra.mxu0 0.0
  %1362 = vmatpush.msra.mxu0 0.0
  %1363 = vmatpush.msra.mxu0 0.0
  %1364 = vmatpush.msra.mxu0 %v1271
  %1365 = vmatmul.f32.gmra.mxu0 %v1307
  %v1366 = vpop.f32.mrf.mxu0
  %v1367 = vadd.f32 0.0, %v1366
  %1368 = vdwg.mxu0
  %1369 = vmatpush.msra.mxu0 0.0
  %1370 = vmatpush.msra.mxu0 0.0
  %1371 = vmatpush.msra.mxu0 0.0
  %1372 = vmatpush.msra.mxu0 0.0
  %1373 = vmatpush.msra.mxu0 0.0
  %1374 = vmatpush.msra.mxu0 0.0
  %1375 = vmatpush.msra.mxu0 0.0
  %1376 = vmatpush.msra.mxu0 0.0
  %1377 = vmatpush.msra.mxu0 0.0
  %1378 = vmatpush.msra.mxu0 0.0
  %1379 = vmatpush.msra.mxu0 0.0
  %1380 = vmatpush.msra.mxu0 0.0
  %1381 = vmatpush.msra.mxu0 0.0
  %1382 = vmatpush.msra.mxu0 0.0
  %1383 = vmatpush.msra.mxu0 0.0
  %1384 = vmatpush.msra.mxu0 %v1272
  %1385 = vmatmul.f32.gmra.mxu0 %v1307
  %v1386 = vpop.f32.mrf.mxu0
  %v1387 = vadd.f32 0.0, %v1386
  %1388 = vdwg.mxu0
  %1389 = vmatpush.msra.mxu0 0.0
  %1390 = vmatpush.msra.mxu0 0.0
  %1391 = vmatpush.msra.mxu0 0.0
  %1392 = vmatpush.msra.mxu0 0.0
  %1393 = vmatpush.msra.mxu0 0.0
  %1394 = vmatpush.msra.mxu0 0.0
  %1395 = vmatpush.msra.mxu0 0.0
  %1396 = vmatpush.msra.mxu0 0.0
  %1397 = vmatpush.msra.mxu0 0.0
  %1398 = vmatpush.msra.mxu0 0.0
  %1399 = vmatpush.msra.mxu0 0.0
  %1400 = vmatpush.msra.mxu0 0.0
  %1401 = vmatpush.msra.mxu0 0.0
  %1402 = vmatpush.msra.mxu0 0.0
  %1403 = vmatpush.msra.mxu0 0.0
  %1404 = vmatpush.msra.mxu0 %v1273
  %1405 = vmatmul.f32.gmra.mxu0 %v1307
  %v1406 = vpop.f32.mrf.mxu0
  %v1407 = vadd.f32 0.0, %v1406
  %1408 = vdwg.mxu0
  %1409 = vmatpush.msra.mxu0 0.0
  %1410 = vmatpush.msra.mxu0 0.0
  %1411 = vmatpush.msra.mxu0 0.0
  %1412 = vmatpush.msra.mxu0 0.0
  %1413 = vmatpush.msra.mxu0 0.0
  %1414 = vmatpush.msra.mxu0 0.0
  %1415 = vmatpush.msra.mxu0 0.0
  %1416 = vmatpush.msra.mxu0 0.0
  %1417 = vmatpush.msra.mxu0 0.0
  %1418 = vmatpush.msra.mxu0 0.0
  %1419 = vmatpush.msra.mxu0 0.0
  %1420 = vmatpush.msra.mxu0 0.0
  %1421 = vmatpush.msra.mxu0 0.0
  %1422 = vmatpush.msra.mxu0 0.0
  %1423 = vmatpush.msra.mxu0 0.0
  %1424 = vmatpush.msra.mxu0 %v1274
  %1425 = vmatmul.f32.gmra.mxu0 %v1307
  %v1426 = vpop.f32.mrf.mxu0
  %v1427 = vadd.f32 0.0, %v1426
  %1428 = vdwg.mxu0
  %1429 = vmatpush.msra.mxu0 0.0
  %1430 = vmatpush.msra.mxu0 0.0
  %1431 = vmatpush.msra.mxu0 0.0
  %1432 = vmatpush.msra.mxu0 0.0
  %1433 = vmatpush.msra.mxu0 0.0
  %1434 = vmatpush.msra.mxu0 0.0
  %1435 = vmatpush.msra.mxu0 0.0
  %1436 = vmatpush.msra.mxu0 0.0
  %1437 = vmatpush.msra.mxu0 0.0
  %1438 = vmatpush.msra.mxu0 0.0
  %1439 = vmatpush.msra.mxu0 0.0
  %1440 = vmatpush.msra.mxu0 0.0
  %1441 = vmatpush.msra.mxu0 0.0
  %1442 = vmatpush.msra.mxu0 0.0
  %1443 = vmatpush.msra.mxu0 0.0
  %1444 = vmatpush.msra.mxu0 %v1275
  %1445 = vmatmul.f32.gmra.mxu0 %v1307
  %v1446 = vpop.f32.mrf.mxu0
  %v1447 = vadd.f32 0.0, %v1446
  %1448 = vdwg.mxu0
  %1449 = vmatpush.msra.mxu0 0.0
  %1450 = vmatpush.msra.mxu0 0.0
  %1451 = vmatpush.msra.mxu0 0.0
  %1452 = vmatpush.msra.mxu0 0.0
  %1453 = vmatpush.msra.mxu0 0.0
  %1454 = vmatpush.msra.mxu0 0.0
  %1455 = vmatpush.msra.mxu0 0.0
  %1456 = vmatpush.msra.mxu0 0.0
  %1457 = vmatpush.msra.mxu0 0.0
  %1458 = vmatpush.msra.mxu0 0.0
  %1459 = vmatpush.msra.mxu0 0.0
  %1460 = vmatpush.msra.mxu0 0.0
  %1461 = vmatpush.msra.mxu0 0.0
  %1462 = vmatpush.msra.mxu0 0.0
  %1463 = vmatpush.msra.mxu0 0.0
  %1464 = vmatpush.msra.mxu0 %v1276
  %1465 = vmatmul.f32.gmra.mxu0 %v1307
  %v1466 = vpop.f32.mrf.mxu0
  %v1467 = vadd.f32 0.0, %v1466
  %1468 = vdwg.mxu0
  %1469 = vmatpush.msra.mxu0 0.0
  %1470 = vmatpush.msra.mxu0 0.0
  %1471 = vmatpush.msra.mxu0 0.0
  %1472 = vmatpush.msra.mxu0 0.0
  %1473 = vmatpush.msra.mxu0 0.0
  %1474 = vmatpush.msra.mxu0 0.0
  %1475 = vmatpush.msra.mxu0 0.0
  %1476 = vmatpush.msra.mxu0 0.0
  %1477 = vmatpush.msra.mxu0 0.0
  %1478 = vmatpush.msra.mxu0 0.0
  %1479 = vmatpush.msra.mxu0 0.0
  %1480 = vmatpush.msra.mxu0 0.0
  %1481 = vmatpush.msra.mxu0 0.0
  %1482 = vmatpush.msra.mxu0 0.0
  %1483 = vmatpush.msra.mxu0 0.0
  %1484 = vmatpush.msra.mxu0 %v1277
  %1485 = vmatmul.f32.gmra.mxu0 %v1307
  %v1486 = vpop.f32.mrf.mxu0
  %v1487 = vadd.f32 0.0, %v1486
  %1488 = vdwg.mxu0
  %1489 = vmatpush.msra.mxu0 0.0
  %1490 = vmatpush.msra.mxu0 0.0
  %1491 = vmatpush.msra.mxu0 0.0
  %1492 = vmatpush.msra.mxu0 0.0
  %1493 = vmatpush.msra.mxu0 0.0
  %1494 = vmatpush.msra.mxu0 0.0
  %1495 = vmatpush.msra.mxu0 0.0
  %1496 = vmatpush.msra.mxu0 0.0
  %1497 = vmatpush.msra.mxu0 0.0
  %1498 = vmatpush.msra.mxu0 0.0
  %1499 = vmatpush.msra.mxu0 0.0
  %1500 = vmatpush.msra.mxu0 0.0
  %1501 = vmatpush.msra.mxu0 0.0
  %1502 = vmatpush.msra.mxu0 0.0
  %1503 = vmatpush.msra.mxu0 0.0
  %1504 = vmatpush.msra.mxu0 %v1278
  %1505 = vmatmul.f32.gmra.mxu0 %v1307
  %v1506 = vpop.f32.mrf.mxu0
  %v1507 = vadd.f32 0.0, %v1506
  %1508 = vdwg.mxu0
  %1509 = vmatpush.msra.mxu0 0.0
  %1510 = vmatpush.msra.mxu0 0.0
  %1511 = vmatpush.msra.mxu0 0.0
  %1512 = vmatpush.msra.mxu0 0.0
  %1513 = vmatpush.msra.mxu0 0.0
  %1514 = vmatpush.msra.mxu0 0.0
  %1515 = vmatpush.msra.mxu0 0.0
  %1516 = vmatpush.msra.mxu0 0.0
  %1517 = vmatpush.msra.mxu0 0.0
  %1518 = vmatpush.msra.mxu0 0.0
  %1519 = vmatpush.msra.mxu0 0.0
  %1520 = vmatpush.msra.mxu0 0.0
  %1521 = vmatpush.msra.mxu0 0.0
  %1522 = vmatpush.msra.mxu0 0.0
  %1523 = vmatpush.msra.mxu0 0.0
  %1524 = vmatpush.msra.mxu0 %v1279
  %1525 = vmatmul.f32.gmra.mxu0 %v1307
  %v1526 = vpop.f32.mrf.mxu0
  %v1527 = vadd.f32 0.0, %v1526
  %1528 = vdwg.mxu0
  %1529 = vmatpush.msra.mxu0 0.0
  %1530 = vmatpush.msra.mxu0 0.0
  %1531 = vmatpush.msra.mxu0 0.0
  %1532 = vmatpush.msra.mxu0 0.0
  %1533 = vmatpush.msra.mxu0 0.0
  %1534 = vmatpush.msra.mxu0 0.0
  %1535 = vmatpush.msra.mxu0 0.0
  %1536 = vmatpush.msra.mxu0 0.0
  %1537 = vmatpush.msra.mxu0 0.0
  %1538 = vmatpush.msra.mxu0 0.0
  %1539 = vmatpush.msra.mxu0 0.0
  %1540 = vmatpush.msra.mxu0 0.0
  %1541 = vmatpush.msra.mxu0 0.0
  %1542 = vmatpush.msra.mxu0 0.0
  %1543 = vmatpush.msra.mxu0 0.0
  %1544 = vmatpush.msra.mxu0 %v1280
  %1545 = vmatmul.f32.gmra.mxu0 %v1307
  %v1546 = vpop.f32.mrf.mxu0
  %v1547 = vadd.f32 0.0, %v1546
  %1548 = vdwg.mxu0
  %1549 = vmatpush.msra.mxu0 0.0
  %1550 = vmatpush.msra.mxu0 0.0
  %1551 = vmatpush.msra.mxu0 0.0
  %1552 = vmatpush.msra.mxu0 0.0
  %1553 = vmatpush.msra.mxu0 0.0
  %1554 = vmatpush.msra.mxu0 0.0
  %1555 = vmatpush.msra.mxu0 0.0
  %1556 = vmatpush.msra.mxu0 0.0
  %1557 = vmatpush.msra.mxu0 0.0
  %1558 = vmatpush.msra.mxu0 0.0
  %1559 = vmatpush.msra.mxu0 0.0
  %1560 = vmatpush.msra.mxu0 0.0
  %1561 = vmatpush.msra.mxu0 0.0
  %1562 = vmatpush.msra.mxu0 0.0
  %1563 = vmatpush.msra.mxu0 0.0
  %1564 = vmatpush.msra.mxu0 %v1281
  %1565 = vmatmul.f32.gmra.mxu0 %v1307
  %v1566 = vpop.f32.mrf.mxu0
  %v1567 = vadd.f32 0.0, %v1566
  %1568 = vdwg.mxu0
  %1569 = vmatpush.msra.mxu0 0.0
  %1570 = vmatpush.msra.mxu0 0.0
  %1571 = vmatpush.msra.mxu0 0.0
  %1572 = vmatpush.msra.mxu0 0.0
  %1573 = vmatpush.msra.mxu0 0.0
  %1574 = vmatpush.msra.mxu0 0.0
  %1575 = vmatpush.msra.mxu0 0.0
  %1576 = vmatpush.msra.mxu0 0.0
  %1577 = vmatpush.msra.mxu0 0.0
  %1578 = vmatpush.msra.mxu0 0.0
  %1579 = vmatpush.msra.mxu0 0.0
  %1580 = vmatpush.msra.mxu0 0.0
  %1581 = vmatpush.msra.mxu0 0.0
  %1582 = vmatpush.msra.mxu0 0.0
  %1583 = vmatpush.msra.mxu0 0.0
  %1584 = vmatpush.msra.mxu0 %v1282
  %1585 = vmatmul.f32.gmra.mxu0 %v1307
  %v1586 = vpop.f32.mrf.mxu0
  %v1587 = vadd.f32 0.0, %v1586
  %1588 = vdwg.mxu0
  %1589 = vmatpush.msra.mxu0 0.0
  %1590 = vmatpush.msra.mxu0 0.0
  %1591 = vmatpush.msra.mxu0 0.0
  %1592 = vmatpush.msra.mxu0 0.0
  %1593 = vmatpush.msra.mxu0 0.0
  %1594 = vmatpush.msra.mxu0 0.0
  %1595 = vmatpush.msra.mxu0 0.0
  %1596 = vmatpush.msra.mxu0 0.0
  %1597 = vmatpush.msra.mxu0 0.0
  %1598 = vmatpush.msra.mxu0 0.0
  %1599 = vmatpush.msra.mxu0 0.0
  %1600 = vmatpush.msra.mxu0 0.0
  %1601 = vmatpush.msra.mxu0 0.0
  %1602 = vmatpush.msra.mxu0 0.0
  %1603 = vmatpush.msra.mxu0 0.0
  %1604 = vmatpush.msra.mxu0 %v1283
  %1605 = vmatmul.f32.gmra.mxu0 %v1307
  %v1606 = vpop.f32.mrf.mxu0
  %v1607 = vadd.f32 0.0, %v1606
  %1608 = vdwg.mxu0
  %1609 = vmatpush.msra.mxu0 0.0
  %1610 = vmatpush.msra.mxu0 0.0
  %1611 = vmatpush.msra.mxu0 0.0
  %1612 = vmatpush.msra.mxu0 0.0
  %1613 = vmatpush.msra.mxu0 0.0
  %1614 = vmatpush.msra.mxu0 0.0
  %1615 = vmatpush.msra.mxu0 0.0
  %1616 = vmatpush.msra.mxu0 0.0
  %1617 = vmatpush.msra.mxu0 0.0
  %1618 = vmatpush.msra.mxu0 0.0
  %1619 = vmatpush.msra.mxu0 0.0
  %1620 = vmatpush.msra.mxu0 0.0
  %1621 = vmatpush.msra.mxu0 0.0
  %1622 = vmatpush.msra.mxu0 0.0
  %1623 = vmatpush.msra.mxu0 0.0
  %1624 = vmatpush.msra.mxu0 %v1284
  %1625 = vmatmul.f32.gmra.mxu0 %v1307
  %v1626 = vpop.f32.mrf.mxu0
  %v1627 = vadd.f32 0.0, %v1626
  %1628 = vdwg.mxu0
  %1629 = vmatpush.msra.mxu0 0.0
  %1630 = vmatpush.msra.mxu0 0.0
  %1631 = vmatpush.msra.mxu0 0.0
  %1632 = vmatpush.msra.mxu0 0.0
  %1633 = vmatpush.msra.mxu0 0.0
  %1634 = vmatpush.msra.mxu0 0.0
  %1635 = vmatpush.msra.mxu0 0.0
  %1636 = vmatpush.msra.mxu0 0.0
  %1637 = vmatpush.msra.mxu0 0.0
  %1638 = vmatpush.msra.mxu0 0.0
  %1639 = vmatpush.msra.mxu0 0.0
  %1640 = vmatpush.msra.mxu0 0.0
  %1641 = vmatpush.msra.mxu0 0.0
  %1642 = vmatpush.msra.mxu0 0.0
  %1643 = vmatpush.msra.mxu0 0.0
  %1644 = vmatpush.msra.mxu0 %v1285
  %1645 = vmatmul.f32.gmra.mxu0 %v1307
  %v1646 = vpop.f32.mrf.mxu0
  %v1647 = vadd.f32 0.0, %v1646
  %1648 = vdwg.mxu0
  %1649 = vmatpush.msra.mxu0 0.0
  %1650 = vmatpush.msra.mxu0 0.0
  %1651 = vmatpush.msra.mxu0 0.0
  %1652 = vmatpush.msra.mxu0 0.0
  %1653 = vmatpush.msra.mxu0 0.0
  %1654 = vmatpush.msra.mxu0 0.0
  %1655 = vmatpush.msra.mxu0 0.0
  %1656 = vmatpush.msra.mxu0 0.0
  %1657 = vmatpush.msra.mxu0 0.0
  %1658 = vmatpush.msra.mxu0 0.0
  %1659 = vmatpush.msra.mxu0 0.0
  %1660 = vmatpush.msra.mxu0 0.0
  %1661 = vmatpush.msra.mxu0 0.0
  %1662 = vmatpush.msra.mxu0 0.0
  %1663 = vmatpush.msra.mxu0 0.0
  %1664 = vmatpush.msra.mxu0 %v1286
  %1665 = vmatmul.f32.gmra.mxu0 %v1307
  %v1666 = vpop.f32.mrf.mxu0
  %v1667 = vadd.f32 0.0, %v1666
  %1668 = vdwg.mxu0
  %1669 = vmatpush.msra.mxu0 0.0
  %1670 = vmatpush.msra.mxu0 0.0
  %1671 = vmatpush.msra.mxu0 0.0
  %1672 = vmatpush.msra.mxu0 0.0
  %1673 = vmatpush.msra.mxu0 0.0
  %1674 = vmatpush.msra.mxu0 0.0
  %1675 = vmatpush.msra.mxu0 0.0
  %1676 = vmatpush.msra.mxu0 0.0
  %1677 = vmatpush.msra.mxu0 0.0
  %1678 = vmatpush.msra.mxu0 0.0
  %1679 = vmatpush.msra.mxu0 0.0
  %1680 = vmatpush.msra.mxu0 0.0
  %1681 = vmatpush.msra.mxu0 0.0
  %1682 = vmatpush.msra.mxu0 0.0
  %1683 = vmatpush.msra.mxu0 0.0
  %1684 = vmatpush.msra.mxu0 %v1267
  %1685 = vmatmul.f32.gmra.mxu0 %v1307
  %v1686 = vpop.f32.mrf.mxu0
  %v1687 = vadd.f32 0.0, %v1686
  %1688 = vdwg.mxu0
  %v1689 = vadd.f32 %v866, %v1327
  %v1690 = vadd.f32 %v886, %v1347
  %v1691 = vadd.f32 %v906, %v1367
  %v1692 = vadd.f32 %v926, %v1387
  %v1693 = vadd.f32 %v946, %v1407
  %v1694 = vadd.f32 %v966, %v1427
  %v1695 = vadd.f32 %v986, %v1447
  %v1696 = vadd.f32 %v1006, %v1467
  %v1697 = vadd.f32 %v1026, %v1487
  %v1698 = vadd.f32 %v1046, %v1507
  %v1699 = vadd.f32 %v1066, %v1527
  %v1700 = vadd.f32 %v1086, %v1547
  %v1701 = vadd.f32 %v1106, %v1567
  %v1702 = vadd.f32 %v1126, %v1587
  %v1703 = vadd.f32 %v1146, %v1607
  %v1704 = vadd.f32 %v1166, %v1627
  %v1705 = vadd.f32 %v1186, %v1647
  %v1706 = vadd.f32 %v1206, %v1667
  %v1707 = vadd.f32 %v1226, %v1687
  %s1708 = scalar_lea.vmem %s1, 12
  %v1709 = vld [vmem:[%s1708] sm:$0x7]
  %1710 = vrot.lane.b32.xlu0 %v345, 94
  %v1711 = vpop.permute.xlu0 %1710
  %1712 = vrot.lane.b32.xlu0 %v346, 94
  %v1713 = vpop.permute.xlu0 %1712
  %1714 = vrot.lane.b32.xlu0 %v347, 94
  %v1715 = vpop.permute.xlu0 %1714
  %1716 = vrot.lane.b32.xlu0 %v348, 94
  %v1717 = vpop.permute.xlu0 %1716
  %1718 = vrot.lane.b32.xlu0 %v349, 94
  %v1719 = vpop.permute.xlu0 %1718
  %1720 = vrot.lane.b32.xlu0 %v350, 94
  %v1721 = vpop.permute.xlu0 %1720
  %1722 = vrot.lane.b32.xlu0 %v351, 94
  %v1723 = vpop.permute.xlu0 %1722
  %1724 = vrot.lane.b32.xlu0 %v352, 94
  %v1725 = vpop.permute.xlu0 %1724
  %1726 = vrot.lane.b32.xlu0 %v353, 94
  %v1727 = vpop.permute.xlu0 %1726
  %1728 = vrot.lane.b32.xlu0 %v354, 94
  %v1729 = vpop.permute.xlu0 %1728
  %1730 = vrot.lane.b32.xlu0 %v355, 94
  %v1731 = vpop.permute.xlu0 %1730
  %1732 = vrot.lane.b32.xlu0 %v356, 94
  %v1733 = vpop.permute.xlu0 %1732
  %1734 = vrot.lane.b32.xlu0 %v357, 94
  %v1735 = vpop.permute.xlu0 %1734
  %1736 = vrot.lane.b32.xlu0 %v358, 94
  %v1737 = vpop.permute.xlu0 %1736
  %1738 = vrot.lane.b32.xlu0 %v359, 94
  %v1739 = vpop.permute.xlu0 %1738
  %1740 = vrot.lane.b32.xlu0 %v360, 94
  %v1741 = vpop.permute.xlu0 %1740
  %1742 = vrot.lane.b32.xlu0 %v361, 94
  %v1743 = vpop.permute.xlu0 %1742
  %1744 = vrot.lane.b32.xlu0 %v362, 94
  %v1745 = vpop.permute.xlu0 %1744
  %1746 = vrot.lane.b32.xlu0 %v363, 94
  %v1747 = vpop.permute.xlu0 %1746
  %vm1748 = vcmask 769024
  %v1749 = vsel %vm1748, %v1711, %v1713
  %v1750 = vsel %vm1748, %v1713, %v1715
  %v1751 = vsel %vm1748, %v1715, %v1717
  %v1752 = vsel %vm1748, %v1717, %v1719
  %v1753 = vsel %vm1748, %v1719, %v1721
  %v1754 = vsel %vm1748, %v1721, %v1723
  %v1755 = vsel %vm1748, %v1723, %v1725
  %v1756 = vsel %vm1748, %v1725, %v1727
  %v1757 = vsel %vm1748, %v1727, %v1729
  %v1758 = vsel %vm1748, %v1729, %v1731
  %v1759 = vsel %vm1748, %v1731, %v1733
  %v1760 = vsel %vm1748, %v1733, %v1735
  %v1761 = vsel %vm1748, %v1735, %v1737
  %v1762 = vsel %vm1748, %v1737, %v1739
  %v1763 = vsel %vm1748, %v1739, %v1741
  %v1764 = vsel %vm1748, %v1741, %v1743
  %v1765 = vsel %vm1748, %v1743, %v1745
  %v1766 = vsel %vm1748, %v1745, %v1747
  %v1787 = vsel %vm461, %v1709, 0
  %1789 = vmatpush.msra.mxu0 0.0
  %1790 = vmatpush.msra.mxu0 0.0
  %1791 = vmatpush.msra.mxu0 0.0
  %1792 = vmatpush.msra.mxu0 0.0
  %1793 = vmatpush.msra.mxu0 0.0
  %1794 = vmatpush.msra.mxu0 0.0
  %1795 = vmatpush.msra.mxu0 0.0
  %1796 = vmatpush.msra.mxu0 0.0
  %1797 = vmatpush.msra.mxu0 0.0
  %1798 = vmatpush.msra.mxu0 0.0
  %1799 = vmatpush.msra.mxu0 0.0
  %1800 = vmatpush.msra.mxu0 0.0
  %1801 = vmatpush.msra.mxu0 0.0
  %1802 = vmatpush.msra.mxu0 0.0
  %1803 = vmatpush.msra.mxu0 0.0
  %1804 = vmatpush.msra.mxu0 %v1749
  %1805 = vmatmul.f32.gmra.mxu0 %v1787
  %v1806 = vpop.f32.mrf.mxu0
  %v1807 = vadd.f32 0.0, %v1806
  %1808 = vdwg.mxu0
  %1809 = vmatpush.msra.mxu0 0.0
  %1810 = vmatpush.msra.mxu0 0.0
  %1811 = vmatpush.msra.mxu0 0.0
  %1812 = vmatpush.msra.mxu0 0.0
  %1813 = vmatpush.msra.mxu0 0.0
  %1814 = vmatpush.msra.mxu0 0.0
  %1815 = vmatpush.msra.mxu0 0.0
  %1816 = vmatpush.msra.mxu0 0.0
  %1817 = vmatpush.msra.mxu0 0.0
  %1818 = vmatpush.msra.mxu0 0.0
  %1819 = vmatpush.msra.mxu0 0.0
  %1820 = vmatpush.msra.mxu0 0.0
  %1821 = vmatpush.msra.mxu0 0.0
  %1822 = vmatpush.msra.mxu0 0.0
  %1823 = vmatpush.msra.mxu0 0.0
  %1824 = vmatpush.msra.mxu0 %v1750
  %1825 = vmatmul.f32.gmra.mxu0 %v1787
  %v1826 = vpop.f32.mrf.mxu0
  %v1827 = vadd.f32 0.0, %v1826
  %1828 = vdwg.mxu0
  %1829 = vmatpush.msra.mxu0 0.0
  %1830 = vmatpush.msra.mxu0 0.0
  %1831 = vmatpush.msra.mxu0 0.0
  %1832 = vmatpush.msra.mxu0 0.0
  %1833 = vmatpush.msra.mxu0 0.0
  %1834 = vmatpush.msra.mxu0 0.0
  %1835 = vmatpush.msra.mxu0 0.0
  %1836 = vmatpush.msra.mxu0 0.0
  %1837 = vmatpush.msra.mxu0 0.0
  %1838 = vmatpush.msra.mxu0 0.0
  %1839 = vmatpush.msra.mxu0 0.0
  %1840 = vmatpush.msra.mxu0 0.0
  %1841 = vmatpush.msra.mxu0 0.0
  %1842 = vmatpush.msra.mxu0 0.0
  %1843 = vmatpush.msra.mxu0 0.0
  %1844 = vmatpush.msra.mxu0 %v1751
  %1845 = vmatmul.f32.gmra.mxu0 %v1787
  %v1846 = vpop.f32.mrf.mxu0
  %v1847 = vadd.f32 0.0, %v1846
  %1848 = vdwg.mxu0
  %1849 = vmatpush.msra.mxu0 0.0
  %1850 = vmatpush.msra.mxu0 0.0
  %1851 = vmatpush.msra.mxu0 0.0
  %1852 = vmatpush.msra.mxu0 0.0
  %1853 = vmatpush.msra.mxu0 0.0
  %1854 = vmatpush.msra.mxu0 0.0
  %1855 = vmatpush.msra.mxu0 0.0
  %1856 = vmatpush.msra.mxu0 0.0
  %1857 = vmatpush.msra.mxu0 0.0
  %1858 = vmatpush.msra.mxu0 0.0
  %1859 = vmatpush.msra.mxu0 0.0
  %1860 = vmatpush.msra.mxu0 0.0
  %1861 = vmatpush.msra.mxu0 0.0
  %1862 = vmatpush.msra.mxu0 0.0
  %1863 = vmatpush.msra.mxu0 0.0
  %1864 = vmatpush.msra.mxu0 %v1752
  %1865 = vmatmul.f32.gmra.mxu0 %v1787
  %v1866 = vpop.f32.mrf.mxu0
  %v1867 = vadd.f32 0.0, %v1866
  %1868 = vdwg.mxu0
  %1869 = vmatpush.msra.mxu0 0.0
  %1870 = vmatpush.msra.mxu0 0.0
  %1871 = vmatpush.msra.mxu0 0.0
  %1872 = vmatpush.msra.mxu0 0.0
  %1873 = vmatpush.msra.mxu0 0.0
  %1874 = vmatpush.msra.mxu0 0.0
  %1875 = vmatpush.msra.mxu0 0.0
  %1876 = vmatpush.msra.mxu0 0.0
  %1877 = vmatpush.msra.mxu0 0.0
  %1878 = vmatpush.msra.mxu0 0.0
  %1879 = vmatpush.msra.mxu0 0.0
  %1880 = vmatpush.msra.mxu0 0.0
  %1881 = vmatpush.msra.mxu0 0.0
  %1882 = vmatpush.msra.mxu0 0.0
  %1883 = vmatpush.msra.mxu0 0.0
  %1884 = vmatpush.msra.mxu0 %v1753
  %1885 = vmatmul.f32.gmra.mxu0 %v1787
  %v1886 = vpop.f32.mrf.mxu0
  %v1887 = vadd.f32 0.0, %v1886
  %1888 = vdwg.mxu0
  %1889 = vmatpush.msra.mxu0 0.0
  %1890 = vmatpush.msra.mxu0 0.0
  %1891 = vmatpush.msra.mxu0 0.0
  %1892 = vmatpush.msra.mxu0 0.0
  %1893 = vmatpush.msra.mxu0 0.0
  %1894 = vmatpush.msra.mxu0 0.0
  %1895 = vmatpush.msra.mxu0 0.0
  %1896 = vmatpush.msra.mxu0 0.0
  %1897 = vmatpush.msra.mxu0 0.0
  %1898 = vmatpush.msra.mxu0 0.0
  %1899 = vmatpush.msra.mxu0 0.0
  %1900 = vmatpush.msra.mxu0 0.0
  %1901 = vmatpush.msra.mxu0 0.0
  %1902 = vmatpush.msra.mxu0 0.0
  %1903 = vmatpush.msra.mxu0 0.0
  %1904 = vmatpush.msra.mxu0 %v1754
  %1905 = vmatmul.f32.gmra.mxu0 %v1787
  %v1906 = vpop.f32.mrf.mxu0
  %v1907 = vadd.f32 0.0, %v1906
  %1908 = vdwg.mxu0
  %1909 = vmatpush.msra.mxu0 0.0
  %1910 = vmatpush.msra.mxu0 0.0
  %1911 = vmatpush.msra.mxu0 0.0
  %1912 = vmatpush.msra.mxu0 0.0
  %1913 = vmatpush.msra.mxu0 0.0
  %1914 = vmatpush.msra.mxu0 0.0
  %1915 = vmatpush.msra.mxu0 0.0
  %1916 = vmatpush.msra.mxu0 0.0
  %1917 = vmatpush.msra.mxu0 0.0
  %1918 = vmatpush.msra.mxu0 0.0
  %1919 = vmatpush.msra.mxu0 0.0
  %1920 = vmatpush.msra.mxu0 0.0
  %1921 = vmatpush.msra.mxu0 0.0
  %1922 = vmatpush.msra.mxu0 0.0
  %1923 = vmatpush.msra.mxu0 0.0
  %1924 = vmatpush.msra.mxu0 %v1755
  %1925 = vmatmul.f32.gmra.mxu0 %v1787
  %v1926 = vpop.f32.mrf.mxu0
  %v1927 = vadd.f32 0.0, %v1926
  %1928 = vdwg.mxu0
  %1929 = vmatpush.msra.mxu0 0.0
  %1930 = vmatpush.msra.mxu0 0.0
  %1931 = vmatpush.msra.mxu0 0.0
  %1932 = vmatpush.msra.mxu0 0.0
  %1933 = vmatpush.msra.mxu0 0.0
  %1934 = vmatpush.msra.mxu0 0.0
  %1935 = vmatpush.msra.mxu0 0.0
  %1936 = vmatpush.msra.mxu0 0.0
  %1937 = vmatpush.msra.mxu0 0.0
  %1938 = vmatpush.msra.mxu0 0.0
  %1939 = vmatpush.msra.mxu0 0.0
  %1940 = vmatpush.msra.mxu0 0.0
  %1941 = vmatpush.msra.mxu0 0.0
  %1942 = vmatpush.msra.mxu0 0.0
  %1943 = vmatpush.msra.mxu0 0.0
  %1944 = vmatpush.msra.mxu0 %v1756
  %1945 = vmatmul.f32.gmra.mxu0 %v1787
  %v1946 = vpop.f32.mrf.mxu0
  %v1947 = vadd.f32 0.0, %v1946
  %1948 = vdwg.mxu0
  %1949 = vmatpush.msra.mxu0 0.0
  %1950 = vmatpush.msra.mxu0 0.0
  %1951 = vmatpush.msra.mxu0 0.0
  %1952 = vmatpush.msra.mxu0 0.0
  %1953 = vmatpush.msra.mxu0 0.0
  %1954 = vmatpush.msra.mxu0 0.0
  %1955 = vmatpush.msra.mxu0 0.0
  %1956 = vmatpush.msra.mxu0 0.0
  %1957 = vmatpush.msra.mxu0 0.0
  %1958 = vmatpush.msra.mxu0 0.0
  %1959 = vmatpush.msra.mxu0 0.0
  %1960 = vmatpush.msra.mxu0 0.0
  %1961 = vmatpush.msra.mxu0 0.0
  %1962 = vmatpush.msra.mxu0 0.0
  %1963 = vmatpush.msra.mxu0 0.0
  %1964 = vmatpush.msra.mxu0 %v1757
  %1965 = vmatmul.f32.gmra.mxu0 %v1787
  %v1966 = vpop.f32.mrf.mxu0
  %v1967 = vadd.f32 0.0, %v1966
  %1968 = vdwg.mxu0
  %1969 = vmatpush.msra.mxu0 0.0
  %1970 = vmatpush.msra.mxu0 0.0
  %1971 = vmatpush.msra.mxu0 0.0
  %1972 = vmatpush.msra.mxu0 0.0
  %1973 = vmatpush.msra.mxu0 0.0
  %1974 = vmatpush.msra.mxu0 0.0
  %1975 = vmatpush.msra.mxu0 0.0
  %1976 = vmatpush.msra.mxu0 0.0
  %1977 = vmatpush.msra.mxu0 0.0
  %1978 = vmatpush.msra.mxu0 0.0
  %1979 = vmatpush.msra.mxu0 0.0
  %1980 = vmatpush.msra.mxu0 0.0
  %1981 = vmatpush.msra.mxu0 0.0
  %1982 = vmatpush.msra.mxu0 0.0
  %1983 = vmatpush.msra.mxu0 0.0
  %1984 = vmatpush.msra.mxu0 %v1758
  %1985 = vmatmul.f32.gmra.mxu0 %v1787
  %v1986 = vpop.f32.mrf.mxu0
  %v1987 = vadd.f32 0.0, %v1986
  %1988 = vdwg.mxu0
  %1989 = vmatpush.msra.mxu0 0.0
  %1990 = vmatpush.msra.mxu0 0.0
  %1991 = vmatpush.msra.mxu0 0.0
  %1992 = vmatpush.msra.mxu0 0.0
  %1993 = vmatpush.msra.mxu0 0.0
  %1994 = vmatpush.msra.mxu0 0.0
  %1995 = vmatpush.msra.mxu0 0.0
  %1996 = vmatpush.msra.mxu0 0.0
  %1997 = vmatpush.msra.mxu0 0.0
  %1998 = vmatpush.msra.mxu0 0.0
  %1999 = vmatpush.msra.mxu0 0.0
  %2000 = vmatpush.msra.mxu0 0.0
  %2001 = vmatpush.msra.mxu0 0.0
  %2002 = vmatpush.msra.mxu0 0.0
  %2003 = vmatpush.msra.mxu0 0.0
  %2004 = vmatpush.msra.mxu0 %v1759
  %2005 = vmatmul.f32.gmra.mxu0 %v1787
  %v2006 = vpop.f32.mrf.mxu0
  %v2007 = vadd.f32 0.0, %v2006
  %2008 = vdwg.mxu0
  %2009 = vmatpush.msra.mxu0 0.0
  %2010 = vmatpush.msra.mxu0 0.0
  %2011 = vmatpush.msra.mxu0 0.0
  %2012 = vmatpush.msra.mxu0 0.0
  %2013 = vmatpush.msra.mxu0 0.0
  %2014 = vmatpush.msra.mxu0 0.0
  %2015 = vmatpush.msra.mxu0 0.0
  %2016 = vmatpush.msra.mxu0 0.0
  %2017 = vmatpush.msra.mxu0 0.0
  %2018 = vmatpush.msra.mxu0 0.0
  %2019 = vmatpush.msra.mxu0 0.0
  %2020 = vmatpush.msra.mxu0 0.0
  %2021 = vmatpush.msra.mxu0 0.0
  %2022 = vmatpush.msra.mxu0 0.0
  %2023 = vmatpush.msra.mxu0 0.0
  %2024 = vmatpush.msra.mxu0 %v1760
  %2025 = vmatmul.f32.gmra.mxu0 %v1787
  %v2026 = vpop.f32.mrf.mxu0
  %v2027 = vadd.f32 0.0, %v2026
  %2028 = vdwg.mxu0
  %2029 = vmatpush.msra.mxu0 0.0
  %2030 = vmatpush.msra.mxu0 0.0
  %2031 = vmatpush.msra.mxu0 0.0
  %2032 = vmatpush.msra.mxu0 0.0
  %2033 = vmatpush.msra.mxu0 0.0
  %2034 = vmatpush.msra.mxu0 0.0
  %2035 = vmatpush.msra.mxu0 0.0
  %2036 = vmatpush.msra.mxu0 0.0
  %2037 = vmatpush.msra.mxu0 0.0
  %2038 = vmatpush.msra.mxu0 0.0
  %2039 = vmatpush.msra.mxu0 0.0
  %2040 = vmatpush.msra.mxu0 0.0
  %2041 = vmatpush.msra.mxu0 0.0
  %2042 = vmatpush.msra.mxu0 0.0
  %2043 = vmatpush.msra.mxu0 0.0
  %2044 = vmatpush.msra.mxu0 %v1761
  %2045 = vmatmul.f32.gmra.mxu0 %v1787
  %v2046 = vpop.f32.mrf.mxu0
  %v2047 = vadd.f32 0.0, %v2046
  %2048 = vdwg.mxu0
  %2049 = vmatpush.msra.mxu0 0.0
  %2050 = vmatpush.msra.mxu0 0.0
  %2051 = vmatpush.msra.mxu0 0.0
  %2052 = vmatpush.msra.mxu0 0.0
  %2053 = vmatpush.msra.mxu0 0.0
  %2054 = vmatpush.msra.mxu0 0.0
  %2055 = vmatpush.msra.mxu0 0.0
  %2056 = vmatpush.msra.mxu0 0.0
  %2057 = vmatpush.msra.mxu0 0.0
  %2058 = vmatpush.msra.mxu0 0.0
  %2059 = vmatpush.msra.mxu0 0.0
  %2060 = vmatpush.msra.mxu0 0.0
  %2061 = vmatpush.msra.mxu0 0.0
  %2062 = vmatpush.msra.mxu0 0.0
  %2063 = vmatpush.msra.mxu0 0.0
  %2064 = vmatpush.msra.mxu0 %v1762
  %2065 = vmatmul.f32.gmra.mxu0 %v1787
  %v2066 = vpop.f32.mrf.mxu0
  %v2067 = vadd.f32 0.0, %v2066
  %2068 = vdwg.mxu0
  %2069 = vmatpush.msra.mxu0 0.0
  %2070 = vmatpush.msra.mxu0 0.0
  %2071 = vmatpush.msra.mxu0 0.0
  %2072 = vmatpush.msra.mxu0 0.0
  %2073 = vmatpush.msra.mxu0 0.0
  %2074 = vmatpush.msra.mxu0 0.0
  %2075 = vmatpush.msra.mxu0 0.0
  %2076 = vmatpush.msra.mxu0 0.0
  %2077 = vmatpush.msra.mxu0 0.0
  %2078 = vmatpush.msra.mxu0 0.0
  %2079 = vmatpush.msra.mxu0 0.0
  %2080 = vmatpush.msra.mxu0 0.0
  %2081 = vmatpush.msra.mxu0 0.0
  %2082 = vmatpush.msra.mxu0 0.0
  %2083 = vmatpush.msra.mxu0 0.0
  %2084 = vmatpush.msra.mxu0 %v1763
  %2085 = vmatmul.f32.gmra.mxu0 %v1787
  %v2086 = vpop.f32.mrf.mxu0
  %v2087 = vadd.f32 0.0, %v2086
  %2088 = vdwg.mxu0
  %2089 = vmatpush.msra.mxu0 0.0
  %2090 = vmatpush.msra.mxu0 0.0
  %2091 = vmatpush.msra.mxu0 0.0
  %2092 = vmatpush.msra.mxu0 0.0
  %2093 = vmatpush.msra.mxu0 0.0
  %2094 = vmatpush.msra.mxu0 0.0
  %2095 = vmatpush.msra.mxu0 0.0
  %2096 = vmatpush.msra.mxu0 0.0
  %2097 = vmatpush.msra.mxu0 0.0
  %2098 = vmatpush.msra.mxu0 0.0
  %2099 = vmatpush.msra.mxu0 0.0
  %2100 = vmatpush.msra.mxu0 0.0
  %2101 = vmatpush.msra.mxu0 0.0
  %2102 = vmatpush.msra.mxu0 0.0
  %2103 = vmatpush.msra.mxu0 0.0
  %2104 = vmatpush.msra.mxu0 %v1764
  %2105 = vmatmul.f32.gmra.mxu0 %v1787
  %v2106 = vpop.f32.mrf.mxu0
  %v2107 = vadd.f32 0.0, %v2106
  %2108 = vdwg.mxu0
  %2109 = vmatpush.msra.mxu0 0.0
  %2110 = vmatpush.msra.mxu0 0.0
  %2111 = vmatpush.msra.mxu0 0.0
  %2112 = vmatpush.msra.mxu0 0.0
  %2113 = vmatpush.msra.mxu0 0.0
  %2114 = vmatpush.msra.mxu0 0.0
  %2115 = vmatpush.msra.mxu0 0.0
  %2116 = vmatpush.msra.mxu0 0.0
  %2117 = vmatpush.msra.mxu0 0.0
  %2118 = vmatpush.msra.mxu0 0.0
  %2119 = vmatpush.msra.mxu0 0.0
  %2120 = vmatpush.msra.mxu0 0.0
  %2121 = vmatpush.msra.mxu0 0.0
  %2122 = vmatpush.msra.mxu0 0.0
  %2123 = vmatpush.msra.mxu0 0.0
  %2124 = vmatpush.msra.mxu0 %v1765
  %2125 = vmatmul.f32.gmra.mxu0 %v1787
  %v2126 = vpop.f32.mrf.mxu0
  %v2127 = vadd.f32 0.0, %v2126
  %2128 = vdwg.mxu0
  %2129 = vmatpush.msra.mxu0 0.0
  %2130 = vmatpush.msra.mxu0 0.0
  %2131 = vmatpush.msra.mxu0 0.0
  %2132 = vmatpush.msra.mxu0 0.0
  %2133 = vmatpush.msra.mxu0 0.0
  %2134 = vmatpush.msra.mxu0 0.0
  %2135 = vmatpush.msra.mxu0 0.0
  %2136 = vmatpush.msra.mxu0 0.0
  %2137 = vmatpush.msra.mxu0 0.0
  %2138 = vmatpush.msra.mxu0 0.0
  %2139 = vmatpush.msra.mxu0 0.0
  %2140 = vmatpush.msra.mxu0 0.0
  %2141 = vmatpush.msra.mxu0 0.0
  %2142 = vmatpush.msra.mxu0 0.0
  %2143 = vmatpush.msra.mxu0 0.0
  %2144 = vmatpush.msra.mxu0 %v1766
  %2145 = vmatmul.f32.gmra.mxu0 %v1787
  %v2146 = vpop.f32.mrf.mxu0
  %v2147 = vadd.f32 0.0, %v2146
  %2148 = vdwg.mxu0
  %2149 = vmatpush.msra.mxu0 0.0
  %2150 = vmatpush.msra.mxu0 0.0
  %2151 = vmatpush.msra.mxu0 0.0
  %2152 = vmatpush.msra.mxu0 0.0
  %2153 = vmatpush.msra.mxu0 0.0
  %2154 = vmatpush.msra.mxu0 0.0
  %2155 = vmatpush.msra.mxu0 0.0
  %2156 = vmatpush.msra.mxu0 0.0
  %2157 = vmatpush.msra.mxu0 0.0
  %2158 = vmatpush.msra.mxu0 0.0
  %2159 = vmatpush.msra.mxu0 0.0
  %2160 = vmatpush.msra.mxu0 0.0
  %2161 = vmatpush.msra.mxu0 0.0
  %2162 = vmatpush.msra.mxu0 0.0
  %2163 = vmatpush.msra.mxu0 0.0
  %2164 = vmatpush.msra.mxu0 %v1747
  %2165 = vmatmul.f32.gmra.mxu0 %v1787
  %v2166 = vpop.f32.mrf.mxu0
  %v2167 = vadd.f32 0.0, %v2166
  %2168 = vdwg.mxu0
  %v2169 = vadd.f32 %v1689, %v1807
  %v2170 = vadd.f32 %v1690, %v1827
  %v2171 = vadd.f32 %v1691, %v1847
  %v2172 = vadd.f32 %v1692, %v1867
  %v2173 = vadd.f32 %v1693, %v1887
  %v2174 = vadd.f32 %v1694, %v1907
  %v2175 = vadd.f32 %v1695, %v1927
  %v2176 = vadd.f32 %v1696, %v1947
  %v2177 = vadd.f32 %v1697, %v1967
  %v2178 = vadd.f32 %v1698, %v1987
  %v2179 = vadd.f32 %v1699, %v2007
  %v2180 = vadd.f32 %v1700, %v2027
  %v2181 = vadd.f32 %v1701, %v2047
  %v2182 = vadd.f32 %v1702, %v2067
  %v2183 = vadd.f32 %v1703, %v2087
  %v2184 = vadd.f32 %v1704, %v2107
  %v2185 = vadd.f32 %v1705, %v2127
  %v2186 = vadd.f32 %v1706, %v2147
  %v2187 = vadd.f32 %v1707, %v2167
  %s2188 = scalar_lea.vmem %s1, 16
  %v2189 = vld [vmem:[%s2188] sm:$0x7]
  %2190 = vrot.lane.b32.xlu0 %v345, 93
  %v2191 = vpop.permute.xlu0 %2190
  %2192 = vrot.lane.b32.xlu0 %v346, 93
  %v2193 = vpop.permute.xlu0 %2192
  %2194 = vrot.lane.b32.xlu0 %v347, 93
  %v2195 = vpop.permute.xlu0 %2194
  %2196 = vrot.lane.b32.xlu0 %v348, 93
  %v2197 = vpop.permute.xlu0 %2196
  %2198 = vrot.lane.b32.xlu0 %v349, 93
  %v2199 = vpop.permute.xlu0 %2198
  %2200 = vrot.lane.b32.xlu0 %v350, 93
  %v2201 = vpop.permute.xlu0 %2200
  %2202 = vrot.lane.b32.xlu0 %v351, 93
  %v2203 = vpop.permute.xlu0 %2202
  %2204 = vrot.lane.b32.xlu0 %v352, 93
  %v2205 = vpop.permute.xlu0 %2204
  %2206 = vrot.lane.b32.xlu0 %v353, 93
  %v2207 = vpop.permute.xlu0 %2206
  %2208 = vrot.lane.b32.xlu0 %v354, 93
  %v2209 = vpop.permute.xlu0 %2208
  %2210 = vrot.lane.b32.xlu0 %v355, 93
  %v2211 = vpop.permute.xlu0 %2210
  %2212 = vrot.lane.b32.xlu0 %v356, 93
  %v2213 = vpop.permute.xlu0 %2212
  %2214 = vrot.lane.b32.xlu0 %v357, 93
  %v2215 = vpop.permute.xlu0 %2214
  %2216 = vrot.lane.b32.xlu0 %v358, 93
  %v2217 = vpop.permute.xlu0 %2216
  %2218 = vrot.lane.b32.xlu0 %v359, 93
  %v2219 = vpop.permute.xlu0 %2218
  %2220 = vrot.lane.b32.xlu0 %v360, 93
  %v2221 = vpop.permute.xlu0 %2220
  %2222 = vrot.lane.b32.xlu0 %v361, 93
  %v2223 = vpop.permute.xlu0 %2222
  %2224 = vrot.lane.b32.xlu0 %v362, 93
  %v2225 = vpop.permute.xlu0 %2224
  %2226 = vrot.lane.b32.xlu0 %v363, 93
  %v2227 = vpop.permute.xlu0 %2226
  %vm2228 = vcmask 760832
  %v2229 = vsel %vm2228, %v2191, %v2193
  %v2230 = vsel %vm2228, %v2193, %v2195
  %v2231 = vsel %vm2228, %v2195, %v2197
  %v2232 = vsel %vm2228, %v2197, %v2199
  %v2233 = vsel %vm2228, %v2199, %v2201
  %v2234 = vsel %vm2228, %v2201, %v2203
  %v2235 = vsel %vm2228, %v2203, %v2205
  %v2236 = vsel %vm2228, %v2205, %v2207
  %v2237 = vsel %vm2228, %v2207, %v2209
  %v2238 = vsel %vm2228, %v2209, %v2211
  %v2239 = vsel %vm2228, %v2211, %v2213
  %v2240 = vsel %vm2228, %v2213, %v2215
  %v2241 = vsel %vm2228, %v2215, %v2217
  %v2242 = vsel %vm2228, %v2217, %v2219
  %v2243 = vsel %vm2228, %v2219, %v2221
  %v2244 = vsel %vm2228, %v2221, %v2223
  %v2245 = vsel %vm2228, %v2223, %v2225
  %v2246 = vsel %vm2228, %v2225, %v2227
  %v2267 = vsel %vm461, %v2189, 0
  %2269 = vmatpush.msra.mxu0 0.0
  %2270 = vmatpush.msra.mxu0 0.0
  %2271 = vmatpush.msra.mxu0 0.0
  %2272 = vmatpush.msra.mxu0 0.0
  %2273 = vmatpush.msra.mxu0 0.0
  %2274 = vmatpush.msra.mxu0 0.0
  %2275 = vmatpush.msra.mxu0 0.0
  %2276 = vmatpush.msra.mxu0 0.0
  %2277 = vmatpush.msra.mxu0 0.0
  %2278 = vmatpush.msra.mxu0 0.0
  %2279 = vmatpush.msra.mxu0 0.0
  %2280 = vmatpush.msra.mxu0 0.0
  %2281 = vmatpush.msra.mxu0 0.0
  %2282 = vmatpush.msra.mxu0 0.0
  %2283 = vmatpush.msra.mxu0 0.0
  %2284 = vmatpush.msra.mxu0 %v2229
  %2285 = vmatmul.f32.gmra.mxu0 %v2267
  %v2286 = vpop.f32.mrf.mxu0
  %v2287 = vadd.f32 0.0, %v2286
  %2288 = vdwg.mxu0
  %2289 = vmatpush.msra.mxu0 0.0
  %2290 = vmatpush.msra.mxu0 0.0
  %2291 = vmatpush.msra.mxu0 0.0
  %2292 = vmatpush.msra.mxu0 0.0
  %2293 = vmatpush.msra.mxu0 0.0
  %2294 = vmatpush.msra.mxu0 0.0
  %2295 = vmatpush.msra.mxu0 0.0
  %2296 = vmatpush.msra.mxu0 0.0
  %2297 = vmatpush.msra.mxu0 0.0
  %2298 = vmatpush.msra.mxu0 0.0
  %2299 = vmatpush.msra.mxu0 0.0
  %2300 = vmatpush.msra.mxu0 0.0
  %2301 = vmatpush.msra.mxu0 0.0
  %2302 = vmatpush.msra.mxu0 0.0
  %2303 = vmatpush.msra.mxu0 0.0
  %2304 = vmatpush.msra.mxu0 %v2230
  %2305 = vmatmul.f32.gmra.mxu0 %v2267
  %v2306 = vpop.f32.mrf.mxu0
  %v2307 = vadd.f32 0.0, %v2306
  %2308 = vdwg.mxu0
  %2309 = vmatpush.msra.mxu0 0.0
  %2310 = vmatpush.msra.mxu0 0.0
  %2311 = vmatpush.msra.mxu0 0.0
  %2312 = vmatpush.msra.mxu0 0.0
  %2313 = vmatpush.msra.mxu0 0.0
  %2314 = vmatpush.msra.mxu0 0.0
  %2315 = vmatpush.msra.mxu0 0.0
  %2316 = vmatpush.msra.mxu0 0.0
  %2317 = vmatpush.msra.mxu0 0.0
  %2318 = vmatpush.msra.mxu0 0.0
  %2319 = vmatpush.msra.mxu0 0.0
  %2320 = vmatpush.msra.mxu0 0.0
  %2321 = vmatpush.msra.mxu0 0.0
  %2322 = vmatpush.msra.mxu0 0.0
  %2323 = vmatpush.msra.mxu0 0.0
  %2324 = vmatpush.msra.mxu0 %v2231
  %2325 = vmatmul.f32.gmra.mxu0 %v2267
  %v2326 = vpop.f32.mrf.mxu0
  %v2327 = vadd.f32 0.0, %v2326
  %2328 = vdwg.mxu0
  %2329 = vmatpush.msra.mxu0 0.0
  %2330 = vmatpush.msra.mxu0 0.0
  %2331 = vmatpush.msra.mxu0 0.0
  %2332 = vmatpush.msra.mxu0 0.0
  %2333 = vmatpush.msra.mxu0 0.0
  %2334 = vmatpush.msra.mxu0 0.0
  %2335 = vmatpush.msra.mxu0 0.0
  %2336 = vmatpush.msra.mxu0 0.0
  %2337 = vmatpush.msra.mxu0 0.0
  %2338 = vmatpush.msra.mxu0 0.0
  %2339 = vmatpush.msra.mxu0 0.0
  %2340 = vmatpush.msra.mxu0 0.0
  %2341 = vmatpush.msra.mxu0 0.0
  %2342 = vmatpush.msra.mxu0 0.0
  %2343 = vmatpush.msra.mxu0 0.0
  %2344 = vmatpush.msra.mxu0 %v2232
  %2345 = vmatmul.f32.gmra.mxu0 %v2267
  %v2346 = vpop.f32.mrf.mxu0
  %v2347 = vadd.f32 0.0, %v2346
  %2348 = vdwg.mxu0
  %2349 = vmatpush.msra.mxu0 0.0
  %2350 = vmatpush.msra.mxu0 0.0
  %2351 = vmatpush.msra.mxu0 0.0
  %2352 = vmatpush.msra.mxu0 0.0
  %2353 = vmatpush.msra.mxu0 0.0
  %2354 = vmatpush.msra.mxu0 0.0
  %2355 = vmatpush.msra.mxu0 0.0
  %2356 = vmatpush.msra.mxu0 0.0
  %2357 = vmatpush.msra.mxu0 0.0
  %2358 = vmatpush.msra.mxu0 0.0
  %2359 = vmatpush.msra.mxu0 0.0
  %2360 = vmatpush.msra.mxu0 0.0
  %2361 = vmatpush.msra.mxu0 0.0
  %2362 = vmatpush.msra.mxu0 0.0
  %2363 = vmatpush.msra.mxu0 0.0
  %2364 = vmatpush.msra.mxu0 %v2233
  %2365 = vmatmul.f32.gmra.mxu0 %v2267
  %v2366 = vpop.f32.mrf.mxu0
  %v2367 = vadd.f32 0.0, %v2366
  %2368 = vdwg.mxu0
  %2369 = vmatpush.msra.mxu0 0.0
  %2370 = vmatpush.msra.mxu0 0.0
  %2371 = vmatpush.msra.mxu0 0.0
  %2372 = vmatpush.msra.mxu0 0.0
  %2373 = vmatpush.msra.mxu0 0.0
  %2374 = vmatpush.msra.mxu0 0.0
  %2375 = vmatpush.msra.mxu0 0.0
  %2376 = vmatpush.msra.mxu0 0.0
  %2377 = vmatpush.msra.mxu0 0.0
  %2378 = vmatpush.msra.mxu0 0.0
  %2379 = vmatpush.msra.mxu0 0.0
  %2380 = vmatpush.msra.mxu0 0.0
  %2381 = vmatpush.msra.mxu0 0.0
  %2382 = vmatpush.msra.mxu0 0.0
  %2383 = vmatpush.msra.mxu0 0.0
  %2384 = vmatpush.msra.mxu0 %v2234
  %2385 = vmatmul.f32.gmra.mxu0 %v2267
  %v2386 = vpop.f32.mrf.mxu0
  %v2387 = vadd.f32 0.0, %v2386
  %2388 = vdwg.mxu0
  %2389 = vmatpush.msra.mxu0 0.0
  %2390 = vmatpush.msra.mxu0 0.0
  %2391 = vmatpush.msra.mxu0 0.0
  %2392 = vmatpush.msra.mxu0 0.0
  %2393 = vmatpush.msra.mxu0 0.0
  %2394 = vmatpush.msra.mxu0 0.0
  %2395 = vmatpush.msra.mxu0 0.0
  %2396 = vmatpush.msra.mxu0 0.0
  %2397 = vmatpush.msra.mxu0 0.0
  %2398 = vmatpush.msra.mxu0 0.0
  %2399 = vmatpush.msra.mxu0 0.0
  %2400 = vmatpush.msra.mxu0 0.0
  %2401 = vmatpush.msra.mxu0 0.0
  %2402 = vmatpush.msra.mxu0 0.0
  %2403 = vmatpush.msra.mxu0 0.0
  %2404 = vmatpush.msra.mxu0 %v2235
  %2405 = vmatmul.f32.gmra.mxu0 %v2267
  %v2406 = vpop.f32.mrf.mxu0
  %v2407 = vadd.f32 0.0, %v2406
  %2408 = vdwg.mxu0
  %2409 = vmatpush.msra.mxu0 0.0
  %2410 = vmatpush.msra.mxu0 0.0
  %2411 = vmatpush.msra.mxu0 0.0
  %2412 = vmatpush.msra.mxu0 0.0
  %2413 = vmatpush.msra.mxu0 0.0
  %2414 = vmatpush.msra.mxu0 0.0
  %2415 = vmatpush.msra.mxu0 0.0
  %2416 = vmatpush.msra.mxu0 0.0
  %2417 = vmatpush.msra.mxu0 0.0
  %2418 = vmatpush.msra.mxu0 0.0
  %2419 = vmatpush.msra.mxu0 0.0
  %2420 = vmatpush.msra.mxu0 0.0
  %2421 = vmatpush.msra.mxu0 0.0
  %2422 = vmatpush.msra.mxu0 0.0
  %2423 = vmatpush.msra.mxu0 0.0
  %2424 = vmatpush.msra.mxu0 %v2236
  %2425 = vmatmul.f32.gmra.mxu0 %v2267
  %v2426 = vpop.f32.mrf.mxu0
  %v2427 = vadd.f32 0.0, %v2426
  %2428 = vdwg.mxu0
  %2429 = vmatpush.msra.mxu0 0.0
  %2430 = vmatpush.msra.mxu0 0.0
  %2431 = vmatpush.msra.mxu0 0.0
  %2432 = vmatpush.msra.mxu0 0.0
  %2433 = vmatpush.msra.mxu0 0.0
  %2434 = vmatpush.msra.mxu0 0.0
  %2435 = vmatpush.msra.mxu0 0.0
  %2436 = vmatpush.msra.mxu0 0.0
  %2437 = vmatpush.msra.mxu0 0.0
  %2438 = vmatpush.msra.mxu0 0.0
  %2439 = vmatpush.msra.mxu0 0.0
  %2440 = vmatpush.msra.mxu0 0.0
  %2441 = vmatpush.msra.mxu0 0.0
  %2442 = vmatpush.msra.mxu0 0.0
  %2443 = vmatpush.msra.mxu0 0.0
  %2444 = vmatpush.msra.mxu0 %v2237
  %2445 = vmatmul.f32.gmra.mxu0 %v2267
  %v2446 = vpop.f32.mrf.mxu0
  %v2447 = vadd.f32 0.0, %v2446
  %2448 = vdwg.mxu0
  %2449 = vmatpush.msra.mxu0 0.0
  %2450 = vmatpush.msra.mxu0 0.0
  %2451 = vmatpush.msra.mxu0 0.0
  %2452 = vmatpush.msra.mxu0 0.0
  %2453 = vmatpush.msra.mxu0 0.0
  %2454 = vmatpush.msra.mxu0 0.0
  %2455 = vmatpush.msra.mxu0 0.0
  %2456 = vmatpush.msra.mxu0 0.0
  %2457 = vmatpush.msra.mxu0 0.0
  %2458 = vmatpush.msra.mxu0 0.0
  %2459 = vmatpush.msra.mxu0 0.0
  %2460 = vmatpush.msra.mxu0 0.0
  %2461 = vmatpush.msra.mxu0 0.0
  %2462 = vmatpush.msra.mxu0 0.0
  %2463 = vmatpush.msra.mxu0 0.0
  %2464 = vmatpush.msra.mxu0 %v2238
  %2465 = vmatmul.f32.gmra.mxu0 %v2267
  %v2466 = vpop.f32.mrf.mxu0
  %v2467 = vadd.f32 0.0, %v2466
  %2468 = vdwg.mxu0
  %2469 = vmatpush.msra.mxu0 0.0
  %2470 = vmatpush.msra.mxu0 0.0
  %2471 = vmatpush.msra.mxu0 0.0
  %2472 = vmatpush.msra.mxu0 0.0
  %2473 = vmatpush.msra.mxu0 0.0
  %2474 = vmatpush.msra.mxu0 0.0
  %2475 = vmatpush.msra.mxu0 0.0
  %2476 = vmatpush.msra.mxu0 0.0
  %2477 = vmatpush.msra.mxu0 0.0
  %2478 = vmatpush.msra.mxu0 0.0
  %2479 = vmatpush.msra.mxu0 0.0
  %2480 = vmatpush.msra.mxu0 0.0
  %2481 = vmatpush.msra.mxu0 0.0
  %2482 = vmatpush.msra.mxu0 0.0
  %2483 = vmatpush.msra.mxu0 0.0
  %2484 = vmatpush.msra.mxu0 %v2239
  %2485 = vmatmul.f32.gmra.mxu0 %v2267
  %v2486 = vpop.f32.mrf.mxu0
  %v2487 = vadd.f32 0.0, %v2486
  %2488 = vdwg.mxu0
  %2489 = vmatpush.msra.mxu0 0.0
  %2490 = vmatpush.msra.mxu0 0.0
  %2491 = vmatpush.msra.mxu0 0.0
  %2492 = vmatpush.msra.mxu0 0.0
  %2493 = vmatpush.msra.mxu0 0.0
  %2494 = vmatpush.msra.mxu0 0.0
  %2495 = vmatpush.msra.mxu0 0.0
  %2496 = vmatpush.msra.mxu0 0.0
  %2497 = vmatpush.msra.mxu0 0.0
  %2498 = vmatpush.msra.mxu0 0.0
  %2499 = vmatpush.msra.mxu0 0.0
  %2500 = vmatpush.msra.mxu0 0.0
  %2501 = vmatpush.msra.mxu0 0.0
  %2502 = vmatpush.msra.mxu0 0.0
  %2503 = vmatpush.msra.mxu0 0.0
  %2504 = vmatpush.msra.mxu0 %v2240
  %2505 = vmatmul.f32.gmra.mxu0 %v2267
  %v2506 = vpop.f32.mrf.mxu0
  %v2507 = vadd.f32 0.0, %v2506
  %2508 = vdwg.mxu0
  %2509 = vmatpush.msra.mxu0 0.0
  %2510 = vmatpush.msra.mxu0 0.0
  %2511 = vmatpush.msra.mxu0 0.0
  %2512 = vmatpush.msra.mxu0 0.0
  %2513 = vmatpush.msra.mxu0 0.0
  %2514 = vmatpush.msra.mxu0 0.0
  %2515 = vmatpush.msra.mxu0 0.0
  %2516 = vmatpush.msra.mxu0 0.0
  %2517 = vmatpush.msra.mxu0 0.0
  %2518 = vmatpush.msra.mxu0 0.0
  %2519 = vmatpush.msra.mxu0 0.0
  %2520 = vmatpush.msra.mxu0 0.0
  %2521 = vmatpush.msra.mxu0 0.0
  %2522 = vmatpush.msra.mxu0 0.0
  %2523 = vmatpush.msra.mxu0 0.0
  %2524 = vmatpush.msra.mxu0 %v2241
  %2525 = vmatmul.f32.gmra.mxu0 %v2267
  %v2526 = vpop.f32.mrf.mxu0
  %v2527 = vadd.f32 0.0, %v2526
  %2528 = vdwg.mxu0
  %2529 = vmatpush.msra.mxu0 0.0
  %2530 = vmatpush.msra.mxu0 0.0
  %2531 = vmatpush.msra.mxu0 0.0
  %2532 = vmatpush.msra.mxu0 0.0
  %2533 = vmatpush.msra.mxu0 0.0
  %2534 = vmatpush.msra.mxu0 0.0
  %2535 = vmatpush.msra.mxu0 0.0
  %2536 = vmatpush.msra.mxu0 0.0
  %2537 = vmatpush.msra.mxu0 0.0
  %2538 = vmatpush.msra.mxu0 0.0
  %2539 = vmatpush.msra.mxu0 0.0
  %2540 = vmatpush.msra.mxu0 0.0
  %2541 = vmatpush.msra.mxu0 0.0
  %2542 = vmatpush.msra.mxu0 0.0
  %2543 = vmatpush.msra.mxu0 0.0
  %2544 = vmatpush.msra.mxu0 %v2242
  %2545 = vmatmul.f32.gmra.mxu0 %v2267
  %v2546 = vpop.f32.mrf.mxu0
  %v2547 = vadd.f32 0.0, %v2546
  %2548 = vdwg.mxu0
  %2549 = vmatpush.msra.mxu0 0.0
  %2550 = vmatpush.msra.mxu0 0.0
  %2551 = vmatpush.msra.mxu0 0.0
  %2552 = vmatpush.msra.mxu0 0.0
  %2553 = vmatpush.msra.mxu0 0.0
  %2554 = vmatpush.msra.mxu0 0.0
  %2555 = vmatpush.msra.mxu0 0.0
  %2556 = vmatpush.msra.mxu0 0.0
  %2557 = vmatpush.msra.mxu0 0.0
  %2558 = vmatpush.msra.mxu0 0.0
  %2559 = vmatpush.msra.mxu0 0.0
  %2560 = vmatpush.msra.mxu0 0.0
  %2561 = vmatpush.msra.mxu0 0.0
  %2562 = vmatpush.msra.mxu0 0.0
  %2563 = vmatpush.msra.mxu0 0.0
  %2564 = vmatpush.msra.mxu0 %v2243
  %2565 = vmatmul.f32.gmra.mxu0 %v2267
  %v2566 = vpop.f32.mrf.mxu0
  %v2567 = vadd.f32 0.0, %v2566
  %2568 = vdwg.mxu0
  %2569 = vmatpush.msra.mxu0 0.0
  %2570 = vmatpush.msra.mxu0 0.0
  %2571 = vmatpush.msra.mxu0 0.0
  %2572 = vmatpush.msra.mxu0 0.0
  %2573 = vmatpush.msra.mxu0 0.0
  %2574 = vmatpush.msra.mxu0 0.0
  %2575 = vmatpush.msra.mxu0 0.0
  %2576 = vmatpush.msra.mxu0 0.0
  %2577 = vmatpush.msra.mxu0 0.0
  %2578 = vmatpush.msra.mxu0 0.0
  %2579 = vmatpush.msra.mxu0 0.0
  %2580 = vmatpush.msra.mxu0 0.0
  %2581 = vmatpush.msra.mxu0 0.0
  %2582 = vmatpush.msra.mxu0 0.0
  %2583 = vmatpush.msra.mxu0 0.0
  %2584 = vmatpush.msra.mxu0 %v2244
  %2585 = vmatmul.f32.gmra.mxu0 %v2267
  %v2586 = vpop.f32.mrf.mxu0
  %v2587 = vadd.f32 0.0, %v2586
  %2588 = vdwg.mxu0
  %2589 = vmatpush.msra.mxu0 0.0
  %2590 = vmatpush.msra.mxu0 0.0
  %2591 = vmatpush.msra.mxu0 0.0
  %2592 = vmatpush.msra.mxu0 0.0
  %2593 = vmatpush.msra.mxu0 0.0
  %2594 = vmatpush.msra.mxu0 0.0
  %2595 = vmatpush.msra.mxu0 0.0
  %2596 = vmatpush.msra.mxu0 0.0
  %2597 = vmatpush.msra.mxu0 0.0
  %2598 = vmatpush.msra.mxu0 0.0
  %2599 = vmatpush.msra.mxu0 0.0
  %2600 = vmatpush.msra.mxu0 0.0
  %2601 = vmatpush.msra.mxu0 0.0
  %2602 = vmatpush.msra.mxu0 0.0
  %2603 = vmatpush.msra.mxu0 0.0
  %2604 = vmatpush.msra.mxu0 %v2245
  %2605 = vmatmul.f32.gmra.mxu0 %v2267
  %v2606 = vpop.f32.mrf.mxu0
  %v2607 = vadd.f32 0.0, %v2606
  %2608 = vdwg.mxu0
  %2609 = vmatpush.msra.mxu0 0.0
  %2610 = vmatpush.msra.mxu0 0.0
  %2611 = vmatpush.msra.mxu0 0.0
  %2612 = vmatpush.msra.mxu0 0.0
  %2613 = vmatpush.msra.mxu0 0.0
  %2614 = vmatpush.msra.mxu0 0.0
  %2615 = vmatpush.msra.mxu0 0.0
  %2616 = vmatpush.msra.mxu0 0.0
  %2617 = vmatpush.msra.mxu0 0.0
  %2618 = vmatpush.msra.mxu0 0.0
  %2619 = vmatpush.msra.mxu0 0.0
  %2620 = vmatpush.msra.mxu0 0.0
  %2621 = vmatpush.msra.mxu0 0.0
  %2622 = vmatpush.msra.mxu0 0.0
  %2623 = vmatpush.msra.mxu0 0.0
  %2624 = vmatpush.msra.mxu0 %v2246
  %2625 = vmatmul.f32.gmra.mxu0 %v2267
  %v2626 = vpop.f32.mrf.mxu0
  %v2627 = vadd.f32 0.0, %v2626
  %2628 = vdwg.mxu0
  %2629 = vmatpush.msra.mxu0 0.0
  %2630 = vmatpush.msra.mxu0 0.0
  %2631 = vmatpush.msra.mxu0 0.0
  %2632 = vmatpush.msra.mxu0 0.0
  %2633 = vmatpush.msra.mxu0 0.0
  %2634 = vmatpush.msra.mxu0 0.0
  %2635 = vmatpush.msra.mxu0 0.0
  %2636 = vmatpush.msra.mxu0 0.0
  %2637 = vmatpush.msra.mxu0 0.0
  %2638 = vmatpush.msra.mxu0 0.0
  %2639 = vmatpush.msra.mxu0 0.0
  %2640 = vmatpush.msra.mxu0 0.0
  %2641 = vmatpush.msra.mxu0 0.0
  %2642 = vmatpush.msra.mxu0 0.0
  %2643 = vmatpush.msra.mxu0 0.0
  %2644 = vmatpush.msra.mxu0 %v2227
  %2645 = vmatmul.f32.gmra.mxu0 %v2267
  %v2646 = vpop.f32.mrf.mxu0
  %v2647 = vadd.f32 0.0, %v2646
  %2648 = vdwg.mxu0
  %v2649 = vadd.f32 %v2169, %v2287
  %v2650 = vadd.f32 %v2170, %v2307
  %v2651 = vadd.f32 %v2171, %v2327
  %v2652 = vadd.f32 %v2172, %v2347
  %v2653 = vadd.f32 %v2173, %v2367
  %v2654 = vadd.f32 %v2174, %v2387
  %v2655 = vadd.f32 %v2175, %v2407
  %v2656 = vadd.f32 %v2176, %v2427
  %v2657 = vadd.f32 %v2177, %v2447
  %v2658 = vadd.f32 %v2178, %v2467
  %v2659 = vadd.f32 %v2179, %v2487
  %v2660 = vadd.f32 %v2180, %v2507
  %v2661 = vadd.f32 %v2181, %v2527
  %v2662 = vadd.f32 %v2182, %v2547
  %v2663 = vadd.f32 %v2183, %v2567
  %v2664 = vadd.f32 %v2184, %v2587
  %v2665 = vadd.f32 %v2185, %v2607
  %v2666 = vadd.f32 %v2186, %v2627
  %v2667 = vadd.f32 %v2187, %v2647
  %s2668 = scalar_lea.vmem %s1, 20
  %v2669 = vld [vmem:[%s2668] sm:$0x7]
  %2670 = vrot.lane.b32.xlu0 %v345, 92
  %v2671 = vpop.permute.xlu0 %2670
  %2672 = vrot.lane.b32.xlu0 %v346, 92
  %v2673 = vpop.permute.xlu0 %2672
  %2674 = vrot.lane.b32.xlu0 %v347, 92
  %v2675 = vpop.permute.xlu0 %2674
  %2676 = vrot.lane.b32.xlu0 %v348, 92
  %v2677 = vpop.permute.xlu0 %2676
  %2678 = vrot.lane.b32.xlu0 %v349, 92
  %v2679 = vpop.permute.xlu0 %2678
  %2680 = vrot.lane.b32.xlu0 %v350, 92
  %v2681 = vpop.permute.xlu0 %2680
  %2682 = vrot.lane.b32.xlu0 %v351, 92
  %v2683 = vpop.permute.xlu0 %2682
  %2684 = vrot.lane.b32.xlu0 %v352, 92
  %v2685 = vpop.permute.xlu0 %2684
  %2686 = vrot.lane.b32.xlu0 %v353, 92
  %v2687 = vpop.permute.xlu0 %2686
  %2688 = vrot.lane.b32.xlu0 %v354, 92
  %v2689 = vpop.permute.xlu0 %2688
  %2690 = vrot.lane.b32.xlu0 %v355, 92
  %v2691 = vpop.permute.xlu0 %2690
  %2692 = vrot.lane.b32.xlu0 %v356, 92
  %v2693 = vpop.permute.xlu0 %2692
  %2694 = vrot.lane.b32.xlu0 %v357, 92
  %v2695 = vpop.permute.xlu0 %2694
  %2696 = vrot.lane.b32.xlu0 %v358, 92
  %v2697 = vpop.permute.xlu0 %2696
  %2698 = vrot.lane.b32.xlu0 %v359, 92
  %v2699 = vpop.permute.xlu0 %2698
  %2700 = vrot.lane.b32.xlu0 %v360, 92
  %v2701 = vpop.permute.xlu0 %2700
  %2702 = vrot.lane.b32.xlu0 %v361, 92
  %v2703 = vpop.permute.xlu0 %2702
  %2704 = vrot.lane.b32.xlu0 %v362, 92
  %v2705 = vpop.permute.xlu0 %2704
  %2706 = vrot.lane.b32.xlu0 %v363, 92
  %v2707 = vpop.permute.xlu0 %2706
  %vm2708 = vcmask 752640
  %v2709 = vsel %vm2708, %v2671, %v2673
  %v2710 = vsel %vm2708, %v2673, %v2675
  %v2711 = vsel %vm2708, %v2675, %v2677
  %v2712 = vsel %vm2708, %v2677, %v2679
  %v2713 = vsel %vm2708, %v2679, %v2681
  %v2714 = vsel %vm2708, %v2681, %v2683
  %v2715 = vsel %vm2708, %v2683, %v2685
  %v2716 = vsel %vm2708, %v2685, %v2687
  %v2717 = vsel %vm2708, %v2687, %v2689
  %v2718 = vsel %vm2708, %v2689, %v2691
  %v2719 = vsel %vm2708, %v2691, %v2693
  %v2720 = vsel %vm2708, %v2693, %v2695
  %v2721 = vsel %vm2708, %v2695, %v2697
  %v2722 = vsel %vm2708, %v2697, %v2699
  %v2723 = vsel %vm2708, %v2699, %v2701
  %v2724 = vsel %vm2708, %v2701, %v2703
  %v2725 = vsel %vm2708, %v2703, %v2705
  %v2726 = vsel %vm2708, %v2705, %v2707
  %v2747 = vsel %vm461, %v2669, 0
  %2749 = vmatpush.msra.mxu0 0.0
  %2750 = vmatpush.msra.mxu0 0.0
  %2751 = vmatpush.msra.mxu0 0.0
  %2752 = vmatpush.msra.mxu0 0.0
  %2753 = vmatpush.msra.mxu0 0.0
  %2754 = vmatpush.msra.mxu0 0.0
  %2755 = vmatpush.msra.mxu0 0.0
  %2756 = vmatpush.msra.mxu0 0.0
  %2757 = vmatpush.msra.mxu0 0.0
  %2758 = vmatpush.msra.mxu0 0.0
  %2759 = vmatpush.msra.mxu0 0.0
  %2760 = vmatpush.msra.mxu0 0.0
  %2761 = vmatpush.msra.mxu0 0.0
  %2762 = vmatpush.msra.mxu0 0.0
  %2763 = vmatpush.msra.mxu0 0.0
  %2764 = vmatpush.msra.mxu0 %v2709
  %2765 = vmatmul.f32.gmra.mxu0 %v2747
  %v2766 = vpop.f32.mrf.mxu0
  %v2767 = vadd.f32 0.0, %v2766
  %2768 = vdwg.mxu0
  %2769 = vmatpush.msra.mxu0 0.0
  %2770 = vmatpush.msra.mxu0 0.0
  %2771 = vmatpush.msra.mxu0 0.0
  %2772 = vmatpush.msra.mxu0 0.0
  %2773 = vmatpush.msra.mxu0 0.0
  %2774 = vmatpush.msra.mxu0 0.0
  %2775 = vmatpush.msra.mxu0 0.0
  %2776 = vmatpush.msra.mxu0 0.0
  %2777 = vmatpush.msra.mxu0 0.0
  %2778 = vmatpush.msra.mxu0 0.0
  %2779 = vmatpush.msra.mxu0 0.0
  %2780 = vmatpush.msra.mxu0 0.0
  %2781 = vmatpush.msra.mxu0 0.0
  %2782 = vmatpush.msra.mxu0 0.0
  %2783 = vmatpush.msra.mxu0 0.0
  %2784 = vmatpush.msra.mxu0 %v2710
  %2785 = vmatmul.f32.gmra.mxu0 %v2747
  %v2786 = vpop.f32.mrf.mxu0
  %v2787 = vadd.f32 0.0, %v2786
  %2788 = vdwg.mxu0
  %2789 = vmatpush.msra.mxu0 0.0
  %2790 = vmatpush.msra.mxu0 0.0
  %2791 = vmatpush.msra.mxu0 0.0
  %2792 = vmatpush.msra.mxu0 0.0
  %2793 = vmatpush.msra.mxu0 0.0
  %2794 = vmatpush.msra.mxu0 0.0
  %2795 = vmatpush.msra.mxu0 0.0
  %2796 = vmatpush.msra.mxu0 0.0
  %2797 = vmatpush.msra.mxu0 0.0
  %2798 = vmatpush.msra.mxu0 0.0
  %2799 = vmatpush.msra.mxu0 0.0
  %2800 = vmatpush.msra.mxu0 0.0
  %2801 = vmatpush.msra.mxu0 0.0
  %2802 = vmatpush.msra.mxu0 0.0
  %2803 = vmatpush.msra.mxu0 0.0
  %2804 = vmatpush.msra.mxu0 %v2711
  %2805 = vmatmul.f32.gmra.mxu0 %v2747
  %v2806 = vpop.f32.mrf.mxu0
  %v2807 = vadd.f32 0.0, %v2806
  %2808 = vdwg.mxu0
  %2809 = vmatpush.msra.mxu0 0.0
  %2810 = vmatpush.msra.mxu0 0.0
  %2811 = vmatpush.msra.mxu0 0.0
  %2812 = vmatpush.msra.mxu0 0.0
  %2813 = vmatpush.msra.mxu0 0.0
  %2814 = vmatpush.msra.mxu0 0.0
  %2815 = vmatpush.msra.mxu0 0.0
  %2816 = vmatpush.msra.mxu0 0.0
  %2817 = vmatpush.msra.mxu0 0.0
  %2818 = vmatpush.msra.mxu0 0.0
  %2819 = vmatpush.msra.mxu0 0.0
  %2820 = vmatpush.msra.mxu0 0.0
  %2821 = vmatpush.msra.mxu0 0.0
  %2822 = vmatpush.msra.mxu0 0.0
  %2823 = vmatpush.msra.mxu0 0.0
  %2824 = vmatpush.msra.mxu0 %v2712
  %2825 = vmatmul.f32.gmra.mxu0 %v2747
  %v2826 = vpop.f32.mrf.mxu0
  %v2827 = vadd.f32 0.0, %v2826
  %2828 = vdwg.mxu0
  %2829 = vmatpush.msra.mxu0 0.0
  %2830 = vmatpush.msra.mxu0 0.0
  %2831 = vmatpush.msra.mxu0 0.0
  %2832 = vmatpush.msra.mxu0 0.0
  %2833 = vmatpush.msra.mxu0 0.0
  %2834 = vmatpush.msra.mxu0 0.0
  %2835 = vmatpush.msra.mxu0 0.0
  %2836 = vmatpush.msra.mxu0 0.0
  %2837 = vmatpush.msra.mxu0 0.0
  %2838 = vmatpush.msra.mxu0 0.0
  %2839 = vmatpush.msra.mxu0 0.0
  %2840 = vmatpush.msra.mxu0 0.0
  %2841 = vmatpush.msra.mxu0 0.0
  %2842 = vmatpush.msra.mxu0 0.0
  %2843 = vmatpush.msra.mxu0 0.0
  %2844 = vmatpush.msra.mxu0 %v2713
  %2845 = vmatmul.f32.gmra.mxu0 %v2747
  %v2846 = vpop.f32.mrf.mxu0
  %v2847 = vadd.f32 0.0, %v2846
  %2848 = vdwg.mxu0
  %2849 = vmatpush.msra.mxu0 0.0
  %2850 = vmatpush.msra.mxu0 0.0
  %2851 = vmatpush.msra.mxu0 0.0
  %2852 = vmatpush.msra.mxu0 0.0
  %2853 = vmatpush.msra.mxu0 0.0
  %2854 = vmatpush.msra.mxu0 0.0
  %2855 = vmatpush.msra.mxu0 0.0
  %2856 = vmatpush.msra.mxu0 0.0
  %2857 = vmatpush.msra.mxu0 0.0
  %2858 = vmatpush.msra.mxu0 0.0
  %2859 = vmatpush.msra.mxu0 0.0
  %2860 = vmatpush.msra.mxu0 0.0
  %2861 = vmatpush.msra.mxu0 0.0
  %2862 = vmatpush.msra.mxu0 0.0
  %2863 = vmatpush.msra.mxu0 0.0
  %2864 = vmatpush.msra.mxu0 %v2714
  %2865 = vmatmul.f32.gmra.mxu0 %v2747
  %v2866 = vpop.f32.mrf.mxu0
  %v2867 = vadd.f32 0.0, %v2866
  %2868 = vdwg.mxu0
  %2869 = vmatpush.msra.mxu0 0.0
  %2870 = vmatpush.msra.mxu0 0.0
  %2871 = vmatpush.msra.mxu0 0.0
  %2872 = vmatpush.msra.mxu0 0.0
  %2873 = vmatpush.msra.mxu0 0.0
  %2874 = vmatpush.msra.mxu0 0.0
  %2875 = vmatpush.msra.mxu0 0.0
  %2876 = vmatpush.msra.mxu0 0.0
  %2877 = vmatpush.msra.mxu0 0.0
  %2878 = vmatpush.msra.mxu0 0.0
  %2879 = vmatpush.msra.mxu0 0.0
  %2880 = vmatpush.msra.mxu0 0.0
  %2881 = vmatpush.msra.mxu0 0.0
  %2882 = vmatpush.msra.mxu0 0.0
  %2883 = vmatpush.msra.mxu0 0.0
  %2884 = vmatpush.msra.mxu0 %v2715
  %2885 = vmatmul.f32.gmra.mxu0 %v2747
  %v2886 = vpop.f32.mrf.mxu0
  %v2887 = vadd.f32 0.0, %v2886
  %2888 = vdwg.mxu0
  %2889 = vmatpush.msra.mxu0 0.0
  %2890 = vmatpush.msra.mxu0 0.0
  %2891 = vmatpush.msra.mxu0 0.0
  %2892 = vmatpush.msra.mxu0 0.0
  %2893 = vmatpush.msra.mxu0 0.0
  %2894 = vmatpush.msra.mxu0 0.0
  %2895 = vmatpush.msra.mxu0 0.0
  %2896 = vmatpush.msra.mxu0 0.0
  %2897 = vmatpush.msra.mxu0 0.0
  %2898 = vmatpush.msra.mxu0 0.0
  %2899 = vmatpush.msra.mxu0 0.0
  %2900 = vmatpush.msra.mxu0 0.0
  %2901 = vmatpush.msra.mxu0 0.0
  %2902 = vmatpush.msra.mxu0 0.0
  %2903 = vmatpush.msra.mxu0 0.0
  %2904 = vmatpush.msra.mxu0 %v2716
  %2905 = vmatmul.f32.gmra.mxu0 %v2747
  %v2906 = vpop.f32.mrf.mxu0
  %v2907 = vadd.f32 0.0, %v2906
  %2908 = vdwg.mxu0
  %2909 = vmatpush.msra.mxu0 0.0
  %2910 = vmatpush.msra.mxu0 0.0
  %2911 = vmatpush.msra.mxu0 0.0
  %2912 = vmatpush.msra.mxu0 0.0
  %2913 = vmatpush.msra.mxu0 0.0
  %2914 = vmatpush.msra.mxu0 0.0
  %2915 = vmatpush.msra.mxu0 0.0
  %2916 = vmatpush.msra.mxu0 0.0
  %2917 = vmatpush.msra.mxu0 0.0
  %2918 = vmatpush.msra.mxu0 0.0
  %2919 = vmatpush.msra.mxu0 0.0
  %2920 = vmatpush.msra.mxu0 0.0
  %2921 = vmatpush.msra.mxu0 0.0
  %2922 = vmatpush.msra.mxu0 0.0
  %2923 = vmatpush.msra.mxu0 0.0
  %2924 = vmatpush.msra.mxu0 %v2717
  %2925 = vmatmul.f32.gmra.mxu0 %v2747
  %v2926 = vpop.f32.mrf.mxu0
  %v2927 = vadd.f32 0.0, %v2926
  %2928 = vdwg.mxu0
  %2929 = vmatpush.msra.mxu0 0.0
  %2930 = vmatpush.msra.mxu0 0.0
  %2931 = vmatpush.msra.mxu0 0.0
  %2932 = vmatpush.msra.mxu0 0.0
  %2933 = vmatpush.msra.mxu0 0.0
  %2934 = vmatpush.msra.mxu0 0.0
  %2935 = vmatpush.msra.mxu0 0.0
  %2936 = vmatpush.msra.mxu0 0.0
  %2937 = vmatpush.msra.mxu0 0.0
  %2938 = vmatpush.msra.mxu0 0.0
  %2939 = vmatpush.msra.mxu0 0.0
  %2940 = vmatpush.msra.mxu0 0.0
  %2941 = vmatpush.msra.mxu0 0.0
  %2942 = vmatpush.msra.mxu0 0.0
  %2943 = vmatpush.msra.mxu0 0.0
  %2944 = vmatpush.msra.mxu0 %v2718
  %2945 = vmatmul.f32.gmra.mxu0 %v2747
  %v2946 = vpop.f32.mrf.mxu0
  %v2947 = vadd.f32 0.0, %v2946
  %2948 = vdwg.mxu0
  %2949 = vmatpush.msra.mxu0 0.0
  %2950 = vmatpush.msra.mxu0 0.0
  %2951 = vmatpush.msra.mxu0 0.0
  %2952 = vmatpush.msra.mxu0 0.0
  %2953 = vmatpush.msra.mxu0 0.0
  %2954 = vmatpush.msra.mxu0 0.0
  %2955 = vmatpush.msra.mxu0 0.0
  %2956 = vmatpush.msra.mxu0 0.0
  %2957 = vmatpush.msra.mxu0 0.0
  %2958 = vmatpush.msra.mxu0 0.0
  %2959 = vmatpush.msra.mxu0 0.0
  %2960 = vmatpush.msra.mxu0 0.0
  %2961 = vmatpush.msra.mxu0 0.0
  %2962 = vmatpush.msra.mxu0 0.0
  %2963 = vmatpush.msra.mxu0 0.0
  %2964 = vmatpush.msra.mxu0 %v2719
  %2965 = vmatmul.f32.gmra.mxu0 %v2747
  %v2966 = vpop.f32.mrf.mxu0
  %v2967 = vadd.f32 0.0, %v2966
  %2968 = vdwg.mxu0
  %2969 = vmatpush.msra.mxu0 0.0
  %2970 = vmatpush.msra.mxu0 0.0
  %2971 = vmatpush.msra.mxu0 0.0
  %2972 = vmatpush.msra.mxu0 0.0
  %2973 = vmatpush.msra.mxu0 0.0
  %2974 = vmatpush.msra.mxu0 0.0
  %2975 = vmatpush.msra.mxu0 0.0
  %2976 = vmatpush.msra.mxu0 0.0
  %2977 = vmatpush.msra.mxu0 0.0
  %2978 = vmatpush.msra.mxu0 0.0
  %2979 = vmatpush.msra.mxu0 0.0
  %2980 = vmatpush.msra.mxu0 0.0
  %2981 = vmatpush.msra.mxu0 0.0
  %2982 = vmatpush.msra.mxu0 0.0
  %2983 = vmatpush.msra.mxu0 0.0
  %2984 = vmatpush.msra.mxu0 %v2720
  %2985 = vmatmul.f32.gmra.mxu0 %v2747
  %v2986 = vpop.f32.mrf.mxu0
  %v2987 = vadd.f32 0.0, %v2986
  %2988 = vdwg.mxu0
  %2989 = vmatpush.msra.mxu0 0.0
  %2990 = vmatpush.msra.mxu0 0.0
  %2991 = vmatpush.msra.mxu0 0.0
  %2992 = vmatpush.msra.mxu0 0.0
  %2993 = vmatpush.msra.mxu0 0.0
  %2994 = vmatpush.msra.mxu0 0.0
  %2995 = vmatpush.msra.mxu0 0.0
  %2996 = vmatpush.msra.mxu0 0.0
  %2997 = vmatpush.msra.mxu0 0.0
  %2998 = vmatpush.msra.mxu0 0.0
  %2999 = vmatpush.msra.mxu0 0.0
  %3000 = vmatpush.msra.mxu0 0.0
  %3001 = vmatpush.msra.mxu0 0.0
  %3002 = vmatpush.msra.mxu0 0.0
  %3003 = vmatpush.msra.mxu0 0.0
  %3004 = vmatpush.msra.mxu0 %v2721
  %3005 = vmatmul.f32.gmra.mxu0 %v2747
  %v3006 = vpop.f32.mrf.mxu0
  %v3007 = vadd.f32 0.0, %v3006
  %3008 = vdwg.mxu0
  %3009 = vmatpush.msra.mxu0 0.0
  %3010 = vmatpush.msra.mxu0 0.0
  %3011 = vmatpush.msra.mxu0 0.0
  %3012 = vmatpush.msra.mxu0 0.0
  %3013 = vmatpush.msra.mxu0 0.0
  %3014 = vmatpush.msra.mxu0 0.0
  %3015 = vmatpush.msra.mxu0 0.0
  %3016 = vmatpush.msra.mxu0 0.0
  %3017 = vmatpush.msra.mxu0 0.0
  %3018 = vmatpush.msra.mxu0 0.0
  %3019 = vmatpush.msra.mxu0 0.0
  %3020 = vmatpush.msra.mxu0 0.0
  %3021 = vmatpush.msra.mxu0 0.0
  %3022 = vmatpush.msra.mxu0 0.0
  %3023 = vmatpush.msra.mxu0 0.0
  %3024 = vmatpush.msra.mxu0 %v2722
  %3025 = vmatmul.f32.gmra.mxu0 %v2747
  %v3026 = vpop.f32.mrf.mxu0
  %v3027 = vadd.f32 0.0, %v3026
  %3028 = vdwg.mxu0
  %3029 = vmatpush.msra.mxu0 0.0
  %3030 = vmatpush.msra.mxu0 0.0
  %3031 = vmatpush.msra.mxu0 0.0
  %3032 = vmatpush.msra.mxu0 0.0
  %3033 = vmatpush.msra.mxu0 0.0
  %3034 = vmatpush.msra.mxu0 0.0
  %3035 = vmatpush.msra.mxu0 0.0
  %3036 = vmatpush.msra.mxu0 0.0
  %3037 = vmatpush.msra.mxu0 0.0
  %3038 = vmatpush.msra.mxu0 0.0
  %3039 = vmatpush.msra.mxu0 0.0
  %3040 = vmatpush.msra.mxu0 0.0
  %3041 = vmatpush.msra.mxu0 0.0
  %3042 = vmatpush.msra.mxu0 0.0
  %3043 = vmatpush.msra.mxu0 0.0
  %3044 = vmatpush.msra.mxu0 %v2723
  %3045 = vmatmul.f32.gmra.mxu0 %v2747
  %v3046 = vpop.f32.mrf.mxu0
  %v3047 = vadd.f32 0.0, %v3046
  %3048 = vdwg.mxu0
  %3049 = vmatpush.msra.mxu0 0.0
  %3050 = vmatpush.msra.mxu0 0.0
  %3051 = vmatpush.msra.mxu0 0.0
  %3052 = vmatpush.msra.mxu0 0.0
  %3053 = vmatpush.msra.mxu0 0.0
  %3054 = vmatpush.msra.mxu0 0.0
  %3055 = vmatpush.msra.mxu0 0.0
  %3056 = vmatpush.msra.mxu0 0.0
  %3057 = vmatpush.msra.mxu0 0.0
  %3058 = vmatpush.msra.mxu0 0.0
  %3059 = vmatpush.msra.mxu0 0.0
  %3060 = vmatpush.msra.mxu0 0.0
  %3061 = vmatpush.msra.mxu0 0.0
  %3062 = vmatpush.msra.mxu0 0.0
  %3063 = vmatpush.msra.mxu0 0.0
  %3064 = vmatpush.msra.mxu0 %v2724
  %3065 = vmatmul.f32.gmra.mxu0 %v2747
  %v3066 = vpop.f32.mrf.mxu0
  %v3067 = vadd.f32 0.0, %v3066
  %3068 = vdwg.mxu0
  %3069 = vmatpush.msra.mxu0 0.0
  %3070 = vmatpush.msra.mxu0 0.0
  %3071 = vmatpush.msra.mxu0 0.0
  %3072 = vmatpush.msra.mxu0 0.0
  %3073 = vmatpush.msra.mxu0 0.0
  %3074 = vmatpush.msra.mxu0 0.0
  %3075 = vmatpush.msra.mxu0 0.0
  %3076 = vmatpush.msra.mxu0 0.0
  %3077 = vmatpush.msra.mxu0 0.0
  %3078 = vmatpush.msra.mxu0 0.0
  %3079 = vmatpush.msra.mxu0 0.0
  %3080 = vmatpush.msra.mxu0 0.0
  %3081 = vmatpush.msra.mxu0 0.0
  %3082 = vmatpush.msra.mxu0 0.0
  %3083 = vmatpush.msra.mxu0 0.0
  %3084 = vmatpush.msra.mxu0 %v2725
  %3085 = vmatmul.f32.gmra.mxu0 %v2747
  %v3086 = vpop.f32.mrf.mxu0
  %v3087 = vadd.f32 0.0, %v3086
  %3088 = vdwg.mxu0
  %3089 = vmatpush.msra.mxu0 0.0
  %3090 = vmatpush.msra.mxu0 0.0
  %3091 = vmatpush.msra.mxu0 0.0
  %3092 = vmatpush.msra.mxu0 0.0
  %3093 = vmatpush.msra.mxu0 0.0
  %3094 = vmatpush.msra.mxu0 0.0
  %3095 = vmatpush.msra.mxu0 0.0
  %3096 = vmatpush.msra.mxu0 0.0
  %3097 = vmatpush.msra.mxu0 0.0
  %3098 = vmatpush.msra.mxu0 0.0
  %3099 = vmatpush.msra.mxu0 0.0
  %3100 = vmatpush.msra.mxu0 0.0
  %3101 = vmatpush.msra.mxu0 0.0
  %3102 = vmatpush.msra.mxu0 0.0
  %3103 = vmatpush.msra.mxu0 0.0
  %3104 = vmatpush.msra.mxu0 %v2726
  %3105 = vmatmul.f32.gmra.mxu0 %v2747
  %v3106 = vpop.f32.mrf.mxu0
  %v3107 = vadd.f32 0.0, %v3106
  %3108 = vdwg.mxu0
  %3109 = vmatpush.msra.mxu0 0.0
  %3110 = vmatpush.msra.mxu0 0.0
  %3111 = vmatpush.msra.mxu0 0.0
  %3112 = vmatpush.msra.mxu0 0.0
  %3113 = vmatpush.msra.mxu0 0.0
  %3114 = vmatpush.msra.mxu0 0.0
  %3115 = vmatpush.msra.mxu0 0.0
  %3116 = vmatpush.msra.mxu0 0.0
  %3117 = vmatpush.msra.mxu0 0.0
  %3118 = vmatpush.msra.mxu0 0.0
  %3119 = vmatpush.msra.mxu0 0.0
  %3120 = vmatpush.msra.mxu0 0.0
  %3121 = vmatpush.msra.mxu0 0.0
  %3122 = vmatpush.msra.mxu0 0.0
  %3123 = vmatpush.msra.mxu0 0.0
  %3124 = vmatpush.msra.mxu0 %v2707
  %3125 = vmatmul.f32.gmra.mxu0 %v2747
  %v3126 = vpop.f32.mrf.mxu0
  %v3127 = vadd.f32 0.0, %v3126
  %3128 = vdwg.mxu0
  %v3129 = vadd.f32 %v2649, %v2767
  %v3130 = vadd.f32 %v2650, %v2787
  %v3131 = vadd.f32 %v2651, %v2807
  %v3132 = vadd.f32 %v2652, %v2827
  %v3133 = vadd.f32 %v2653, %v2847
  %v3134 = vadd.f32 %v2654, %v2867
  %v3135 = vadd.f32 %v2655, %v2887
  %v3136 = vadd.f32 %v2656, %v2907
  %v3137 = vadd.f32 %v2657, %v2927
  %v3138 = vadd.f32 %v2658, %v2947
  %v3139 = vadd.f32 %v2659, %v2967
  %v3140 = vadd.f32 %v2660, %v2987
  %v3141 = vadd.f32 %v2661, %v3007
  %v3142 = vadd.f32 %v2662, %v3027
  %v3143 = vadd.f32 %v2663, %v3047
  %v3144 = vadd.f32 %v2664, %v3067
  %v3145 = vadd.f32 %v2665, %v3087
  %v3146 = vadd.f32 %v2666, %v3107
  %v3147 = vadd.f32 %v2667, %v3127
  %s3148 = scalar_lea.vmem %s1, 24
  %v3149 = vld [vmem:[%s3148] sm:$0x7]
  %3150 = vrot.lane.b32.xlu0 %v345, 60
  %v3151 = vpop.permute.xlu0 %3150
  %3152 = vrot.lane.b32.xlu0 %v346, 60
  %v3153 = vpop.permute.xlu0 %3152
  %3154 = vrot.lane.b32.xlu0 %v347, 60
  %v3155 = vpop.permute.xlu0 %3154
  %3156 = vrot.lane.b32.xlu0 %v348, 60
  %v3157 = vpop.permute.xlu0 %3156
  %3158 = vrot.lane.b32.xlu0 %v349, 60
  %v3159 = vpop.permute.xlu0 %3158
  %3160 = vrot.lane.b32.xlu0 %v350, 60
  %v3161 = vpop.permute.xlu0 %3160
  %3162 = vrot.lane.b32.xlu0 %v351, 60
  %v3163 = vpop.permute.xlu0 %3162
  %3164 = vrot.lane.b32.xlu0 %v352, 60
  %v3165 = vpop.permute.xlu0 %3164
  %3166 = vrot.lane.b32.xlu0 %v353, 60
  %v3167 = vpop.permute.xlu0 %3166
  %3168 = vrot.lane.b32.xlu0 %v354, 60
  %v3169 = vpop.permute.xlu0 %3168
  %3170 = vrot.lane.b32.xlu0 %v355, 60
  %v3171 = vpop.permute.xlu0 %3170
  %3172 = vrot.lane.b32.xlu0 %v356, 60
  %v3173 = vpop.permute.xlu0 %3172
  %3174 = vrot.lane.b32.xlu0 %v357, 60
  %v3175 = vpop.permute.xlu0 %3174
  %3176 = vrot.lane.b32.xlu0 %v358, 60
  %v3177 = vpop.permute.xlu0 %3176
  %3178 = vrot.lane.b32.xlu0 %v359, 60
  %v3179 = vpop.permute.xlu0 %3178
  %3180 = vrot.lane.b32.xlu0 %v360, 60
  %v3181 = vpop.permute.xlu0 %3180
  %3182 = vrot.lane.b32.xlu0 %v361, 60
  %v3183 = vpop.permute.xlu0 %3182
  %3184 = vrot.lane.b32.xlu0 %v362, 60
  %v3185 = vpop.permute.xlu0 %3184
  %3186 = vrot.lane.b32.xlu0 %v363, 60
  %v3187 = vpop.permute.xlu0 %3186
  %vm3188 = vcmask 490496
  %v3189 = vsel %vm3188, %v3151, %v3153
  %v3190 = vsel %vm3188, %v3153, %v3155
  %v3191 = vsel %vm3188, %v3155, %v3157
  %v3192 = vsel %vm3188, %v3157, %v3159
  %v3193 = vsel %vm3188, %v3159, %v3161
  %v3194 = vsel %vm3188, %v3161, %v3163
  %v3195 = vsel %vm3188, %v3163, %v3165
  %v3196 = vsel %vm3188, %v3165, %v3167
  %v3197 = vsel %vm3188, %v3167, %v3169
  %v3198 = vsel %vm3188, %v3169, %v3171
  %v3199 = vsel %vm3188, %v3171, %v3173
  %v3200 = vsel %vm3188, %v3173, %v3175
  %v3201 = vsel %vm3188, %v3175, %v3177
  %v3202 = vsel %vm3188, %v3177, %v3179
  %v3203 = vsel %vm3188, %v3179, %v3181
  %v3204 = vsel %vm3188, %v3181, %v3183
  %v3205 = vsel %vm3188, %v3183, %v3185
  %v3206 = vsel %vm3188, %v3185, %v3187
  %v3227 = vsel %vm461, %v3149, 0
  %3229 = vmatpush.msra.mxu0 0.0
  %3230 = vmatpush.msra.mxu0 0.0
  %3231 = vmatpush.msra.mxu0 0.0
  %3232 = vmatpush.msra.mxu0 0.0
  %3233 = vmatpush.msra.mxu0 0.0
  %3234 = vmatpush.msra.mxu0 0.0
  %3235 = vmatpush.msra.mxu0 0.0
  %3236 = vmatpush.msra.mxu0 0.0
  %3237 = vmatpush.msra.mxu0 0.0
  %3238 = vmatpush.msra.mxu0 0.0
  %3239 = vmatpush.msra.mxu0 0.0
  %3240 = vmatpush.msra.mxu0 0.0
  %3241 = vmatpush.msra.mxu0 0.0
  %3242 = vmatpush.msra.mxu0 0.0
  %3243 = vmatpush.msra.mxu0 0.0
  %3244 = vmatpush.msra.mxu0 %v3189
  %3245 = vmatmul.f32.gmra.mxu0 %v3227
  %v3246 = vpop.f32.mrf.mxu0
  %v3247 = vadd.f32 0.0, %v3246
  %3248 = vdwg.mxu0
  %3249 = vmatpush.msra.mxu0 0.0
  %3250 = vmatpush.msra.mxu0 0.0
  %3251 = vmatpush.msra.mxu0 0.0
  %3252 = vmatpush.msra.mxu0 0.0
  %3253 = vmatpush.msra.mxu0 0.0
  %3254 = vmatpush.msra.mxu0 0.0
  %3255 = vmatpush.msra.mxu0 0.0
  %3256 = vmatpush.msra.mxu0 0.0
  %3257 = vmatpush.msra.mxu0 0.0
  %3258 = vmatpush.msra.mxu0 0.0
  %3259 = vmatpush.msra.mxu0 0.0
  %3260 = vmatpush.msra.mxu0 0.0
  %3261 = vmatpush.msra.mxu0 0.0
  %3262 = vmatpush.msra.mxu0 0.0
  %3263 = vmatpush.msra.mxu0 0.0
  %3264 = vmatpush.msra.mxu0 %v3190
  %3265 = vmatmul.f32.gmra.mxu0 %v3227
  %v3266 = vpop.f32.mrf.mxu0
  %v3267 = vadd.f32 0.0, %v3266
  %3268 = vdwg.mxu0
  %3269 = vmatpush.msra.mxu0 0.0
  %3270 = vmatpush.msra.mxu0 0.0
  %3271 = vmatpush.msra.mxu0 0.0
  %3272 = vmatpush.msra.mxu0 0.0
  %3273 = vmatpush.msra.mxu0 0.0
  %3274 = vmatpush.msra.mxu0 0.0
  %3275 = vmatpush.msra.mxu0 0.0
  %3276 = vmatpush.msra.mxu0 0.0
  %3277 = vmatpush.msra.mxu0 0.0
  %3278 = vmatpush.msra.mxu0 0.0
  %3279 = vmatpush.msra.mxu0 0.0
  %3280 = vmatpush.msra.mxu0 0.0
  %3281 = vmatpush.msra.mxu0 0.0
  %3282 = vmatpush.msra.mxu0 0.0
  %3283 = vmatpush.msra.mxu0 0.0
  %3284 = vmatpush.msra.mxu0 %v3191
  %3285 = vmatmul.f32.gmra.mxu0 %v3227
  %v3286 = vpop.f32.mrf.mxu0
  %v3287 = vadd.f32 0.0, %v3286
  %3288 = vdwg.mxu0
  %3289 = vmatpush.msra.mxu0 0.0
  %3290 = vmatpush.msra.mxu0 0.0
  %3291 = vmatpush.msra.mxu0 0.0
  %3292 = vmatpush.msra.mxu0 0.0
  %3293 = vmatpush.msra.mxu0 0.0
  %3294 = vmatpush.msra.mxu0 0.0
  %3295 = vmatpush.msra.mxu0 0.0
  %3296 = vmatpush.msra.mxu0 0.0
  %3297 = vmatpush.msra.mxu0 0.0
  %3298 = vmatpush.msra.mxu0 0.0
  %3299 = vmatpush.msra.mxu0 0.0
  %3300 = vmatpush.msra.mxu0 0.0
  %3301 = vmatpush.msra.mxu0 0.0
  %3302 = vmatpush.msra.mxu0 0.0
  %3303 = vmatpush.msra.mxu0 0.0
  %3304 = vmatpush.msra.mxu0 %v3192
  %3305 = vmatmul.f32.gmra.mxu0 %v3227
  %v3306 = vpop.f32.mrf.mxu0
  %v3307 = vadd.f32 0.0, %v3306
  %3308 = vdwg.mxu0
  %3309 = vmatpush.msra.mxu0 0.0
  %3310 = vmatpush.msra.mxu0 0.0
  %3311 = vmatpush.msra.mxu0 0.0
  %3312 = vmatpush.msra.mxu0 0.0
  %3313 = vmatpush.msra.mxu0 0.0
  %3314 = vmatpush.msra.mxu0 0.0
  %3315 = vmatpush.msra.mxu0 0.0
  %3316 = vmatpush.msra.mxu0 0.0
  %3317 = vmatpush.msra.mxu0 0.0
  %3318 = vmatpush.msra.mxu0 0.0
  %3319 = vmatpush.msra.mxu0 0.0
  %3320 = vmatpush.msra.mxu0 0.0
  %3321 = vmatpush.msra.mxu0 0.0
  %3322 = vmatpush.msra.mxu0 0.0
  %3323 = vmatpush.msra.mxu0 0.0
  %3324 = vmatpush.msra.mxu0 %v3193
  %3325 = vmatmul.f32.gmra.mxu0 %v3227
  %v3326 = vpop.f32.mrf.mxu0
  %v3327 = vadd.f32 0.0, %v3326
  %3328 = vdwg.mxu0
  %3329 = vmatpush.msra.mxu0 0.0
  %3330 = vmatpush.msra.mxu0 0.0
  %3331 = vmatpush.msra.mxu0 0.0
  %3332 = vmatpush.msra.mxu0 0.0
  %3333 = vmatpush.msra.mxu0 0.0
  %3334 = vmatpush.msra.mxu0 0.0
  %3335 = vmatpush.msra.mxu0 0.0
  %3336 = vmatpush.msra.mxu0 0.0
  %3337 = vmatpush.msra.mxu0 0.0
  %3338 = vmatpush.msra.mxu0 0.0
  %3339 = vmatpush.msra.mxu0 0.0
  %3340 = vmatpush.msra.mxu0 0.0
  %3341 = vmatpush.msra.mxu0 0.0
  %3342 = vmatpush.msra.mxu0 0.0
  %3343 = vmatpush.msra.mxu0 0.0
  %3344 = vmatpush.msra.mxu0 %v3194
  %3345 = vmatmul.f32.gmra.mxu0 %v3227
  %v3346 = vpop.f32.mrf.mxu0
  %v3347 = vadd.f32 0.0, %v3346
  %3348 = vdwg.mxu0
  %3349 = vmatpush.msra.mxu0 0.0
  %3350 = vmatpush.msra.mxu0 0.0
  %3351 = vmatpush.msra.mxu0 0.0
  %3352 = vmatpush.msra.mxu0 0.0
  %3353 = vmatpush.msra.mxu0 0.0
  %3354 = vmatpush.msra.mxu0 0.0
  %3355 = vmatpush.msra.mxu0 0.0
  %3356 = vmatpush.msra.mxu0 0.0
  %3357 = vmatpush.msra.mxu0 0.0
  %3358 = vmatpush.msra.mxu0 0.0
  %3359 = vmatpush.msra.mxu0 0.0
  %3360 = vmatpush.msra.mxu0 0.0
  %3361 = vmatpush.msra.mxu0 0.0
  %3362 = vmatpush.msra.mxu0 0.0
  %3363 = vmatpush.msra.mxu0 0.0
  %3364 = vmatpush.msra.mxu0 %v3195
  %3365 = vmatmul.f32.gmra.mxu0 %v3227
  %v3366 = vpop.f32.mrf.mxu0
  %v3367 = vadd.f32 0.0, %v3366
  %3368 = vdwg.mxu0
  %3369 = vmatpush.msra.mxu0 0.0
  %3370 = vmatpush.msra.mxu0 0.0
  %3371 = vmatpush.msra.mxu0 0.0
  %3372 = vmatpush.msra.mxu0 0.0
  %3373 = vmatpush.msra.mxu0 0.0
  %3374 = vmatpush.msra.mxu0 0.0
  %3375 = vmatpush.msra.mxu0 0.0
  %3376 = vmatpush.msra.mxu0 0.0
  %3377 = vmatpush.msra.mxu0 0.0
  %3378 = vmatpush.msra.mxu0 0.0
  %3379 = vmatpush.msra.mxu0 0.0
  %3380 = vmatpush.msra.mxu0 0.0
  %3381 = vmatpush.msra.mxu0 0.0
  %3382 = vmatpush.msra.mxu0 0.0
  %3383 = vmatpush.msra.mxu0 0.0
  %3384 = vmatpush.msra.mxu0 %v3196
  %3385 = vmatmul.f32.gmra.mxu0 %v3227
  %v3386 = vpop.f32.mrf.mxu0
  %v3387 = vadd.f32 0.0, %v3386
  %3388 = vdwg.mxu0
  %3389 = vmatpush.msra.mxu0 0.0
  %3390 = vmatpush.msra.mxu0 0.0
  %3391 = vmatpush.msra.mxu0 0.0
  %3392 = vmatpush.msra.mxu0 0.0
  %3393 = vmatpush.msra.mxu0 0.0
  %3394 = vmatpush.msra.mxu0 0.0
  %3395 = vmatpush.msra.mxu0 0.0
  %3396 = vmatpush.msra.mxu0 0.0
  %3397 = vmatpush.msra.mxu0 0.0
  %3398 = vmatpush.msra.mxu0 0.0
  %3399 = vmatpush.msra.mxu0 0.0
  %3400 = vmatpush.msra.mxu0 0.0
  %3401 = vmatpush.msra.mxu0 0.0
  %3402 = vmatpush.msra.mxu0 0.0
  %3403 = vmatpush.msra.mxu0 0.0
  %3404 = vmatpush.msra.mxu0 %v3197
  %3405 = vmatmul.f32.gmra.mxu0 %v3227
  %v3406 = vpop.f32.mrf.mxu0
  %v3407 = vadd.f32 0.0, %v3406
  %3408 = vdwg.mxu0
  %3409 = vmatpush.msra.mxu0 0.0
  %3410 = vmatpush.msra.mxu0 0.0
  %3411 = vmatpush.msra.mxu0 0.0
  %3412 = vmatpush.msra.mxu0 0.0
  %3413 = vmatpush.msra.mxu0 0.0
  %3414 = vmatpush.msra.mxu0 0.0
  %3415 = vmatpush.msra.mxu0 0.0
  %3416 = vmatpush.msra.mxu0 0.0
  %3417 = vmatpush.msra.mxu0 0.0
  %3418 = vmatpush.msra.mxu0 0.0
  %3419 = vmatpush.msra.mxu0 0.0
  %3420 = vmatpush.msra.mxu0 0.0
  %3421 = vmatpush.msra.mxu0 0.0
  %3422 = vmatpush.msra.mxu0 0.0
  %3423 = vmatpush.msra.mxu0 0.0
  %3424 = vmatpush.msra.mxu0 %v3198
  %3425 = vmatmul.f32.gmra.mxu0 %v3227
  %v3426 = vpop.f32.mrf.mxu0
  %v3427 = vadd.f32 0.0, %v3426
  %3428 = vdwg.mxu0
  %3429 = vmatpush.msra.mxu0 0.0
  %3430 = vmatpush.msra.mxu0 0.0
  %3431 = vmatpush.msra.mxu0 0.0
  %3432 = vmatpush.msra.mxu0 0.0
  %3433 = vmatpush.msra.mxu0 0.0
  %3434 = vmatpush.msra.mxu0 0.0
  %3435 = vmatpush.msra.mxu0 0.0
  %3436 = vmatpush.msra.mxu0 0.0
  %3437 = vmatpush.msra.mxu0 0.0
  %3438 = vmatpush.msra.mxu0 0.0
  %3439 = vmatpush.msra.mxu0 0.0
  %3440 = vmatpush.msra.mxu0 0.0
  %3441 = vmatpush.msra.mxu0 0.0
  %3442 = vmatpush.msra.mxu0 0.0
  %3443 = vmatpush.msra.mxu0 0.0
  %3444 = vmatpush.msra.mxu0 %v3199
  %3445 = vmatmul.f32.gmra.mxu0 %v3227
  %v3446 = vpop.f32.mrf.mxu0
  %v3447 = vadd.f32 0.0, %v3446
  %3448 = vdwg.mxu0
  %3449 = vmatpush.msra.mxu0 0.0
  %3450 = vmatpush.msra.mxu0 0.0
  %3451 = vmatpush.msra.mxu0 0.0
  %3452 = vmatpush.msra.mxu0 0.0
  %3453 = vmatpush.msra.mxu0 0.0
  %3454 = vmatpush.msra.mxu0 0.0
  %3455 = vmatpush.msra.mxu0 0.0
  %3456 = vmatpush.msra.mxu0 0.0
  %3457 = vmatpush.msra.mxu0 0.0
  %3458 = vmatpush.msra.mxu0 0.0
  %3459 = vmatpush.msra.mxu0 0.0
  %3460 = vmatpush.msra.mxu0 0.0
  %3461 = vmatpush.msra.mxu0 0.0
  %3462 = vmatpush.msra.mxu0 0.0
  %3463 = vmatpush.msra.mxu0 0.0
  %3464 = vmatpush.msra.mxu0 %v3200
  %3465 = vmatmul.f32.gmra.mxu0 %v3227
  %v3466 = vpop.f32.mrf.mxu0
  %v3467 = vadd.f32 0.0, %v3466
  %3468 = vdwg.mxu0
  %3469 = vmatpush.msra.mxu0 0.0
  %3470 = vmatpush.msra.mxu0 0.0
  %3471 = vmatpush.msra.mxu0 0.0
  %3472 = vmatpush.msra.mxu0 0.0
  %3473 = vmatpush.msra.mxu0 0.0
  %3474 = vmatpush.msra.mxu0 0.0
  %3475 = vmatpush.msra.mxu0 0.0
  %3476 = vmatpush.msra.mxu0 0.0
  %3477 = vmatpush.msra.mxu0 0.0
  %3478 = vmatpush.msra.mxu0 0.0
  %3479 = vmatpush.msra.mxu0 0.0
  %3480 = vmatpush.msra.mxu0 0.0
  %3481 = vmatpush.msra.mxu0 0.0
  %3482 = vmatpush.msra.mxu0 0.0
  %3483 = vmatpush.msra.mxu0 0.0
  %3484 = vmatpush.msra.mxu0 %v3201
  %3485 = vmatmul.f32.gmra.mxu0 %v3227
  %v3486 = vpop.f32.mrf.mxu0
  %v3487 = vadd.f32 0.0, %v3486
  %3488 = vdwg.mxu0
  %3489 = vmatpush.msra.mxu0 0.0
  %3490 = vmatpush.msra.mxu0 0.0
  %3491 = vmatpush.msra.mxu0 0.0
  %3492 = vmatpush.msra.mxu0 0.0
  %3493 = vmatpush.msra.mxu0 0.0
  %3494 = vmatpush.msra.mxu0 0.0
  %3495 = vmatpush.msra.mxu0 0.0
  %3496 = vmatpush.msra.mxu0 0.0
  %3497 = vmatpush.msra.mxu0 0.0
  %3498 = vmatpush.msra.mxu0 0.0
  %3499 = vmatpush.msra.mxu0 0.0
  %3500 = vmatpush.msra.mxu0 0.0
  %3501 = vmatpush.msra.mxu0 0.0
  %3502 = vmatpush.msra.mxu0 0.0
  %3503 = vmatpush.msra.mxu0 0.0
  %3504 = vmatpush.msra.mxu0 %v3202
  %3505 = vmatmul.f32.gmra.mxu0 %v3227
  %v3506 = vpop.f32.mrf.mxu0
  %v3507 = vadd.f32 0.0, %v3506
  %3508 = vdwg.mxu0
  %3509 = vmatpush.msra.mxu0 0.0
  %3510 = vmatpush.msra.mxu0 0.0
  %3511 = vmatpush.msra.mxu0 0.0
  %3512 = vmatpush.msra.mxu0 0.0
  %3513 = vmatpush.msra.mxu0 0.0
  %3514 = vmatpush.msra.mxu0 0.0
  %3515 = vmatpush.msra.mxu0 0.0
  %3516 = vmatpush.msra.mxu0 0.0
  %3517 = vmatpush.msra.mxu0 0.0
  %3518 = vmatpush.msra.mxu0 0.0
  %3519 = vmatpush.msra.mxu0 0.0
  %3520 = vmatpush.msra.mxu0 0.0
  %3521 = vmatpush.msra.mxu0 0.0
  %3522 = vmatpush.msra.mxu0 0.0
  %3523 = vmatpush.msra.mxu0 0.0
  %3524 = vmatpush.msra.mxu0 %v3203
  %3525 = vmatmul.f32.gmra.mxu0 %v3227
  %v3526 = vpop.f32.mrf.mxu0
  %v3527 = vadd.f32 0.0, %v3526
  %3528 = vdwg.mxu0
  %3529 = vmatpush.msra.mxu0 0.0
  %3530 = vmatpush.msra.mxu0 0.0
  %3531 = vmatpush.msra.mxu0 0.0
  %3532 = vmatpush.msra.mxu0 0.0
  %3533 = vmatpush.msra.mxu0 0.0
  %3534 = vmatpush.msra.mxu0 0.0
  %3535 = vmatpush.msra.mxu0 0.0
  %3536 = vmatpush.msra.mxu0 0.0
  %3537 = vmatpush.msra.mxu0 0.0
  %3538 = vmatpush.msra.mxu0 0.0
  %3539 = vmatpush.msra.mxu0 0.0
  %3540 = vmatpush.msra.mxu0 0.0
  %3541 = vmatpush.msra.mxu0 0.0
  %3542 = vmatpush.msra.mxu0 0.0
  %3543 = vmatpush.msra.mxu0 0.0
  %3544 = vmatpush.msra.mxu0 %v3204
  %3545 = vmatmul.f32.gmra.mxu0 %v3227
  %v3546 = vpop.f32.mrf.mxu0
  %v3547 = vadd.f32 0.0, %v3546
  %3548 = vdwg.mxu0
  %3549 = vmatpush.msra.mxu0 0.0
  %3550 = vmatpush.msra.mxu0 0.0
  %3551 = vmatpush.msra.mxu0 0.0
  %3552 = vmatpush.msra.mxu0 0.0
  %3553 = vmatpush.msra.mxu0 0.0
  %3554 = vmatpush.msra.mxu0 0.0
  %3555 = vmatpush.msra.mxu0 0.0
  %3556 = vmatpush.msra.mxu0 0.0
  %3557 = vmatpush.msra.mxu0 0.0
  %3558 = vmatpush.msra.mxu0 0.0
  %3559 = vmatpush.msra.mxu0 0.0
  %3560 = vmatpush.msra.mxu0 0.0
  %3561 = vmatpush.msra.mxu0 0.0
  %3562 = vmatpush.msra.mxu0 0.0
  %3563 = vmatpush.msra.mxu0 0.0
  %3564 = vmatpush.msra.mxu0 %v3205
  %3565 = vmatmul.f32.gmra.mxu0 %v3227
  %v3566 = vpop.f32.mrf.mxu0
  %v3567 = vadd.f32 0.0, %v3566
  %3568 = vdwg.mxu0
  %3569 = vmatpush.msra.mxu0 0.0
  %3570 = vmatpush.msra.mxu0 0.0
  %3571 = vmatpush.msra.mxu0 0.0
  %3572 = vmatpush.msra.mxu0 0.0
  %3573 = vmatpush.msra.mxu0 0.0
  %3574 = vmatpush.msra.mxu0 0.0
  %3575 = vmatpush.msra.mxu0 0.0
  %3576 = vmatpush.msra.mxu0 0.0
  %3577 = vmatpush.msra.mxu0 0.0
  %3578 = vmatpush.msra.mxu0 0.0
  %3579 = vmatpush.msra.mxu0 0.0
  %3580 = vmatpush.msra.mxu0 0.0
  %3581 = vmatpush.msra.mxu0 0.0
  %3582 = vmatpush.msra.mxu0 0.0
  %3583 = vmatpush.msra.mxu0 0.0
  %3584 = vmatpush.msra.mxu0 %v3206
  %3585 = vmatmul.f32.gmra.mxu0 %v3227
  %v3586 = vpop.f32.mrf.mxu0
  %v3587 = vadd.f32 0.0, %v3586
  %3588 = vdwg.mxu0
  %3589 = vmatpush.msra.mxu0 0.0
  %3590 = vmatpush.msra.mxu0 0.0
  %3591 = vmatpush.msra.mxu0 0.0
  %3592 = vmatpush.msra.mxu0 0.0
  %3593 = vmatpush.msra.mxu0 0.0
  %3594 = vmatpush.msra.mxu0 0.0
  %3595 = vmatpush.msra.mxu0 0.0
  %3596 = vmatpush.msra.mxu0 0.0
  %3597 = vmatpush.msra.mxu0 0.0
  %3598 = vmatpush.msra.mxu0 0.0
  %3599 = vmatpush.msra.mxu0 0.0
  %3600 = vmatpush.msra.mxu0 0.0
  %3601 = vmatpush.msra.mxu0 0.0
  %3602 = vmatpush.msra.mxu0 0.0
  %3603 = vmatpush.msra.mxu0 0.0
  %3604 = vmatpush.msra.mxu0 %v3187
  %3605 = vmatmul.f32.gmra.mxu0 %v3227
  %v3606 = vpop.f32.mrf.mxu0
  %v3607 = vadd.f32 0.0, %v3606
  %3608 = vdwg.mxu0
  %v3609 = vadd.f32 %v3129, %v3247
  %v3610 = vadd.f32 %v3130, %v3267
  %v3611 = vadd.f32 %v3131, %v3287
  %v3612 = vadd.f32 %v3132, %v3307
  %v3613 = vadd.f32 %v3133, %v3327
  %v3614 = vadd.f32 %v3134, %v3347
  %v3615 = vadd.f32 %v3135, %v3367
  %v3616 = vadd.f32 %v3136, %v3387
  %v3617 = vadd.f32 %v3137, %v3407
  %v3618 = vadd.f32 %v3138, %v3427
  %v3619 = vadd.f32 %v3139, %v3447
  %v3620 = vadd.f32 %v3140, %v3467
  %v3621 = vadd.f32 %v3141, %v3487
  %v3622 = vadd.f32 %v3142, %v3507
  %v3623 = vadd.f32 %v3143, %v3527
  %v3624 = vadd.f32 %v3144, %v3547
  %v3625 = vadd.f32 %v3145, %v3567
  %v3626 = vadd.f32 %v3146, %v3587
  %v3627 = vadd.f32 %v3147, %v3607
  %s3628 = scalar_lea.vmem %s1, 28
  %v3629 = vld [vmem:[%s3628] sm:$0x7]
  %3630 = vrot.lane.b32.xlu0 %v345, 59
  %v3631 = vpop.permute.xlu0 %3630
  %3632 = vrot.lane.b32.xlu0 %v346, 59
  %v3633 = vpop.permute.xlu0 %3632
  %3634 = vrot.lane.b32.xlu0 %v347, 59
  %v3635 = vpop.permute.xlu0 %3634
  %3636 = vrot.lane.b32.xlu0 %v348, 59
  %v3637 = vpop.permute.xlu0 %3636
  %3638 = vrot.lane.b32.xlu0 %v349, 59
  %v3639 = vpop.permute.xlu0 %3638
  %3640 = vrot.lane.b32.xlu0 %v350, 59
  %v3641 = vpop.permute.xlu0 %3640
  %3642 = vrot.lane.b32.xlu0 %v351, 59
  %v3643 = vpop.permute.xlu0 %3642
  %3644 = vrot.lane.b32.xlu0 %v352, 59
  %v3645 = vpop.permute.xlu0 %3644
  %3646 = vrot.lane.b32.xlu0 %v353, 59
  %v3647 = vpop.permute.xlu0 %3646
  %3648 = vrot.lane.b32.xlu0 %v354, 59
  %v3649 = vpop.permute.xlu0 %3648
  %3650 = vrot.lane.b32.xlu0 %v355, 59
  %v3651 = vpop.permute.xlu0 %3650
  %3652 = vrot.lane.b32.xlu0 %v356, 59
  %v3653 = vpop.permute.xlu0 %3652
  %3654 = vrot.lane.b32.xlu0 %v357, 59
  %v3655 = vpop.permute.xlu0 %3654
  %3656 = vrot.lane.b32.xlu0 %v358, 59
  %v3657 = vpop.permute.xlu0 %3656
  %3658 = vrot.lane.b32.xlu0 %v359, 59
  %v3659 = vpop.permute.xlu0 %3658
  %3660 = vrot.lane.b32.xlu0 %v360, 59
  %v3661 = vpop.permute.xlu0 %3660
  %3662 = vrot.lane.b32.xlu0 %v361, 59
  %v3663 = vpop.permute.xlu0 %3662
  %3664 = vrot.lane.b32.xlu0 %v362, 59
  %v3665 = vpop.permute.xlu0 %3664
  %3666 = vrot.lane.b32.xlu0 %v363, 59
  %v3667 = vpop.permute.xlu0 %3666
  %vm3668 = vcmask 482304
  %v3669 = vsel %vm3668, %v3631, %v3633
  %v3670 = vsel %vm3668, %v3633, %v3635
  %v3671 = vsel %vm3668, %v3635, %v3637
  %v3672 = vsel %vm3668, %v3637, %v3639
  %v3673 = vsel %vm3668, %v3639, %v3641
  %v3674 = vsel %vm3668, %v3641, %v3643
  %v3675 = vsel %vm3668, %v3643, %v3645
  %v3676 = vsel %vm3668, %v3645, %v3647
  %v3677 = vsel %vm3668, %v3647, %v3649
  %v3678 = vsel %vm3668, %v3649, %v3651
  %v3679 = vsel %vm3668, %v3651, %v3653
  %v3680 = vsel %vm3668, %v3653, %v3655
  %v3681 = vsel %vm3668, %v3655, %v3657
  %v3682 = vsel %vm3668, %v3657, %v3659
  %v3683 = vsel %vm3668, %v3659, %v3661
  %v3684 = vsel %vm3668, %v3661, %v3663
  %v3685 = vsel %vm3668, %v3663, %v3665
  %v3686 = vsel %vm3668, %v3665, %v3667
  %v3707 = vsel %vm461, %v3629, 0
  %3709 = vmatpush.msra.mxu0 0.0
  %3710 = vmatpush.msra.mxu0 0.0
  %3711 = vmatpush.msra.mxu0 0.0
  %3712 = vmatpush.msra.mxu0 0.0
  %3713 = vmatpush.msra.mxu0 0.0
  %3714 = vmatpush.msra.mxu0 0.0
  %3715 = vmatpush.msra.mxu0 0.0
  %3716 = vmatpush.msra.mxu0 0.0
  %3717 = vmatpush.msra.mxu0 0.0
  %3718 = vmatpush.msra.mxu0 0.0
  %3719 = vmatpush.msra.mxu0 0.0
  %3720 = vmatpush.msra.mxu0 0.0
  %3721 = vmatpush.msra.mxu0 0.0
  %3722 = vmatpush.msra.mxu0 0.0
  %3723 = vmatpush.msra.mxu0 0.0
  %3724 = vmatpush.msra.mxu0 %v3669
  %3725 = vmatmul.f32.gmra.mxu0 %v3707
  %v3726 = vpop.f32.mrf.mxu0
  %v3727 = vadd.f32 0.0, %v3726
  %3728 = vdwg.mxu0
  %3729 = vmatpush.msra.mxu0 0.0
  %3730 = vmatpush.msra.mxu0 0.0
  %3731 = vmatpush.msra.mxu0 0.0
  %3732 = vmatpush.msra.mxu0 0.0
  %3733 = vmatpush.msra.mxu0 0.0
  %3734 = vmatpush.msra.mxu0 0.0
  %3735 = vmatpush.msra.mxu0 0.0
  %3736 = vmatpush.msra.mxu0 0.0
  %3737 = vmatpush.msra.mxu0 0.0
  %3738 = vmatpush.msra.mxu0 0.0
  %3739 = vmatpush.msra.mxu0 0.0
  %3740 = vmatpush.msra.mxu0 0.0
  %3741 = vmatpush.msra.mxu0 0.0
  %3742 = vmatpush.msra.mxu0 0.0
  %3743 = vmatpush.msra.mxu0 0.0
  %3744 = vmatpush.msra.mxu0 %v3670
  %3745 = vmatmul.f32.gmra.mxu0 %v3707
  %v3746 = vpop.f32.mrf.mxu0
  %v3747 = vadd.f32 0.0, %v3746
  %3748 = vdwg.mxu0
  %3749 = vmatpush.msra.mxu0 0.0
  %3750 = vmatpush.msra.mxu0 0.0
  %3751 = vmatpush.msra.mxu0 0.0
  %3752 = vmatpush.msra.mxu0 0.0
  %3753 = vmatpush.msra.mxu0 0.0
  %3754 = vmatpush.msra.mxu0 0.0
  %3755 = vmatpush.msra.mxu0 0.0
  %3756 = vmatpush.msra.mxu0 0.0
  %3757 = vmatpush.msra.mxu0 0.0
  %3758 = vmatpush.msra.mxu0 0.0
  %3759 = vmatpush.msra.mxu0 0.0
  %3760 = vmatpush.msra.mxu0 0.0
  %3761 = vmatpush.msra.mxu0 0.0
  %3762 = vmatpush.msra.mxu0 0.0
  %3763 = vmatpush.msra.mxu0 0.0
  %3764 = vmatpush.msra.mxu0 %v3671
  %3765 = vmatmul.f32.gmra.mxu0 %v3707
  %v3766 = vpop.f32.mrf.mxu0
  %v3767 = vadd.f32 0.0, %v3766
  %3768 = vdwg.mxu0
  %3769 = vmatpush.msra.mxu0 0.0
  %3770 = vmatpush.msra.mxu0 0.0
  %3771 = vmatpush.msra.mxu0 0.0
  %3772 = vmatpush.msra.mxu0 0.0
  %3773 = vmatpush.msra.mxu0 0.0
  %3774 = vmatpush.msra.mxu0 0.0
  %3775 = vmatpush.msra.mxu0 0.0
  %3776 = vmatpush.msra.mxu0 0.0
  %3777 = vmatpush.msra.mxu0 0.0
  %3778 = vmatpush.msra.mxu0 0.0
  %3779 = vmatpush.msra.mxu0 0.0
  %3780 = vmatpush.msra.mxu0 0.0
  %3781 = vmatpush.msra.mxu0 0.0
  %3782 = vmatpush.msra.mxu0 0.0
  %3783 = vmatpush.msra.mxu0 0.0
  %3784 = vmatpush.msra.mxu0 %v3672
  %3785 = vmatmul.f32.gmra.mxu0 %v3707
  %v3786 = vpop.f32.mrf.mxu0
  %v3787 = vadd.f32 0.0, %v3786
  %3788 = vdwg.mxu0
  %3789 = vmatpush.msra.mxu0 0.0
  %3790 = vmatpush.msra.mxu0 0.0
  %3791 = vmatpush.msra.mxu0 0.0
  %3792 = vmatpush.msra.mxu0 0.0
  %3793 = vmatpush.msra.mxu0 0.0
  %3794 = vmatpush.msra.mxu0 0.0
  %3795 = vmatpush.msra.mxu0 0.0
  %3796 = vmatpush.msra.mxu0 0.0
  %3797 = vmatpush.msra.mxu0 0.0
  %3798 = vmatpush.msra.mxu0 0.0
  %3799 = vmatpush.msra.mxu0 0.0
  %3800 = vmatpush.msra.mxu0 0.0
  %3801 = vmatpush.msra.mxu0 0.0
  %3802 = vmatpush.msra.mxu0 0.0
  %3803 = vmatpush.msra.mxu0 0.0
  %3804 = vmatpush.msra.mxu0 %v3673
  %3805 = vmatmul.f32.gmra.mxu0 %v3707
  %v3806 = vpop.f32.mrf.mxu0
  %v3807 = vadd.f32 0.0, %v3806
  %3808 = vdwg.mxu0
  %3809 = vmatpush.msra.mxu0 0.0
  %3810 = vmatpush.msra.mxu0 0.0
  %3811 = vmatpush.msra.mxu0 0.0
  %3812 = vmatpush.msra.mxu0 0.0
  %3813 = vmatpush.msra.mxu0 0.0
  %3814 = vmatpush.msra.mxu0 0.0
  %3815 = vmatpush.msra.mxu0 0.0
  %3816 = vmatpush.msra.mxu0 0.0
  %3817 = vmatpush.msra.mxu0 0.0
  %3818 = vmatpush.msra.mxu0 0.0
  %3819 = vmatpush.msra.mxu0 0.0
  %3820 = vmatpush.msra.mxu0 0.0
  %3821 = vmatpush.msra.mxu0 0.0
  %3822 = vmatpush.msra.mxu0 0.0
  %3823 = vmatpush.msra.mxu0 0.0
  %3824 = vmatpush.msra.mxu0 %v3674
  %3825 = vmatmul.f32.gmra.mxu0 %v3707
  %v3826 = vpop.f32.mrf.mxu0
  %v3827 = vadd.f32 0.0, %v3826
  %3828 = vdwg.mxu0
  %3829 = vmatpush.msra.mxu0 0.0
  %3830 = vmatpush.msra.mxu0 0.0
  %3831 = vmatpush.msra.mxu0 0.0
  %3832 = vmatpush.msra.mxu0 0.0
  %3833 = vmatpush.msra.mxu0 0.0
  %3834 = vmatpush.msra.mxu0 0.0
  %3835 = vmatpush.msra.mxu0 0.0
  %3836 = vmatpush.msra.mxu0 0.0
  %3837 = vmatpush.msra.mxu0 0.0
  %3838 = vmatpush.msra.mxu0 0.0
  %3839 = vmatpush.msra.mxu0 0.0
  %3840 = vmatpush.msra.mxu0 0.0
  %3841 = vmatpush.msra.mxu0 0.0
  %3842 = vmatpush.msra.mxu0 0.0
  %3843 = vmatpush.msra.mxu0 0.0
  %3844 = vmatpush.msra.mxu0 %v3675
  %3845 = vmatmul.f32.gmra.mxu0 %v3707
  %v3846 = vpop.f32.mrf.mxu0
  %v3847 = vadd.f32 0.0, %v3846
  %3848 = vdwg.mxu0
  %3849 = vmatpush.msra.mxu0 0.0
  %3850 = vmatpush.msra.mxu0 0.0
  %3851 = vmatpush.msra.mxu0 0.0
  %3852 = vmatpush.msra.mxu0 0.0
  %3853 = vmatpush.msra.mxu0 0.0
  %3854 = vmatpush.msra.mxu0 0.0
  %3855 = vmatpush.msra.mxu0 0.0
  %3856 = vmatpush.msra.mxu0 0.0
  %3857 = vmatpush.msra.mxu0 0.0
  %3858 = vmatpush.msra.mxu0 0.0
  %3859 = vmatpush.msra.mxu0 0.0
  %3860 = vmatpush.msra.mxu0 0.0
  %3861 = vmatpush.msra.mxu0 0.0
  %3862 = vmatpush.msra.mxu0 0.0
  %3863 = vmatpush.msra.mxu0 0.0
  %3864 = vmatpush.msra.mxu0 %v3676
  %3865 = vmatmul.f32.gmra.mxu0 %v3707
  %v3866 = vpop.f32.mrf.mxu0
  %v3867 = vadd.f32 0.0, %v3866
  %3868 = vdwg.mxu0
  %3869 = vmatpush.msra.mxu0 0.0
  %3870 = vmatpush.msra.mxu0 0.0
  %3871 = vmatpush.msra.mxu0 0.0
  %3872 = vmatpush.msra.mxu0 0.0
  %3873 = vmatpush.msra.mxu0 0.0
  %3874 = vmatpush.msra.mxu0 0.0
  %3875 = vmatpush.msra.mxu0 0.0
  %3876 = vmatpush.msra.mxu0 0.0
  %3877 = vmatpush.msra.mxu0 0.0
  %3878 = vmatpush.msra.mxu0 0.0
  %3879 = vmatpush.msra.mxu0 0.0
  %3880 = vmatpush.msra.mxu0 0.0
  %3881 = vmatpush.msra.mxu0 0.0
  %3882 = vmatpush.msra.mxu0 0.0
  %3883 = vmatpush.msra.mxu0 0.0
  %3884 = vmatpush.msra.mxu0 %v3677
  %3885 = vmatmul.f32.gmra.mxu0 %v3707
  %v3886 = vpop.f32.mrf.mxu0
  %v3887 = vadd.f32 0.0, %v3886
  %3888 = vdwg.mxu0
  %3889 = vmatpush.msra.mxu0 0.0
  %3890 = vmatpush.msra.mxu0 0.0
  %3891 = vmatpush.msra.mxu0 0.0
  %3892 = vmatpush.msra.mxu0 0.0
  %3893 = vmatpush.msra.mxu0 0.0
  %3894 = vmatpush.msra.mxu0 0.0
  %3895 = vmatpush.msra.mxu0 0.0
  %3896 = vmatpush.msra.mxu0 0.0
  %3897 = vmatpush.msra.mxu0 0.0
  %3898 = vmatpush.msra.mxu0 0.0
  %3899 = vmatpush.msra.mxu0 0.0
  %3900 = vmatpush.msra.mxu0 0.0
  %3901 = vmatpush.msra.mxu0 0.0
  %3902 = vmatpush.msra.mxu0 0.0
  %3903 = vmatpush.msra.mxu0 0.0
  %3904 = vmatpush.msra.mxu0 %v3678
  %3905 = vmatmul.f32.gmra.mxu0 %v3707
  %v3906 = vpop.f32.mrf.mxu0
  %v3907 = vadd.f32 0.0, %v3906
  %3908 = vdwg.mxu0
  %3909 = vmatpush.msra.mxu0 0.0
  %3910 = vmatpush.msra.mxu0 0.0
  %3911 = vmatpush.msra.mxu0 0.0
  %3912 = vmatpush.msra.mxu0 0.0
  %3913 = vmatpush.msra.mxu0 0.0
  %3914 = vmatpush.msra.mxu0 0.0
  %3915 = vmatpush.msra.mxu0 0.0
  %3916 = vmatpush.msra.mxu0 0.0
  %3917 = vmatpush.msra.mxu0 0.0
  %3918 = vmatpush.msra.mxu0 0.0
  %3919 = vmatpush.msra.mxu0 0.0
  %3920 = vmatpush.msra.mxu0 0.0
  %3921 = vmatpush.msra.mxu0 0.0
  %3922 = vmatpush.msra.mxu0 0.0
  %3923 = vmatpush.msra.mxu0 0.0
  %3924 = vmatpush.msra.mxu0 %v3679
  %3925 = vmatmul.f32.gmra.mxu0 %v3707
  %v3926 = vpop.f32.mrf.mxu0
  %v3927 = vadd.f32 0.0, %v3926
  %3928 = vdwg.mxu0
  %3929 = vmatpush.msra.mxu0 0.0
  %3930 = vmatpush.msra.mxu0 0.0
  %3931 = vmatpush.msra.mxu0 0.0
  %3932 = vmatpush.msra.mxu0 0.0
  %3933 = vmatpush.msra.mxu0 0.0
  %3934 = vmatpush.msra.mxu0 0.0
  %3935 = vmatpush.msra.mxu0 0.0
  %3936 = vmatpush.msra.mxu0 0.0
  %3937 = vmatpush.msra.mxu0 0.0
  %3938 = vmatpush.msra.mxu0 0.0
  %3939 = vmatpush.msra.mxu0 0.0
  %3940 = vmatpush.msra.mxu0 0.0
  %3941 = vmatpush.msra.mxu0 0.0
  %3942 = vmatpush.msra.mxu0 0.0
  %3943 = vmatpush.msra.mxu0 0.0
  %3944 = vmatpush.msra.mxu0 %v3680
  %3945 = vmatmul.f32.gmra.mxu0 %v3707
  %v3946 = vpop.f32.mrf.mxu0
  %v3947 = vadd.f32 0.0, %v3946
  %3948 = vdwg.mxu0
  %3949 = vmatpush.msra.mxu0 0.0
  %3950 = vmatpush.msra.mxu0 0.0
  %3951 = vmatpush.msra.mxu0 0.0
  %3952 = vmatpush.msra.mxu0 0.0
  %3953 = vmatpush.msra.mxu0 0.0
  %3954 = vmatpush.msra.mxu0 0.0
  %3955 = vmatpush.msra.mxu0 0.0
  %3956 = vmatpush.msra.mxu0 0.0
  %3957 = vmatpush.msra.mxu0 0.0
  %3958 = vmatpush.msra.mxu0 0.0
  %3959 = vmatpush.msra.mxu0 0.0
  %3960 = vmatpush.msra.mxu0 0.0
  %3961 = vmatpush.msra.mxu0 0.0
  %3962 = vmatpush.msra.mxu0 0.0
  %3963 = vmatpush.msra.mxu0 0.0
  %3964 = vmatpush.msra.mxu0 %v3681
  %3965 = vmatmul.f32.gmra.mxu0 %v3707
  %v3966 = vpop.f32.mrf.mxu0
  %v3967 = vadd.f32 0.0, %v3966
  %3968 = vdwg.mxu0
  %3969 = vmatpush.msra.mxu0 0.0
  %3970 = vmatpush.msra.mxu0 0.0
  %3971 = vmatpush.msra.mxu0 0.0
  %3972 = vmatpush.msra.mxu0 0.0
  %3973 = vmatpush.msra.mxu0 0.0
  %3974 = vmatpush.msra.mxu0 0.0
  %3975 = vmatpush.msra.mxu0 0.0
  %3976 = vmatpush.msra.mxu0 0.0
  %3977 = vmatpush.msra.mxu0 0.0
  %3978 = vmatpush.msra.mxu0 0.0
  %3979 = vmatpush.msra.mxu0 0.0
  %3980 = vmatpush.msra.mxu0 0.0
  %3981 = vmatpush.msra.mxu0 0.0
  %3982 = vmatpush.msra.mxu0 0.0
  %3983 = vmatpush.msra.mxu0 0.0
  %3984 = vmatpush.msra.mxu0 %v3682
  %3985 = vmatmul.f32.gmra.mxu0 %v3707
  %v3986 = vpop.f32.mrf.mxu0
  %v3987 = vadd.f32 0.0, %v3986
  %3988 = vdwg.mxu0
  %3989 = vmatpush.msra.mxu0 0.0
  %3990 = vmatpush.msra.mxu0 0.0
  %3991 = vmatpush.msra.mxu0 0.0
  %3992 = vmatpush.msra.mxu0 0.0
  %3993 = vmatpush.msra.mxu0 0.0
  %3994 = vmatpush.msra.mxu0 0.0
  %3995 = vmatpush.msra.mxu0 0.0
  %3996 = vmatpush.msra.mxu0 0.0
  %3997 = vmatpush.msra.mxu0 0.0
  %3998 = vmatpush.msra.mxu0 0.0
  %3999 = vmatpush.msra.mxu0 0.0
  %4000 = vmatpush.msra.mxu0 0.0
  %4001 = vmatpush.msra.mxu0 0.0
  %4002 = vmatpush.msra.mxu0 0.0
  %4003 = vmatpush.msra.mxu0 0.0
  %4004 = vmatpush.msra.mxu0 %v3683
  %4005 = vmatmul.f32.gmra.mxu0 %v3707
  %v4006 = vpop.f32.mrf.mxu0
  %v4007 = vadd.f32 0.0, %v4006
  %4008 = vdwg.mxu0
  %4009 = vmatpush.msra.mxu0 0.0
  %4010 = vmatpush.msra.mxu0 0.0
  %4011 = vmatpush.msra.mxu0 0.0
  %4012 = vmatpush.msra.mxu0 0.0
  %4013 = vmatpush.msra.mxu0 0.0
  %4014 = vmatpush.msra.mxu0 0.0
  %4015 = vmatpush.msra.mxu0 0.0
  %4016 = vmatpush.msra.mxu0 0.0
  %4017 = vmatpush.msra.mxu0 0.0
  %4018 = vmatpush.msra.mxu0 0.0
  %4019 = vmatpush.msra.mxu0 0.0
  %4020 = vmatpush.msra.mxu0 0.0
  %4021 = vmatpush.msra.mxu0 0.0
  %4022 = vmatpush.msra.mxu0 0.0
  %4023 = vmatpush.msra.mxu0 0.0
  %4024 = vmatpush.msra.mxu0 %v3684
  %4025 = vmatmul.f32.gmra.mxu0 %v3707
  %v4026 = vpop.f32.mrf.mxu0
  %v4027 = vadd.f32 0.0, %v4026
  %4028 = vdwg.mxu0
  %4029 = vmatpush.msra.mxu0 0.0
  %4030 = vmatpush.msra.mxu0 0.0
  %4031 = vmatpush.msra.mxu0 0.0
  %4032 = vmatpush.msra.mxu0 0.0
  %4033 = vmatpush.msra.mxu0 0.0
  %4034 = vmatpush.msra.mxu0 0.0
  %4035 = vmatpush.msra.mxu0 0.0
  %4036 = vmatpush.msra.mxu0 0.0
  %4037 = vmatpush.msra.mxu0 0.0
  %4038 = vmatpush.msra.mxu0 0.0
  %4039 = vmatpush.msra.mxu0 0.0
  %4040 = vmatpush.msra.mxu0 0.0
  %4041 = vmatpush.msra.mxu0 0.0
  %4042 = vmatpush.msra.mxu0 0.0
  %4043 = vmatpush.msra.mxu0 0.0
  %4044 = vmatpush.msra.mxu0 %v3685
  %4045 = vmatmul.f32.gmra.mxu0 %v3707
  %v4046 = vpop.f32.mrf.mxu0
  %v4047 = vadd.f32 0.0, %v4046
  %4048 = vdwg.mxu0
  %4049 = vmatpush.msra.mxu0 0.0
  %4050 = vmatpush.msra.mxu0 0.0
  %4051 = vmatpush.msra.mxu0 0.0
  %4052 = vmatpush.msra.mxu0 0.0
  %4053 = vmatpush.msra.mxu0 0.0
  %4054 = vmatpush.msra.mxu0 0.0
  %4055 = vmatpush.msra.mxu0 0.0
  %4056 = vmatpush.msra.mxu0 0.0
  %4057 = vmatpush.msra.mxu0 0.0
  %4058 = vmatpush.msra.mxu0 0.0
  %4059 = vmatpush.msra.mxu0 0.0
  %4060 = vmatpush.msra.mxu0 0.0
  %4061 = vmatpush.msra.mxu0 0.0
  %4062 = vmatpush.msra.mxu0 0.0
  %4063 = vmatpush.msra.mxu0 0.0
  %4064 = vmatpush.msra.mxu0 %v3686
  %4065 = vmatmul.f32.gmra.mxu0 %v3707
  %v4066 = vpop.f32.mrf.mxu0
  %v4067 = vadd.f32 0.0, %v4066
  %4068 = vdwg.mxu0
  %4069 = vmatpush.msra.mxu0 0.0
  %4070 = vmatpush.msra.mxu0 0.0
  %4071 = vmatpush.msra.mxu0 0.0
  %4072 = vmatpush.msra.mxu0 0.0
  %4073 = vmatpush.msra.mxu0 0.0
  %4074 = vmatpush.msra.mxu0 0.0
  %4075 = vmatpush.msra.mxu0 0.0
  %4076 = vmatpush.msra.mxu0 0.0
  %4077 = vmatpush.msra.mxu0 0.0
  %4078 = vmatpush.msra.mxu0 0.0
  %4079 = vmatpush.msra.mxu0 0.0
  %4080 = vmatpush.msra.mxu0 0.0
  %4081 = vmatpush.msra.mxu0 0.0
  %4082 = vmatpush.msra.mxu0 0.0
  %4083 = vmatpush.msra.mxu0 0.0
  %4084 = vmatpush.msra.mxu0 %v3667
  %4085 = vmatmul.f32.gmra.mxu0 %v3707
  %v4086 = vpop.f32.mrf.mxu0
  %v4087 = vadd.f32 0.0, %v4086
  %4088 = vdwg.mxu0
  %v4089 = vadd.f32 %v3609, %v3727
  %v4090 = vadd.f32 %v3610, %v3747
  %v4091 = vadd.f32 %v3611, %v3767
  %v4092 = vadd.f32 %v3612, %v3787
  %v4093 = vadd.f32 %v3613, %v3807
  %v4094 = vadd.f32 %v3614, %v3827
  %v4095 = vadd.f32 %v3615, %v3847
  %v4096 = vadd.f32 %v3616, %v3867
  %v4097 = vadd.f32 %v3617, %v3887
  %v4098 = vadd.f32 %v3618, %v3907
  %v4099 = vadd.f32 %v3619, %v3927
  %v4100 = vadd.f32 %v3620, %v3947
  %v4101 = vadd.f32 %v3621, %v3967
  %v4102 = vadd.f32 %v3622, %v3987
  %v4103 = vadd.f32 %v3623, %v4007
  %v4104 = vadd.f32 %v3624, %v4027
  %v4105 = vadd.f32 %v3625, %v4047
  %v4106 = vadd.f32 %v3626, %v4067
  %v4107 = vadd.f32 %v3627, %v4087
  %s4108 = scalar_lea.vmem %s1, 32
  %v4109 = vld [vmem:[%s4108] sm:$0x7]
  %4110 = vrot.lane.b32.xlu0 %v345, 58
  %v4111 = vpop.permute.xlu0 %4110
  %4112 = vrot.lane.b32.xlu0 %v346, 58
  %v4113 = vpop.permute.xlu0 %4112
  %4114 = vrot.lane.b32.xlu0 %v347, 58
  %v4115 = vpop.permute.xlu0 %4114
  %4116 = vrot.lane.b32.xlu0 %v348, 58
  %v4117 = vpop.permute.xlu0 %4116
  %4118 = vrot.lane.b32.xlu0 %v349, 58
  %v4119 = vpop.permute.xlu0 %4118
  %4120 = vrot.lane.b32.xlu0 %v350, 58
  %v4121 = vpop.permute.xlu0 %4120
  %4122 = vrot.lane.b32.xlu0 %v351, 58
  %v4123 = vpop.permute.xlu0 %4122
  %4124 = vrot.lane.b32.xlu0 %v352, 58
  %v4125 = vpop.permute.xlu0 %4124
  %4126 = vrot.lane.b32.xlu0 %v353, 58
  %v4127 = vpop.permute.xlu0 %4126
  %4128 = vrot.lane.b32.xlu0 %v354, 58
  %v4129 = vpop.permute.xlu0 %4128
  %4130 = vrot.lane.b32.xlu0 %v355, 58
  %v4131 = vpop.permute.xlu0 %4130
  %4132 = vrot.lane.b32.xlu0 %v356, 58
  %v4133 = vpop.permute.xlu0 %4132
  %4134 = vrot.lane.b32.xlu0 %v357, 58
  %v4135 = vpop.permute.xlu0 %4134
  %4136 = vrot.lane.b32.xlu0 %v358, 58
  %v4137 = vpop.permute.xlu0 %4136
  %4138 = vrot.lane.b32.xlu0 %v359, 58
  %v4139 = vpop.permute.xlu0 %4138
  %4140 = vrot.lane.b32.xlu0 %v360, 58
  %v4141 = vpop.permute.xlu0 %4140
  %4142 = vrot.lane.b32.xlu0 %v361, 58
  %v4143 = vpop.permute.xlu0 %4142
  %4144 = vrot.lane.b32.xlu0 %v362, 58
  %v4145 = vpop.permute.xlu0 %4144
  %4146 = vrot.lane.b32.xlu0 %v363, 58
  %v4147 = vpop.permute.xlu0 %4146
  %vm4148 = vcmask 474112
  %v4149 = vsel %vm4148, %v4111, %v4113
  %v4150 = vsel %vm4148, %v4113, %v4115
  %v4151 = vsel %vm4148, %v4115, %v4117
  %v4152 = vsel %vm4148, %v4117, %v4119
  %v4153 = vsel %vm4148, %v4119, %v4121
  %v4154 = vsel %vm4148, %v4121, %v4123
  %v4155 = vsel %vm4148, %v4123, %v4125
  %v4156 = vsel %vm4148, %v4125, %v4127
  %v4157 = vsel %vm4148, %v4127, %v4129
  %v4158 = vsel %vm4148, %v4129, %v4131
  %v4159 = vsel %vm4148, %v4131, %v4133
  %v4160 = vsel %vm4148, %v4133, %v4135
  %v4161 = vsel %vm4148, %v4135, %v4137
  %v4162 = vsel %vm4148, %v4137, %v4139
  %v4163 = vsel %vm4148, %v4139, %v4141
  %v4164 = vsel %vm4148, %v4141, %v4143
  %v4165 = vsel %vm4148, %v4143, %v4145
  %v4166 = vsel %vm4148, %v4145, %v4147
  %v4187 = vsel %vm461, %v4109, 0
  %4189 = vmatpush.msra.mxu0 0.0
  %4190 = vmatpush.msra.mxu0 0.0
  %4191 = vmatpush.msra.mxu0 0.0
  %4192 = vmatpush.msra.mxu0 0.0
  %4193 = vmatpush.msra.mxu0 0.0
  %4194 = vmatpush.msra.mxu0 0.0
  %4195 = vmatpush.msra.mxu0 0.0
  %4196 = vmatpush.msra.mxu0 0.0
  %4197 = vmatpush.msra.mxu0 0.0
  %4198 = vmatpush.msra.mxu0 0.0
  %4199 = vmatpush.msra.mxu0 0.0
  %4200 = vmatpush.msra.mxu0 0.0
  %4201 = vmatpush.msra.mxu0 0.0
  %4202 = vmatpush.msra.mxu0 0.0
  %4203 = vmatpush.msra.mxu0 0.0
  %4204 = vmatpush.msra.mxu0 %v4149
  %4205 = vmatmul.f32.gmra.mxu0 %v4187
  %v4206 = vpop.f32.mrf.mxu0
  %v4207 = vadd.f32 0.0, %v4206
  %4208 = vdwg.mxu0
  %4209 = vmatpush.msra.mxu0 0.0
  %4210 = vmatpush.msra.mxu0 0.0
  %4211 = vmatpush.msra.mxu0 0.0
  %4212 = vmatpush.msra.mxu0 0.0
  %4213 = vmatpush.msra.mxu0 0.0
  %4214 = vmatpush.msra.mxu0 0.0
  %4215 = vmatpush.msra.mxu0 0.0
  %4216 = vmatpush.msra.mxu0 0.0
  %4217 = vmatpush.msra.mxu0 0.0
  %4218 = vmatpush.msra.mxu0 0.0
  %4219 = vmatpush.msra.mxu0 0.0
  %4220 = vmatpush.msra.mxu0 0.0
  %4221 = vmatpush.msra.mxu0 0.0
  %4222 = vmatpush.msra.mxu0 0.0
  %4223 = vmatpush.msra.mxu0 0.0
  %4224 = vmatpush.msra.mxu0 %v4150
  %4225 = vmatmul.f32.gmra.mxu0 %v4187
  %v4226 = vpop.f32.mrf.mxu0
  %v4227 = vadd.f32 0.0, %v4226
  %4228 = vdwg.mxu0
  %4229 = vmatpush.msra.mxu0 0.0
  %4230 = vmatpush.msra.mxu0 0.0
  %4231 = vmatpush.msra.mxu0 0.0
  %4232 = vmatpush.msra.mxu0 0.0
  %4233 = vmatpush.msra.mxu0 0.0
  %4234 = vmatpush.msra.mxu0 0.0
  %4235 = vmatpush.msra.mxu0 0.0
  %4236 = vmatpush.msra.mxu0 0.0
  %4237 = vmatpush.msra.mxu0 0.0
  %4238 = vmatpush.msra.mxu0 0.0
  %4239 = vmatpush.msra.mxu0 0.0
  %4240 = vmatpush.msra.mxu0 0.0
  %4241 = vmatpush.msra.mxu0 0.0
  %4242 = vmatpush.msra.mxu0 0.0
  %4243 = vmatpush.msra.mxu0 0.0
  %4244 = vmatpush.msra.mxu0 %v4151
  %4245 = vmatmul.f32.gmra.mxu0 %v4187
  %v4246 = vpop.f32.mrf.mxu0
  %v4247 = vadd.f32 0.0, %v4246
  %4248 = vdwg.mxu0
  %4249 = vmatpush.msra.mxu0 0.0
  %4250 = vmatpush.msra.mxu0 0.0
  %4251 = vmatpush.msra.mxu0 0.0
  %4252 = vmatpush.msra.mxu0 0.0
  %4253 = vmatpush.msra.mxu0 0.0
  %4254 = vmatpush.msra.mxu0 0.0
  %4255 = vmatpush.msra.mxu0 0.0
  %4256 = vmatpush.msra.mxu0 0.0
  %4257 = vmatpush.msra.mxu0 0.0
  %4258 = vmatpush.msra.mxu0 0.0
  %4259 = vmatpush.msra.mxu0 0.0
  %4260 = vmatpush.msra.mxu0 0.0
  %4261 = vmatpush.msra.mxu0 0.0
  %4262 = vmatpush.msra.mxu0 0.0
  %4263 = vmatpush.msra.mxu0 0.0
  %4264 = vmatpush.msra.mxu0 %v4152
  %4265 = vmatmul.f32.gmra.mxu0 %v4187
  %v4266 = vpop.f32.mrf.mxu0
  %v4267 = vadd.f32 0.0, %v4266
  %4268 = vdwg.mxu0
  %4269 = vmatpush.msra.mxu0 0.0
  %4270 = vmatpush.msra.mxu0 0.0
  %4271 = vmatpush.msra.mxu0 0.0
  %4272 = vmatpush.msra.mxu0 0.0
  %4273 = vmatpush.msra.mxu0 0.0
  %4274 = vmatpush.msra.mxu0 0.0
  %4275 = vmatpush.msra.mxu0 0.0
  %4276 = vmatpush.msra.mxu0 0.0
  %4277 = vmatpush.msra.mxu0 0.0
  %4278 = vmatpush.msra.mxu0 0.0
  %4279 = vmatpush.msra.mxu0 0.0
  %4280 = vmatpush.msra.mxu0 0.0
  %4281 = vmatpush.msra.mxu0 0.0
  %4282 = vmatpush.msra.mxu0 0.0
  %4283 = vmatpush.msra.mxu0 0.0
  %4284 = vmatpush.msra.mxu0 %v4153
  %4285 = vmatmul.f32.gmra.mxu0 %v4187
  %v4286 = vpop.f32.mrf.mxu0
  %v4287 = vadd.f32 0.0, %v4286
  %4288 = vdwg.mxu0
  %4289 = vmatpush.msra.mxu0 0.0
  %4290 = vmatpush.msra.mxu0 0.0
  %4291 = vmatpush.msra.mxu0 0.0
  %4292 = vmatpush.msra.mxu0 0.0
  %4293 = vmatpush.msra.mxu0 0.0
  %4294 = vmatpush.msra.mxu0 0.0
  %4295 = vmatpush.msra.mxu0 0.0
  %4296 = vmatpush.msra.mxu0 0.0
  %4297 = vmatpush.msra.mxu0 0.0
  %4298 = vmatpush.msra.mxu0 0.0
  %4299 = vmatpush.msra.mxu0 0.0
  %4300 = vmatpush.msra.mxu0 0.0
  %4301 = vmatpush.msra.mxu0 0.0
  %4302 = vmatpush.msra.mxu0 0.0
  %4303 = vmatpush.msra.mxu0 0.0
  %4304 = vmatpush.msra.mxu0 %v4154
  %4305 = vmatmul.f32.gmra.mxu0 %v4187
  %v4306 = vpop.f32.mrf.mxu0
  %v4307 = vadd.f32 0.0, %v4306
  %4308 = vdwg.mxu0
  %4309 = vmatpush.msra.mxu0 0.0
  %4310 = vmatpush.msra.mxu0 0.0
  %4311 = vmatpush.msra.mxu0 0.0
  %4312 = vmatpush.msra.mxu0 0.0
  %4313 = vmatpush.msra.mxu0 0.0
  %4314 = vmatpush.msra.mxu0 0.0
  %4315 = vmatpush.msra.mxu0 0.0
  %4316 = vmatpush.msra.mxu0 0.0
  %4317 = vmatpush.msra.mxu0 0.0
  %4318 = vmatpush.msra.mxu0 0.0
  %4319 = vmatpush.msra.mxu0 0.0
  %4320 = vmatpush.msra.mxu0 0.0
  %4321 = vmatpush.msra.mxu0 0.0
  %4322 = vmatpush.msra.mxu0 0.0
  %4323 = vmatpush.msra.mxu0 0.0
  %4324 = vmatpush.msra.mxu0 %v4155
  %4325 = vmatmul.f32.gmra.mxu0 %v4187
  %v4326 = vpop.f32.mrf.mxu0
  %v4327 = vadd.f32 0.0, %v4326
  %4328 = vdwg.mxu0
  %4329 = vmatpush.msra.mxu0 0.0
  %4330 = vmatpush.msra.mxu0 0.0
  %4331 = vmatpush.msra.mxu0 0.0
  %4332 = vmatpush.msra.mxu0 0.0
  %4333 = vmatpush.msra.mxu0 0.0
  %4334 = vmatpush.msra.mxu0 0.0
  %4335 = vmatpush.msra.mxu0 0.0
  %4336 = vmatpush.msra.mxu0 0.0
  %4337 = vmatpush.msra.mxu0 0.0
  %4338 = vmatpush.msra.mxu0 0.0
  %4339 = vmatpush.msra.mxu0 0.0
  %4340 = vmatpush.msra.mxu0 0.0
  %4341 = vmatpush.msra.mxu0 0.0
  %4342 = vmatpush.msra.mxu0 0.0
  %4343 = vmatpush.msra.mxu0 0.0
  %4344 = vmatpush.msra.mxu0 %v4156
  %4345 = vmatmul.f32.gmra.mxu0 %v4187
  %v4346 = vpop.f32.mrf.mxu0
  %v4347 = vadd.f32 0.0, %v4346
  %4348 = vdwg.mxu0
  %4349 = vmatpush.msra.mxu0 0.0
  %4350 = vmatpush.msra.mxu0 0.0
  %4351 = vmatpush.msra.mxu0 0.0
  %4352 = vmatpush.msra.mxu0 0.0
  %4353 = vmatpush.msra.mxu0 0.0
  %4354 = vmatpush.msra.mxu0 0.0
  %4355 = vmatpush.msra.mxu0 0.0
  %4356 = vmatpush.msra.mxu0 0.0
  %4357 = vmatpush.msra.mxu0 0.0
  %4358 = vmatpush.msra.mxu0 0.0
  %4359 = vmatpush.msra.mxu0 0.0
  %4360 = vmatpush.msra.mxu0 0.0
  %4361 = vmatpush.msra.mxu0 0.0
  %4362 = vmatpush.msra.mxu0 0.0
  %4363 = vmatpush.msra.mxu0 0.0
  %4364 = vmatpush.msra.mxu0 %v4157
  %4365 = vmatmul.f32.gmra.mxu0 %v4187
  %v4366 = vpop.f32.mrf.mxu0
  %v4367 = vadd.f32 0.0, %v4366
  %4368 = vdwg.mxu0
  %4369 = vmatpush.msra.mxu0 0.0
  %4370 = vmatpush.msra.mxu0 0.0
  %4371 = vmatpush.msra.mxu0 0.0
  %4372 = vmatpush.msra.mxu0 0.0
  %4373 = vmatpush.msra.mxu0 0.0
  %4374 = vmatpush.msra.mxu0 0.0
  %4375 = vmatpush.msra.mxu0 0.0
  %4376 = vmatpush.msra.mxu0 0.0
  %4377 = vmatpush.msra.mxu0 0.0
  %4378 = vmatpush.msra.mxu0 0.0
  %4379 = vmatpush.msra.mxu0 0.0
  %4380 = vmatpush.msra.mxu0 0.0
  %4381 = vmatpush.msra.mxu0 0.0
  %4382 = vmatpush.msra.mxu0 0.0
  %4383 = vmatpush.msra.mxu0 0.0
  %4384 = vmatpush.msra.mxu0 %v4158
  %4385 = vmatmul.f32.gmra.mxu0 %v4187
  %v4386 = vpop.f32.mrf.mxu0
  %v4387 = vadd.f32 0.0, %v4386
  %4388 = vdwg.mxu0
  %4389 = vmatpush.msra.mxu0 0.0
  %4390 = vmatpush.msra.mxu0 0.0
  %4391 = vmatpush.msra.mxu0 0.0
  %4392 = vmatpush.msra.mxu0 0.0
  %4393 = vmatpush.msra.mxu0 0.0
  %4394 = vmatpush.msra.mxu0 0.0
  %4395 = vmatpush.msra.mxu0 0.0
  %4396 = vmatpush.msra.mxu0 0.0
  %4397 = vmatpush.msra.mxu0 0.0
  %4398 = vmatpush.msra.mxu0 0.0
  %4399 = vmatpush.msra.mxu0 0.0
  %4400 = vmatpush.msra.mxu0 0.0
  %4401 = vmatpush.msra.mxu0 0.0
  %4402 = vmatpush.msra.mxu0 0.0
  %4403 = vmatpush.msra.mxu0 0.0
  %4404 = vmatpush.msra.mxu0 %v4159
  %4405 = vmatmul.f32.gmra.mxu0 %v4187
  %v4406 = vpop.f32.mrf.mxu0
  %v4407 = vadd.f32 0.0, %v4406
  %4408 = vdwg.mxu0
  %4409 = vmatpush.msra.mxu0 0.0
  %4410 = vmatpush.msra.mxu0 0.0
  %4411 = vmatpush.msra.mxu0 0.0
  %4412 = vmatpush.msra.mxu0 0.0
  %4413 = vmatpush.msra.mxu0 0.0
  %4414 = vmatpush.msra.mxu0 0.0
  %4415 = vmatpush.msra.mxu0 0.0
  %4416 = vmatpush.msra.mxu0 0.0
  %4417 = vmatpush.msra.mxu0 0.0
  %4418 = vmatpush.msra.mxu0 0.0
  %4419 = vmatpush.msra.mxu0 0.0
  %4420 = vmatpush.msra.mxu0 0.0
  %4421 = vmatpush.msra.mxu0 0.0
  %4422 = vmatpush.msra.mxu0 0.0
  %4423 = vmatpush.msra.mxu0 0.0
  %4424 = vmatpush.msra.mxu0 %v4160
  %4425 = vmatmul.f32.gmra.mxu0 %v4187
  %v4426 = vpop.f32.mrf.mxu0
  %v4427 = vadd.f32 0.0, %v4426
  %4428 = vdwg.mxu0
  %4429 = vmatpush.msra.mxu0 0.0
  %4430 = vmatpush.msra.mxu0 0.0
  %4431 = vmatpush.msra.mxu0 0.0
  %4432 = vmatpush.msra.mxu0 0.0
  %4433 = vmatpush.msra.mxu0 0.0
  %4434 = vmatpush.msra.mxu0 0.0
  %4435 = vmatpush.msra.mxu0 0.0
  %4436 = vmatpush.msra.mxu0 0.0
  %4437 = vmatpush.msra.mxu0 0.0
  %4438 = vmatpush.msra.mxu0 0.0
  %4439 = vmatpush.msra.mxu0 0.0
  %4440 = vmatpush.msra.mxu0 0.0
  %4441 = vmatpush.msra.mxu0 0.0
  %4442 = vmatpush.msra.mxu0 0.0
  %4443 = vmatpush.msra.mxu0 0.0
  %4444 = vmatpush.msra.mxu0 %v4161
  %4445 = vmatmul.f32.gmra.mxu0 %v4187
  %v4446 = vpop.f32.mrf.mxu0
  %v4447 = vadd.f32 0.0, %v4446
  %4448 = vdwg.mxu0
  %4449 = vmatpush.msra.mxu0 0.0
  %4450 = vmatpush.msra.mxu0 0.0
  %4451 = vmatpush.msra.mxu0 0.0
  %4452 = vmatpush.msra.mxu0 0.0
  %4453 = vmatpush.msra.mxu0 0.0
  %4454 = vmatpush.msra.mxu0 0.0
  %4455 = vmatpush.msra.mxu0 0.0
  %4456 = vmatpush.msra.mxu0 0.0
  %4457 = vmatpush.msra.mxu0 0.0
  %4458 = vmatpush.msra.mxu0 0.0
  %4459 = vmatpush.msra.mxu0 0.0
  %4460 = vmatpush.msra.mxu0 0.0
  %4461 = vmatpush.msra.mxu0 0.0
  %4462 = vmatpush.msra.mxu0 0.0
  %4463 = vmatpush.msra.mxu0 0.0
  %4464 = vmatpush.msra.mxu0 %v4162
  %4465 = vmatmul.f32.gmra.mxu0 %v4187
  %v4466 = vpop.f32.mrf.mxu0
  %v4467 = vadd.f32 0.0, %v4466
  %4468 = vdwg.mxu0
  %4469 = vmatpush.msra.mxu0 0.0
  %4470 = vmatpush.msra.mxu0 0.0
  %4471 = vmatpush.msra.mxu0 0.0
  %4472 = vmatpush.msra.mxu0 0.0
  %4473 = vmatpush.msra.mxu0 0.0
  %4474 = vmatpush.msra.mxu0 0.0
  %4475 = vmatpush.msra.mxu0 0.0
  %4476 = vmatpush.msra.mxu0 0.0
  %4477 = vmatpush.msra.mxu0 0.0
  %4478 = vmatpush.msra.mxu0 0.0
  %4479 = vmatpush.msra.mxu0 0.0
  %4480 = vmatpush.msra.mxu0 0.0
  %4481 = vmatpush.msra.mxu0 0.0
  %4482 = vmatpush.msra.mxu0 0.0
  %4483 = vmatpush.msra.mxu0 0.0
  %4484 = vmatpush.msra.mxu0 %v4163
  %4485 = vmatmul.f32.gmra.mxu0 %v4187
  %v4486 = vpop.f32.mrf.mxu0
  %v4487 = vadd.f32 0.0, %v4486
  %4488 = vdwg.mxu0
  %4489 = vmatpush.msra.mxu0 0.0
  %4490 = vmatpush.msra.mxu0 0.0
  %4491 = vmatpush.msra.mxu0 0.0
  %4492 = vmatpush.msra.mxu0 0.0
  %4493 = vmatpush.msra.mxu0 0.0
  %4494 = vmatpush.msra.mxu0 0.0
  %4495 = vmatpush.msra.mxu0 0.0
  %4496 = vmatpush.msra.mxu0 0.0
  %4497 = vmatpush.msra.mxu0 0.0
  %4498 = vmatpush.msra.mxu0 0.0
  %4499 = vmatpush.msra.mxu0 0.0
  %4500 = vmatpush.msra.mxu0 0.0
  %4501 = vmatpush.msra.mxu0 0.0
  %4502 = vmatpush.msra.mxu0 0.0
  %4503 = vmatpush.msra.mxu0 0.0
  %4504 = vmatpush.msra.mxu0 %v4164
  %4505 = vmatmul.f32.gmra.mxu0 %v4187
  %v4506 = vpop.f32.mrf.mxu0
  %v4507 = vadd.f32 0.0, %v4506
  %4508 = vdwg.mxu0
  %4509 = vmatpush.msra.mxu0 0.0
  %4510 = vmatpush.msra.mxu0 0.0
  %4511 = vmatpush.msra.mxu0 0.0
  %4512 = vmatpush.msra.mxu0 0.0
  %4513 = vmatpush.msra.mxu0 0.0
  %4514 = vmatpush.msra.mxu0 0.0
  %4515 = vmatpush.msra.mxu0 0.0
  %4516 = vmatpush.msra.mxu0 0.0
  %4517 = vmatpush.msra.mxu0 0.0
  %4518 = vmatpush.msra.mxu0 0.0
  %4519 = vmatpush.msra.mxu0 0.0
  %4520 = vmatpush.msra.mxu0 0.0
  %4521 = vmatpush.msra.mxu0 0.0
  %4522 = vmatpush.msra.mxu0 0.0
  %4523 = vmatpush.msra.mxu0 0.0
  %4524 = vmatpush.msra.mxu0 %v4165
  %4525 = vmatmul.f32.gmra.mxu0 %v4187
  %v4526 = vpop.f32.mrf.mxu0
  %v4527 = vadd.f32 0.0, %v4526
  %4528 = vdwg.mxu0
  %4529 = vmatpush.msra.mxu0 0.0
  %4530 = vmatpush.msra.mxu0 0.0
  %4531 = vmatpush.msra.mxu0 0.0
  %4532 = vmatpush.msra.mxu0 0.0
  %4533 = vmatpush.msra.mxu0 0.0
  %4534 = vmatpush.msra.mxu0 0.0
  %4535 = vmatpush.msra.mxu0 0.0
  %4536 = vmatpush.msra.mxu0 0.0
  %4537 = vmatpush.msra.mxu0 0.0
  %4538 = vmatpush.msra.mxu0 0.0
  %4539 = vmatpush.msra.mxu0 0.0
  %4540 = vmatpush.msra.mxu0 0.0
  %4541 = vmatpush.msra.mxu0 0.0
  %4542 = vmatpush.msra.mxu0 0.0
  %4543 = vmatpush.msra.mxu0 0.0
  %4544 = vmatpush.msra.mxu0 %v4166
  %4545 = vmatmul.f32.gmra.mxu0 %v4187
  %v4546 = vpop.f32.mrf.mxu0
  %v4547 = vadd.f32 0.0, %v4546
  %4548 = vdwg.mxu0
  %4549 = vmatpush.msra.mxu0 0.0
  %4550 = vmatpush.msra.mxu0 0.0
  %4551 = vmatpush.msra.mxu0 0.0
  %4552 = vmatpush.msra.mxu0 0.0
  %4553 = vmatpush.msra.mxu0 0.0
  %4554 = vmatpush.msra.mxu0 0.0
  %4555 = vmatpush.msra.mxu0 0.0
  %4556 = vmatpush.msra.mxu0 0.0
  %4557 = vmatpush.msra.mxu0 0.0
  %4558 = vmatpush.msra.mxu0 0.0
  %4559 = vmatpush.msra.mxu0 0.0
  %4560 = vmatpush.msra.mxu0 0.0
  %4561 = vmatpush.msra.mxu0 0.0
  %4562 = vmatpush.msra.mxu0 0.0
  %4563 = vmatpush.msra.mxu0 0.0
  %4564 = vmatpush.msra.mxu0 %v4147
  %4565 = vmatmul.f32.gmra.mxu0 %v4187
  %v4566 = vpop.f32.mrf.mxu0
  %v4567 = vadd.f32 0.0, %v4566
  %4568 = vdwg.mxu0
  %v4569 = vadd.f32 %v4089, %v4207
  %v4570 = vadd.f32 %v4090, %v4227
  %v4571 = vadd.f32 %v4091, %v4247
  %v4572 = vadd.f32 %v4092, %v4267
  %v4573 = vadd.f32 %v4093, %v4287
  %v4574 = vadd.f32 %v4094, %v4307
  %v4575 = vadd.f32 %v4095, %v4327
  %v4576 = vadd.f32 %v4096, %v4347
  %v4577 = vadd.f32 %v4097, %v4367
  %v4578 = vadd.f32 %v4098, %v4387
  %v4579 = vadd.f32 %v4099, %v4407
  %v4580 = vadd.f32 %v4100, %v4427
  %v4581 = vadd.f32 %v4101, %v4447
  %v4582 = vadd.f32 %v4102, %v4467
  %v4583 = vadd.f32 %v4103, %v4487
  %v4584 = vadd.f32 %v4104, %v4507
  %v4585 = vadd.f32 %v4105, %v4527
  %v4586 = vadd.f32 %v4106, %v4547
  %v4587 = vadd.f32 %v4107, %v4567
  %v4588 = vld [vmem:[%s2] sm:$0x7]
  %4590 = vset.pattern.permute.xlu0 0
  %4591 = vperm.xlu0 %4590, %v4588
  %v4592 = vpop.permute.xlu0 %4591
  %v4594 = vadd.f32 %v4569, %v4592
  %v4595 = vadd.f32 %v4570, %v4592
  %v4596 = vadd.f32 %v4571, %v4592
  %v4597 = vadd.f32 %v4572, %v4592
  %v4598 = vadd.f32 %v4573, %v4592
  %v4599 = vadd.f32 %v4574, %v4592
  %v4600 = vadd.f32 %v4575, %v4592
  %v4601 = vadd.f32 %v4576, %v4592
  %v4602 = vadd.f32 %v4577, %v4592
  %v4603 = vadd.f32 %v4578, %v4592
  %v4604 = vadd.f32 %v4579, %v4592
  %v4605 = vadd.f32 %v4580, %v4592
  %v4606 = vadd.f32 %v4581, %v4592
  %v4607 = vadd.f32 %v4582, %v4592
  %v4608 = vadd.f32 %v4583, %v4592
  %v4609 = vadd.f32 %v4584, %v4592
  %v4610 = vadd.f32 %v4585, %v4592
  %v4611 = vadd.f32 %v4586, %v4592
  %v4612 = vadd.f32 %v4587, %v4592
  %v4613 = vtanh.pop %v4594
  %v4614 = vtanh.pop %v4595
  %v4615 = vtanh.pop %v4596
  %v4616 = vtanh.pop %v4597
  %v4617 = vtanh.pop %v4598
  %v4618 = vtanh.pop %v4599
  %v4619 = vtanh.pop %v4600
  %v4620 = vtanh.pop %v4601
  %v4621 = vtanh.pop %v4602
  %v4622 = vtanh.pop %v4603
  %v4623 = vtanh.pop %v4604
  %v4624 = vtanh.pop %v4605
  %v4625 = vtanh.pop %v4606
  %v4626 = vtanh.pop %v4607
  %v4627 = vtanh.pop %v4608
  %v4628 = vtanh.pop %v4609
  %v4629 = vtanh.pop %v4610
  %v4630 = vtanh.pop %v4611
  %v4631 = vtanh.pop %v4612
  %v4650 = vrot.slane %v4614, 4
  %v4651 = vrot.slane %v4616, 4
  %v4652 = vrot.slane %v4618, 4
  %v4653 = vrot.slane %v4620, 4
  %v4654 = vrot.slane %v4622, 4
  %v4655 = vrot.slane %v4624, 4
  %v4656 = vrot.slane %v4626, 4
  %v4657 = vrot.slane %v4628, 4
  %v4658 = vrot.slane %v4630, 4
  %vm4659 = vcmask 1043456
  %v4660 = vsel %vm4659, %v4613, %v4650
  %v4661 = vsel %vm4659, %v4615, %v4651
  %v4662 = vsel %vm4659, %v4617, %v4652
  %v4663 = vsel %vm4659, %v4619, %v4653
  %v4664 = vsel %vm4659, %v4621, %v4654
  %v4665 = vsel %vm4659, %v4623, %v4655
  %v4666 = vsel %vm4659, %v4625, %v4656
  %v4667 = vsel %vm4659, %v4627, %v4657
  %v4668 = vsel %vm4659, %v4629, %v4658
  %4678 = vst [vmem:[%s6] sm:$0x77] %v4660
  %4679 = vst [vmem:[%s6 + $0x8] sm:$0x77] %v4661
  %4680 = vst [vmem:[%s6 + $0x10] sm:$0x77] %v4662
  %4681 = vst [vmem:[%s6 + $0x18] sm:$0x77] %v4663
  %4682 = vst [vmem:[%s6 + $0x20] sm:$0x77] %v4664
  %4683 = vst [vmem:[%s6 + $0x28] sm:$0x77] %v4665
  %4684 = vst [vmem:[%s6 + $0x30] sm:$0x77] %v4666
  %4685 = vst [vmem:[%s6 + $0x38] sm:$0x77] %v4667
  %4686 = vst [vmem:[%s6 + $0x40] sm:$0x77] %v4668
  %vm4687 = vcmask 59392
  %4688 = vst.msk [vmem:[%s6 + $0x48] sm:$0x7] %vm4687, %v4631
  // Predicated region
  $region26: #{network_gen_auto_forward.9} parent=0 // pred_check
    _
  $region27: #{network_gen_auto_forward.9} parent=0 // pred_check_branch
    %4690 = sbr.rel (0) target = $region29
  $region28: #{network_gen_auto_forward.9} parent=0 // pred_region
    _
  $region29: #{network_gen_auto_forward.9} parent=0 // pred_fallthru
    _
  // Predicated region
  $region30: #{network_gen_auto_forward.9} parent=0 // pred_check
    _
  $region31: #{network_gen_auto_forward.9} parent=0 // pred_check_branch
    %4692 = sbr.rel (0) target = $region33
  $region32: #{network_gen_auto_forward.9} parent=0 // pred_region
    _
  $region33: #{network_gen_auto_forward.9} parent=0 // pred_fallthru
    _

</llo_original>
